<compile_context>
chip_gen: v7x
topology: tpu7x:2x2x1
jax: 0.10.0
libtpu: 0.0.40
codegen_flags: <defaults>
</compile_context>

<pallas_src>
import functools

import numpy as np

import jax
import jax.numpy as jnp
from jax import lax
from jax.experimental import pallas as pl
from jax.experimental.pallas import tpu as pltpu

_GATE_SRC = (0, 1, 3, 2)          # packed gate order [i, f, o, g]  <-  PyTorch [i, f, g, o]
_LANES = 64                       # padded gate width (8 * max hidden) -> one vreg row
_HIGH = jax.lax.Precision.HIGHEST


def _pad8(n):
    return ((n + 7) // 8) * 8


def _tree_sum(terms):
    """Pairwise-tree sum to keep the VALU dependency chain short."""
    while len(terms) > 1:
        nxt = [a + b for a, b in zip(terms[0::2], terms[1::2])]
        if len(terms) % 2:
            nxt.append(terms[-1])
        terms = nxt
    return terms[0]


# ----------------------------------------------------------------------------
# Fused kernel
# ----------------------------------------------------------------------------
def make_lstmae_kernel(*, T, B, D, F, layer_meta, head_meta):
    """layer_meta: per layer (H, Din, row_Wab, row_Whh, row_bias) into the slab."""

    def kernel(x_ref, p_ref, out_ref):
        # Per-time input blocks (batch rows x feature lanes), taken straight from
        # the caller's (B, T*D) layout -- no transpose anywhere.
        blocks = [x_ref[:, t * D:(t + 1) * D] for t in range(T)]

        for (H, Din, r_wab, r_whh, r_b) in layer_meta:
            H2 = 2 * H
            # ---- hoisted, direction-fused input projection (off the chain) ----
            Xc = jnp.concatenate(blocks, axis=0)           # (T*B, Din)   step order
            Rc = jnp.concatenate(blocks[::-1], axis=0)     # time-reversed copy
            cat = jnp.concatenate([Xc, Rc], axis=1)        # (T*B, 2*Din)
            Wab = p_ref[r_wab:r_wab + 2 * Din, :]          # (2*Din, 64) zero cross blocks
            bias = p_ref[r_b:r_b + 1, :]                   # (1, 64)
            GX = jnp.dot(cat, Wab, preferred_element_type=jnp.float32,
                         precision=_HIGH) + bias           # (T*B, 64), time-aligned
            gx = [GX[s * B:(s + 1) * B, :] for s in range(T)]   # pre-split, off chain

            # Recurrent weights as pre-sliced rows for the VPU broadcast-FMA.
            Whh = p_ref[r_whh:r_whh + H2, :]               # (2H, 64) block-diagonal
            w_rows = [Whh[r:r + 1, :] for r in range(H2)]

            h = None
            c = None
            new_blocks = []
            for s in range(T):                             # static unroll (T small)
                if s == 0:
                    gates = gx[0]                          # h0 = 0 -> no recurrence
                else:
                    # VPU broadcast-FMA: sum_r h[:, r] * Whh[r, :]  (no MXU on chain)
                    terms = [h[:, r:r + 1] * w_rows[r] for r in range(H2)]
                    gates = gx[s] + _tree_sum(terms)
                # One sigmoid over the whole packed gate vreg; g-gate pre-activations
                # were pre-scaled by 2, so tanh(a) = 2*sigmoid(2a) - 1.
                sig = jax.nn.sigmoid(gates)
                i = sig[:, 0:H2]
                f = sig[:, H2:2 * H2]
                o = sig[:, 2 * H2:3 * H2]
                g = 2.0 * sig[:, 3 * H2:4 * H2] - 1.0
                c = i * g if s == 0 else f * c + i * g
                h = o * jnp.tanh(c)
                new_blocks.append(h)                       # [h_fwd(s) | h_bwd(T-1-s)]
            blocks = new_blocks                            # next layer consumes directly

        # ---- decoder Linear head, same [Xc | reversed(Xc)] trick ----
        Hl, r_wh, r_bh = head_meta
        Xc = jnp.concatenate(blocks, axis=0)
        Rc = jnp.concatenate(blocks[::-1], axis=0)
        cat = jnp.concatenate([Xc, Rc], axis=1)            # (T*B, 4*Hl)
        Wh = p_ref[r_wh:r_wh + 4 * Hl, :]                  # (4*Hl, 64), cols >= F zero
        bh = p_ref[r_bh:r_bh + 1, :]
        Y = jnp.dot(cat, Wh, preferred_element_type=jnp.float32,
                    precision=_HIGH) + bh                  # rows in (t, b) order
        for t in range(T):                                 # write caller's (B, T*F) layout
            out_ref[:, t * F:(t + 1) * F] = Y[t * B:(t + 1) * B, 0:F]

    return kernel


def lstmae_forward(x, param_slab, *, T, B, D, F, layer_meta, head_meta):
    """x: (B, T, D) batch_first. Returns (B, T, F)."""
    x2 = x.reshape(B, T * D)                               # contiguous, no transpose
    out = pl.pallas_call(
        make_lstmae_kernel(T=T, B=B, D=D, F=F,
                           layer_meta=layer_meta, head_meta=head_meta),
        out_shape=jax.ShapeDtypeStruct((B, T * F), jnp.float32),
        in_specs=[pl.BlockSpec(memory_space=pltpu.MemorySpace.VMEM),
                  pl.BlockSpec(memory_space=pltpu.MemorySpace.VMEM)],
        out_specs=pl.BlockSpec(memory_space=pltpu.MemorySpace.VMEM),
    )(x2, param_slab)
    return out.reshape(B, T, F)


# ----------------------------------------------------------------------------
# Parameter init (PyTorch layout) and packing into one lane-padded slab.
# ----------------------------------------------------------------------------
def init_lstm_dir(key, input_size, hidden_size):
    """PyTorch LSTM per-direction params: W_ih (4H,D), W_hh (4H,H), b_ih, b_hh."""
    k = 1.0 / (hidden_size ** 0.5)
    k1, k2, k3, k4 = jax.random.split(key, 4)
    return (jax.random.uniform(k1, (4 * hidden_size, input_size), jnp.float32, -k, k),
            jax.random.uniform(k2, (4 * hidden_size, hidden_size), jnp.float32, -k, k),
            jax.random.uniform(k3, (4 * hidden_size,), jnp.float32, -k, k),
            jax.random.uniform(k4, (4 * hidden_size,), jnp.float32, -k, k))


def pack_all_params(raw_layers, w_out, b_out, hidden_sizes, input_sizes):
    """Pack every layer + head into one (rows, 64) f32 slab; return static row meta."""
    sections = []
    row = 0

    def add(mat):
        nonlocal row
        mat = np.asarray(mat, np.float32)
        r, cc = mat.shape
        pr = _pad8(r)
        buf = np.zeros((pr, _LANES), np.float32)
        buf[:r, :cc] = mat
        sections.append(buf)
        start = row
        row += pr
        return start

    layer_meta = []
    for li, ((dir_f, dir_b), H, Din) in enumerate(zip(raw_layers, hidden_sizes, input_sizes)):
        wih_f, whh_f, bih_f, bhh_f = [np.asarray(a, np.float32) for a in dir_f]
        wih_b, whh_b, bih_b, bhh_b = [np.asarray(a, np.float32) for a in dir_b]
        G = 8 * H
        Wab = np.zeros((2 * Din, G), np.float32)    # rows 0:Din act on Xc, Din:2Din on R(Xc)
        Whh = np.zeros((2 * H, G), np.float32)      # block-diagonal [h_fwd | h_bwd]
        bias = np.zeros((1, G), np.float32)
        for kk, gs in enumerate(_GATE_SRC):          # packed [i, f, o, g]
            fcol = slice(kk * 2 * H, kk * 2 * H + H)
            bcol = slice(kk * 2 * H + H, (kk + 1) * 2 * H)
            wf = wih_f[gs * H:(gs + 1) * H, :]       # (H, Din)
            wb = wih_b[gs * H:(gs + 1) * H, :]
            if li == 0:
                # raw input: fwd direction eats Xc(t), bwd direction eats R(Xc)(t)
                Wab[0:Din, fcol] = wf.T
                Wab[Din:2 * Din, bcol] = wb.T
            else:
                # input halves: Xc = [yf(t) | yb(T-1-t)], R(Xc) = [yf(T-1-t) | yb(t)]
                Hp = Din // 2
                Wab[0:Hp, fcol] = wf[:, 0:Hp].T              # yf(t)      -> fwd gates
                Wab[Din + Hp:2 * Din, fcol] = wf[:, Hp:2 * Hp].T  # yb(t)   -> fwd gates
                Wab[Hp:Din, bcol] = wb[:, Hp:2 * Hp].T       # yb(T-1-t)  -> bwd gates
                Wab[Din:Din + Hp, bcol] = wb[:, 0:Hp].T      # yf(T-1-t)  -> bwd gates
            Whh[0:H, fcol] = whh_f[gs * H:(gs + 1) * H, :].T
            Whh[H:2 * H, bcol] = whh_b[gs * H:(gs + 1) * H, :].T
            bias[0, fcol] = bih_f[gs * H:(gs + 1) * H] + bhh_f[gs * H:(gs + 1) * H]
            bias[0, bcol] = bih_b[gs * H:(gs + 1) * H] + bhh_b[gs * H:(gs + 1) * H]
        # Pre-scale g-gate columns by 2 everywhere (tanh(x) = 2*sigmoid(2x) - 1).
        gcols = slice(3 * 2 * H, 4 * 2 * H)
        Wab[:, gcols] *= 2.0
        Whh[:, gcols] *= 2.0
        bias[:, gcols] *= 2.0
        r_wab = add(Wab)
        r_whh = add(Whh)
        r_b = add(bias)
        layer_meta.append((H, Din, r_wab, r_whh, r_b))

    # Head: out(t) = yf(t) @ Wf.T + yb(t) @ Wb.T + b, folded into the [Xc | R(Xc)] layout.
    Hl = hidden_sizes[-1]
    w_out = np.asarray(w_out, np.float32)
    F = w_out.shape[0]
    Whead = np.zeros((4 * Hl, F), np.float32)
    Whead[0:Hl, :] = w_out[:, 0:Hl].T               # yf(t) half of Xc
    Whead[3 * Hl:4 * Hl, :] = w_out[:, Hl:2 * Hl].T  # yb(t) half of R(Xc)
    bhead = np.asarray(b_out, np.float32).reshape(1, F)
    r_wh = add(Whead)
    r_bh = add(bhead)

    slab = jnp.asarray(np.concatenate(sections, axis=0))
    return slab, tuple(layer_meta), (Hl, r_wh, r_bh)


# ----------------------------------------------------------------------------
# Pure-JAX reference (faithful PyTorch semantics) for the correctness check.
# ----------------------------------------------------------------------------
def _lstm_dir_ref(x_tbd, w_ih, w_hh, b_ih, b_hh):
    H = w_hh.shape[1]
    B = x_tbd.shape[1]
    b = (b_ih + b_hh)[None, :]

    def step(carry, x_t):
        h, c = carry
        gates = (jnp.dot(x_t, w_ih.T, precision=_HIGH)
                 + jnp.dot(h, w_hh.T, precision=_HIGH) + b)
        i = jax.nn.sigmoid(gates[:, 0 * H:1 * H])
        f = jax.nn.sigmoid(gates[:, 1 * H:2 * H])
        g = jnp.tanh(gates[:, 2 * H:3 * H])
        o = jax.nn.sigmoid(gates[:, 3 * H:4 * H])
        c = f * c + i * g
        h = o * jnp.tanh(c)
        return (h, c), h

    z = jnp.zeros((B, H), jnp.float32)
    _, ys = lax.scan(step, (z, z), x_tbd)
    return ys


def _bilstm_ref(x_btd, dir_f, dir_b):
    x_tbd = jnp.transpose(x_btd, (1, 0, 2))
    yf = _lstm_dir_ref(x_tbd, *dir_f)
    yb = _lstm_dir_ref(x_tbd[::-1], *dir_b)[::-1]
    return jnp.transpose(jnp.concatenate([yf, yb], axis=-1), (1, 0, 2))


def lstmae_ref(x, raw_layers, w_out, b_out):
    for dir_f, dir_b in raw_layers:
        x = _bilstm_ref(x, dir_f, dir_b)
    return jnp.dot(x, w_out.T, precision=_HIGH) + b_out[None, None, :]


# ----------------------------------------------------------------------------
if __name__ == "__main__":
    N_FEATURES = 8
    HIDDEN_DIM = 8                                   # LSTMAE default hidden_dim
    B, T = 2, 8
    HIDDEN_SIZES = (4, 2, 4, HIDDEN_DIM)             # enc.l1, enc.l2, dec.l1, dec.l2
    INPUT_SIZES = (HIDDEN_DIM, 8, 4, 8)              # each layer feeds 2*H to the next

    key = jax.random.PRNGKey(0)
    keys = jax.random.split(key, 6)
    x = jax.random.normal(keys[0], (B, T, HIDDEN_DIM), jnp.float32)

    raw_layers = []
    for li, (D, H) in enumerate(zip(INPUT_SIZES, HIDDEN_SIZES)):
        kf, kb = jax.random.split(keys[1 + li])
        raw_layers.append((init_lstm_dir(kf, D, H), init_lstm_dir(kb, D, H)))

    kw, kb2 = jax.random.split(keys[5])
    klin = 1.0 / ((2 * HIDDEN_DIM) ** 0.5)
    w_out = jax.random.uniform(kw, (N_FEATURES, 2 * HIDDEN_DIM), jnp.float32, -klin, klin)
    b_out = jax.random.uniform(kb2, (N_FEATURES,), jnp.float32, -klin, klin)

    # Pack once (outside the jitted forward): one contiguous parameter slab.
    param_slab, layer_meta, head_meta = pack_all_params(
        raw_layers, w_out, b_out, HIDDEN_SIZES, INPUT_SIZES)

    fwd = jax.jit(functools.partial(
        lstmae_forward, T=T, B=B, D=HIDDEN_DIM, F=N_FEATURES,
        layer_meta=layer_meta, head_meta=head_meta))
    out = jax.block_until_ready(fwd(x, param_slab))
    assert out.shape == (B, T, N_FEATURES), out.shape

    ref = lstmae_ref(x, raw_layers, w_out, b_out)
    max_err = float(jnp.max(jnp.abs(out - ref)))
    assert jnp.allclose(out, ref, atol=1e-4, rtol=1e-4), max_err

    print("KERNEL_OK")
</pallas_src>

<mosaic_0001>
module attributes {stable_mosaic.version = 11 : i64} {
  func.func @kernel(%arg0: memref<2x64xf32, #tpu.memory_space<vmem>>, %arg1: memref<168x64xf32, #tpu.memory_space<vmem>>, %arg2: memref<2x64xf32, #tpu.memory_space<vmem>>) attributes {dimension_semantics = [], scalar_prefetch = 0 : i64, scratch_operands = 0 : i64, tpu.core_type = #tpu.core_type<tc>} {
    %c0 = arith.constant 0 : index
    %c0_0 = arith.constant 0 : index
    %0 = vector.load %arg0[%c0, %c0_0] : memref<2x64xf32, #tpu.memory_space<vmem>>, vector<2x8xf32>
    %c0_1 = arith.constant 0 : index
    %c8 = arith.constant 8 : index
    %1 = vector.load %arg0[%c0_1, %c8] : memref<2x64xf32, #tpu.memory_space<vmem>>, vector<2x8xf32>
    %c0_2 = arith.constant 0 : index
    %c16 = arith.constant 16 : index
    %2 = vector.load %arg0[%c0_2, %c16] : memref<2x64xf32, #tpu.memory_space<vmem>>, vector<2x8xf32>
    %c0_3 = arith.constant 0 : index
    %c24 = arith.constant 24 : index
    %3 = vector.load %arg0[%c0_3, %c24] : memref<2x64xf32, #tpu.memory_space<vmem>>, vector<2x8xf32>
    %c0_4 = arith.constant 0 : index
    %c32 = arith.constant 32 : index
    %4 = vector.load %arg0[%c0_4, %c32] : memref<2x64xf32, #tpu.memory_space<vmem>>, vector<2x8xf32>
    %c0_5 = arith.constant 0 : index
    %c40 = arith.constant 40 : index
    %5 = vector.load %arg0[%c0_5, %c40] : memref<2x64xf32, #tpu.memory_space<vmem>>, vector<2x8xf32>
    %c0_6 = arith.constant 0 : index
    %c48 = arith.constant 48 : index
    %6 = vector.load %arg0[%c0_6, %c48] : memref<2x64xf32, #tpu.memory_space<vmem>>, vector<2x8xf32>
    %c0_7 = arith.constant 0 : index
    %c56 = arith.constant 56 : index
    %7 = vector.load %arg0[%c0_7, %c56] : memref<2x64xf32, #tpu.memory_space<vmem>>, vector<2x8xf32>
    %8 = tpu.concatenate %0, %1, %2, %3, %4, %5, %6, %7 in 0 : vector<2x8xf32>, vector<2x8xf32>, vector<2x8xf32>, vector<2x8xf32>, vector<2x8xf32>, vector<2x8xf32>, vector<2x8xf32>, vector<2x8xf32> -> vector<16x8xf32>
    %9 = tpu.concatenate %7, %6, %5, %4, %3, %2, %1, %0 in 0 : vector<2x8xf32>, vector<2x8xf32>, vector<2x8xf32>, vector<2x8xf32>, vector<2x8xf32>, vector<2x8xf32>, vector<2x8xf32>, vector<2x8xf32> -> vector<16x8xf32>
    %10 = tpu.concatenate %8, %9 in 1 : vector<16x8xf32>, vector<16x8xf32> -> vector<16x16xf32>
    %c0_8 = arith.constant 0 : index
    %c0_9 = arith.constant 0 : index
    %11 = vector.load %arg1[%c0_8, %c0_9] : memref<168x64xf32, #tpu.memory_space<vmem>>, vector<16x64xf32>
    %c24_10 = arith.constant 24 : index
    %c0_11 = arith.constant 0 : index
    %12 = vector.load %arg1[%c24_10, %c0_11] : memref<168x64xf32, #tpu.memory_space<vmem>>, vector<1x64xf32>
    %cst = arith.constant dense<0.000000e+00> : vector<16x64xf32>
    %13 = tpu.matmul %10, %11, %cst {dimension_numbers = #tpu.dot_dimension_numbers<[1], [0], [0], [1], [0, 0, 1, 1], [], []>, precision = #tpu.contract_precision<fp32>} : vector<16x16xf32>, vector<16x64xf32>, vector<16x64xf32> -> vector<16x64xf32>
    %14 = vector.broadcast %12 : vector<1x64xf32> to vector<16x64xf32>
    %15 = arith.addf %13, %14 : vector<16x64xf32>
    %16 = vector.extract_strided_slice %15 {offsets = [0, 0], sizes = [2, 64], strides = [1, 1]} : vector<16x64xf32> to vector<2x64xf32>
    %17 = vector.extract_strided_slice %15 {offsets = [2, 0], sizes = [2, 64], strides = [1, 1]} : vector<16x64xf32> to vector<2x64xf32>
    %18 = vector.extract_strided_slice %15 {offsets = [4, 0], sizes = [2, 64], strides = [1, 1]} : vector<16x64xf32> to vector<2x64xf32>
    %19 = vector.extract_strided_slice %15 {offsets = [6, 0], sizes = [2, 64], strides = [1, 1]} : vector<16x64xf32> to vector<2x64xf32>
    %20 = vector.extract_strided_slice %15 {offsets = [8, 0], sizes = [2, 64], strides = [1, 1]} : vector<16x64xf32> to vector<2x64xf32>
    %21 = vector.extract_strided_slice %15 {offsets = [10, 0], sizes = [2, 64], strides = [1, 1]} : vector<16x64xf32> to vector<2x64xf32>
    %22 = vector.extract_strided_slice %15 {offsets = [12, 0], sizes = [2, 64], strides = [1, 1]} : vector<16x64xf32> to vector<2x64xf32>
    %23 = vector.extract_strided_slice %15 {offsets = [14, 0], sizes = [2, 64], strides = [1, 1]} : vector<16x64xf32> to vector<2x64xf32>
    %c16_12 = arith.constant 16 : index
    %c0_13 = arith.constant 0 : index
    %24 = vector.load %arg1[%c16_12, %c0_13] : memref<168x64xf32, #tpu.memory_space<vmem>>, vector<8x64xf32>
    %25 = vector.extract_strided_slice %24 {offsets = [0, 0], sizes = [1, 64], strides = [1, 1]} : vector<8x64xf32> to vector<1x64xf32>
    %26 = vector.extract_strided_slice %24 {offsets = [1, 0], sizes = [1, 64], strides = [1, 1]} : vector<8x64xf32> to vector<1x64xf32>
    %27 = vector.extract_strided_slice %24 {offsets = [2, 0], sizes = [1, 64], strides = [1, 1]} : vector<8x64xf32> to vector<1x64xf32>
    %28 = vector.extract_strided_slice %24 {offsets = [3, 0], sizes = [1, 64], strides = [1, 1]} : vector<8x64xf32> to vector<1x64xf32>
    %29 = vector.extract_strided_slice %24 {offsets = [4, 0], sizes = [1, 64], strides = [1, 1]} : vector<8x64xf32> to vector<1x64xf32>
    %30 = vector.extract_strided_slice %24 {offsets = [5, 0], sizes = [1, 64], strides = [1, 1]} : vector<8x64xf32> to vector<1x64xf32>
    %31 = vector.extract_strided_slice %24 {offsets = [6, 0], sizes = [1, 64], strides = [1, 1]} : vector<8x64xf32> to vector<1x64xf32>
    %32 = vector.extract_strided_slice %24 {offsets = [7, 0], sizes = [1, 64], strides = [1, 1]} : vector<8x64xf32> to vector<1x64xf32>
    %33 = arith.negf %16 : vector<2x64xf32>
    %34 = math.exp %33 : vector<2x64xf32>
    %cst_14 = arith.constant 1.000000e+00 : f32
    %35 = vector.broadcast %cst_14 : f32 to vector<2x64xf32>
    %36 = arith.addf %35, %34 : vector<2x64xf32>
    %37 = arith.divf %35, %36 : vector<2x64xf32>
    %38 = vector.extract_strided_slice %37 {offsets = [0, 0], sizes = [2, 8], strides = [1, 1]} : vector<2x64xf32> to vector<2x8xf32>
    %39 = vector.extract_strided_slice %37 {offsets = [0, 16], sizes = [2, 8], strides = [1, 1]} : vector<2x64xf32> to vector<2x8xf32>
    %40 = vector.extract_strided_slice %37 {offsets = [0, 24], sizes = [2, 8], strides = [1, 1]} : vector<2x64xf32> to vector<2x8xf32>
    %cst_15 = arith.constant 2.000000e+00 : f32
    %41 = vector.broadcast %cst_15 : f32 to vector<2x8xf32>
    %42 = arith.mulf %41, %40 : vector<2x8xf32>
    %cst_16 = arith.constant 1.000000e+00 : f32
    %43 = vector.broadcast %cst_16 : f32 to vector<2x8xf32>
    %44 = arith.subf %42, %43 : vector<2x8xf32>
    %45 = arith.mulf %38, %44 : vector<2x8xf32>
    %46 = math.tanh %45 : vector<2x8xf32>
    %47 = arith.mulf %39, %46 : vector<2x8xf32>
    %48 = vector.extract_strided_slice %47 {offsets = [0, 0], sizes = [2, 1], strides = [1, 1]} : vector<2x8xf32> to vector<2x1xf32>
    %49 = vector.broadcast %48 : vector<2x1xf32> to vector<2x64xf32>
    %50 = vector.broadcast %25 : vector<1x64xf32> to vector<2x64xf32>
    %51 = arith.mulf %49, %50 : vector<2x64xf32>
    %52 = vector.extract_strided_slice %47 {offsets = [0, 1], sizes = [2, 1], strides = [1, 1]} : vector<2x8xf32> to vector<2x1xf32>
    %53 = vector.broadcast %52 : vector<2x1xf32> to vector<2x64xf32>
    %54 = vector.broadcast %26 : vector<1x64xf32> to vector<2x64xf32>
    %55 = arith.mulf %53, %54 : vector<2x64xf32>
    %56 = vector.extract_strided_slice %47 {offsets = [0, 2], sizes = [2, 1], strides = [1, 1]} : vector<2x8xf32> to vector<2x1xf32>
    %57 = vector.broadcast %56 : vector<2x1xf32> to vector<2x64xf32>
    %58 = vector.broadcast %27 : vector<1x64xf32> to vector<2x64xf32>
    %59 = arith.mulf %57, %58 : vector<2x64xf32>
    %60 = vector.extract_strided_slice %47 {offsets = [0, 3], sizes = [2, 1], strides = [1, 1]} : vector<2x8xf32> to vector<2x1xf32>
    %61 = vector.broadcast %60 : vector<2x1xf32> to vector<2x64xf32>
    %62 = vector.broadcast %28 : vector<1x64xf32> to vector<2x64xf32>
    %63 = arith.mulf %61, %62 : vector<2x64xf32>
    %64 = vector.extract_strided_slice %47 {offsets = [0, 4], sizes = [2, 1], strides = [1, 1]} : vector<2x8xf32> to vector<2x1xf32>
    %65 = vector.broadcast %64 : vector<2x1xf32> to vector<2x64xf32>
    %66 = vector.broadcast %29 : vector<1x64xf32> to vector<2x64xf32>
    %67 = arith.mulf %65, %66 : vector<2x64xf32>
    %68 = vector.extract_strided_slice %47 {offsets = [0, 5], sizes = [2, 1], strides = [1, 1]} : vector<2x8xf32> to vector<2x1xf32>
    %69 = vector.broadcast %68 : vector<2x1xf32> to vector<2x64xf32>
    %70 = vector.broadcast %30 : vector<1x64xf32> to vector<2x64xf32>
    %71 = arith.mulf %69, %70 : vector<2x64xf32>
    %72 = vector.extract_strided_slice %47 {offsets = [0, 6], sizes = [2, 1], strides = [1, 1]} : vector<2x8xf32> to vector<2x1xf32>
    %73 = vector.broadcast %72 : vector<2x1xf32> to vector<2x64xf32>
    %74 = vector.broadcast %31 : vector<1x64xf32> to vector<2x64xf32>
    %75 = arith.mulf %73, %74 : vector<2x64xf32>
    %76 = vector.extract_strided_slice %47 {offsets = [0, 7], sizes = [2, 1], strides = [1, 1]} : vector<2x8xf32> to vector<2x1xf32>
    %77 = vector.broadcast %76 : vector<2x1xf32> to vector<2x64xf32>
    %78 = vector.broadcast %32 : vector<1x64xf32> to vector<2x64xf32>
    %79 = arith.mulf %77, %78 : vector<2x64xf32>
    %80 = arith.addf %51, %55 : vector<2x64xf32>
    %81 = arith.addf %59, %63 : vector<2x64xf32>
    %82 = arith.addf %67, %71 : vector<2x64xf32>
    %83 = arith.addf %75, %79 : vector<2x64xf32>
    %84 = arith.addf %80, %81 : vector<2x64xf32>
    %85 = arith.addf %82, %83 : vector<2x64xf32>
    %86 = arith.addf %84, %85 : vector<2x64xf32>
    %87 = arith.addf %17, %86 : vector<2x64xf32>
    %88 = arith.negf %87 : vector<2x64xf32>
    %89 = math.exp %88 : vector<2x64xf32>
    %cst_17 = arith.constant 1.000000e+00 : f32
    %90 = vector.broadcast %cst_17 : f32 to vector<2x64xf32>
    %91 = arith.addf %90, %89 : vector<2x64xf32>
    %92 = arith.divf %90, %91 : vector<2x64xf32>
    %93 = vector.extract_strided_slice %92 {offsets = [0, 0], sizes = [2, 8], strides = [1, 1]} : vector<2x64xf32> to vector<2x8xf32>
    %94 = vector.extract_strided_slice %92 {offsets = [0, 8], sizes = [2, 8], strides = [1, 1]} : vector<2x64xf32> to vector<2x8xf32>
    %95 = vector.extract_strided_slice %92 {offsets = [0, 16], sizes = [2, 8], strides = [1, 1]} : vector<2x64xf32> to vector<2x8xf32>
    %96 = vector.extract_strided_slice %92 {offsets = [0, 24], sizes = [2, 8], strides = [1, 1]} : vector<2x64xf32> to vector<2x8xf32>
    %cst_18 = arith.constant 2.000000e+00 : f32
    %97 = vector.broadcast %cst_18 : f32 to vector<2x8xf32>
    %98 = arith.mulf %97, %96 : vector<2x8xf32>
    %cst_19 = arith.constant 1.000000e+00 : f32
    %99 = vector.broadcast %cst_19 : f32 to vector<2x8xf32>
    %100 = arith.subf %98, %99 : vector<2x8xf32>
    %101 = arith.mulf %94, %45 : vector<2x8xf32>
    %102 = arith.mulf %93, %100 : vector<2x8xf32>
    %103 = arith.addf %101, %102 : vector<2x8xf32>
    %104 = math.tanh %103 : vector<2x8xf32>
    %105 = arith.mulf %95, %104 : vector<2x8xf32>
    %106 = vector.extract_strided_slice %105 {offsets = [0, 0], sizes = [2, 1], strides = [1, 1]} : vector<2x8xf32> to vector<2x1xf32>
    %107 = vector.broadcast %106 : vector<2x1xf32> to vector<2x64xf32>
    %108 = vector.broadcast %25 : vector<1x64xf32> to vector<2x64xf32>
    %109 = arith.mulf %107, %108 : vector<2x64xf32>
    %110 = vector.extract_strided_slice %105 {offsets = [0, 1], sizes = [2, 1], strides = [1, 1]} : vector<2x8xf32> to vector<2x1xf32>
    %111 = vector.broadcast %110 : vector<2x1xf32> to vector<2x64xf32>
    %112 = vector.broadcast %26 : vector<1x64xf32> to vector<2x64xf32>
    %113 = arith.mulf %111, %112 : vector<2x64xf32>
    %114 = vector.extract_strided_slice %105 {offsets = [0, 2], sizes = [2, 1], strides = [1, 1]} : vector<2x8xf32> to vector<2x1xf32>
    %115 = vector.broadcast %114 : vector<2x1xf32> to vector<2x64xf32>
    %116 = vector.broadcast %27 : vector<1x64xf32> to vector<2x64xf32>
    %117 = arith.mulf %115, %116 : vector<2x64xf32>
    %118 = vector.extract_strided_slice %105 {offsets = [0, 3], sizes = [2, 1], strides = [1, 1]} : vector<2x8xf32> to vector<2x1xf32>
    %119 = vector.broadcast %118 : vector<2x1xf32> to vector<2x64xf32>
    %120 = vector.broadcast %28 : vector<1x64xf32> to vector<2x64xf32>
    %121 = arith.mulf %119, %120 : vector<2x64xf32>
    %122 = vector.extract_strided_slice %105 {offsets = [0, 4], sizes = [2, 1], strides = [1, 1]} : vector<2x8xf32> to vector<2x1xf32>
    %123 = vector.broadcast %122 : vector<2x1xf32> to vector<2x64xf32>
    %124 = vector.broadcast %29 : vector<1x64xf32> to vector<2x64xf32>
    %125 = arith.mulf %123, %124 : vector<2x64xf32>
    %126 = vector.extract_strided_slice %105 {offsets = [0, 5], sizes = [2, 1], strides = [1, 1]} : vector<2x8xf32> to vector<2x1xf32>
    %127 = vector.broadcast %126 : vector<2x1xf32> to vector<2x64xf32>
    %128 = vector.broadcast %30 : vector<1x64xf32> to vector<2x64xf32>
    %129 = arith.mulf %127, %128 : vector<2x64xf32>
    %130 = vector.extract_strided_slice %105 {offsets = [0, 6], sizes = [2, 1], strides = [1, 1]} : vector<2x8xf32> to vector<2x1xf32>
    %131 = vector.broadcast %130 : vector<2x1xf32> to vector<2x64xf32>
    %132 = vector.broadcast %31 : vector<1x64xf32> to vector<2x64xf32>
    %133 = arith.mulf %131, %132 : vector<2x64xf32>
    %134 = vector.extract_strided_slice %105 {offsets = [0, 7], sizes = [2, 1], strides = [1, 1]} : vector<2x8xf32> to vector<2x1xf32>
    %135 = vector.broadcast %134 : vector<2x1xf32> to vector<2x64xf32>
    %136 = vector.broadcast %32 : vector<1x64xf32> to vector<2x64xf32>
    %137 = arith.mulf %135, %136 : vector<2x64xf32>
    %138 = arith.addf %109, %113 : vector<2x64xf32>
    %139 = arith.addf %117, %121 : vector<2x64xf32>
    %140 = arith.addf %125, %129 : vector<2x64xf32>
    %141 = arith.addf %133, %137 : vector<2x64xf32>
    %142 = arith.addf %138, %139 : vector<2x64xf32>
    %143 = arith.addf %140, %141 : vector<2x64xf32>
    %144 = arith.addf %142, %143 : vector<2x64xf32>
    %145 = arith.addf %18, %144 : vector<2x64xf32>
    %146 = arith.negf %145 : vector<2x64xf32>
    %147 = math.exp %146 : vector<2x64xf32>
    %cst_20 = arith.constant 1.000000e+00 : f32
    %148 = vector.broadcast %cst_20 : f32 to vector<2x64xf32>
    %149 = arith.addf %148, %147 : vector<2x64xf32>
    %150 = arith.divf %148, %149 : vector<2x64xf32>
    %151 = vector.extract_strided_slice %150 {offsets = [0, 0], sizes = [2, 8], strides = [1, 1]} : vector<2x64xf32> to vector<2x8xf32>
    %152 = vector.extract_strided_slice %150 {offsets = [0, 8], sizes = [2, 8], strides = [1, 1]} : vector<2x64xf32> to vector<2x8xf32>
    %153 = vector.extract_strided_slice %150 {offsets = [0, 16], sizes = [2, 8], strides = [1, 1]} : vector<2x64xf32> to vector<2x8xf32>
    %154 = vector.extract_strided_slice %150 {offsets = [0, 24], sizes = [2, 8], strides = [1, 1]} : vector<2x64xf32> to vector<2x8xf32>
    %cst_21 = arith.constant 2.000000e+00 : f32
    %155 = vector.broadcast %cst_21 : f32 to vector<2x8xf32>
    %156 = arith.mulf %155, %154 : vector<2x8xf32>
    %cst_22 = arith.constant 1.000000e+00 : f32
    %157 = vector.broadcast %cst_22 : f32 to vector<2x8xf32>
    %158 = arith.subf %156, %157 : vector<2x8xf32>
    %159 = arith.mulf %152, %103 : vector<2x8xf32>
    %160 = arith.mulf %151, %158 : vector<2x8xf32>
    %161 = arith.addf %159, %160 : vector<2x8xf32>
    %162 = math.tanh %161 : vector<2x8xf32>
    %163 = arith.mulf %153, %162 : vector<2x8xf32>
    %164 = vector.extract_strided_slice %163 {offsets = [0, 0], sizes = [2, 1], strides = [1, 1]} : vector<2x8xf32> to vector<2x1xf32>
    %165 = vector.broadcast %164 : vector<2x1xf32> to vector<2x64xf32>
    %166 = vector.broadcast %25 : vector<1x64xf32> to vector<2x64xf32>
    %167 = arith.mulf %165, %166 : vector<2x64xf32>
    %168 = vector.extract_strided_slice %163 {offsets = [0, 1], sizes = [2, 1], strides = [1, 1]} : vector<2x8xf32> to vector<2x1xf32>
    %169 = vector.broadcast %168 : vector<2x1xf32> to vector<2x64xf32>
    %170 = vector.broadcast %26 : vector<1x64xf32> to vector<2x64xf32>
    %171 = arith.mulf %169, %170 : vector<2x64xf32>
    %172 = vector.extract_strided_slice %163 {offsets = [0, 2], sizes = [2, 1], strides = [1, 1]} : vector<2x8xf32> to vector<2x1xf32>
    %173 = vector.broadcast %172 : vector<2x1xf32> to vector<2x64xf32>
    %174 = vector.broadcast %27 : vector<1x64xf32> to vector<2x64xf32>
    %175 = arith.mulf %173, %174 : vector<2x64xf32>
    %176 = vector.extract_strided_slice %163 {offsets = [0, 3], sizes = [2, 1], strides = [1, 1]} : vector<2x8xf32> to vector<2x1xf32>
    %177 = vector.broadcast %176 : vector<2x1xf32> to vector<2x64xf32>
    %178 = vector.broadcast %28 : vector<1x64xf32> to vector<2x64xf32>
    %179 = arith.mulf %177, %178 : vector<2x64xf32>
    %180 = vector.extract_strided_slice %163 {offsets = [0, 4], sizes = [2, 1], strides = [1, 1]} : vector<2x8xf32> to vector<2x1xf32>
    %181 = vector.broadcast %180 : vector<2x1xf32> to vector<2x64xf32>
    %182 = vector.broadcast %29 : vector<1x64xf32> to vector<2x64xf32>
    %183 = arith.mulf %181, %182 : vector<2x64xf32>
    %184 = vector.extract_strided_slice %163 {offsets = [0, 5], sizes = [2, 1], strides = [1, 1]} : vector<2x8xf32> to vector<2x1xf32>
    %185 = vector.broadcast %184 : vector<2x1xf32> to vector<2x64xf32>
    %186 = vector.broadcast %30 : vector<1x64xf32> to vector<2x64xf32>
    %187 = arith.mulf %185, %186 : vector<2x64xf32>
    %188 = vector.extract_strided_slice %163 {offsets = [0, 6], sizes = [2, 1], strides = [1, 1]} : vector<2x8xf32> to vector<2x1xf32>
    %189 = vector.broadcast %188 : vector<2x1xf32> to vector<2x64xf32>
    %190 = vector.broadcast %31 : vector<1x64xf32> to vector<2x64xf32>
    %191 = arith.mulf %189, %190 : vector<2x64xf32>
    %192 = vector.extract_strided_slice %163 {offsets = [0, 7], sizes = [2, 1], strides = [1, 1]} : vector<2x8xf32> to vector<2x1xf32>
    %193 = vector.broadcast %192 : vector<2x1xf32> to vector<2x64xf32>
    %194 = vector.broadcast %32 : vector<1x64xf32> to vector<2x64xf32>
    %195 = arith.mulf %193, %194 : vector<2x64xf32>
    %196 = arith.addf %167, %171 : vector<2x64xf32>
    %197 = arith.addf %175, %179 : vector<2x64xf32>
    %198 = arith.addf %183, %187 : vector<2x64xf32>
    %199 = arith.addf %191, %195 : vector<2x64xf32>
    %200 = arith.addf %196, %197 : vector<2x64xf32>
    %201 = arith.addf %198, %199 : vector<2x64xf32>
    %202 = arith.addf %200, %201 : vector<2x64xf32>
    %203 = arith.addf %19, %202 : vector<2x64xf32>
    %204 = arith.negf %203 : vector<2x64xf32>
    %205 = math.exp %204 : vector<2x64xf32>
    %cst_23 = arith.constant 1.000000e+00 : f32
    %206 = vector.broadcast %cst_23 : f32 to vector<2x64xf32>
    %207 = arith.addf %206, %205 : vector<2x64xf32>
    %208 = arith.divf %206, %207 : vector<2x64xf32>
    %209 = vector.extract_strided_slice %208 {offsets = [0, 0], sizes = [2, 8], strides = [1, 1]} : vector<2x64xf32> to vector<2x8xf32>
    %210 = vector.extract_strided_slice %208 {offsets = [0, 8], sizes = [2, 8], strides = [1, 1]} : vector<2x64xf32> to vector<2x8xf32>
    %211 = vector.extract_strided_slice %208 {offsets = [0, 16], sizes = [2, 8], strides = [1, 1]} : vector<2x64xf32> to vector<2x8xf32>
    %212 = vector.extract_strided_slice %208 {offsets = [0, 24], sizes = [2, 8], strides = [1, 1]} : vector<2x64xf32> to vector<2x8xf32>
    %cst_24 = arith.constant 2.000000e+00 : f32
    %213 = vector.broadcast %cst_24 : f32 to vector<2x8xf32>
    %214 = arith.mulf %213, %212 : vector<2x8xf32>
    %cst_25 = arith.constant 1.000000e+00 : f32
    %215 = vector.broadcast %cst_25 : f32 to vector<2x8xf32>
    %216 = arith.subf %214, %215 : vector<2x8xf32>
    %217 = arith.mulf %210, %161 : vector<2x8xf32>
    %218 = arith.mulf %209, %216 : vector<2x8xf32>
    %219 = arith.addf %217, %218 : vector<2x8xf32>
    %220 = math.tanh %219 : vector<2x8xf32>
    %221 = arith.mulf %211, %220 : vector<2x8xf32>
    %222 = vector.extract_strided_slice %221 {offsets = [0, 0], sizes = [2, 1], strides = [1, 1]} : vector<2x8xf32> to vector<2x1xf32>
    %223 = vector.broadcast %222 : vector<2x1xf32> to vector<2x64xf32>
    %224 = vector.broadcast %25 : vector<1x64xf32> to vector<2x64xf32>
    %225 = arith.mulf %223, %224 : vector<2x64xf32>
    %226 = vector.extract_strided_slice %221 {offsets = [0, 1], sizes = [2, 1], strides = [1, 1]} : vector<2x8xf32> to vector<2x1xf32>
    %227 = vector.broadcast %226 : vector<2x1xf32> to vector<2x64xf32>
    %228 = vector.broadcast %26 : vector<1x64xf32> to vector<2x64xf32>
    %229 = arith.mulf %227, %228 : vector<2x64xf32>
    %230 = vector.extract_strided_slice %221 {offsets = [0, 2], sizes = [2, 1], strides = [1, 1]} : vector<2x8xf32> to vector<2x1xf32>
    %231 = vector.broadcast %230 : vector<2x1xf32> to vector<2x64xf32>
    %232 = vector.broadcast %27 : vector<1x64xf32> to vector<2x64xf32>
    %233 = arith.mulf %231, %232 : vector<2x64xf32>
    %234 = vector.extract_strided_slice %221 {offsets = [0, 3], sizes = [2, 1], strides = [1, 1]} : vector<2x8xf32> to vector<2x1xf32>
    %235 = vector.broadcast %234 : vector<2x1xf32> to vector<2x64xf32>
    %236 = vector.broadcast %28 : vector<1x64xf32> to vector<2x64xf32>
    %237 = arith.mulf %235, %236 : vector<2x64xf32>
    %238 = vector.extract_strided_slice %221 {offsets = [0, 4], sizes = [2, 1], strides = [1, 1]} : vector<2x8xf32> to vector<2x1xf32>
    %239 = vector.broadcast %238 : vector<2x1xf32> to vector<2x64xf32>
    %240 = vector.broadcast %29 : vector<1x64xf32> to vector<2x64xf32>
    %241 = arith.mulf %239, %240 : vector<2x64xf32>
    %242 = vector.extract_strided_slice %221 {offsets = [0, 5], sizes = [2, 1], strides = [1, 1]} : vector<2x8xf32> to vector<2x1xf32>
    %243 = vector.broadcast %242 : vector<2x1xf32> to vector<2x64xf32>
    %244 = vector.broadcast %30 : vector<1x64xf32> to vector<2x64xf32>
    %245 = arith.mulf %243, %244 : vector<2x64xf32>
    %246 = vector.extract_strided_slice %221 {offsets = [0, 6], sizes = [2, 1], strides = [1, 1]} : vector<2x8xf32> to vector<2x1xf32>
    %247 = vector.broadcast %246 : vector<2x1xf32> to vector<2x64xf32>
    %248 = vector.broadcast %31 : vector<1x64xf32> to vector<2x64xf32>
    %249 = arith.mulf %247, %248 : vector<2x64xf32>
    %250 = vector.extract_strided_slice %221 {offsets = [0, 7], sizes = [2, 1], strides = [1, 1]} : vector<2x8xf32> to vector<2x1xf32>
    %251 = vector.broadcast %250 : vector<2x1xf32> to vector<2x64xf32>
    %252 = vector.broadcast %32 : vector<1x64xf32> to vector<2x64xf32>
    %253 = arith.mulf %251, %252 : vector<2x64xf32>
    %254 = arith.addf %225, %229 : vector<2x64xf32>
    %255 = arith.addf %233, %237 : vector<2x64xf32>
    %256 = arith.addf %241, %245 : vector<2x64xf32>
    %257 = arith.addf %249, %253 : vector<2x64xf32>
    %258 = arith.addf %254, %255 : vector<2x64xf32>
    %259 = arith.addf %256, %257 : vector<2x64xf32>
    %260 = arith.addf %258, %259 : vector<2x64xf32>
    %261 = arith.addf %20, %260 : vector<2x64xf32>
    %262 = arith.negf %261 : vector<2x64xf32>
    %263 = math.exp %262 : vector<2x64xf32>
    %cst_26 = arith.constant 1.000000e+00 : f32
    %264 = vector.broadcast %cst_26 : f32 to vector<2x64xf32>
    %265 = arith.addf %264, %263 : vector<2x64xf32>
    %266 = arith.divf %264, %265 : vector<2x64xf32>
    %267 = vector.extract_strided_slice %266 {offsets = [0, 0], sizes = [2, 8], strides = [1, 1]} : vector<2x64xf32> to vector<2x8xf32>
    %268 = vector.extract_strided_slice %266 {offsets = [0, 8], sizes = [2, 8], strides = [1, 1]} : vector<2x64xf32> to vector<2x8xf32>
    %269 = vector.extract_strided_slice %266 {offsets = [0, 16], sizes = [2, 8], strides = [1, 1]} : vector<2x64xf32> to vector<2x8xf32>
    %270 = vector.extract_strided_slice %266 {offsets = [0, 24], sizes = [2, 8], strides = [1, 1]} : vector<2x64xf32> to vector<2x8xf32>
    %cst_27 = arith.constant 2.000000e+00 : f32
    %271 = vector.broadcast %cst_27 : f32 to vector<2x8xf32>
    %272 = arith.mulf %271, %270 : vector<2x8xf32>
    %cst_28 = arith.constant 1.000000e+00 : f32
    %273 = vector.broadcast %cst_28 : f32 to vector<2x8xf32>
    %274 = arith.subf %272, %273 : vector<2x8xf32>
    %275 = arith.mulf %268, %219 : vector<2x8xf32>
    %276 = arith.mulf %267, %274 : vector<2x8xf32>
    %277 = arith.addf %275, %276 : vector<2x8xf32>
    %278 = math.tanh %277 : vector<2x8xf32>
    %279 = arith.mulf %269, %278 : vector<2x8xf32>
    %280 = vector.extract_strided_slice %279 {offsets = [0, 0], sizes = [2, 1], strides = [1, 1]} : vector<2x8xf32> to vector<2x1xf32>
    %281 = vector.broadcast %280 : vector<2x1xf32> to vector<2x64xf32>
    %282 = vector.broadcast %25 : vector<1x64xf32> to vector<2x64xf32>
    %283 = arith.mulf %281, %282 : vector<2x64xf32>
    %284 = vector.extract_strided_slice %279 {offsets = [0, 1], sizes = [2, 1], strides = [1, 1]} : vector<2x8xf32> to vector<2x1xf32>
    %285 = vector.broadcast %284 : vector<2x1xf32> to vector<2x64xf32>
    %286 = vector.broadcast %26 : vector<1x64xf32> to vector<2x64xf32>
    %287 = arith.mulf %285, %286 : vector<2x64xf32>
    %288 = vector.extract_strided_slice %279 {offsets = [0, 2], sizes = [2, 1], strides = [1, 1]} : vector<2x8xf32> to vector<2x1xf32>
    %289 = vector.broadcast %288 : vector<2x1xf32> to vector<2x64xf32>
    %290 = vector.broadcast %27 : vector<1x64xf32> to vector<2x64xf32>
    %291 = arith.mulf %289, %290 : vector<2x64xf32>
    %292 = vector.extract_strided_slice %279 {offsets = [0, 3], sizes = [2, 1], strides = [1, 1]} : vector<2x8xf32> to vector<2x1xf32>
    %293 = vector.broadcast %292 : vector<2x1xf32> to vector<2x64xf32>
    %294 = vector.broadcast %28 : vector<1x64xf32> to vector<2x64xf32>
    %295 = arith.mulf %293, %294 : vector<2x64xf32>
    %296 = vector.extract_strided_slice %279 {offsets = [0, 4], sizes = [2, 1], strides = [1, 1]} : vector<2x8xf32> to vector<2x1xf32>
    %297 = vector.broadcast %296 : vector<2x1xf32> to vector<2x64xf32>
    %298 = vector.broadcast %29 : vector<1x64xf32> to vector<2x64xf32>
    %299 = arith.mulf %297, %298 : vector<2x64xf32>
    %300 = vector.extract_strided_slice %279 {offsets = [0, 5], sizes = [2, 1], strides = [1, 1]} : vector<2x8xf32> to vector<2x1xf32>
    %301 = vector.broadcast %300 : vector<2x1xf32> to vector<2x64xf32>
    %302 = vector.broadcast %30 : vector<1x64xf32> to vector<2x64xf32>
    %303 = arith.mulf %301, %302 : vector<2x64xf32>
    %304 = vector.extract_strided_slice %279 {offsets = [0, 6], sizes = [2, 1], strides = [1, 1]} : vector<2x8xf32> to vector<2x1xf32>
    %305 = vector.broadcast %304 : vector<2x1xf32> to vector<2x64xf32>
    %306 = vector.broadcast %31 : vector<1x64xf32> to vector<2x64xf32>
    %307 = arith.mulf %305, %306 : vector<2x64xf32>
    %308 = vector.extract_strided_slice %279 {offsets = [0, 7], sizes = [2, 1], strides = [1, 1]} : vector<2x8xf32> to vector<2x1xf32>
    %309 = vector.broadcast %308 : vector<2x1xf32> to vector<2x64xf32>
    %310 = vector.broadcast %32 : vector<1x64xf32> to vector<2x64xf32>
    %311 = arith.mulf %309, %310 : vector<2x64xf32>
    %312 = arith.addf %283, %287 : vector<2x64xf32>
    %313 = arith.addf %291, %295 : vector<2x64xf32>
    %314 = arith.addf %299, %303 : vector<2x64xf32>
    %315 = arith.addf %307, %311 : vector<2x64xf32>
    %316 = arith.addf %312, %313 : vector<2x64xf32>
    %317 = arith.addf %314, %315 : vector<2x64xf32>
    %318 = arith.addf %316, %317 : vector<2x64xf32>
    %319 = arith.addf %21, %318 : vector<2x64xf32>
    %320 = arith.negf %319 : vector<2x64xf32>
    %321 = math.exp %320 : vector<2x64xf32>
    %cst_29 = arith.constant 1.000000e+00 : f32
    %322 = vector.broadcast %cst_29 : f32 to vector<2x64xf32>
    %323 = arith.addf %322, %321 : vector<2x64xf32>
    %324 = arith.divf %322, %323 : vector<2x64xf32>
    %325 = vector.extract_strided_slice %324 {offsets = [0, 0], sizes = [2, 8], strides = [1, 1]} : vector<2x64xf32> to vector<2x8xf32>
    %326 = vector.extract_strided_slice %324 {offsets = [0, 8], sizes = [2, 8], strides = [1, 1]} : vector<2x64xf32> to vector<2x8xf32>
    %327 = vector.extract_strided_slice %324 {offsets = [0, 16], sizes = [2, 8], strides = [1, 1]} : vector<2x64xf32> to vector<2x8xf32>
    %328 = vector.extract_strided_slice %324 {offsets = [0, 24], sizes = [2, 8], strides = [1, 1]} : vector<2x64xf32> to vector<2x8xf32>
    %cst_30 = arith.constant 2.000000e+00 : f32
    %329 = vector.broadcast %cst_30 : f32 to vector<2x8xf32>
    %330 = arith.mulf %329, %328 : vector<2x8xf32>
    %cst_31 = arith.constant 1.000000e+00 : f32
    %331 = vector.broadcast %cst_31 : f32 to vector<2x8xf32>
    %332 = arith.subf %330, %331 : vector<2x8xf32>
    %333 = arith.mulf %326, %277 : vector<2x8xf32>
    %334 = arith.mulf %325, %332 : vector<2x8xf32>
    %335 = arith.addf %333, %334 : vector<2x8xf32>
    %336 = math.tanh %335 : vector<2x8xf32>
    %337 = arith.mulf %327, %336 : vector<2x8xf32>
    %338 = vector.extract_strided_slice %337 {offsets = [0, 0], sizes = [2, 1], strides = [1, 1]} : vector<2x8xf32> to vector<2x1xf32>
    %339 = vector.broadcast %338 : vector<2x1xf32> to vector<2x64xf32>
    %340 = vector.broadcast %25 : vector<1x64xf32> to vector<2x64xf32>
    %341 = arith.mulf %339, %340 : vector<2x64xf32>
    %342 = vector.extract_strided_slice %337 {offsets = [0, 1], sizes = [2, 1], strides = [1, 1]} : vector<2x8xf32> to vector<2x1xf32>
    %343 = vector.broadcast %342 : vector<2x1xf32> to vector<2x64xf32>
    %344 = vector.broadcast %26 : vector<1x64xf32> to vector<2x64xf32>
    %345 = arith.mulf %343, %344 : vector<2x64xf32>
    %346 = vector.extract_strided_slice %337 {offsets = [0, 2], sizes = [2, 1], strides = [1, 1]} : vector<2x8xf32> to vector<2x1xf32>
    %347 = vector.broadcast %346 : vector<2x1xf32> to vector<2x64xf32>
    %348 = vector.broadcast %27 : vector<1x64xf32> to vector<2x64xf32>
    %349 = arith.mulf %347, %348 : vector<2x64xf32>
    %350 = vector.extract_strided_slice %337 {offsets = [0, 3], sizes = [2, 1], strides = [1, 1]} : vector<2x8xf32> to vector<2x1xf32>
    %351 = vector.broadcast %350 : vector<2x1xf32> to vector<2x64xf32>
    %352 = vector.broadcast %28 : vector<1x64xf32> to vector<2x64xf32>
    %353 = arith.mulf %351, %352 : vector<2x64xf32>
    %354 = vector.extract_strided_slice %337 {offsets = [0, 4], sizes = [2, 1], strides = [1, 1]} : vector<2x8xf32> to vector<2x1xf32>
    %355 = vector.broadcast %354 : vector<2x1xf32> to vector<2x64xf32>
    %356 = vector.broadcast %29 : vector<1x64xf32> to vector<2x64xf32>
    %357 = arith.mulf %355, %356 : vector<2x64xf32>
    %358 = vector.extract_strided_slice %337 {offsets = [0, 5], sizes = [2, 1], strides = [1, 1]} : vector<2x8xf32> to vector<2x1xf32>
    %359 = vector.broadcast %358 : vector<2x1xf32> to vector<2x64xf32>
    %360 = vector.broadcast %30 : vector<1x64xf32> to vector<2x64xf32>
    %361 = arith.mulf %359, %360 : vector<2x64xf32>
    %362 = vector.extract_strided_slice %337 {offsets = [0, 6], sizes = [2, 1], strides = [1, 1]} : vector<2x8xf32> to vector<2x1xf32>
    %363 = vector.broadcast %362 : vector<2x1xf32> to vector<2x64xf32>
    %364 = vector.broadcast %31 : vector<1x64xf32> to vector<2x64xf32>
    %365 = arith.mulf %363, %364 : vector<2x64xf32>
    %366 = vector.extract_strided_slice %337 {offsets = [0, 7], sizes = [2, 1], strides = [1, 1]} : vector<2x8xf32> to vector<2x1xf32>
    %367 = vector.broadcast %366 : vector<2x1xf32> to vector<2x64xf32>
    %368 = vector.broadcast %32 : vector<1x64xf32> to vector<2x64xf32>
    %369 = arith.mulf %367, %368 : vector<2x64xf32>
    %370 = arith.addf %341, %345 : vector<2x64xf32>
    %371 = arith.addf %349, %353 : vector<2x64xf32>
    %372 = arith.addf %357, %361 : vector<2x64xf32>
    %373 = arith.addf %365, %369 : vector<2x64xf32>
    %374 = arith.addf %370, %371 : vector<2x64xf32>
    %375 = arith.addf %372, %373 : vector<2x64xf32>
    %376 = arith.addf %374, %375 : vector<2x64xf32>
    %377 = arith.addf %22, %376 : vector<2x64xf32>
    %378 = arith.negf %377 : vector<2x64xf32>
    %379 = math.exp %378 : vector<2x64xf32>
    %cst_32 = arith.constant 1.000000e+00 : f32
    %380 = vector.broadcast %cst_32 : f32 to vector<2x64xf32>
    %381 = arith.addf %380, %379 : vector<2x64xf32>
    %382 = arith.divf %380, %381 : vector<2x64xf32>
    %383 = vector.extract_strided_slice %382 {offsets = [0, 0], sizes = [2, 8], strides = [1, 1]} : vector<2x64xf32> to vector<2x8xf32>
    %384 = vector.extract_strided_slice %382 {offsets = [0, 8], sizes = [2, 8], strides = [1, 1]} : vector<2x64xf32> to vector<2x8xf32>
    %385 = vector.extract_strided_slice %382 {offsets = [0, 16], sizes = [2, 8], strides = [1, 1]} : vector<2x64xf32> to vector<2x8xf32>
    %386 = vector.extract_strided_slice %382 {offsets = [0, 24], sizes = [2, 8], strides = [1, 1]} : vector<2x64xf32> to vector<2x8xf32>
    %cst_33 = arith.constant 2.000000e+00 : f32
    %387 = vector.broadcast %cst_33 : f32 to vector<2x8xf32>
    %388 = arith.mulf %387, %386 : vector<2x8xf32>
    %cst_34 = arith.constant 1.000000e+00 : f32
    %389 = vector.broadcast %cst_34 : f32 to vector<2x8xf32>
    %390 = arith.subf %388, %389 : vector<2x8xf32>
    %391 = arith.mulf %384, %335 : vector<2x8xf32>
    %392 = arith.mulf %383, %390 : vector<2x8xf32>
    %393 = arith.addf %391, %392 : vector<2x8xf32>
    %394 = math.tanh %393 : vector<2x8xf32>
    %395 = arith.mulf %385, %394 : vector<2x8xf32>
    %396 = vector.extract_strided_slice %395 {offsets = [0, 0], sizes = [2, 1], strides = [1, 1]} : vector<2x8xf32> to vector<2x1xf32>
    %397 = vector.broadcast %396 : vector<2x1xf32> to vector<2x64xf32>
    %398 = vector.broadcast %25 : vector<1x64xf32> to vector<2x64xf32>
    %399 = arith.mulf %397, %398 : vector<2x64xf32>
    %400 = vector.extract_strided_slice %395 {offsets = [0, 1], sizes = [2, 1], strides = [1, 1]} : vector<2x8xf32> to vector<2x1xf32>
    %401 = vector.broadcast %400 : vector<2x1xf32> to vector<2x64xf32>
    %402 = vector.broadcast %26 : vector<1x64xf32> to vector<2x64xf32>
    %403 = arith.mulf %401, %402 : vector<2x64xf32>
    %404 = vector.extract_strided_slice %395 {offsets = [0, 2], sizes = [2, 1], strides = [1, 1]} : vector<2x8xf32> to vector<2x1xf32>
    %405 = vector.broadcast %404 : vector<2x1xf32> to vector<2x64xf32>
    %406 = vector.broadcast %27 : vector<1x64xf32> to vector<2x64xf32>
    %407 = arith.mulf %405, %406 : vector<2x64xf32>
    %408 = vector.extract_strided_slice %395 {offsets = [0, 3], sizes = [2, 1], strides = [1, 1]} : vector<2x8xf32> to vector<2x1xf32>
    %409 = vector.broadcast %408 : vector<2x1xf32> to vector<2x64xf32>
    %410 = vector.broadcast %28 : vector<1x64xf32> to vector<2x64xf32>
    %411 = arith.mulf %409, %410 : vector<2x64xf32>
    %412 = vector.extract_strided_slice %395 {offsets = [0, 4], sizes = [2, 1], strides = [1, 1]} : vector<2x8xf32> to vector<2x1xf32>
    %413 = vector.broadcast %412 : vector<2x1xf32> to vector<2x64xf32>
    %414 = vector.broadcast %29 : vector<1x64xf32> to vector<2x64xf32>
    %415 = arith.mulf %413, %414 : vector<2x64xf32>
    %416 = vector.extract_strided_slice %395 {offsets = [0, 5], sizes = [2, 1], strides = [1, 1]} : vector<2x8xf32> to vector<2x1xf32>
    %417 = vector.broadcast %416 : vector<2x1xf32> to vector<2x64xf32>
    %418 = vector.broadcast %30 : vector<1x64xf32> to vector<2x64xf32>
    %419 = arith.mulf %417, %418 : vector<2x64xf32>
    %420 = vector.extract_strided_slice %395 {offsets = [0, 6], sizes = [2, 1], strides = [1, 1]} : vector<2x8xf32> to vector<2x1xf32>
    %421 = vector.broadcast %420 : vector<2x1xf32> to vector<2x64xf32>
    %422 = vector.broadcast %31 : vector<1x64xf32> to vector<2x64xf32>
    %423 = arith.mulf %421, %422 : vector<2x64xf32>
    %424 = vector.extract_strided_slice %395 {offsets = [0, 7], sizes = [2, 1], strides = [1, 1]} : vector<2x8xf32> to vector<2x1xf32>
    %425 = vector.broadcast %424 : vector<2x1xf32> to vector<2x64xf32>
    %426 = vector.broadcast %32 : vector<1x64xf32> to vector<2x64xf32>
    %427 = arith.mulf %425, %426 : vector<2x64xf32>
    %428 = arith.addf %399, %403 : vector<2x64xf32>
    %429 = arith.addf %407, %411 : vector<2x64xf32>
    %430 = arith.addf %415, %419 : vector<2x64xf32>
    %431 = arith.addf %423, %427 : vector<2x64xf32>
    %432 = arith.addf %428, %429 : vector<2x64xf32>
    %433 = arith.addf %430, %431 : vector<2x64xf32>
    %434 = arith.addf %432, %433 : vector<2x64xf32>
    %435 = arith.addf %23, %434 : vector<2x64xf32>
    %436 = arith.negf %435 : vector<2x64xf32>
    %437 = math.exp %436 : vector<2x64xf32>
    %cst_35 = arith.constant 1.000000e+00 : f32
    %438 = vector.broadcast %cst_35 : f32 to vector<2x64xf32>
    %439 = arith.addf %438, %437 : vector<2x64xf32>
    %440 = arith.divf %438, %439 : vector<2x64xf32>
    %441 = vector.extract_strided_slice %440 {offsets = [0, 0], sizes = [2, 8], strides = [1, 1]} : vector<2x64xf32> to vector<2x8xf32>
    %442 = vector.extract_strided_slice %440 {offsets = [0, 8], sizes = [2, 8], strides = [1, 1]} : vector<2x64xf32> to vector<2x8xf32>
    %443 = vector.extract_strided_slice %440 {offsets = [0, 16], sizes = [2, 8], strides = [1, 1]} : vector<2x64xf32> to vector<2x8xf32>
    %444 = vector.extract_strided_slice %440 {offsets = [0, 24], sizes = [2, 8], strides = [1, 1]} : vector<2x64xf32> to vector<2x8xf32>
    %cst_36 = arith.constant 2.000000e+00 : f32
    %445 = vector.broadcast %cst_36 : f32 to vector<2x8xf32>
    %446 = arith.mulf %445, %444 : vector<2x8xf32>
    %cst_37 = arith.constant 1.000000e+00 : f32
    %447 = vector.broadcast %cst_37 : f32 to vector<2x8xf32>
    %448 = arith.subf %446, %447 : vector<2x8xf32>
    %449 = arith.mulf %442, %393 : vector<2x8xf32>
    %450 = arith.mulf %441, %448 : vector<2x8xf32>
    %451 = arith.addf %449, %450 : vector<2x8xf32>
    %452 = math.tanh %451 : vector<2x8xf32>
    %453 = arith.mulf %443, %452 : vector<2x8xf32>
    %454 = tpu.concatenate %47, %105, %163, %221, %279, %337, %395, %453 in 0 : vector<2x8xf32>, vector<2x8xf32>, vector<2x8xf32>, vector<2x8xf32>, vector<2x8xf32>, vector<2x8xf32>, vector<2x8xf32>, vector<2x8xf32> -> vector<16x8xf32>
    %455 = tpu.concatenate %453, %395, %337, %279, %221, %163, %105, %47 in 0 : vector<2x8xf32>, vector<2x8xf32>, vector<2x8xf32>, vector<2x8xf32>, vector<2x8xf32>, vector<2x8xf32>, vector<2x8xf32>, vector<2x8xf32> -> vector<16x8xf32>
    %456 = tpu.concatenate %454, %455 in 1 : vector<16x8xf32>, vector<16x8xf32> -> vector<16x16xf32>
    %c32_38 = arith.constant 32 : index
    %c0_39 = arith.constant 0 : index
    %457 = vector.load %arg1[%c32_38, %c0_39] : memref<168x64xf32, #tpu.memory_space<vmem>>, vector<16x64xf32>
    %c56_40 = arith.constant 56 : index
    %c0_41 = arith.constant 0 : index
    %458 = vector.load %arg1[%c56_40, %c0_41] : memref<168x64xf32, #tpu.memory_space<vmem>>, vector<1x64xf32>
    %cst_42 = arith.constant dense<0.000000e+00> : vector<16x64xf32>
    %459 = tpu.matmul %456, %457, %cst_42 {dimension_numbers = #tpu.dot_dimension_numbers<[1], [0], [0], [1], [0, 0, 1, 1], [], []>, precision = #tpu.contract_precision<fp32>} : vector<16x16xf32>, vector<16x64xf32>, vector<16x64xf32> -> vector<16x64xf32>
    %460 = vector.broadcast %458 : vector<1x64xf32> to vector<16x64xf32>
    %461 = arith.addf %459, %460 : vector<16x64xf32>
    %462 = vector.extract_strided_slice %461 {offsets = [0, 0], sizes = [2, 64], strides = [1, 1]} : vector<16x64xf32> to vector<2x64xf32>
    %463 = vector.extract_strided_slice %461 {offsets = [2, 0], sizes = [2, 64], strides = [1, 1]} : vector<16x64xf32> to vector<2x64xf32>
    %464 = vector.extract_strided_slice %461 {offsets = [4, 0], sizes = [2, 64], strides = [1, 1]} : vector<16x64xf32> to vector<2x64xf32>
    %465 = vector.extract_strided_slice %461 {offsets = [6, 0], sizes = [2, 64], strides = [1, 1]} : vector<16x64xf32> to vector<2x64xf32>
    %466 = vector.extract_strided_slice %461 {offsets = [8, 0], sizes = [2, 64], strides = [1, 1]} : vector<16x64xf32> to vector<2x64xf32>
    %467 = vector.extract_strided_slice %461 {offsets = [10, 0], sizes = [2, 64], strides = [1, 1]} : vector<16x64xf32> to vector<2x64xf32>
    %468 = vector.extract_strided_slice %461 {offsets = [12, 0], sizes = [2, 64], strides = [1, 1]} : vector<16x64xf32> to vector<2x64xf32>
    %469 = vector.extract_strided_slice %461 {offsets = [14, 0], sizes = [2, 64], strides = [1, 1]} : vector<16x64xf32> to vector<2x64xf32>
    %c48_43 = arith.constant 48 : index
    %c0_44 = arith.constant 0 : index
    %470 = vector.load %arg1[%c48_43, %c0_44] : memref<168x64xf32, #tpu.memory_space<vmem>>, vector<4x64xf32>
    %471 = vector.extract_strided_slice %470 {offsets = [0, 0], sizes = [1, 64], strides = [1, 1]} : vector<4x64xf32> to vector<1x64xf32>
    %472 = vector.extract_strided_slice %470 {offsets = [1, 0], sizes = [1, 64], strides = [1, 1]} : vector<4x64xf32> to vector<1x64xf32>
    %473 = vector.extract_strided_slice %470 {offsets = [2, 0], sizes = [1, 64], strides = [1, 1]} : vector<4x64xf32> to vector<1x64xf32>
    %474 = vector.extract_strided_slice %470 {offsets = [3, 0], sizes = [1, 64], strides = [1, 1]} : vector<4x64xf32> to vector<1x64xf32>
    %475 = arith.negf %462 : vector<2x64xf32>
    %476 = math.exp %475 : vector<2x64xf32>
    %cst_45 = arith.constant 1.000000e+00 : f32
    %477 = vector.broadcast %cst_45 : f32 to vector<2x64xf32>
    %478 = arith.addf %477, %476 : vector<2x64xf32>
    %479 = arith.divf %477, %478 : vector<2x64xf32>
    %480 = vector.extract_strided_slice %479 {offsets = [0, 0], sizes = [2, 4], strides = [1, 1]} : vector<2x64xf32> to vector<2x4xf32>
    %481 = vector.extract_strided_slice %479 {offsets = [0, 8], sizes = [2, 4], strides = [1, 1]} : vector<2x64xf32> to vector<2x4xf32>
    %482 = vector.extract_strided_slice %479 {offsets = [0, 12], sizes = [2, 4], strides = [1, 1]} : vector<2x64xf32> to vector<2x4xf32>
    %cst_46 = arith.constant 2.000000e+00 : f32
    %483 = vector.broadcast %cst_46 : f32 to vector<2x4xf32>
    %484 = arith.mulf %483, %482 : vector<2x4xf32>
    %cst_47 = arith.constant 1.000000e+00 : f32
    %485 = vector.broadcast %cst_47 : f32 to vector<2x4xf32>
    %486 = arith.subf %484, %485 : vector<2x4xf32>
    %487 = arith.mulf %480, %486 : vector<2x4xf32>
    %488 = math.tanh %487 : vector<2x4xf32>
    %489 = arith.mulf %481, %488 : vector<2x4xf32>
    %490 = vector.extract_strided_slice %489 {offsets = [0, 0], sizes = [2, 1], strides = [1, 1]} : vector<2x4xf32> to vector<2x1xf32>
    %491 = vector.broadcast %490 : vector<2x1xf32> to vector<2x64xf32>
    %492 = vector.broadcast %471 : vector<1x64xf32> to vector<2x64xf32>
    %493 = arith.mulf %491, %492 : vector<2x64xf32>
    %494 = vector.extract_strided_slice %489 {offsets = [0, 1], sizes = [2, 1], strides = [1, 1]} : vector<2x4xf32> to vector<2x1xf32>
    %495 = vector.broadcast %494 : vector<2x1xf32> to vector<2x64xf32>
    %496 = vector.broadcast %472 : vector<1x64xf32> to vector<2x64xf32>
    %497 = arith.mulf %495, %496 : vector<2x64xf32>
    %498 = vector.extract_strided_slice %489 {offsets = [0, 2], sizes = [2, 1], strides = [1, 1]} : vector<2x4xf32> to vector<2x1xf32>
    %499 = vector.broadcast %498 : vector<2x1xf32> to vector<2x64xf32>
    %500 = vector.broadcast %473 : vector<1x64xf32> to vector<2x64xf32>
    %501 = arith.mulf %499, %500 : vector<2x64xf32>
    %502 = vector.extract_strided_slice %489 {offsets = [0, 3], sizes = [2, 1], strides = [1, 1]} : vector<2x4xf32> to vector<2x1xf32>
    %503 = vector.broadcast %502 : vector<2x1xf32> to vector<2x64xf32>
    %504 = vector.broadcast %474 : vector<1x64xf32> to vector<2x64xf32>
    %505 = arith.mulf %503, %504 : vector<2x64xf32>
    %506 = arith.addf %493, %497 : vector<2x64xf32>
    %507 = arith.addf %501, %505 : vector<2x64xf32>
    %508 = arith.addf %506, %507 : vector<2x64xf32>
    %509 = arith.addf %463, %508 : vector<2x64xf32>
    %510 = arith.negf %509 : vector<2x64xf32>
    %511 = math.exp %510 : vector<2x64xf32>
    %cst_48 = arith.constant 1.000000e+00 : f32
    %512 = vector.broadcast %cst_48 : f32 to vector<2x64xf32>
    %513 = arith.addf %512, %511 : vector<2x64xf32>
    %514 = arith.divf %512, %513 : vector<2x64xf32>
    %515 = vector.extract_strided_slice %514 {offsets = [0, 0], sizes = [2, 4], strides = [1, 1]} : vector<2x64xf32> to vector<2x4xf32>
    %516 = vector.extract_strided_slice %514 {offsets = [0, 4], sizes = [2, 4], strides = [1, 1]} : vector<2x64xf32> to vector<2x4xf32>
    %517 = vector.extract_strided_slice %514 {offsets = [0, 8], sizes = [2, 4], strides = [1, 1]} : vector<2x64xf32> to vector<2x4xf32>
    %518 = vector.extract_strided_slice %514 {offsets = [0, 12], sizes = [2, 4], strides = [1, 1]} : vector<2x64xf32> to vector<2x4xf32>
    %cst_49 = arith.constant 2.000000e+00 : f32
    %519 = vector.broadcast %cst_49 : f32 to vector<2x4xf32>
    %520 = arith.mulf %519, %518 : vector<2x4xf32>
    %cst_50 = arith.constant 1.000000e+00 : f32
    %521 = vector.broadcast %cst_50 : f32 to vector<2x4xf32>
    %522 = arith.subf %520, %521 : vector<2x4xf32>
    %523 = arith.mulf %516, %487 : vector<2x4xf32>
    %524 = arith.mulf %515, %522 : vector<2x4xf32>
    %525 = arith.addf %523, %524 : vector<2x4xf32>
    %526 = math.tanh %525 : vector<2x4xf32>
    %527 = arith.mulf %517, %526 : vector<2x4xf32>
    %528 = vector.extract_strided_slice %527 {offsets = [0, 0], sizes = [2, 1], strides = [1, 1]} : vector<2x4xf32> to vector<2x1xf32>
    %529 = vector.broadcast %528 : vector<2x1xf32> to vector<2x64xf32>
    %530 = vector.broadcast %471 : vector<1x64xf32> to vector<2x64xf32>
    %531 = arith.mulf %529, %530 : vector<2x64xf32>
    %532 = vector.extract_strided_slice %527 {offsets = [0, 1], sizes = [2, 1], strides = [1, 1]} : vector<2x4xf32> to vector<2x1xf32>
    %533 = vector.broadcast %532 : vector<2x1xf32> to vector<2x64xf32>
    %534 = vector.broadcast %472 : vector<1x64xf32> to vector<2x64xf32>
    %535 = arith.mulf %533, %534 : vector<2x64xf32>
    %536 = vector.extract_strided_slice %527 {offsets = [0, 2], sizes = [2, 1], strides = [1, 1]} : vector<2x4xf32> to vector<2x1xf32>
    %537 = vector.broadcast %536 : vector<2x1xf32> to vector<2x64xf32>
    %538 = vector.broadcast %473 : vector<1x64xf32> to vector<2x64xf32>
    %539 = arith.mulf %537, %538 : vector<2x64xf32>
    %540 = vector.extract_strided_slice %527 {offsets = [0, 3], sizes = [2, 1], strides = [1, 1]} : vector<2x4xf32> to vector<2x1xf32>
    %541 = vector.broadcast %540 : vector<2x1xf32> to vector<2x64xf32>
    %542 = vector.broadcast %474 : vector<1x64xf32> to vector<2x64xf32>
    %543 = arith.mulf %541, %542 : vector<2x64xf32>
    %544 = arith.addf %531, %535 : vector<2x64xf32>
    %545 = arith.addf %539, %543 : vector<2x64xf32>
    %546 = arith.addf %544, %545 : vector<2x64xf32>
    %547 = arith.addf %464, %546 : vector<2x64xf32>
    %548 = arith.negf %547 : vector<2x64xf32>
    %549 = math.exp %548 : vector<2x64xf32>
    %cst_51 = arith.constant 1.000000e+00 : f32
    %550 = vector.broadcast %cst_51 : f32 to vector<2x64xf32>
    %551 = arith.addf %550, %549 : vector<2x64xf32>
    %552 = arith.divf %550, %551 : vector<2x64xf32>
    %553 = vector.extract_strided_slice %552 {offsets = [0, 0], sizes = [2, 4], strides = [1, 1]} : vector<2x64xf32> to vector<2x4xf32>
    %554 = vector.extract_strided_slice %552 {offsets = [0, 4], sizes = [2, 4], strides = [1, 1]} : vector<2x64xf32> to vector<2x4xf32>
    %555 = vector.extract_strided_slice %552 {offsets = [0, 8], sizes = [2, 4], strides = [1, 1]} : vector<2x64xf32> to vector<2x4xf32>
    %556 = vector.extract_strided_slice %552 {offsets = [0, 12], sizes = [2, 4], strides = [1, 1]} : vector<2x64xf32> to vector<2x4xf32>
    %cst_52 = arith.constant 2.000000e+00 : f32
    %557 = vector.broadcast %cst_52 : f32 to vector<2x4xf32>
    %558 = arith.mulf %557, %556 : vector<2x4xf32>
    %cst_53 = arith.constant 1.000000e+00 : f32
    %559 = vector.broadcast %cst_53 : f32 to vector<2x4xf32>
    %560 = arith.subf %558, %559 : vector<2x4xf32>
    %561 = arith.mulf %554, %525 : vector<2x4xf32>
    %562 = arith.mulf %553, %560 : vector<2x4xf32>
    %563 = arith.addf %561, %562 : vector<2x4xf32>
    %564 = math.tanh %563 : vector<2x4xf32>
    %565 = arith.mulf %555, %564 : vector<2x4xf32>
    %566 = vector.extract_strided_slice %565 {offsets = [0, 0], sizes = [2, 1], strides = [1, 1]} : vector<2x4xf32> to vector<2x1xf32>
    %567 = vector.broadcast %566 : vector<2x1xf32> to vector<2x64xf32>
    %568 = vector.broadcast %471 : vector<1x64xf32> to vector<2x64xf32>
    %569 = arith.mulf %567, %568 : vector<2x64xf32>
    %570 = vector.extract_strided_slice %565 {offsets = [0, 1], sizes = [2, 1], strides = [1, 1]} : vector<2x4xf32> to vector<2x1xf32>
    %571 = vector.broadcast %570 : vector<2x1xf32> to vector<2x64xf32>
    %572 = vector.broadcast %472 : vector<1x64xf32> to vector<2x64xf32>
    %573 = arith.mulf %571, %572 : vector<2x64xf32>
    %574 = vector.extract_strided_slice %565 {offsets = [0, 2], sizes = [2, 1], strides = [1, 1]} : vector<2x4xf32> to vector<2x1xf32>
    %575 = vector.broadcast %574 : vector<2x1xf32> to vector<2x64xf32>
    %576 = vector.broadcast %473 : vector<1x64xf32> to vector<2x64xf32>
    %577 = arith.mulf %575, %576 : vector<2x64xf32>
    %578 = vector.extract_strided_slice %565 {offsets = [0, 3], sizes = [2, 1], strides = [1, 1]} : vector<2x4xf32> to vector<2x1xf32>
    %579 = vector.broadcast %578 : vector<2x1xf32> to vector<2x64xf32>
    %580 = vector.broadcast %474 : vector<1x64xf32> to vector<2x64xf32>
    %581 = arith.mulf %579, %580 : vector<2x64xf32>
    %582 = arith.addf %569, %573 : vector<2x64xf32>
    %583 = arith.addf %577, %581 : vector<2x64xf32>
    %584 = arith.addf %582, %583 : vector<2x64xf32>
    %585 = arith.addf %465, %584 : vector<2x64xf32>
    %586 = arith.negf %585 : vector<2x64xf32>
    %587 = math.exp %586 : vector<2x64xf32>
    %cst_54 = arith.constant 1.000000e+00 : f32
    %588 = vector.broadcast %cst_54 : f32 to vector<2x64xf32>
    %589 = arith.addf %588, %587 : vector<2x64xf32>
    %590 = arith.divf %588, %589 : vector<2x64xf32>
    %591 = vector.extract_strided_slice %590 {offsets = [0, 0], sizes = [2, 4], strides = [1, 1]} : vector<2x64xf32> to vector<2x4xf32>
    %592 = vector.extract_strided_slice %590 {offsets = [0, 4], sizes = [2, 4], strides = [1, 1]} : vector<2x64xf32> to vector<2x4xf32>
    %593 = vector.extract_strided_slice %590 {offsets = [0, 8], sizes = [2, 4], strides = [1, 1]} : vector<2x64xf32> to vector<2x4xf32>
    %594 = vector.extract_strided_slice %590 {offsets = [0, 12], sizes = [2, 4], strides = [1, 1]} : vector<2x64xf32> to vector<2x4xf32>
    %cst_55 = arith.constant 2.000000e+00 : f32
    %595 = vector.broadcast %cst_55 : f32 to vector<2x4xf32>
    %596 = arith.mulf %595, %594 : vector<2x4xf32>
    %cst_56 = arith.constant 1.000000e+00 : f32
    %597 = vector.broadcast %cst_56 : f32 to vector<2x4xf32>
    %598 = arith.subf %596, %597 : vector<2x4xf32>
    %599 = arith.mulf %592, %563 : vector<2x4xf32>
    %600 = arith.mulf %591, %598 : vector<2x4xf32>
    %601 = arith.addf %599, %600 : vector<2x4xf32>
    %602 = math.tanh %601 : vector<2x4xf32>
    %603 = arith.mulf %593, %602 : vector<2x4xf32>
    %604 = vector.extract_strided_slice %603 {offsets = [0, 0], sizes = [2, 1], strides = [1, 1]} : vector<2x4xf32> to vector<2x1xf32>
    %605 = vector.broadcast %604 : vector<2x1xf32> to vector<2x64xf32>
    %606 = vector.broadcast %471 : vector<1x64xf32> to vector<2x64xf32>
    %607 = arith.mulf %605, %606 : vector<2x64xf32>
    %608 = vector.extract_strided_slice %603 {offsets = [0, 1], sizes = [2, 1], strides = [1, 1]} : vector<2x4xf32> to vector<2x1xf32>
    %609 = vector.broadcast %608 : vector<2x1xf32> to vector<2x64xf32>
    %610 = vector.broadcast %472 : vector<1x64xf32> to vector<2x64xf32>
    %611 = arith.mulf %609, %610 : vector<2x64xf32>
    %612 = vector.extract_strided_slice %603 {offsets = [0, 2], sizes = [2, 1], strides = [1, 1]} : vector<2x4xf32> to vector<2x1xf32>
    %613 = vector.broadcast %612 : vector<2x1xf32> to vector<2x64xf32>
    %614 = vector.broadcast %473 : vector<1x64xf32> to vector<2x64xf32>
    %615 = arith.mulf %613, %614 : vector<2x64xf32>
    %616 = vector.extract_strided_slice %603 {offsets = [0, 3], sizes = [2, 1], strides = [1, 1]} : vector<2x4xf32> to vector<2x1xf32>
    %617 = vector.broadcast %616 : vector<2x1xf32> to vector<2x64xf32>
    %618 = vector.broadcast %474 : vector<1x64xf32> to vector<2x64xf32>
    %619 = arith.mulf %617, %618 : vector<2x64xf32>
    %620 = arith.addf %607, %611 : vector<2x64xf32>
    %621 = arith.addf %615, %619 : vector<2x64xf32>
    %622 = arith.addf %620, %621 : vector<2x64xf32>
    %623 = arith.addf %466, %622 : vector<2x64xf32>
    %624 = arith.negf %623 : vector<2x64xf32>
    %625 = math.exp %624 : vector<2x64xf32>
    %cst_57 = arith.constant 1.000000e+00 : f32
    %626 = vector.broadcast %cst_57 : f32 to vector<2x64xf32>
    %627 = arith.addf %626, %625 : vector<2x64xf32>
    %628 = arith.divf %626, %627 : vector<2x64xf32>
    %629 = vector.extract_strided_slice %628 {offsets = [0, 0], sizes = [2, 4], strides = [1, 1]} : vector<2x64xf32> to vector<2x4xf32>
    %630 = vector.extract_strided_slice %628 {offsets = [0, 4], sizes = [2, 4], strides = [1, 1]} : vector<2x64xf32> to vector<2x4xf32>
    %631 = vector.extract_strided_slice %628 {offsets = [0, 8], sizes = [2, 4], strides = [1, 1]} : vector<2x64xf32> to vector<2x4xf32>
    %632 = vector.extract_strided_slice %628 {offsets = [0, 12], sizes = [2, 4], strides = [1, 1]} : vector<2x64xf32> to vector<2x4xf32>
    %cst_58 = arith.constant 2.000000e+00 : f32
    %633 = vector.broadcast %cst_58 : f32 to vector<2x4xf32>
    %634 = arith.mulf %633, %632 : vector<2x4xf32>
    %cst_59 = arith.constant 1.000000e+00 : f32
    %635 = vector.broadcast %cst_59 : f32 to vector<2x4xf32>
    %636 = arith.subf %634, %635 : vector<2x4xf32>
    %637 = arith.mulf %630, %601 : vector<2x4xf32>
    %638 = arith.mulf %629, %636 : vector<2x4xf32>
    %639 = arith.addf %637, %638 : vector<2x4xf32>
    %640 = math.tanh %639 : vector<2x4xf32>
    %641 = arith.mulf %631, %640 : vector<2x4xf32>
    %642 = vector.extract_strided_slice %641 {offsets = [0, 0], sizes = [2, 1], strides = [1, 1]} : vector<2x4xf32> to vector<2x1xf32>
    %643 = vector.broadcast %642 : vector<2x1xf32> to vector<2x64xf32>
    %644 = vector.broadcast %471 : vector<1x64xf32> to vector<2x64xf32>
    %645 = arith.mulf %643, %644 : vector<2x64xf32>
    %646 = vector.extract_strided_slice %641 {offsets = [0, 1], sizes = [2, 1], strides = [1, 1]} : vector<2x4xf32> to vector<2x1xf32>
    %647 = vector.broadcast %646 : vector<2x1xf32> to vector<2x64xf32>
    %648 = vector.broadcast %472 : vector<1x64xf32> to vector<2x64xf32>
    %649 = arith.mulf %647, %648 : vector<2x64xf32>
    %650 = vector.extract_strided_slice %641 {offsets = [0, 2], sizes = [2, 1], strides = [1, 1]} : vector<2x4xf32> to vector<2x1xf32>
    %651 = vector.broadcast %650 : vector<2x1xf32> to vector<2x64xf32>
    %652 = vector.broadcast %473 : vector<1x64xf32> to vector<2x64xf32>
    %653 = arith.mulf %651, %652 : vector<2x64xf32>
    %654 = vector.extract_strided_slice %641 {offsets = [0, 3], sizes = [2, 1], strides = [1, 1]} : vector<2x4xf32> to vector<2x1xf32>
    %655 = vector.broadcast %654 : vector<2x1xf32> to vector<2x64xf32>
    %656 = vector.broadcast %474 : vector<1x64xf32> to vector<2x64xf32>
    %657 = arith.mulf %655, %656 : vector<2x64xf32>
    %658 = arith.addf %645, %649 : vector<2x64xf32>
    %659 = arith.addf %653, %657 : vector<2x64xf32>
    %660 = arith.addf %658, %659 : vector<2x64xf32>
    %661 = arith.addf %467, %660 : vector<2x64xf32>
    %662 = arith.negf %661 : vector<2x64xf32>
    %663 = math.exp %662 : vector<2x64xf32>
    %cst_60 = arith.constant 1.000000e+00 : f32
    %664 = vector.broadcast %cst_60 : f32 to vector<2x64xf32>
    %665 = arith.addf %664, %663 : vector<2x64xf32>
    %666 = arith.divf %664, %665 : vector<2x64xf32>
    %667 = vector.extract_strided_slice %666 {offsets = [0, 0], sizes = [2, 4], strides = [1, 1]} : vector<2x64xf32> to vector<2x4xf32>
    %668 = vector.extract_strided_slice %666 {offsets = [0, 4], sizes = [2, 4], strides = [1, 1]} : vector<2x64xf32> to vector<2x4xf32>
    %669 = vector.extract_strided_slice %666 {offsets = [0, 8], sizes = [2, 4], strides = [1, 1]} : vector<2x64xf32> to vector<2x4xf32>
    %670 = vector.extract_strided_slice %666 {offsets = [0, 12], sizes = [2, 4], strides = [1, 1]} : vector<2x64xf32> to vector<2x4xf32>
    %cst_61 = arith.constant 2.000000e+00 : f32
    %671 = vector.broadcast %cst_61 : f32 to vector<2x4xf32>
    %672 = arith.mulf %671, %670 : vector<2x4xf32>
    %cst_62 = arith.constant 1.000000e+00 : f32
    %673 = vector.broadcast %cst_62 : f32 to vector<2x4xf32>
    %674 = arith.subf %672, %673 : vector<2x4xf32>
    %675 = arith.mulf %668, %639 : vector<2x4xf32>
    %676 = arith.mulf %667, %674 : vector<2x4xf32>
    %677 = arith.addf %675, %676 : vector<2x4xf32>
    %678 = math.tanh %677 : vector<2x4xf32>
    %679 = arith.mulf %669, %678 : vector<2x4xf32>
    %680 = vector.extract_strided_slice %679 {offsets = [0, 0], sizes = [2, 1], strides = [1, 1]} : vector<2x4xf32> to vector<2x1xf32>
    %681 = vector.broadcast %680 : vector<2x1xf32> to vector<2x64xf32>
    %682 = vector.broadcast %471 : vector<1x64xf32> to vector<2x64xf32>
    %683 = arith.mulf %681, %682 : vector<2x64xf32>
    %684 = vector.extract_strided_slice %679 {offsets = [0, 1], sizes = [2, 1], strides = [1, 1]} : vector<2x4xf32> to vector<2x1xf32>
    %685 = vector.broadcast %684 : vector<2x1xf32> to vector<2x64xf32>
    %686 = vector.broadcast %472 : vector<1x64xf32> to vector<2x64xf32>
    %687 = arith.mulf %685, %686 : vector<2x64xf32>
    %688 = vector.extract_strided_slice %679 {offsets = [0, 2], sizes = [2, 1], strides = [1, 1]} : vector<2x4xf32> to vector<2x1xf32>
    %689 = vector.broadcast %688 : vector<2x1xf32> to vector<2x64xf32>
    %690 = vector.broadcast %473 : vector<1x64xf32> to vector<2x64xf32>
    %691 = arith.mulf %689, %690 : vector<2x64xf32>
    %692 = vector.extract_strided_slice %679 {offsets = [0, 3], sizes = [2, 1], strides = [1, 1]} : vector<2x4xf32> to vector<2x1xf32>
    %693 = vector.broadcast %692 : vector<2x1xf32> to vector<2x64xf32>
    %694 = vector.broadcast %474 : vector<1x64xf32> to vector<2x64xf32>
    %695 = arith.mulf %693, %694 : vector<2x64xf32>
    %696 = arith.addf %683, %687 : vector<2x64xf32>
    %697 = arith.addf %691, %695 : vector<2x64xf32>
    %698 = arith.addf %696, %697 : vector<2x64xf32>
    %699 = arith.addf %468, %698 : vector<2x64xf32>
    %700 = arith.negf %699 : vector<2x64xf32>
    %701 = math.exp %700 : vector<2x64xf32>
    %cst_63 = arith.constant 1.000000e+00 : f32
    %702 = vector.broadcast %cst_63 : f32 to vector<2x64xf32>
    %703 = arith.addf %702, %701 : vector<2x64xf32>
    %704 = arith.divf %702, %703 : vector<2x64xf32>
    %705 = vector.extract_strided_slice %704 {offsets = [0, 0], sizes = [2, 4], strides = [1, 1]} : vector<2x64xf32> to vector<2x4xf32>
    %706 = vector.extract_strided_slice %704 {offsets = [0, 4], sizes = [2, 4], strides = [1, 1]} : vector<2x64xf32> to vector<2x4xf32>
    %707 = vector.extract_strided_slice %704 {offsets = [0, 8], sizes = [2, 4], strides = [1, 1]} : vector<2x64xf32> to vector<2x4xf32>
    %708 = vector.extract_strided_slice %704 {offsets = [0, 12], sizes = [2, 4], strides = [1, 1]} : vector<2x64xf32> to vector<2x4xf32>
    %cst_64 = arith.constant 2.000000e+00 : f32
    %709 = vector.broadcast %cst_64 : f32 to vector<2x4xf32>
    %710 = arith.mulf %709, %708 : vector<2x4xf32>
    %cst_65 = arith.constant 1.000000e+00 : f32
    %711 = vector.broadcast %cst_65 : f32 to vector<2x4xf32>
    %712 = arith.subf %710, %711 : vector<2x4xf32>
    %713 = arith.mulf %706, %677 : vector<2x4xf32>
    %714 = arith.mulf %705, %712 : vector<2x4xf32>
    %715 = arith.addf %713, %714 : vector<2x4xf32>
    %716 = math.tanh %715 : vector<2x4xf32>
    %717 = arith.mulf %707, %716 : vector<2x4xf32>
    %718 = vector.extract_strided_slice %717 {offsets = [0, 0], sizes = [2, 1], strides = [1, 1]} : vector<2x4xf32> to vector<2x1xf32>
    %719 = vector.broadcast %718 : vector<2x1xf32> to vector<2x64xf32>
    %720 = vector.broadcast %471 : vector<1x64xf32> to vector<2x64xf32>
    %721 = arith.mulf %719, %720 : vector<2x64xf32>
    %722 = vector.extract_strided_slice %717 {offsets = [0, 1], sizes = [2, 1], strides = [1, 1]} : vector<2x4xf32> to vector<2x1xf32>
    %723 = vector.broadcast %722 : vector<2x1xf32> to vector<2x64xf32>
    %724 = vector.broadcast %472 : vector<1x64xf32> to vector<2x64xf32>
    %725 = arith.mulf %723, %724 : vector<2x64xf32>
    %726 = vector.extract_strided_slice %717 {offsets = [0, 2], sizes = [2, 1], strides = [1, 1]} : vector<2x4xf32> to vector<2x1xf32>
    %727 = vector.broadcast %726 : vector<2x1xf32> to vector<2x64xf32>
    %728 = vector.broadcast %473 : vector<1x64xf32> to vector<2x64xf32>
    %729 = arith.mulf %727, %728 : vector<2x64xf32>
    %730 = vector.extract_strided_slice %717 {offsets = [0, 3], sizes = [2, 1], strides = [1, 1]} : vector<2x4xf32> to vector<2x1xf32>
    %731 = vector.broadcast %730 : vector<2x1xf32> to vector<2x64xf32>
    %732 = vector.broadcast %474 : vector<1x64xf32> to vector<2x64xf32>
    %733 = arith.mulf %731, %732 : vector<2x64xf32>
    %734 = arith.addf %721, %725 : vector<2x64xf32>
    %735 = arith.addf %729, %733 : vector<2x64xf32>
    %736 = arith.addf %734, %735 : vector<2x64xf32>
    %737 = arith.addf %469, %736 : vector<2x64xf32>
    %738 = arith.negf %737 : vector<2x64xf32>
    %739 = math.exp %738 : vector<2x64xf32>
    %cst_66 = arith.constant 1.000000e+00 : f32
    %740 = vector.broadcast %cst_66 : f32 to vector<2x64xf32>
    %741 = arith.addf %740, %739 : vector<2x64xf32>
    %742 = arith.divf %740, %741 : vector<2x64xf32>
    %743 = vector.extract_strided_slice %742 {offsets = [0, 0], sizes = [2, 4], strides = [1, 1]} : vector<2x64xf32> to vector<2x4xf32>
    %744 = vector.extract_strided_slice %742 {offsets = [0, 4], sizes = [2, 4], strides = [1, 1]} : vector<2x64xf32> to vector<2x4xf32>
    %745 = vector.extract_strided_slice %742 {offsets = [0, 8], sizes = [2, 4], strides = [1, 1]} : vector<2x64xf32> to vector<2x4xf32>
    %746 = vector.extract_strided_slice %742 {offsets = [0, 12], sizes = [2, 4], strides = [1, 1]} : vector<2x64xf32> to vector<2x4xf32>
    %cst_67 = arith.constant 2.000000e+00 : f32
    %747 = vector.broadcast %cst_67 : f32 to vector<2x4xf32>
    %748 = arith.mulf %747, %746 : vector<2x4xf32>
    %cst_68 = arith.constant 1.000000e+00 : f32
    %749 = vector.broadcast %cst_68 : f32 to vector<2x4xf32>
    %750 = arith.subf %748, %749 : vector<2x4xf32>
    %751 = arith.mulf %744, %715 : vector<2x4xf32>
    %752 = arith.mulf %743, %750 : vector<2x4xf32>
    %753 = arith.addf %751, %752 : vector<2x4xf32>
    %754 = math.tanh %753 : vector<2x4xf32>
    %755 = arith.mulf %745, %754 : vector<2x4xf32>
    %756 = tpu.concatenate %489, %527, %565, %603, %641, %679, %717, %755 in 0 : vector<2x4xf32>, vector<2x4xf32>, vector<2x4xf32>, vector<2x4xf32>, vector<2x4xf32>, vector<2x4xf32>, vector<2x4xf32>, vector<2x4xf32> -> vector<16x4xf32>
    %757 = tpu.concatenate %755, %717, %679, %641, %603, %565, %527, %489 in 0 : vector<2x4xf32>, vector<2x4xf32>, vector<2x4xf32>, vector<2x4xf32>, vector<2x4xf32>, vector<2x4xf32>, vector<2x4xf32>, vector<2x4xf32> -> vector<16x4xf32>
    %758 = tpu.concatenate %756, %757 in 1 : vector<16x4xf32>, vector<16x4xf32> -> vector<16x8xf32>
    %c64 = arith.constant 64 : index
    %c0_69 = arith.constant 0 : index
    %759 = vector.load %arg1[%c64, %c0_69] : memref<168x64xf32, #tpu.memory_space<vmem>>, vector<8x64xf32>
    %c80 = arith.constant 80 : index
    %c0_70 = arith.constant 0 : index
    %760 = vector.load %arg1[%c80, %c0_70] : memref<168x64xf32, #tpu.memory_space<vmem>>, vector<1x64xf32>
    %cst_71 = arith.constant dense<0.000000e+00> : vector<16x64xf32>
    %761 = tpu.matmul %758, %759, %cst_71 {dimension_numbers = #tpu.dot_dimension_numbers<[1], [0], [0], [1], [0, 0, 1, 1], [], []>, precision = #tpu.contract_precision<fp32>} : vector<16x8xf32>, vector<8x64xf32>, vector<16x64xf32> -> vector<16x64xf32>
    %762 = vector.broadcast %760 : vector<1x64xf32> to vector<16x64xf32>
    %763 = arith.addf %761, %762 : vector<16x64xf32>
    %764 = vector.extract_strided_slice %763 {offsets = [0, 0], sizes = [2, 64], strides = [1, 1]} : vector<16x64xf32> to vector<2x64xf32>
    %765 = vector.extract_strided_slice %763 {offsets = [2, 0], sizes = [2, 64], strides = [1, 1]} : vector<16x64xf32> to vector<2x64xf32>
    %766 = vector.extract_strided_slice %763 {offsets = [4, 0], sizes = [2, 64], strides = [1, 1]} : vector<16x64xf32> to vector<2x64xf32>
    %767 = vector.extract_strided_slice %763 {offsets = [6, 0], sizes = [2, 64], strides = [1, 1]} : vector<16x64xf32> to vector<2x64xf32>
    %768 = vector.extract_strided_slice %763 {offsets = [8, 0], sizes = [2, 64], strides = [1, 1]} : vector<16x64xf32> to vector<2x64xf32>
    %769 = vector.extract_strided_slice %763 {offsets = [10, 0], sizes = [2, 64], strides = [1, 1]} : vector<16x64xf32> to vector<2x64xf32>
    %770 = vector.extract_strided_slice %763 {offsets = [12, 0], sizes = [2, 64], strides = [1, 1]} : vector<16x64xf32> to vector<2x64xf32>
    %771 = vector.extract_strided_slice %763 {offsets = [14, 0], sizes = [2, 64], strides = [1, 1]} : vector<16x64xf32> to vector<2x64xf32>
    %c72 = arith.constant 72 : index
    %c0_72 = arith.constant 0 : index
    %772 = vector.load %arg1[%c72, %c0_72] : memref<168x64xf32, #tpu.memory_space<vmem>>, vector<8x64xf32>
    %773 = vector.extract_strided_slice %772 {offsets = [0, 0], sizes = [1, 64], strides = [1, 1]} : vector<8x64xf32> to vector<1x64xf32>
    %774 = vector.extract_strided_slice %772 {offsets = [1, 0], sizes = [1, 64], strides = [1, 1]} : vector<8x64xf32> to vector<1x64xf32>
    %775 = vector.extract_strided_slice %772 {offsets = [2, 0], sizes = [1, 64], strides = [1, 1]} : vector<8x64xf32> to vector<1x64xf32>
    %776 = vector.extract_strided_slice %772 {offsets = [3, 0], sizes = [1, 64], strides = [1, 1]} : vector<8x64xf32> to vector<1x64xf32>
    %777 = vector.extract_strided_slice %772 {offsets = [4, 0], sizes = [1, 64], strides = [1, 1]} : vector<8x64xf32> to vector<1x64xf32>
    %778 = vector.extract_strided_slice %772 {offsets = [5, 0], sizes = [1, 64], strides = [1, 1]} : vector<8x64xf32> to vector<1x64xf32>
    %779 = vector.extract_strided_slice %772 {offsets = [6, 0], sizes = [1, 64], strides = [1, 1]} : vector<8x64xf32> to vector<1x64xf32>
    %780 = vector.extract_strided_slice %772 {offsets = [7, 0], sizes = [1, 64], strides = [1, 1]} : vector<8x64xf32> to vector<1x64xf32>
    %781 = arith.negf %764 : vector<2x64xf32>
    %782 = math.exp %781 : vector<2x64xf32>
    %cst_73 = arith.constant 1.000000e+00 : f32
    %783 = vector.broadcast %cst_73 : f32 to vector<2x64xf32>
    %784 = arith.addf %783, %782 : vector<2x64xf32>
    %785 = arith.divf %783, %784 : vector<2x64xf32>
    %786 = vector.extract_strided_slice %785 {offsets = [0, 0], sizes = [2, 8], strides = [1, 1]} : vector<2x64xf32> to vector<2x8xf32>
    %787 = vector.extract_strided_slice %785 {offsets = [0, 16], sizes = [2, 8], strides = [1, 1]} : vector<2x64xf32> to vector<2x8xf32>
    %788 = vector.extract_strided_slice %785 {offsets = [0, 24], sizes = [2, 8], strides = [1, 1]} : vector<2x64xf32> to vector<2x8xf32>
    %cst_74 = arith.constant 2.000000e+00 : f32
    %789 = vector.broadcast %cst_74 : f32 to vector<2x8xf32>
    %790 = arith.mulf %789, %788 : vector<2x8xf32>
    %cst_75 = arith.constant 1.000000e+00 : f32
    %791 = vector.broadcast %cst_75 : f32 to vector<2x8xf32>
    %792 = arith.subf %790, %791 : vector<2x8xf32>
    %793 = arith.mulf %786, %792 : vector<2x8xf32>
    %794 = math.tanh %793 : vector<2x8xf32>
    %795 = arith.mulf %787, %794 : vector<2x8xf32>
    %796 = vector.extract_strided_slice %795 {offsets = [0, 0], sizes = [2, 1], strides = [1, 1]} : vector<2x8xf32> to vector<2x1xf32>
    %797 = vector.broadcast %796 : vector<2x1xf32> to vector<2x64xf32>
    %798 = vector.broadcast %773 : vector<1x64xf32> to vector<2x64xf32>
    %799 = arith.mulf %797, %798 : vector<2x64xf32>
    %800 = vector.extract_strided_slice %795 {offsets = [0, 1], sizes = [2, 1], strides = [1, 1]} : vector<2x8xf32> to vector<2x1xf32>
    %801 = vector.broadcast %800 : vector<2x1xf32> to vector<2x64xf32>
    %802 = vector.broadcast %774 : vector<1x64xf32> to vector<2x64xf32>
    %803 = arith.mulf %801, %802 : vector<2x64xf32>
    %804 = vector.extract_strided_slice %795 {offsets = [0, 2], sizes = [2, 1], strides = [1, 1]} : vector<2x8xf32> to vector<2x1xf32>
    %805 = vector.broadcast %804 : vector<2x1xf32> to vector<2x64xf32>
    %806 = vector.broadcast %775 : vector<1x64xf32> to vector<2x64xf32>
    %807 = arith.mulf %805, %806 : vector<2x64xf32>
    %808 = vector.extract_strided_slice %795 {offsets = [0, 3], sizes = [2, 1], strides = [1, 1]} : vector<2x8xf32> to vector<2x1xf32>
    %809 = vector.broadcast %808 : vector<2x1xf32> to vector<2x64xf32>
    %810 = vector.broadcast %776 : vector<1x64xf32> to vector<2x64xf32>
    %811 = arith.mulf %809, %810 : vector<2x64xf32>
    %812 = vector.extract_strided_slice %795 {offsets = [0, 4], sizes = [2, 1], strides = [1, 1]} : vector<2x8xf32> to vector<2x1xf32>
    %813 = vector.broadcast %812 : vector<2x1xf32> to vector<2x64xf32>
    %814 = vector.broadcast %777 : vector<1x64xf32> to vector<2x64xf32>
    %815 = arith.mulf %813, %814 : vector<2x64xf32>
    %816 = vector.extract_strided_slice %795 {offsets = [0, 5], sizes = [2, 1], strides = [1, 1]} : vector<2x8xf32> to vector<2x1xf32>
    %817 = vector.broadcast %816 : vector<2x1xf32> to vector<2x64xf32>
    %818 = vector.broadcast %778 : vector<1x64xf32> to vector<2x64xf32>
    %819 = arith.mulf %817, %818 : vector<2x64xf32>
    %820 = vector.extract_strided_slice %795 {offsets = [0, 6], sizes = [2, 1], strides = [1, 1]} : vector<2x8xf32> to vector<2x1xf32>
    %821 = vector.broadcast %820 : vector<2x1xf32> to vector<2x64xf32>
    %822 = vector.broadcast %779 : vector<1x64xf32> to vector<2x64xf32>
    %823 = arith.mulf %821, %822 : vector<2x64xf32>
    %824 = vector.extract_strided_slice %795 {offsets = [0, 7], sizes = [2, 1], strides = [1, 1]} : vector<2x8xf32> to vector<2x1xf32>
    %825 = vector.broadcast %824 : vector<2x1xf32> to vector<2x64xf32>
    %826 = vector.broadcast %780 : vector<1x64xf32> to vector<2x64xf32>
    %827 = arith.mulf %825, %826 : vector<2x64xf32>
    %828 = arith.addf %799, %803 : vector<2x64xf32>
    %829 = arith.addf %807, %811 : vector<2x64xf32>
    %830 = arith.addf %815, %819 : vector<2x64xf32>
    %831 = arith.addf %823, %827 : vector<2x64xf32>
    %832 = arith.addf %828, %829 : vector<2x64xf32>
    %833 = arith.addf %830, %831 : vector<2x64xf32>
    %834 = arith.addf %832, %833 : vector<2x64xf32>
    %835 = arith.addf %765, %834 : vector<2x64xf32>
    %836 = arith.negf %835 : vector<2x64xf32>
    %837 = math.exp %836 : vector<2x64xf32>
    %cst_76 = arith.constant 1.000000e+00 : f32
    %838 = vector.broadcast %cst_76 : f32 to vector<2x64xf32>
    %839 = arith.addf %838, %837 : vector<2x64xf32>
    %840 = arith.divf %838, %839 : vector<2x64xf32>
    %841 = vector.extract_strided_slice %840 {offsets = [0, 0], sizes = [2, 8], strides = [1, 1]} : vector<2x64xf32> to vector<2x8xf32>
    %842 = vector.extract_strided_slice %840 {offsets = [0, 8], sizes = [2, 8], strides = [1, 1]} : vector<2x64xf32> to vector<2x8xf32>
    %843 = vector.extract_strided_slice %840 {offsets = [0, 16], sizes = [2, 8], strides = [1, 1]} : vector<2x64xf32> to vector<2x8xf32>
    %844 = vector.extract_strided_slice %840 {offsets = [0, 24], sizes = [2, 8], strides = [1, 1]} : vector<2x64xf32> to vector<2x8xf32>
    %cst_77 = arith.constant 2.000000e+00 : f32
    %845 = vector.broadcast %cst_77 : f32 to vector<2x8xf32>
    %846 = arith.mulf %845, %844 : vector<2x8xf32>
    %cst_78 = arith.constant 1.000000e+00 : f32
    %847 = vector.broadcast %cst_78 : f32 to vector<2x8xf32>
    %848 = arith.subf %846, %847 : vector<2x8xf32>
    %849 = arith.mulf %842, %793 : vector<2x8xf32>
    %850 = arith.mulf %841, %848 : vector<2x8xf32>
    %851 = arith.addf %849, %850 : vector<2x8xf32>
    %852 = math.tanh %851 : vector<2x8xf32>
    %853 = arith.mulf %843, %852 : vector<2x8xf32>
    %854 = vector.extract_strided_slice %853 {offsets = [0, 0], sizes = [2, 1], strides = [1, 1]} : vector<2x8xf32> to vector<2x1xf32>
    %855 = vector.broadcast %854 : vector<2x1xf32> to vector<2x64xf32>
    %856 = vector.broadcast %773 : vector<1x64xf32> to vector<2x64xf32>
    %857 = arith.mulf %855, %856 : vector<2x64xf32>
    %858 = vector.extract_strided_slice %853 {offsets = [0, 1], sizes = [2, 1], strides = [1, 1]} : vector<2x8xf32> to vector<2x1xf32>
    %859 = vector.broadcast %858 : vector<2x1xf32> to vector<2x64xf32>
    %860 = vector.broadcast %774 : vector<1x64xf32> to vector<2x64xf32>
    %861 = arith.mulf %859, %860 : vector<2x64xf32>
    %862 = vector.extract_strided_slice %853 {offsets = [0, 2], sizes = [2, 1], strides = [1, 1]} : vector<2x8xf32> to vector<2x1xf32>
    %863 = vector.broadcast %862 : vector<2x1xf32> to vector<2x64xf32>
    %864 = vector.broadcast %775 : vector<1x64xf32> to vector<2x64xf32>
    %865 = arith.mulf %863, %864 : vector<2x64xf32>
    %866 = vector.extract_strided_slice %853 {offsets = [0, 3], sizes = [2, 1], strides = [1, 1]} : vector<2x8xf32> to vector<2x1xf32>
    %867 = vector.broadcast %866 : vector<2x1xf32> to vector<2x64xf32>
    %868 = vector.broadcast %776 : vector<1x64xf32> to vector<2x64xf32>
    %869 = arith.mulf %867, %868 : vector<2x64xf32>
    %870 = vector.extract_strided_slice %853 {offsets = [0, 4], sizes = [2, 1], strides = [1, 1]} : vector<2x8xf32> to vector<2x1xf32>
    %871 = vector.broadcast %870 : vector<2x1xf32> to vector<2x64xf32>
    %872 = vector.broadcast %777 : vector<1x64xf32> to vector<2x64xf32>
    %873 = arith.mulf %871, %872 : vector<2x64xf32>
    %874 = vector.extract_strided_slice %853 {offsets = [0, 5], sizes = [2, 1], strides = [1, 1]} : vector<2x8xf32> to vector<2x1xf32>
    %875 = vector.broadcast %874 : vector<2x1xf32> to vector<2x64xf32>
    %876 = vector.broadcast %778 : vector<1x64xf32> to vector<2x64xf32>
    %877 = arith.mulf %875, %876 : vector<2x64xf32>
    %878 = vector.extract_strided_slice %853 {offsets = [0, 6], sizes = [2, 1], strides = [1, 1]} : vector<2x8xf32> to vector<2x1xf32>
    %879 = vector.broadcast %878 : vector<2x1xf32> to vector<2x64xf32>
    %880 = vector.broadcast %779 : vector<1x64xf32> to vector<2x64xf32>
    %881 = arith.mulf %879, %880 : vector<2x64xf32>
    %882 = vector.extract_strided_slice %853 {offsets = [0, 7], sizes = [2, 1], strides = [1, 1]} : vector<2x8xf32> to vector<2x1xf32>
    %883 = vector.broadcast %882 : vector<2x1xf32> to vector<2x64xf32>
    %884 = vector.broadcast %780 : vector<1x64xf32> to vector<2x64xf32>
    %885 = arith.mulf %883, %884 : vector<2x64xf32>
    %886 = arith.addf %857, %861 : vector<2x64xf32>
    %887 = arith.addf %865, %869 : vector<2x64xf32>
    %888 = arith.addf %873, %877 : vector<2x64xf32>
    %889 = arith.addf %881, %885 : vector<2x64xf32>
    %890 = arith.addf %886, %887 : vector<2x64xf32>
    %891 = arith.addf %888, %889 : vector<2x64xf32>
    %892 = arith.addf %890, %891 : vector<2x64xf32>
    %893 = arith.addf %766, %892 : vector<2x64xf32>
    %894 = arith.negf %893 : vector<2x64xf32>
    %895 = math.exp %894 : vector<2x64xf32>
    %cst_79 = arith.constant 1.000000e+00 : f32
    %896 = vector.broadcast %cst_79 : f32 to vector<2x64xf32>
    %897 = arith.addf %896, %895 : vector<2x64xf32>
    %898 = arith.divf %896, %897 : vector<2x64xf32>
    %899 = vector.extract_strided_slice %898 {offsets = [0, 0], sizes = [2, 8], strides = [1, 1]} : vector<2x64xf32> to vector<2x8xf32>
    %900 = vector.extract_strided_slice %898 {offsets = [0, 8], sizes = [2, 8], strides = [1, 1]} : vector<2x64xf32> to vector<2x8xf32>
    %901 = vector.extract_strided_slice %898 {offsets = [0, 16], sizes = [2, 8], strides = [1, 1]} : vector<2x64xf32> to vector<2x8xf32>
    %902 = vector.extract_strided_slice %898 {offsets = [0, 24], sizes = [2, 8], strides = [1, 1]} : vector<2x64xf32> to vector<2x8xf32>
    %cst_80 = arith.constant 2.000000e+00 : f32
    %903 = vector.broadcast %cst_80 : f32 to vector<2x8xf32>
    %904 = arith.mulf %903, %902 : vector<2x8xf32>
    %cst_81 = arith.constant 1.000000e+00 : f32
    %905 = vector.broadcast %cst_81 : f32 to vector<2x8xf32>
    %906 = arith.subf %904, %905 : vector<2x8xf32>
    %907 = arith.mulf %900, %851 : vector<2x8xf32>
    %908 = arith.mulf %899, %906 : vector<2x8xf32>
    %909 = arith.addf %907, %908 : vector<2x8xf32>
    %910 = math.tanh %909 : vector<2x8xf32>
    %911 = arith.mulf %901, %910 : vector<2x8xf32>
    %912 = vector.extract_strided_slice %911 {offsets = [0, 0], sizes = [2, 1], strides = [1, 1]} : vector<2x8xf32> to vector<2x1xf32>
    %913 = vector.broadcast %912 : vector<2x1xf32> to vector<2x64xf32>
    %914 = vector.broadcast %773 : vector<1x64xf32> to vector<2x64xf32>
    %915 = arith.mulf %913, %914 : vector<2x64xf32>
    %916 = vector.extract_strided_slice %911 {offsets = [0, 1], sizes = [2, 1], strides = [1, 1]} : vector<2x8xf32> to vector<2x1xf32>
    %917 = vector.broadcast %916 : vector<2x1xf32> to vector<2x64xf32>
    %918 = vector.broadcast %774 : vector<1x64xf32> to vector<2x64xf32>
    %919 = arith.mulf %917, %918 : vector<2x64xf32>
    %920 = vector.extract_strided_slice %911 {offsets = [0, 2], sizes = [2, 1], strides = [1, 1]} : vector<2x8xf32> to vector<2x1xf32>
    %921 = vector.broadcast %920 : vector<2x1xf32> to vector<2x64xf32>
    %922 = vector.broadcast %775 : vector<1x64xf32> to vector<2x64xf32>
    %923 = arith.mulf %921, %922 : vector<2x64xf32>
    %924 = vector.extract_strided_slice %911 {offsets = [0, 3], sizes = [2, 1], strides = [1, 1]} : vector<2x8xf32> to vector<2x1xf32>
    %925 = vector.broadcast %924 : vector<2x1xf32> to vector<2x64xf32>
    %926 = vector.broadcast %776 : vector<1x64xf32> to vector<2x64xf32>
    %927 = arith.mulf %925, %926 : vector<2x64xf32>
    %928 = vector.extract_strided_slice %911 {offsets = [0, 4], sizes = [2, 1], strides = [1, 1]} : vector<2x8xf32> to vector<2x1xf32>
    %929 = vector.broadcast %928 : vector<2x1xf32> to vector<2x64xf32>
    %930 = vector.broadcast %777 : vector<1x64xf32> to vector<2x64xf32>
    %931 = arith.mulf %929, %930 : vector<2x64xf32>
    %932 = vector.extract_strided_slice %911 {offsets = [0, 5], sizes = [2, 1], strides = [1, 1]} : vector<2x8xf32> to vector<2x1xf32>
    %933 = vector.broadcast %932 : vector<2x1xf32> to vector<2x64xf32>
    %934 = vector.broadcast %778 : vector<1x64xf32> to vector<2x64xf32>
    %935 = arith.mulf %933, %934 : vector<2x64xf32>
    %936 = vector.extract_strided_slice %911 {offsets = [0, 6], sizes = [2, 1], strides = [1, 1]} : vector<2x8xf32> to vector<2x1xf32>
    %937 = vector.broadcast %936 : vector<2x1xf32> to vector<2x64xf32>
    %938 = vector.broadcast %779 : vector<1x64xf32> to vector<2x64xf32>
    %939 = arith.mulf %937, %938 : vector<2x64xf32>
    %940 = vector.extract_strided_slice %911 {offsets = [0, 7], sizes = [2, 1], strides = [1, 1]} : vector<2x8xf32> to vector<2x1xf32>
    %941 = vector.broadcast %940 : vector<2x1xf32> to vector<2x64xf32>
    %942 = vector.broadcast %780 : vector<1x64xf32> to vector<2x64xf32>
    %943 = arith.mulf %941, %942 : vector<2x64xf32>
    %944 = arith.addf %915, %919 : vector<2x64xf32>
    %945 = arith.addf %923, %927 : vector<2x64xf32>
    %946 = arith.addf %931, %935 : vector<2x64xf32>
    %947 = arith.addf %939, %943 : vector<2x64xf32>
    %948 = arith.addf %944, %945 : vector<2x64xf32>
    %949 = arith.addf %946, %947 : vector<2x64xf32>
    %950 = arith.addf %948, %949 : vector<2x64xf32>
    %951 = arith.addf %767, %950 : vector<2x64xf32>
    %952 = arith.negf %951 : vector<2x64xf32>
    %953 = math.exp %952 : vector<2x64xf32>
    %cst_82 = arith.constant 1.000000e+00 : f32
    %954 = vector.broadcast %cst_82 : f32 to vector<2x64xf32>
    %955 = arith.addf %954, %953 : vector<2x64xf32>
    %956 = arith.divf %954, %955 : vector<2x64xf32>
    %957 = vector.extract_strided_slice %956 {offsets = [0, 0], sizes = [2, 8], strides = [1, 1]} : vector<2x64xf32> to vector<2x8xf32>
    %958 = vector.extract_strided_slice %956 {offsets = [0, 8], sizes = [2, 8], strides = [1, 1]} : vector<2x64xf32> to vector<2x8xf32>
    %959 = vector.extract_strided_slice %956 {offsets = [0, 16], sizes = [2, 8], strides = [1, 1]} : vector<2x64xf32> to vector<2x8xf32>
    %960 = vector.extract_strided_slice %956 {offsets = [0, 24], sizes = [2, 8], strides = [1, 1]} : vector<2x64xf32> to vector<2x8xf32>
    %cst_83 = arith.constant 2.000000e+00 : f32
    %961 = vector.broadcast %cst_83 : f32 to vector<2x8xf32>
    %962 = arith.mulf %961, %960 : vector<2x8xf32>
    %cst_84 = arith.constant 1.000000e+00 : f32
    %963 = vector.broadcast %cst_84 : f32 to vector<2x8xf32>
    %964 = arith.subf %962, %963 : vector<2x8xf32>
    %965 = arith.mulf %958, %909 : vector<2x8xf32>
    %966 = arith.mulf %957, %964 : vector<2x8xf32>
    %967 = arith.addf %965, %966 : vector<2x8xf32>
    %968 = math.tanh %967 : vector<2x8xf32>
    %969 = arith.mulf %959, %968 : vector<2x8xf32>
    %970 = vector.extract_strided_slice %969 {offsets = [0, 0], sizes = [2, 1], strides = [1, 1]} : vector<2x8xf32> to vector<2x1xf32>
    %971 = vector.broadcast %970 : vector<2x1xf32> to vector<2x64xf32>
    %972 = vector.broadcast %773 : vector<1x64xf32> to vector<2x64xf32>
    %973 = arith.mulf %971, %972 : vector<2x64xf32>
    %974 = vector.extract_strided_slice %969 {offsets = [0, 1], sizes = [2, 1], strides = [1, 1]} : vector<2x8xf32> to vector<2x1xf32>
    %975 = vector.broadcast %974 : vector<2x1xf32> to vector<2x64xf32>
    %976 = vector.broadcast %774 : vector<1x64xf32> to vector<2x64xf32>
    %977 = arith.mulf %975, %976 : vector<2x64xf32>
    %978 = vector.extract_strided_slice %969 {offsets = [0, 2], sizes = [2, 1], strides = [1, 1]} : vector<2x8xf32> to vector<2x1xf32>
    %979 = vector.broadcast %978 : vector<2x1xf32> to vector<2x64xf32>
    %980 = vector.broadcast %775 : vector<1x64xf32> to vector<2x64xf32>
    %981 = arith.mulf %979, %980 : vector<2x64xf32>
    %982 = vector.extract_strided_slice %969 {offsets = [0, 3], sizes = [2, 1], strides = [1, 1]} : vector<2x8xf32> to vector<2x1xf32>
    %983 = vector.broadcast %982 : vector<2x1xf32> to vector<2x64xf32>
    %984 = vector.broadcast %776 : vector<1x64xf32> to vector<2x64xf32>
    %985 = arith.mulf %983, %984 : vector<2x64xf32>
    %986 = vector.extract_strided_slice %969 {offsets = [0, 4], sizes = [2, 1], strides = [1, 1]} : vector<2x8xf32> to vector<2x1xf32>
    %987 = vector.broadcast %986 : vector<2x1xf32> to vector<2x64xf32>
    %988 = vector.broadcast %777 : vector<1x64xf32> to vector<2x64xf32>
    %989 = arith.mulf %987, %988 : vector<2x64xf32>
    %990 = vector.extract_strided_slice %969 {offsets = [0, 5], sizes = [2, 1], strides = [1, 1]} : vector<2x8xf32> to vector<2x1xf32>
    %991 = vector.broadcast %990 : vector<2x1xf32> to vector<2x64xf32>
    %992 = vector.broadcast %778 : vector<1x64xf32> to vector<2x64xf32>
    %993 = arith.mulf %991, %992 : vector<2x64xf32>
    %994 = vector.extract_strided_slice %969 {offsets = [0, 6], sizes = [2, 1], strides = [1, 1]} : vector<2x8xf32> to vector<2x1xf32>
    %995 = vector.broadcast %994 : vector<2x1xf32> to vector<2x64xf32>
    %996 = vector.broadcast %779 : vector<1x64xf32> to vector<2x64xf32>
    %997 = arith.mulf %995, %996 : vector<2x64xf32>
    %998 = vector.extract_strided_slice %969 {offsets = [0, 7], sizes = [2, 1], strides = [1, 1]} : vector<2x8xf32> to vector<2x1xf32>
    %999 = vector.broadcast %998 : vector<2x1xf32> to vector<2x64xf32>
    %1000 = vector.broadcast %780 : vector<1x64xf32> to vector<2x64xf32>
    %1001 = arith.mulf %999, %1000 : vector<2x64xf32>
    %1002 = arith.addf %973, %977 : vector<2x64xf32>
    %1003 = arith.addf %981, %985 : vector<2x64xf32>
    %1004 = arith.addf %989, %993 : vector<2x64xf32>
    %1005 = arith.addf %997, %1001 : vector<2x64xf32>
    %1006 = arith.addf %1002, %1003 : vector<2x64xf32>
    %1007 = arith.addf %1004, %1005 : vector<2x64xf32>
    %1008 = arith.addf %1006, %1007 : vector<2x64xf32>
    %1009 = arith.addf %768, %1008 : vector<2x64xf32>
    %1010 = arith.negf %1009 : vector<2x64xf32>
    %1011 = math.exp %1010 : vector<2x64xf32>
    %cst_85 = arith.constant 1.000000e+00 : f32
    %1012 = vector.broadcast %cst_85 : f32 to vector<2x64xf32>
    %1013 = arith.addf %1012, %1011 : vector<2x64xf32>
    %1014 = arith.divf %1012, %1013 : vector<2x64xf32>
    %1015 = vector.extract_strided_slice %1014 {offsets = [0, 0], sizes = [2, 8], strides = [1, 1]} : vector<2x64xf32> to vector<2x8xf32>
    %1016 = vector.extract_strided_slice %1014 {offsets = [0, 8], sizes = [2, 8], strides = [1, 1]} : vector<2x64xf32> to vector<2x8xf32>
    %1017 = vector.extract_strided_slice %1014 {offsets = [0, 16], sizes = [2, 8], strides = [1, 1]} : vector<2x64xf32> to vector<2x8xf32>
    %1018 = vector.extract_strided_slice %1014 {offsets = [0, 24], sizes = [2, 8], strides = [1, 1]} : vector<2x64xf32> to vector<2x8xf32>
    %cst_86 = arith.constant 2.000000e+00 : f32
    %1019 = vector.broadcast %cst_86 : f32 to vector<2x8xf32>
    %1020 = arith.mulf %1019, %1018 : vector<2x8xf32>
    %cst_87 = arith.constant 1.000000e+00 : f32
    %1021 = vector.broadcast %cst_87 : f32 to vector<2x8xf32>
    %1022 = arith.subf %1020, %1021 : vector<2x8xf32>
    %1023 = arith.mulf %1016, %967 : vector<2x8xf32>
    %1024 = arith.mulf %1015, %1022 : vector<2x8xf32>
    %1025 = arith.addf %1023, %1024 : vector<2x8xf32>
    %1026 = math.tanh %1025 : vector<2x8xf32>
    %1027 = arith.mulf %1017, %1026 : vector<2x8xf32>
    %1028 = vector.extract_strided_slice %1027 {offsets = [0, 0], sizes = [2, 1], strides = [1, 1]} : vector<2x8xf32> to vector<2x1xf32>
    %1029 = vector.broadcast %1028 : vector<2x1xf32> to vector<2x64xf32>
    %1030 = vector.broadcast %773 : vector<1x64xf32> to vector<2x64xf32>
    %1031 = arith.mulf %1029, %1030 : vector<2x64xf32>
    %1032 = vector.extract_strided_slice %1027 {offsets = [0, 1], sizes = [2, 1], strides = [1, 1]} : vector<2x8xf32> to vector<2x1xf32>
    %1033 = vector.broadcast %1032 : vector<2x1xf32> to vector<2x64xf32>
    %1034 = vector.broadcast %774 : vector<1x64xf32> to vector<2x64xf32>
    %1035 = arith.mulf %1033, %1034 : vector<2x64xf32>
    %1036 = vector.extract_strided_slice %1027 {offsets = [0, 2], sizes = [2, 1], strides = [1, 1]} : vector<2x8xf32> to vector<2x1xf32>
    %1037 = vector.broadcast %1036 : vector<2x1xf32> to vector<2x64xf32>
    %1038 = vector.broadcast %775 : vector<1x64xf32> to vector<2x64xf32>
    %1039 = arith.mulf %1037, %1038 : vector<2x64xf32>
    %1040 = vector.extract_strided_slice %1027 {offsets = [0, 3], sizes = [2, 1], strides = [1, 1]} : vector<2x8xf32> to vector<2x1xf32>
    %1041 = vector.broadcast %1040 : vector<2x1xf32> to vector<2x64xf32>
    %1042 = vector.broadcast %776 : vector<1x64xf32> to vector<2x64xf32>
    %1043 = arith.mulf %1041, %1042 : vector<2x64xf32>
    %1044 = vector.extract_strided_slice %1027 {offsets = [0, 4], sizes = [2, 1], strides = [1, 1]} : vector<2x8xf32> to vector<2x1xf32>
    %1045 = vector.broadcast %1044 : vector<2x1xf32> to vector<2x64xf32>
    %1046 = vector.broadcast %777 : vector<1x64xf32> to vector<2x64xf32>
    %1047 = arith.mulf %1045, %1046 : vector<2x64xf32>
    %1048 = vector.extract_strided_slice %1027 {offsets = [0, 5], sizes = [2, 1], strides = [1, 1]} : vector<2x8xf32> to vector<2x1xf32>
    %1049 = vector.broadcast %1048 : vector<2x1xf32> to vector<2x64xf32>
    %1050 = vector.broadcast %778 : vector<1x64xf32> to vector<2x64xf32>
    %1051 = arith.mulf %1049, %1050 : vector<2x64xf32>
    %1052 = vector.extract_strided_slice %1027 {offsets = [0, 6], sizes = [2, 1], strides = [1, 1]} : vector<2x8xf32> to vector<2x1xf32>
    %1053 = vector.broadcast %1052 : vector<2x1xf32> to vector<2x64xf32>
    %1054 = vector.broadcast %779 : vector<1x64xf32> to vector<2x64xf32>
    %1055 = arith.mulf %1053, %1054 : vector<2x64xf32>
    %1056 = vector.extract_strided_slice %1027 {offsets = [0, 7], sizes = [2, 1], strides = [1, 1]} : vector<2x8xf32> to vector<2x1xf32>
    %1057 = vector.broadcast %1056 : vector<2x1xf32> to vector<2x64xf32>
    %1058 = vector.broadcast %780 : vector<1x64xf32> to vector<2x64xf32>
    %1059 = arith.mulf %1057, %1058 : vector<2x64xf32>
    %1060 = arith.addf %1031, %1035 : vector<2x64xf32>
    %1061 = arith.addf %1039, %1043 : vector<2x64xf32>
    %1062 = arith.addf %1047, %1051 : vector<2x64xf32>
    %1063 = arith.addf %1055, %1059 : vector<2x64xf32>
    %1064 = arith.addf %1060, %1061 : vector<2x64xf32>
    %1065 = arith.addf %1062, %1063 : vector<2x64xf32>
    %1066 = arith.addf %1064, %1065 : vector<2x64xf32>
    %1067 = arith.addf %769, %1066 : vector<2x64xf32>
    %1068 = arith.negf %1067 : vector<2x64xf32>
    %1069 = math.exp %1068 : vector<2x64xf32>
    %cst_88 = arith.constant 1.000000e+00 : f32
    %1070 = vector.broadcast %cst_88 : f32 to vector<2x64xf32>
    %1071 = arith.addf %1070, %1069 : vector<2x64xf32>
    %1072 = arith.divf %1070, %1071 : vector<2x64xf32>
    %1073 = vector.extract_strided_slice %1072 {offsets = [0, 0], sizes = [2, 8], strides = [1, 1]} : vector<2x64xf32> to vector<2x8xf32>
    %1074 = vector.extract_strided_slice %1072 {offsets = [0, 8], sizes = [2, 8], strides = [1, 1]} : vector<2x64xf32> to vector<2x8xf32>
    %1075 = vector.extract_strided_slice %1072 {offsets = [0, 16], sizes = [2, 8], strides = [1, 1]} : vector<2x64xf32> to vector<2x8xf32>
    %1076 = vector.extract_strided_slice %1072 {offsets = [0, 24], sizes = [2, 8], strides = [1, 1]} : vector<2x64xf32> to vector<2x8xf32>
    %cst_89 = arith.constant 2.000000e+00 : f32
    %1077 = vector.broadcast %cst_89 : f32 to vector<2x8xf32>
    %1078 = arith.mulf %1077, %1076 : vector<2x8xf32>
    %cst_90 = arith.constant 1.000000e+00 : f32
    %1079 = vector.broadcast %cst_90 : f32 to vector<2x8xf32>
    %1080 = arith.subf %1078, %1079 : vector<2x8xf32>
    %1081 = arith.mulf %1074, %1025 : vector<2x8xf32>
    %1082 = arith.mulf %1073, %1080 : vector<2x8xf32>
    %1083 = arith.addf %1081, %1082 : vector<2x8xf32>
    %1084 = math.tanh %1083 : vector<2x8xf32>
    %1085 = arith.mulf %1075, %1084 : vector<2x8xf32>
    %1086 = vector.extract_strided_slice %1085 {offsets = [0, 0], sizes = [2, 1], strides = [1, 1]} : vector<2x8xf32> to vector<2x1xf32>
    %1087 = vector.broadcast %1086 : vector<2x1xf32> to vector<2x64xf32>
    %1088 = vector.broadcast %773 : vector<1x64xf32> to vector<2x64xf32>
    %1089 = arith.mulf %1087, %1088 : vector<2x64xf32>
    %1090 = vector.extract_strided_slice %1085 {offsets = [0, 1], sizes = [2, 1], strides = [1, 1]} : vector<2x8xf32> to vector<2x1xf32>
    %1091 = vector.broadcast %1090 : vector<2x1xf32> to vector<2x64xf32>
    %1092 = vector.broadcast %774 : vector<1x64xf32> to vector<2x64xf32>
    %1093 = arith.mulf %1091, %1092 : vector<2x64xf32>
    %1094 = vector.extract_strided_slice %1085 {offsets = [0, 2], sizes = [2, 1], strides = [1, 1]} : vector<2x8xf32> to vector<2x1xf32>
    %1095 = vector.broadcast %1094 : vector<2x1xf32> to vector<2x64xf32>
    %1096 = vector.broadcast %775 : vector<1x64xf32> to vector<2x64xf32>
    %1097 = arith.mulf %1095, %1096 : vector<2x64xf32>
    %1098 = vector.extract_strided_slice %1085 {offsets = [0, 3], sizes = [2, 1], strides = [1, 1]} : vector<2x8xf32> to vector<2x1xf32>
    %1099 = vector.broadcast %1098 : vector<2x1xf32> to vector<2x64xf32>
    %1100 = vector.broadcast %776 : vector<1x64xf32> to vector<2x64xf32>
    %1101 = arith.mulf %1099, %1100 : vector<2x64xf32>
    %1102 = vector.extract_strided_slice %1085 {offsets = [0, 4], sizes = [2, 1], strides = [1, 1]} : vector<2x8xf32> to vector<2x1xf32>
    %1103 = vector.broadcast %1102 : vector<2x1xf32> to vector<2x64xf32>
    %1104 = vector.broadcast %777 : vector<1x64xf32> to vector<2x64xf32>
    %1105 = arith.mulf %1103, %1104 : vector<2x64xf32>
    %1106 = vector.extract_strided_slice %1085 {offsets = [0, 5], sizes = [2, 1], strides = [1, 1]} : vector<2x8xf32> to vector<2x1xf32>
    %1107 = vector.broadcast %1106 : vector<2x1xf32> to vector<2x64xf32>
    %1108 = vector.broadcast %778 : vector<1x64xf32> to vector<2x64xf32>
    %1109 = arith.mulf %1107, %1108 : vector<2x64xf32>
    %1110 = vector.extract_strided_slice %1085 {offsets = [0, 6], sizes = [2, 1], strides = [1, 1]} : vector<2x8xf32> to vector<2x1xf32>
    %1111 = vector.broadcast %1110 : vector<2x1xf32> to vector<2x64xf32>
    %1112 = vector.broadcast %779 : vector<1x64xf32> to vector<2x64xf32>
    %1113 = arith.mulf %1111, %1112 : vector<2x64xf32>
    %1114 = vector.extract_strided_slice %1085 {offsets = [0, 7], sizes = [2, 1], strides = [1, 1]} : vector<2x8xf32> to vector<2x1xf32>
    %1115 = vector.broadcast %1114 : vector<2x1xf32> to vector<2x64xf32>
    %1116 = vector.broadcast %780 : vector<1x64xf32> to vector<2x64xf32>
    %1117 = arith.mulf %1115, %1116 : vector<2x64xf32>
    %1118 = arith.addf %1089, %1093 : vector<2x64xf32>
    %1119 = arith.addf %1097, %1101 : vector<2x64xf32>
    %1120 = arith.addf %1105, %1109 : vector<2x64xf32>
    %1121 = arith.addf %1113, %1117 : vector<2x64xf32>
    %1122 = arith.addf %1118, %1119 : vector<2x64xf32>
    %1123 = arith.addf %1120, %1121 : vector<2x64xf32>
    %1124 = arith.addf %1122, %1123 : vector<2x64xf32>
    %1125 = arith.addf %770, %1124 : vector<2x64xf32>
    %1126 = arith.negf %1125 : vector<2x64xf32>
    %1127 = math.exp %1126 : vector<2x64xf32>
    %cst_91 = arith.constant 1.000000e+00 : f32
    %1128 = vector.broadcast %cst_91 : f32 to vector<2x64xf32>
    %1129 = arith.addf %1128, %1127 : vector<2x64xf32>
    %1130 = arith.divf %1128, %1129 : vector<2x64xf32>
    %1131 = vector.extract_strided_slice %1130 {offsets = [0, 0], sizes = [2, 8], strides = [1, 1]} : vector<2x64xf32> to vector<2x8xf32>
    %1132 = vector.extract_strided_slice %1130 {offsets = [0, 8], sizes = [2, 8], strides = [1, 1]} : vector<2x64xf32> to vector<2x8xf32>
    %1133 = vector.extract_strided_slice %1130 {offsets = [0, 16], sizes = [2, 8], strides = [1, 1]} : vector<2x64xf32> to vector<2x8xf32>
    %1134 = vector.extract_strided_slice %1130 {offsets = [0, 24], sizes = [2, 8], strides = [1, 1]} : vector<2x64xf32> to vector<2x8xf32>
    %cst_92 = arith.constant 2.000000e+00 : f32
    %1135 = vector.broadcast %cst_92 : f32 to vector<2x8xf32>
    %1136 = arith.mulf %1135, %1134 : vector<2x8xf32>
    %cst_93 = arith.constant 1.000000e+00 : f32
    %1137 = vector.broadcast %cst_93 : f32 to vector<2x8xf32>
    %1138 = arith.subf %1136, %1137 : vector<2x8xf32>
    %1139 = arith.mulf %1132, %1083 : vector<2x8xf32>
    %1140 = arith.mulf %1131, %1138 : vector<2x8xf32>
    %1141 = arith.addf %1139, %1140 : vector<2x8xf32>
    %1142 = math.tanh %1141 : vector<2x8xf32>
    %1143 = arith.mulf %1133, %1142 : vector<2x8xf32>
    %1144 = vector.extract_strided_slice %1143 {offsets = [0, 0], sizes = [2, 1], strides = [1, 1]} : vector<2x8xf32> to vector<2x1xf32>
    %1145 = vector.broadcast %1144 : vector<2x1xf32> to vector<2x64xf32>
    %1146 = vector.broadcast %773 : vector<1x64xf32> to vector<2x64xf32>
    %1147 = arith.mulf %1145, %1146 : vector<2x64xf32>
    %1148 = vector.extract_strided_slice %1143 {offsets = [0, 1], sizes = [2, 1], strides = [1, 1]} : vector<2x8xf32> to vector<2x1xf32>
    %1149 = vector.broadcast %1148 : vector<2x1xf32> to vector<2x64xf32>
    %1150 = vector.broadcast %774 : vector<1x64xf32> to vector<2x64xf32>
    %1151 = arith.mulf %1149, %1150 : vector<2x64xf32>
    %1152 = vector.extract_strided_slice %1143 {offsets = [0, 2], sizes = [2, 1], strides = [1, 1]} : vector<2x8xf32> to vector<2x1xf32>
    %1153 = vector.broadcast %1152 : vector<2x1xf32> to vector<2x64xf32>
    %1154 = vector.broadcast %775 : vector<1x64xf32> to vector<2x64xf32>
    %1155 = arith.mulf %1153, %1154 : vector<2x64xf32>
    %1156 = vector.extract_strided_slice %1143 {offsets = [0, 3], sizes = [2, 1], strides = [1, 1]} : vector<2x8xf32> to vector<2x1xf32>
    %1157 = vector.broadcast %1156 : vector<2x1xf32> to vector<2x64xf32>
    %1158 = vector.broadcast %776 : vector<1x64xf32> to vector<2x64xf32>
    %1159 = arith.mulf %1157, %1158 : vector<2x64xf32>
    %1160 = vector.extract_strided_slice %1143 {offsets = [0, 4], sizes = [2, 1], strides = [1, 1]} : vector<2x8xf32> to vector<2x1xf32>
    %1161 = vector.broadcast %1160 : vector<2x1xf32> to vector<2x64xf32>
    %1162 = vector.broadcast %777 : vector<1x64xf32> to vector<2x64xf32>
    %1163 = arith.mulf %1161, %1162 : vector<2x64xf32>
    %1164 = vector.extract_strided_slice %1143 {offsets = [0, 5], sizes = [2, 1], strides = [1, 1]} : vector<2x8xf32> to vector<2x1xf32>
    %1165 = vector.broadcast %1164 : vector<2x1xf32> to vector<2x64xf32>
    %1166 = vector.broadcast %778 : vector<1x64xf32> to vector<2x64xf32>
    %1167 = arith.mulf %1165, %1166 : vector<2x64xf32>
    %1168 = vector.extract_strided_slice %1143 {offsets = [0, 6], sizes = [2, 1], strides = [1, 1]} : vector<2x8xf32> to vector<2x1xf32>
    %1169 = vector.broadcast %1168 : vector<2x1xf32> to vector<2x64xf32>
    %1170 = vector.broadcast %779 : vector<1x64xf32> to vector<2x64xf32>
    %1171 = arith.mulf %1169, %1170 : vector<2x64xf32>
    %1172 = vector.extract_strided_slice %1143 {offsets = [0, 7], sizes = [2, 1], strides = [1, 1]} : vector<2x8xf32> to vector<2x1xf32>
    %1173 = vector.broadcast %1172 : vector<2x1xf32> to vector<2x64xf32>
    %1174 = vector.broadcast %780 : vector<1x64xf32> to vector<2x64xf32>
    %1175 = arith.mulf %1173, %1174 : vector<2x64xf32>
    %1176 = arith.addf %1147, %1151 : vector<2x64xf32>
    %1177 = arith.addf %1155, %1159 : vector<2x64xf32>
    %1178 = arith.addf %1163, %1167 : vector<2x64xf32>
    %1179 = arith.addf %1171, %1175 : vector<2x64xf32>
    %1180 = arith.addf %1176, %1177 : vector<2x64xf32>
    %1181 = arith.addf %1178, %1179 : vector<2x64xf32>
    %1182 = arith.addf %1180, %1181 : vector<2x64xf32>
    %1183 = arith.addf %771, %1182 : vector<2x64xf32>
    %1184 = arith.negf %1183 : vector<2x64xf32>
    %1185 = math.exp %1184 : vector<2x64xf32>
    %cst_94 = arith.constant 1.000000e+00 : f32
    %1186 = vector.broadcast %cst_94 : f32 to vector<2x64xf32>
    %1187 = arith.addf %1186, %1185 : vector<2x64xf32>
    %1188 = arith.divf %1186, %1187 : vector<2x64xf32>
    %1189 = vector.extract_strided_slice %1188 {offsets = [0, 0], sizes = [2, 8], strides = [1, 1]} : vector<2x64xf32> to vector<2x8xf32>
    %1190 = vector.extract_strided_slice %1188 {offsets = [0, 8], sizes = [2, 8], strides = [1, 1]} : vector<2x64xf32> to vector<2x8xf32>
    %1191 = vector.extract_strided_slice %1188 {offsets = [0, 16], sizes = [2, 8], strides = [1, 1]} : vector<2x64xf32> to vector<2x8xf32>
    %1192 = vector.extract_strided_slice %1188 {offsets = [0, 24], sizes = [2, 8], strides = [1, 1]} : vector<2x64xf32> to vector<2x8xf32>
    %cst_95 = arith.constant 2.000000e+00 : f32
    %1193 = vector.broadcast %cst_95 : f32 to vector<2x8xf32>
    %1194 = arith.mulf %1193, %1192 : vector<2x8xf32>
    %cst_96 = arith.constant 1.000000e+00 : f32
    %1195 = vector.broadcast %cst_96 : f32 to vector<2x8xf32>
    %1196 = arith.subf %1194, %1195 : vector<2x8xf32>
    %1197 = arith.mulf %1190, %1141 : vector<2x8xf32>
    %1198 = arith.mulf %1189, %1196 : vector<2x8xf32>
    %1199 = arith.addf %1197, %1198 : vector<2x8xf32>
    %1200 = math.tanh %1199 : vector<2x8xf32>
    %1201 = arith.mulf %1191, %1200 : vector<2x8xf32>
    %1202 = tpu.concatenate %795, %853, %911, %969, %1027, %1085, %1143, %1201 in 0 : vector<2x8xf32>, vector<2x8xf32>, vector<2x8xf32>, vector<2x8xf32>, vector<2x8xf32>, vector<2x8xf32>, vector<2x8xf32>, vector<2x8xf32> -> vector<16x8xf32>
    %1203 = tpu.concatenate %1201, %1143, %1085, %1027, %969, %911, %853, %795 in 0 : vector<2x8xf32>, vector<2x8xf32>, vector<2x8xf32>, vector<2x8xf32>, vector<2x8xf32>, vector<2x8xf32>, vector<2x8xf32>, vector<2x8xf32> -> vector<16x8xf32>
    %1204 = tpu.concatenate %1202, %1203 in 1 : vector<16x8xf32>, vector<16x8xf32> -> vector<16x16xf32>
    %c88 = arith.constant 88 : index
    %c0_97 = arith.constant 0 : index
    %1205 = vector.load %arg1[%c88, %c0_97] : memref<168x64xf32, #tpu.memory_space<vmem>>, vector<16x64xf32>
    %c120 = arith.constant 120 : index
    %c0_98 = arith.constant 0 : index
    %1206 = vector.load %arg1[%c120, %c0_98] : memref<168x64xf32, #tpu.memory_space<vmem>>, vector<1x64xf32>
    %cst_99 = arith.constant dense<0.000000e+00> : vector<16x64xf32>
    %1207 = tpu.matmul %1204, %1205, %cst_99 {dimension_numbers = #tpu.dot_dimension_numbers<[1], [0], [0], [1], [0, 0, 1, 1], [], []>, precision = #tpu.contract_precision<fp32>} : vector<16x16xf32>, vector<16x64xf32>, vector<16x64xf32> -> vector<16x64xf32>
    %1208 = vector.broadcast %1206 : vector<1x64xf32> to vector<16x64xf32>
    %1209 = arith.addf %1207, %1208 : vector<16x64xf32>
    %1210 = vector.extract_strided_slice %1209 {offsets = [0, 0], sizes = [2, 64], strides = [1, 1]} : vector<16x64xf32> to vector<2x64xf32>
    %1211 = vector.extract_strided_slice %1209 {offsets = [2, 0], sizes = [2, 64], strides = [1, 1]} : vector<16x64xf32> to vector<2x64xf32>
    %1212 = vector.extract_strided_slice %1209 {offsets = [4, 0], sizes = [2, 64], strides = [1, 1]} : vector<16x64xf32> to vector<2x64xf32>
    %1213 = vector.extract_strided_slice %1209 {offsets = [6, 0], sizes = [2, 64], strides = [1, 1]} : vector<16x64xf32> to vector<2x64xf32>
    %1214 = vector.extract_strided_slice %1209 {offsets = [8, 0], sizes = [2, 64], strides = [1, 1]} : vector<16x64xf32> to vector<2x64xf32>
    %1215 = vector.extract_strided_slice %1209 {offsets = [10, 0], sizes = [2, 64], strides = [1, 1]} : vector<16x64xf32> to vector<2x64xf32>
    %1216 = vector.extract_strided_slice %1209 {offsets = [12, 0], sizes = [2, 64], strides = [1, 1]} : vector<16x64xf32> to vector<2x64xf32>
    %1217 = vector.extract_strided_slice %1209 {offsets = [14, 0], sizes = [2, 64], strides = [1, 1]} : vector<16x64xf32> to vector<2x64xf32>
    %c104 = arith.constant 104 : index
    %c0_100 = arith.constant 0 : index
    %1218 = vector.load %arg1[%c104, %c0_100] : memref<168x64xf32, #tpu.memory_space<vmem>>, vector<16x64xf32>
    %1219 = vector.extract_strided_slice %1218 {offsets = [0, 0], sizes = [1, 64], strides = [1, 1]} : vector<16x64xf32> to vector<1x64xf32>
    %1220 = vector.extract_strided_slice %1218 {offsets = [1, 0], sizes = [1, 64], strides = [1, 1]} : vector<16x64xf32> to vector<1x64xf32>
    %1221 = vector.extract_strided_slice %1218 {offsets = [2, 0], sizes = [1, 64], strides = [1, 1]} : vector<16x64xf32> to vector<1x64xf32>
    %1222 = vector.extract_strided_slice %1218 {offsets = [3, 0], sizes = [1, 64], strides = [1, 1]} : vector<16x64xf32> to vector<1x64xf32>
    %1223 = vector.extract_strided_slice %1218 {offsets = [4, 0], sizes = [1, 64], strides = [1, 1]} : vector<16x64xf32> to vector<1x64xf32>
    %1224 = vector.extract_strided_slice %1218 {offsets = [5, 0], sizes = [1, 64], strides = [1, 1]} : vector<16x64xf32> to vector<1x64xf32>
    %1225 = vector.extract_strided_slice %1218 {offsets = [6, 0], sizes = [1, 64], strides = [1, 1]} : vector<16x64xf32> to vector<1x64xf32>
    %1226 = vector.extract_strided_slice %1218 {offsets = [7, 0], sizes = [1, 64], strides = [1, 1]} : vector<16x64xf32> to vector<1x64xf32>
    %1227 = vector.extract_strided_slice %1218 {offsets = [8, 0], sizes = [1, 64], strides = [1, 1]} : vector<16x64xf32> to vector<1x64xf32>
    %1228 = vector.extract_strided_slice %1218 {offsets = [9, 0], sizes = [1, 64], strides = [1, 1]} : vector<16x64xf32> to vector<1x64xf32>
    %1229 = vector.extract_strided_slice %1218 {offsets = [10, 0], sizes = [1, 64], strides = [1, 1]} : vector<16x64xf32> to vector<1x64xf32>
    %1230 = vector.extract_strided_slice %1218 {offsets = [11, 0], sizes = [1, 64], strides = [1, 1]} : vector<16x64xf32> to vector<1x64xf32>
    %1231 = vector.extract_strided_slice %1218 {offsets = [12, 0], sizes = [1, 64], strides = [1, 1]} : vector<16x64xf32> to vector<1x64xf32>
    %1232 = vector.extract_strided_slice %1218 {offsets = [13, 0], sizes = [1, 64], strides = [1, 1]} : vector<16x64xf32> to vector<1x64xf32>
    %1233 = vector.extract_strided_slice %1218 {offsets = [14, 0], sizes = [1, 64], strides = [1, 1]} : vector<16x64xf32> to vector<1x64xf32>
    %1234 = vector.extract_strided_slice %1218 {offsets = [15, 0], sizes = [1, 64], strides = [1, 1]} : vector<16x64xf32> to vector<1x64xf32>
    %1235 = arith.negf %1210 : vector<2x64xf32>
    %1236 = math.exp %1235 : vector<2x64xf32>
    %cst_101 = arith.constant 1.000000e+00 : f32
    %1237 = vector.broadcast %cst_101 : f32 to vector<2x64xf32>
    %1238 = arith.addf %1237, %1236 : vector<2x64xf32>
    %1239 = arith.divf %1237, %1238 : vector<2x64xf32>
    %1240 = vector.extract_strided_slice %1239 {offsets = [0, 0], sizes = [2, 16], strides = [1, 1]} : vector<2x64xf32> to vector<2x16xf32>
    %1241 = vector.extract_strided_slice %1239 {offsets = [0, 32], sizes = [2, 16], strides = [1, 1]} : vector<2x64xf32> to vector<2x16xf32>
    %1242 = vector.extract_strided_slice %1239 {offsets = [0, 48], sizes = [2, 16], strides = [1, 1]} : vector<2x64xf32> to vector<2x16xf32>
    %cst_102 = arith.constant 2.000000e+00 : f32
    %1243 = vector.broadcast %cst_102 : f32 to vector<2x16xf32>
    %1244 = arith.mulf %1243, %1242 : vector<2x16xf32>
    %cst_103 = arith.constant 1.000000e+00 : f32
    %1245 = vector.broadcast %cst_103 : f32 to vector<2x16xf32>
    %1246 = arith.subf %1244, %1245 : vector<2x16xf32>
    %1247 = arith.mulf %1240, %1246 : vector<2x16xf32>
    %1248 = math.tanh %1247 : vector<2x16xf32>
    %1249 = arith.mulf %1241, %1248 : vector<2x16xf32>
    %1250 = vector.extract_strided_slice %1249 {offsets = [0, 0], sizes = [2, 1], strides = [1, 1]} : vector<2x16xf32> to vector<2x1xf32>
    %1251 = vector.broadcast %1250 : vector<2x1xf32> to vector<2x64xf32>
    %1252 = vector.broadcast %1219 : vector<1x64xf32> to vector<2x64xf32>
    %1253 = arith.mulf %1251, %1252 : vector<2x64xf32>
    %1254 = vector.extract_strided_slice %1249 {offsets = [0, 1], sizes = [2, 1], strides = [1, 1]} : vector<2x16xf32> to vector<2x1xf32>
    %1255 = vector.broadcast %1254 : vector<2x1xf32> to vector<2x64xf32>
    %1256 = vector.broadcast %1220 : vector<1x64xf32> to vector<2x64xf32>
    %1257 = arith.mulf %1255, %1256 : vector<2x64xf32>
    %1258 = vector.extract_strided_slice %1249 {offsets = [0, 2], sizes = [2, 1], strides = [1, 1]} : vector<2x16xf32> to vector<2x1xf32>
    %1259 = vector.broadcast %1258 : vector<2x1xf32> to vector<2x64xf32>
    %1260 = vector.broadcast %1221 : vector<1x64xf32> to vector<2x64xf32>
    %1261 = arith.mulf %1259, %1260 : vector<2x64xf32>
    %1262 = vector.extract_strided_slice %1249 {offsets = [0, 3], sizes = [2, 1], strides = [1, 1]} : vector<2x16xf32> to vector<2x1xf32>
    %1263 = vector.broadcast %1262 : vector<2x1xf32> to vector<2x64xf32>
    %1264 = vector.broadcast %1222 : vector<1x64xf32> to vector<2x64xf32>
    %1265 = arith.mulf %1263, %1264 : vector<2x64xf32>
    %1266 = vector.extract_strided_slice %1249 {offsets = [0, 4], sizes = [2, 1], strides = [1, 1]} : vector<2x16xf32> to vector<2x1xf32>
    %1267 = vector.broadcast %1266 : vector<2x1xf32> to vector<2x64xf32>
    %1268 = vector.broadcast %1223 : vector<1x64xf32> to vector<2x64xf32>
    %1269 = arith.mulf %1267, %1268 : vector<2x64xf32>
    %1270 = vector.extract_strided_slice %1249 {offsets = [0, 5], sizes = [2, 1], strides = [1, 1]} : vector<2x16xf32> to vector<2x1xf32>
    %1271 = vector.broadcast %1270 : vector<2x1xf32> to vector<2x64xf32>
    %1272 = vector.broadcast %1224 : vector<1x64xf32> to vector<2x64xf32>
    %1273 = arith.mulf %1271, %1272 : vector<2x64xf32>
    %1274 = vector.extract_strided_slice %1249 {offsets = [0, 6], sizes = [2, 1], strides = [1, 1]} : vector<2x16xf32> to vector<2x1xf32>
    %1275 = vector.broadcast %1274 : vector<2x1xf32> to vector<2x64xf32>
    %1276 = vector.broadcast %1225 : vector<1x64xf32> to vector<2x64xf32>
    %1277 = arith.mulf %1275, %1276 : vector<2x64xf32>
    %1278 = vector.extract_strided_slice %1249 {offsets = [0, 7], sizes = [2, 1], strides = [1, 1]} : vector<2x16xf32> to vector<2x1xf32>
    %1279 = vector.broadcast %1278 : vector<2x1xf32> to vector<2x64xf32>
    %1280 = vector.broadcast %1226 : vector<1x64xf32> to vector<2x64xf32>
    %1281 = arith.mulf %1279, %1280 : vector<2x64xf32>
    %1282 = vector.extract_strided_slice %1249 {offsets = [0, 8], sizes = [2, 1], strides = [1, 1]} : vector<2x16xf32> to vector<2x1xf32>
    %1283 = vector.broadcast %1282 : vector<2x1xf32> to vector<2x64xf32>
    %1284 = vector.broadcast %1227 : vector<1x64xf32> to vector<2x64xf32>
    %1285 = arith.mulf %1283, %1284 : vector<2x64xf32>
    %1286 = vector.extract_strided_slice %1249 {offsets = [0, 9], sizes = [2, 1], strides = [1, 1]} : vector<2x16xf32> to vector<2x1xf32>
    %1287 = vector.broadcast %1286 : vector<2x1xf32> to vector<2x64xf32>
    %1288 = vector.broadcast %1228 : vector<1x64xf32> to vector<2x64xf32>
    %1289 = arith.mulf %1287, %1288 : vector<2x64xf32>
    %1290 = vector.extract_strided_slice %1249 {offsets = [0, 10], sizes = [2, 1], strides = [1, 1]} : vector<2x16xf32> to vector<2x1xf32>
    %1291 = vector.broadcast %1290 : vector<2x1xf32> to vector<2x64xf32>
    %1292 = vector.broadcast %1229 : vector<1x64xf32> to vector<2x64xf32>
    %1293 = arith.mulf %1291, %1292 : vector<2x64xf32>
    %1294 = vector.extract_strided_slice %1249 {offsets = [0, 11], sizes = [2, 1], strides = [1, 1]} : vector<2x16xf32> to vector<2x1xf32>
    %1295 = vector.broadcast %1294 : vector<2x1xf32> to vector<2x64xf32>
    %1296 = vector.broadcast %1230 : vector<1x64xf32> to vector<2x64xf32>
    %1297 = arith.mulf %1295, %1296 : vector<2x64xf32>
    %1298 = vector.extract_strided_slice %1249 {offsets = [0, 12], sizes = [2, 1], strides = [1, 1]} : vector<2x16xf32> to vector<2x1xf32>
    %1299 = vector.broadcast %1298 : vector<2x1xf32> to vector<2x64xf32>
    %1300 = vector.broadcast %1231 : vector<1x64xf32> to vector<2x64xf32>
    %1301 = arith.mulf %1299, %1300 : vector<2x64xf32>
    %1302 = vector.extract_strided_slice %1249 {offsets = [0, 13], sizes = [2, 1], strides = [1, 1]} : vector<2x16xf32> to vector<2x1xf32>
    %1303 = vector.broadcast %1302 : vector<2x1xf32> to vector<2x64xf32>
    %1304 = vector.broadcast %1232 : vector<1x64xf32> to vector<2x64xf32>
    %1305 = arith.mulf %1303, %1304 : vector<2x64xf32>
    %1306 = vector.extract_strided_slice %1249 {offsets = [0, 14], sizes = [2, 1], strides = [1, 1]} : vector<2x16xf32> to vector<2x1xf32>
    %1307 = vector.broadcast %1306 : vector<2x1xf32> to vector<2x64xf32>
    %1308 = vector.broadcast %1233 : vector<1x64xf32> to vector<2x64xf32>
    %1309 = arith.mulf %1307, %1308 : vector<2x64xf32>
    %1310 = vector.extract_strided_slice %1249 {offsets = [0, 15], sizes = [2, 1], strides = [1, 1]} : vector<2x16xf32> to vector<2x1xf32>
    %1311 = vector.broadcast %1310 : vector<2x1xf32> to vector<2x64xf32>
    %1312 = vector.broadcast %1234 : vector<1x64xf32> to vector<2x64xf32>
    %1313 = arith.mulf %1311, %1312 : vector<2x64xf32>
    %1314 = arith.addf %1253, %1257 : vector<2x64xf32>
    %1315 = arith.addf %1261, %1265 : vector<2x64xf32>
    %1316 = arith.addf %1269, %1273 : vector<2x64xf32>
    %1317 = arith.addf %1277, %1281 : vector<2x64xf32>
    %1318 = arith.addf %1285, %1289 : vector<2x64xf32>
    %1319 = arith.addf %1293, %1297 : vector<2x64xf32>
    %1320 = arith.addf %1301, %1305 : vector<2x64xf32>
    %1321 = arith.addf %1309, %1313 : vector<2x64xf32>
    %1322 = arith.addf %1314, %1315 : vector<2x64xf32>
    %1323 = arith.addf %1316, %1317 : vector<2x64xf32>
    %1324 = arith.addf %1318, %1319 : vector<2x64xf32>
    %1325 = arith.addf %1320, %1321 : vector<2x64xf32>
    %1326 = arith.addf %1322, %1323 : vector<2x64xf32>
    %1327 = arith.addf %1324, %1325 : vector<2x64xf32>
    %1328 = arith.addf %1326, %1327 : vector<2x64xf32>
    %1329 = arith.addf %1211, %1328 : vector<2x64xf32>
    %1330 = arith.negf %1329 : vector<2x64xf32>
    %1331 = math.exp %1330 : vector<2x64xf32>
    %cst_104 = arith.constant 1.000000e+00 : f32
    %1332 = vector.broadcast %cst_104 : f32 to vector<2x64xf32>
    %1333 = arith.addf %1332, %1331 : vector<2x64xf32>
    %1334 = arith.divf %1332, %1333 : vector<2x64xf32>
    %1335 = vector.extract_strided_slice %1334 {offsets = [0, 0], sizes = [2, 16], strides = [1, 1]} : vector<2x64xf32> to vector<2x16xf32>
    %1336 = vector.extract_strided_slice %1334 {offsets = [0, 16], sizes = [2, 16], strides = [1, 1]} : vector<2x64xf32> to vector<2x16xf32>
    %1337 = vector.extract_strided_slice %1334 {offsets = [0, 32], sizes = [2, 16], strides = [1, 1]} : vector<2x64xf32> to vector<2x16xf32>
    %1338 = vector.extract_strided_slice %1334 {offsets = [0, 48], sizes = [2, 16], strides = [1, 1]} : vector<2x64xf32> to vector<2x16xf32>
    %cst_105 = arith.constant 2.000000e+00 : f32
    %1339 = vector.broadcast %cst_105 : f32 to vector<2x16xf32>
    %1340 = arith.mulf %1339, %1338 : vector<2x16xf32>
    %cst_106 = arith.constant 1.000000e+00 : f32
    %1341 = vector.broadcast %cst_106 : f32 to vector<2x16xf32>
    %1342 = arith.subf %1340, %1341 : vector<2x16xf32>
    %1343 = arith.mulf %1336, %1247 : vector<2x16xf32>
    %1344 = arith.mulf %1335, %1342 : vector<2x16xf32>
    %1345 = arith.addf %1343, %1344 : vector<2x16xf32>
    %1346 = math.tanh %1345 : vector<2x16xf32>
    %1347 = arith.mulf %1337, %1346 : vector<2x16xf32>
    %1348 = vector.extract_strided_slice %1347 {offsets = [0, 0], sizes = [2, 1], strides = [1, 1]} : vector<2x16xf32> to vector<2x1xf32>
    %1349 = vector.broadcast %1348 : vector<2x1xf32> to vector<2x64xf32>
    %1350 = vector.broadcast %1219 : vector<1x64xf32> to vector<2x64xf32>
    %1351 = arith.mulf %1349, %1350 : vector<2x64xf32>
    %1352 = vector.extract_strided_slice %1347 {offsets = [0, 1], sizes = [2, 1], strides = [1, 1]} : vector<2x16xf32> to vector<2x1xf32>
    %1353 = vector.broadcast %1352 : vector<2x1xf32> to vector<2x64xf32>
    %1354 = vector.broadcast %1220 : vector<1x64xf32> to vector<2x64xf32>
    %1355 = arith.mulf %1353, %1354 : vector<2x64xf32>
    %1356 = vector.extract_strided_slice %1347 {offsets = [0, 2], sizes = [2, 1], strides = [1, 1]} : vector<2x16xf32> to vector<2x1xf32>
    %1357 = vector.broadcast %1356 : vector<2x1xf32> to vector<2x64xf32>
    %1358 = vector.broadcast %1221 : vector<1x64xf32> to vector<2x64xf32>
    %1359 = arith.mulf %1357, %1358 : vector<2x64xf32>
    %1360 = vector.extract_strided_slice %1347 {offsets = [0, 3], sizes = [2, 1], strides = [1, 1]} : vector<2x16xf32> to vector<2x1xf32>
    %1361 = vector.broadcast %1360 : vector<2x1xf32> to vector<2x64xf32>
    %1362 = vector.broadcast %1222 : vector<1x64xf32> to vector<2x64xf32>
    %1363 = arith.mulf %1361, %1362 : vector<2x64xf32>
    %1364 = vector.extract_strided_slice %1347 {offsets = [0, 4], sizes = [2, 1], strides = [1, 1]} : vector<2x16xf32> to vector<2x1xf32>
    %1365 = vector.broadcast %1364 : vector<2x1xf32> to vector<2x64xf32>
    %1366 = vector.broadcast %1223 : vector<1x64xf32> to vector<2x64xf32>
    %1367 = arith.mulf %1365, %1366 : vector<2x64xf32>
    %1368 = vector.extract_strided_slice %1347 {offsets = [0, 5], sizes = [2, 1], strides = [1, 1]} : vector<2x16xf32> to vector<2x1xf32>
    %1369 = vector.broadcast %1368 : vector<2x1xf32> to vector<2x64xf32>
    %1370 = vector.broadcast %1224 : vector<1x64xf32> to vector<2x64xf32>
    %1371 = arith.mulf %1369, %1370 : vector<2x64xf32>
    %1372 = vector.extract_strided_slice %1347 {offsets = [0, 6], sizes = [2, 1], strides = [1, 1]} : vector<2x16xf32> to vector<2x1xf32>
    %1373 = vector.broadcast %1372 : vector<2x1xf32> to vector<2x64xf32>
    %1374 = vector.broadcast %1225 : vector<1x64xf32> to vector<2x64xf32>
    %1375 = arith.mulf %1373, %1374 : vector<2x64xf32>
    %1376 = vector.extract_strided_slice %1347 {offsets = [0, 7], sizes = [2, 1], strides = [1, 1]} : vector<2x16xf32> to vector<2x1xf32>
    %1377 = vector.broadcast %1376 : vector<2x1xf32> to vector<2x64xf32>
    %1378 = vector.broadcast %1226 : vector<1x64xf32> to vector<2x64xf32>
    %1379 = arith.mulf %1377, %1378 : vector<2x64xf32>
    %1380 = vector.extract_strided_slice %1347 {offsets = [0, 8], sizes = [2, 1], strides = [1, 1]} : vector<2x16xf32> to vector<2x1xf32>
    %1381 = vector.broadcast %1380 : vector<2x1xf32> to vector<2x64xf32>
    %1382 = vector.broadcast %1227 : vector<1x64xf32> to vector<2x64xf32>
    %1383 = arith.mulf %1381, %1382 : vector<2x64xf32>
    %1384 = vector.extract_strided_slice %1347 {offsets = [0, 9], sizes = [2, 1], strides = [1, 1]} : vector<2x16xf32> to vector<2x1xf32>
    %1385 = vector.broadcast %1384 : vector<2x1xf32> to vector<2x64xf32>
    %1386 = vector.broadcast %1228 : vector<1x64xf32> to vector<2x64xf32>
    %1387 = arith.mulf %1385, %1386 : vector<2x64xf32>
    %1388 = vector.extract_strided_slice %1347 {offsets = [0, 10], sizes = [2, 1], strides = [1, 1]} : vector<2x16xf32> to vector<2x1xf32>
    %1389 = vector.broadcast %1388 : vector<2x1xf32> to vector<2x64xf32>
    %1390 = vector.broadcast %1229 : vector<1x64xf32> to vector<2x64xf32>
    %1391 = arith.mulf %1389, %1390 : vector<2x64xf32>
    %1392 = vector.extract_strided_slice %1347 {offsets = [0, 11], sizes = [2, 1], strides = [1, 1]} : vector<2x16xf32> to vector<2x1xf32>
    %1393 = vector.broadcast %1392 : vector<2x1xf32> to vector<2x64xf32>
    %1394 = vector.broadcast %1230 : vector<1x64xf32> to vector<2x64xf32>
    %1395 = arith.mulf %1393, %1394 : vector<2x64xf32>
    %1396 = vector.extract_strided_slice %1347 {offsets = [0, 12], sizes = [2, 1], strides = [1, 1]} : vector<2x16xf32> to vector<2x1xf32>
    %1397 = vector.broadcast %1396 : vector<2x1xf32> to vector<2x64xf32>
    %1398 = vector.broadcast %1231 : vector<1x64xf32> to vector<2x64xf32>
    %1399 = arith.mulf %1397, %1398 : vector<2x64xf32>
    %1400 = vector.extract_strided_slice %1347 {offsets = [0, 13], sizes = [2, 1], strides = [1, 1]} : vector<2x16xf32> to vector<2x1xf32>
    %1401 = vector.broadcast %1400 : vector<2x1xf32> to vector<2x64xf32>
    %1402 = vector.broadcast %1232 : vector<1x64xf32> to vector<2x64xf32>
    %1403 = arith.mulf %1401, %1402 : vector<2x64xf32>
    %1404 = vector.extract_strided_slice %1347 {offsets = [0, 14], sizes = [2, 1], strides = [1, 1]} : vector<2x16xf32> to vector<2x1xf32>
    %1405 = vector.broadcast %1404 : vector<2x1xf32> to vector<2x64xf32>
    %1406 = vector.broadcast %1233 : vector<1x64xf32> to vector<2x64xf32>
    %1407 = arith.mulf %1405, %1406 : vector<2x64xf32>
    %1408 = vector.extract_strided_slice %1347 {offsets = [0, 15], sizes = [2, 1], strides = [1, 1]} : vector<2x16xf32> to vector<2x1xf32>
    %1409 = vector.broadcast %1408 : vector<2x1xf32> to vector<2x64xf32>
    %1410 = vector.broadcast %1234 : vector<1x64xf32> to vector<2x64xf32>
    %1411 = arith.mulf %1409, %1410 : vector<2x64xf32>
    %1412 = arith.addf %1351, %1355 : vector<2x64xf32>
    %1413 = arith.addf %1359, %1363 : vector<2x64xf32>
    %1414 = arith.addf %1367, %1371 : vector<2x64xf32>
    %1415 = arith.addf %1375, %1379 : vector<2x64xf32>
    %1416 = arith.addf %1383, %1387 : vector<2x64xf32>
    %1417 = arith.addf %1391, %1395 : vector<2x64xf32>
    %1418 = arith.addf %1399, %1403 : vector<2x64xf32>
    %1419 = arith.addf %1407, %1411 : vector<2x64xf32>
    %1420 = arith.addf %1412, %1413 : vector<2x64xf32>
    %1421 = arith.addf %1414, %1415 : vector<2x64xf32>
    %1422 = arith.addf %1416, %1417 : vector<2x64xf32>
    %1423 = arith.addf %1418, %1419 : vector<2x64xf32>
    %1424 = arith.addf %1420, %1421 : vector<2x64xf32>
    %1425 = arith.addf %1422, %1423 : vector<2x64xf32>
    %1426 = arith.addf %1424, %1425 : vector<2x64xf32>
    %1427 = arith.addf %1212, %1426 : vector<2x64xf32>
    %1428 = arith.negf %1427 : vector<2x64xf32>
    %1429 = math.exp %1428 : vector<2x64xf32>
    %cst_107 = arith.constant 1.000000e+00 : f32
    %1430 = vector.broadcast %cst_107 : f32 to vector<2x64xf32>
    %1431 = arith.addf %1430, %1429 : vector<2x64xf32>
    %1432 = arith.divf %1430, %1431 : vector<2x64xf32>
    %1433 = vector.extract_strided_slice %1432 {offsets = [0, 0], sizes = [2, 16], strides = [1, 1]} : vector<2x64xf32> to vector<2x16xf32>
    %1434 = vector.extract_strided_slice %1432 {offsets = [0, 16], sizes = [2, 16], strides = [1, 1]} : vector<2x64xf32> to vector<2x16xf32>
    %1435 = vector.extract_strided_slice %1432 {offsets = [0, 32], sizes = [2, 16], strides = [1, 1]} : vector<2x64xf32> to vector<2x16xf32>
    %1436 = vector.extract_strided_slice %1432 {offsets = [0, 48], sizes = [2, 16], strides = [1, 1]} : vector<2x64xf32> to vector<2x16xf32>
    %cst_108 = arith.constant 2.000000e+00 : f32
    %1437 = vector.broadcast %cst_108 : f32 to vector<2x16xf32>
    %1438 = arith.mulf %1437, %1436 : vector<2x16xf32>
    %cst_109 = arith.constant 1.000000e+00 : f32
    %1439 = vector.broadcast %cst_109 : f32 to vector<2x16xf32>
    %1440 = arith.subf %1438, %1439 : vector<2x16xf32>
    %1441 = arith.mulf %1434, %1345 : vector<2x16xf32>
    %1442 = arith.mulf %1433, %1440 : vector<2x16xf32>
    %1443 = arith.addf %1441, %1442 : vector<2x16xf32>
    %1444 = math.tanh %1443 : vector<2x16xf32>
    %1445 = arith.mulf %1435, %1444 : vector<2x16xf32>
    %1446 = vector.extract_strided_slice %1445 {offsets = [0, 0], sizes = [2, 1], strides = [1, 1]} : vector<2x16xf32> to vector<2x1xf32>
    %1447 = vector.broadcast %1446 : vector<2x1xf32> to vector<2x64xf32>
    %1448 = vector.broadcast %1219 : vector<1x64xf32> to vector<2x64xf32>
    %1449 = arith.mulf %1447, %1448 : vector<2x64xf32>
    %1450 = vector.extract_strided_slice %1445 {offsets = [0, 1], sizes = [2, 1], strides = [1, 1]} : vector<2x16xf32> to vector<2x1xf32>
    %1451 = vector.broadcast %1450 : vector<2x1xf32> to vector<2x64xf32>
    %1452 = vector.broadcast %1220 : vector<1x64xf32> to vector<2x64xf32>
    %1453 = arith.mulf %1451, %1452 : vector<2x64xf32>
    %1454 = vector.extract_strided_slice %1445 {offsets = [0, 2], sizes = [2, 1], strides = [1, 1]} : vector<2x16xf32> to vector<2x1xf32>
    %1455 = vector.broadcast %1454 : vector<2x1xf32> to vector<2x64xf32>
    %1456 = vector.broadcast %1221 : vector<1x64xf32> to vector<2x64xf32>
    %1457 = arith.mulf %1455, %1456 : vector<2x64xf32>
    %1458 = vector.extract_strided_slice %1445 {offsets = [0, 3], sizes = [2, 1], strides = [1, 1]} : vector<2x16xf32> to vector<2x1xf32>
    %1459 = vector.broadcast %1458 : vector<2x1xf32> to vector<2x64xf32>
    %1460 = vector.broadcast %1222 : vector<1x64xf32> to vector<2x64xf32>
    %1461 = arith.mulf %1459, %1460 : vector<2x64xf32>
    %1462 = vector.extract_strided_slice %1445 {offsets = [0, 4], sizes = [2, 1], strides = [1, 1]} : vector<2x16xf32> to vector<2x1xf32>
    %1463 = vector.broadcast %1462 : vector<2x1xf32> to vector<2x64xf32>
    %1464 = vector.broadcast %1223 : vector<1x64xf32> to vector<2x64xf32>
    %1465 = arith.mulf %1463, %1464 : vector<2x64xf32>
    %1466 = vector.extract_strided_slice %1445 {offsets = [0, 5], sizes = [2, 1], strides = [1, 1]} : vector<2x16xf32> to vector<2x1xf32>
    %1467 = vector.broadcast %1466 : vector<2x1xf32> to vector<2x64xf32>
    %1468 = vector.broadcast %1224 : vector<1x64xf32> to vector<2x64xf32>
    %1469 = arith.mulf %1467, %1468 : vector<2x64xf32>
    %1470 = vector.extract_strided_slice %1445 {offsets = [0, 6], sizes = [2, 1], strides = [1, 1]} : vector<2x16xf32> to vector<2x1xf32>
    %1471 = vector.broadcast %1470 : vector<2x1xf32> to vector<2x64xf32>
    %1472 = vector.broadcast %1225 : vector<1x64xf32> to vector<2x64xf32>
    %1473 = arith.mulf %1471, %1472 : vector<2x64xf32>
    %1474 = vector.extract_strided_slice %1445 {offsets = [0, 7], sizes = [2, 1], strides = [1, 1]} : vector<2x16xf32> to vector<2x1xf32>
    %1475 = vector.broadcast %1474 : vector<2x1xf32> to vector<2x64xf32>
    %1476 = vector.broadcast %1226 : vector<1x64xf32> to vector<2x64xf32>
    %1477 = arith.mulf %1475, %1476 : vector<2x64xf32>
    %1478 = vector.extract_strided_slice %1445 {offsets = [0, 8], sizes = [2, 1], strides = [1, 1]} : vector<2x16xf32> to vector<2x1xf32>
    %1479 = vector.broadcast %1478 : vector<2x1xf32> to vector<2x64xf32>
    %1480 = vector.broadcast %1227 : vector<1x64xf32> to vector<2x64xf32>
    %1481 = arith.mulf %1479, %1480 : vector<2x64xf32>
    %1482 = vector.extract_strided_slice %1445 {offsets = [0, 9], sizes = [2, 1], strides = [1, 1]} : vector<2x16xf32> to vector<2x1xf32>
    %1483 = vector.broadcast %1482 : vector<2x1xf32> to vector<2x64xf32>
    %1484 = vector.broadcast %1228 : vector<1x64xf32> to vector<2x64xf32>
    %1485 = arith.mulf %1483, %1484 : vector<2x64xf32>
    %1486 = vector.extract_strided_slice %1445 {offsets = [0, 10], sizes = [2, 1], strides = [1, 1]} : vector<2x16xf32> to vector<2x1xf32>
    %1487 = vector.broadcast %1486 : vector<2x1xf32> to vector<2x64xf32>
    %1488 = vector.broadcast %1229 : vector<1x64xf32> to vector<2x64xf32>
    %1489 = arith.mulf %1487, %1488 : vector<2x64xf32>
    %1490 = vector.extract_strided_slice %1445 {offsets = [0, 11], sizes = [2, 1], strides = [1, 1]} : vector<2x16xf32> to vector<2x1xf32>
    %1491 = vector.broadcast %1490 : vector<2x1xf32> to vector<2x64xf32>
    %1492 = vector.broadcast %1230 : vector<1x64xf32> to vector<2x64xf32>
    %1493 = arith.mulf %1491, %1492 : vector<2x64xf32>
    %1494 = vector.extract_strided_slice %1445 {offsets = [0, 12], sizes = [2, 1], strides = [1, 1]} : vector<2x16xf32> to vector<2x1xf32>
    %1495 = vector.broadcast %1494 : vector<2x1xf32> to vector<2x64xf32>
    %1496 = vector.broadcast %1231 : vector<1x64xf32> to vector<2x64xf32>
    %1497 = arith.mulf %1495, %1496 : vector<2x64xf32>
    %1498 = vector.extract_strided_slice %1445 {offsets = [0, 13], sizes = [2, 1], strides = [1, 1]} : vector<2x16xf32> to vector<2x1xf32>
    %1499 = vector.broadcast %1498 : vector<2x1xf32> to vector<2x64xf32>
    %1500 = vector.broadcast %1232 : vector<1x64xf32> to vector<2x64xf32>
    %1501 = arith.mulf %1499, %1500 : vector<2x64xf32>
    %1502 = vector.extract_strided_slice %1445 {offsets = [0, 14], sizes = [2, 1], strides = [1, 1]} : vector<2x16xf32> to vector<2x1xf32>
    %1503 = vector.broadcast %1502 : vector<2x1xf32> to vector<2x64xf32>
    %1504 = vector.broadcast %1233 : vector<1x64xf32> to vector<2x64xf32>
    %1505 = arith.mulf %1503, %1504 : vector<2x64xf32>
    %1506 = vector.extract_strided_slice %1445 {offsets = [0, 15], sizes = [2, 1], strides = [1, 1]} : vector<2x16xf32> to vector<2x1xf32>
    %1507 = vector.broadcast %1506 : vector<2x1xf32> to vector<2x64xf32>
    %1508 = vector.broadcast %1234 : vector<1x64xf32> to vector<2x64xf32>
    %1509 = arith.mulf %1507, %1508 : vector<2x64xf32>
    %1510 = arith.addf %1449, %1453 : vector<2x64xf32>
    %1511 = arith.addf %1457, %1461 : vector<2x64xf32>
    %1512 = arith.addf %1465, %1469 : vector<2x64xf32>
    %1513 = arith.addf %1473, %1477 : vector<2x64xf32>
    %1514 = arith.addf %1481, %1485 : vector<2x64xf32>
    %1515 = arith.addf %1489, %1493 : vector<2x64xf32>
    %1516 = arith.addf %1497, %1501 : vector<2x64xf32>
    %1517 = arith.addf %1505, %1509 : vector<2x64xf32>
    %1518 = arith.addf %1510, %1511 : vector<2x64xf32>
    %1519 = arith.addf %1512, %1513 : vector<2x64xf32>
    %1520 = arith.addf %1514, %1515 : vector<2x64xf32>
    %1521 = arith.addf %1516, %1517 : vector<2x64xf32>
    %1522 = arith.addf %1518, %1519 : vector<2x64xf32>
    %1523 = arith.addf %1520, %1521 : vector<2x64xf32>
    %1524 = arith.addf %1522, %1523 : vector<2x64xf32>
    %1525 = arith.addf %1213, %1524 : vector<2x64xf32>
    %1526 = arith.negf %1525 : vector<2x64xf32>
    %1527 = math.exp %1526 : vector<2x64xf32>
    %cst_110 = arith.constant 1.000000e+00 : f32
    %1528 = vector.broadcast %cst_110 : f32 to vector<2x64xf32>
    %1529 = arith.addf %1528, %1527 : vector<2x64xf32>
    %1530 = arith.divf %1528, %1529 : vector<2x64xf32>
    %1531 = vector.extract_strided_slice %1530 {offsets = [0, 0], sizes = [2, 16], strides = [1, 1]} : vector<2x64xf32> to vector<2x16xf32>
    %1532 = vector.extract_strided_slice %1530 {offsets = [0, 16], sizes = [2, 16], strides = [1, 1]} : vector<2x64xf32> to vector<2x16xf32>
    %1533 = vector.extract_strided_slice %1530 {offsets = [0, 32], sizes = [2, 16], strides = [1, 1]} : vector<2x64xf32> to vector<2x16xf32>
    %1534 = vector.extract_strided_slice %1530 {offsets = [0, 48], sizes = [2, 16], strides = [1, 1]} : vector<2x64xf32> to vector<2x16xf32>
    %cst_111 = arith.constant 2.000000e+00 : f32
    %1535 = vector.broadcast %cst_111 : f32 to vector<2x16xf32>
    %1536 = arith.mulf %1535, %1534 : vector<2x16xf32>
    %cst_112 = arith.constant 1.000000e+00 : f32
    %1537 = vector.broadcast %cst_112 : f32 to vector<2x16xf32>
    %1538 = arith.subf %1536, %1537 : vector<2x16xf32>
    %1539 = arith.mulf %1532, %1443 : vector<2x16xf32>
    %1540 = arith.mulf %1531, %1538 : vector<2x16xf32>
    %1541 = arith.addf %1539, %1540 : vector<2x16xf32>
    %1542 = math.tanh %1541 : vector<2x16xf32>
    %1543 = arith.mulf %1533, %1542 : vector<2x16xf32>
    %1544 = vector.extract_strided_slice %1543 {offsets = [0, 0], sizes = [2, 1], strides = [1, 1]} : vector<2x16xf32> to vector<2x1xf32>
    %1545 = vector.broadcast %1544 : vector<2x1xf32> to vector<2x64xf32>
    %1546 = vector.broadcast %1219 : vector<1x64xf32> to vector<2x64xf32>
    %1547 = arith.mulf %1545, %1546 : vector<2x64xf32>
    %1548 = vector.extract_strided_slice %1543 {offsets = [0, 1], sizes = [2, 1], strides = [1, 1]} : vector<2x16xf32> to vector<2x1xf32>
    %1549 = vector.broadcast %1548 : vector<2x1xf32> to vector<2x64xf32>
    %1550 = vector.broadcast %1220 : vector<1x64xf32> to vector<2x64xf32>
    %1551 = arith.mulf %1549, %1550 : vector<2x64xf32>
    %1552 = vector.extract_strided_slice %1543 {offsets = [0, 2], sizes = [2, 1], strides = [1, 1]} : vector<2x16xf32> to vector<2x1xf32>
    %1553 = vector.broadcast %1552 : vector<2x1xf32> to vector<2x64xf32>
    %1554 = vector.broadcast %1221 : vector<1x64xf32> to vector<2x64xf32>
    %1555 = arith.mulf %1553, %1554 : vector<2x64xf32>
    %1556 = vector.extract_strided_slice %1543 {offsets = [0, 3], sizes = [2, 1], strides = [1, 1]} : vector<2x16xf32> to vector<2x1xf32>
    %1557 = vector.broadcast %1556 : vector<2x1xf32> to vector<2x64xf32>
    %1558 = vector.broadcast %1222 : vector<1x64xf32> to vector<2x64xf32>
    %1559 = arith.mulf %1557, %1558 : vector<2x64xf32>
    %1560 = vector.extract_strided_slice %1543 {offsets = [0, 4], sizes = [2, 1], strides = [1, 1]} : vector<2x16xf32> to vector<2x1xf32>
    %1561 = vector.broadcast %1560 : vector<2x1xf32> to vector<2x64xf32>
    %1562 = vector.broadcast %1223 : vector<1x64xf32> to vector<2x64xf32>
    %1563 = arith.mulf %1561, %1562 : vector<2x64xf32>
    %1564 = vector.extract_strided_slice %1543 {offsets = [0, 5], sizes = [2, 1], strides = [1, 1]} : vector<2x16xf32> to vector<2x1xf32>
    %1565 = vector.broadcast %1564 : vector<2x1xf32> to vector<2x64xf32>
    %1566 = vector.broadcast %1224 : vector<1x64xf32> to vector<2x64xf32>
    %1567 = arith.mulf %1565, %1566 : vector<2x64xf32>
    %1568 = vector.extract_strided_slice %1543 {offsets = [0, 6], sizes = [2, 1], strides = [1, 1]} : vector<2x16xf32> to vector<2x1xf32>
    %1569 = vector.broadcast %1568 : vector<2x1xf32> to vector<2x64xf32>
    %1570 = vector.broadcast %1225 : vector<1x64xf32> to vector<2x64xf32>
    %1571 = arith.mulf %1569, %1570 : vector<2x64xf32>
    %1572 = vector.extract_strided_slice %1543 {offsets = [0, 7], sizes = [2, 1], strides = [1, 1]} : vector<2x16xf32> to vector<2x1xf32>
    %1573 = vector.broadcast %1572 : vector<2x1xf32> to vector<2x64xf32>
    %1574 = vector.broadcast %1226 : vector<1x64xf32> to vector<2x64xf32>
    %1575 = arith.mulf %1573, %1574 : vector<2x64xf32>
    %1576 = vector.extract_strided_slice %1543 {offsets = [0, 8], sizes = [2, 1], strides = [1, 1]} : vector<2x16xf32> to vector<2x1xf32>
    %1577 = vector.broadcast %1576 : vector<2x1xf32> to vector<2x64xf32>
    %1578 = vector.broadcast %1227 : vector<1x64xf32> to vector<2x64xf32>
    %1579 = arith.mulf %1577, %1578 : vector<2x64xf32>
    %1580 = vector.extract_strided_slice %1543 {offsets = [0, 9], sizes = [2, 1], strides = [1, 1]} : vector<2x16xf32> to vector<2x1xf32>
    %1581 = vector.broadcast %1580 : vector<2x1xf32> to vector<2x64xf32>
    %1582 = vector.broadcast %1228 : vector<1x64xf32> to vector<2x64xf32>
    %1583 = arith.mulf %1581, %1582 : vector<2x64xf32>
    %1584 = vector.extract_strided_slice %1543 {offsets = [0, 10], sizes = [2, 1], strides = [1, 1]} : vector<2x16xf32> to vector<2x1xf32>
    %1585 = vector.broadcast %1584 : vector<2x1xf32> to vector<2x64xf32>
    %1586 = vector.broadcast %1229 : vector<1x64xf32> to vector<2x64xf32>
    %1587 = arith.mulf %1585, %1586 : vector<2x64xf32>
    %1588 = vector.extract_strided_slice %1543 {offsets = [0, 11], sizes = [2, 1], strides = [1, 1]} : vector<2x16xf32> to vector<2x1xf32>
    %1589 = vector.broadcast %1588 : vector<2x1xf32> to vector<2x64xf32>
    %1590 = vector.broadcast %1230 : vector<1x64xf32> to vector<2x64xf32>
    %1591 = arith.mulf %1589, %1590 : vector<2x64xf32>
    %1592 = vector.extract_strided_slice %1543 {offsets = [0, 12], sizes = [2, 1], strides = [1, 1]} : vector<2x16xf32> to vector<2x1xf32>
    %1593 = vector.broadcast %1592 : vector<2x1xf32> to vector<2x64xf32>
    %1594 = vector.broadcast %1231 : vector<1x64xf32> to vector<2x64xf32>
    %1595 = arith.mulf %1593, %1594 : vector<2x64xf32>
    %1596 = vector.extract_strided_slice %1543 {offsets = [0, 13], sizes = [2, 1], strides = [1, 1]} : vector<2x16xf32> to vector<2x1xf32>
    %1597 = vector.broadcast %1596 : vector<2x1xf32> to vector<2x64xf32>
    %1598 = vector.broadcast %1232 : vector<1x64xf32> to vector<2x64xf32>
    %1599 = arith.mulf %1597, %1598 : vector<2x64xf32>
    %1600 = vector.extract_strided_slice %1543 {offsets = [0, 14], sizes = [2, 1], strides = [1, 1]} : vector<2x16xf32> to vector<2x1xf32>
    %1601 = vector.broadcast %1600 : vector<2x1xf32> to vector<2x64xf32>
    %1602 = vector.broadcast %1233 : vector<1x64xf32> to vector<2x64xf32>
    %1603 = arith.mulf %1601, %1602 : vector<2x64xf32>
    %1604 = vector.extract_strided_slice %1543 {offsets = [0, 15], sizes = [2, 1], strides = [1, 1]} : vector<2x16xf32> to vector<2x1xf32>
    %1605 = vector.broadcast %1604 : vector<2x1xf32> to vector<2x64xf32>
    %1606 = vector.broadcast %1234 : vector<1x64xf32> to vector<2x64xf32>
    %1607 = arith.mulf %1605, %1606 : vector<2x64xf32>
    %1608 = arith.addf %1547, %1551 : vector<2x64xf32>
    %1609 = arith.addf %1555, %1559 : vector<2x64xf32>
    %1610 = arith.addf %1563, %1567 : vector<2x64xf32>
    %1611 = arith.addf %1571, %1575 : vector<2x64xf32>
    %1612 = arith.addf %1579, %1583 : vector<2x64xf32>
    %1613 = arith.addf %1587, %1591 : vector<2x64xf32>
    %1614 = arith.addf %1595, %1599 : vector<2x64xf32>
    %1615 = arith.addf %1603, %1607 : vector<2x64xf32>
    %1616 = arith.addf %1608, %1609 : vector<2x64xf32>
    %1617 = arith.addf %1610, %1611 : vector<2x64xf32>
    %1618 = arith.addf %1612, %1613 : vector<2x64xf32>
    %1619 = arith.addf %1614, %1615 : vector<2x64xf32>
    %1620 = arith.addf %1616, %1617 : vector<2x64xf32>
    %1621 = arith.addf %1618, %1619 : vector<2x64xf32>
    %1622 = arith.addf %1620, %1621 : vector<2x64xf32>
    %1623 = arith.addf %1214, %1622 : vector<2x64xf32>
    %1624 = arith.negf %1623 : vector<2x64xf32>
    %1625 = math.exp %1624 : vector<2x64xf32>
    %cst_113 = arith.constant 1.000000e+00 : f32
    %1626 = vector.broadcast %cst_113 : f32 to vector<2x64xf32>
    %1627 = arith.addf %1626, %1625 : vector<2x64xf32>
    %1628 = arith.divf %1626, %1627 : vector<2x64xf32>
    %1629 = vector.extract_strided_slice %1628 {offsets = [0, 0], sizes = [2, 16], strides = [1, 1]} : vector<2x64xf32> to vector<2x16xf32>
    %1630 = vector.extract_strided_slice %1628 {offsets = [0, 16], sizes = [2, 16], strides = [1, 1]} : vector<2x64xf32> to vector<2x16xf32>
    %1631 = vector.extract_strided_slice %1628 {offsets = [0, 32], sizes = [2, 16], strides = [1, 1]} : vector<2x64xf32> to vector<2x16xf32>
    %1632 = vector.extract_strided_slice %1628 {offsets = [0, 48], sizes = [2, 16], strides = [1, 1]} : vector<2x64xf32> to vector<2x16xf32>
    %cst_114 = arith.constant 2.000000e+00 : f32
    %1633 = vector.broadcast %cst_114 : f32 to vector<2x16xf32>
    %1634 = arith.mulf %1633, %1632 : vector<2x16xf32>
    %cst_115 = arith.constant 1.000000e+00 : f32
    %1635 = vector.broadcast %cst_115 : f32 to vector<2x16xf32>
    %1636 = arith.subf %1634, %1635 : vector<2x16xf32>
    %1637 = arith.mulf %1630, %1541 : vector<2x16xf32>
    %1638 = arith.mulf %1629, %1636 : vector<2x16xf32>
    %1639 = arith.addf %1637, %1638 : vector<2x16xf32>
    %1640 = math.tanh %1639 : vector<2x16xf32>
    %1641 = arith.mulf %1631, %1640 : vector<2x16xf32>
    %1642 = vector.extract_strided_slice %1641 {offsets = [0, 0], sizes = [2, 1], strides = [1, 1]} : vector<2x16xf32> to vector<2x1xf32>
    %1643 = vector.broadcast %1642 : vector<2x1xf32> to vector<2x64xf32>
    %1644 = vector.broadcast %1219 : vector<1x64xf32> to vector<2x64xf32>
    %1645 = arith.mulf %1643, %1644 : vector<2x64xf32>
    %1646 = vector.extract_strided_slice %1641 {offsets = [0, 1], sizes = [2, 1], strides = [1, 1]} : vector<2x16xf32> to vector<2x1xf32>
    %1647 = vector.broadcast %1646 : vector<2x1xf32> to vector<2x64xf32>
    %1648 = vector.broadcast %1220 : vector<1x64xf32> to vector<2x64xf32>
    %1649 = arith.mulf %1647, %1648 : vector<2x64xf32>
    %1650 = vector.extract_strided_slice %1641 {offsets = [0, 2], sizes = [2, 1], strides = [1, 1]} : vector<2x16xf32> to vector<2x1xf32>
    %1651 = vector.broadcast %1650 : vector<2x1xf32> to vector<2x64xf32>
    %1652 = vector.broadcast %1221 : vector<1x64xf32> to vector<2x64xf32>
    %1653 = arith.mulf %1651, %1652 : vector<2x64xf32>
    %1654 = vector.extract_strided_slice %1641 {offsets = [0, 3], sizes = [2, 1], strides = [1, 1]} : vector<2x16xf32> to vector<2x1xf32>
    %1655 = vector.broadcast %1654 : vector<2x1xf32> to vector<2x64xf32>
    %1656 = vector.broadcast %1222 : vector<1x64xf32> to vector<2x64xf32>
    %1657 = arith.mulf %1655, %1656 : vector<2x64xf32>
    %1658 = vector.extract_strided_slice %1641 {offsets = [0, 4], sizes = [2, 1], strides = [1, 1]} : vector<2x16xf32> to vector<2x1xf32>
    %1659 = vector.broadcast %1658 : vector<2x1xf32> to vector<2x64xf32>
    %1660 = vector.broadcast %1223 : vector<1x64xf32> to vector<2x64xf32>
    %1661 = arith.mulf %1659, %1660 : vector<2x64xf32>
    %1662 = vector.extract_strided_slice %1641 {offsets = [0, 5], sizes = [2, 1], strides = [1, 1]} : vector<2x16xf32> to vector<2x1xf32>
    %1663 = vector.broadcast %1662 : vector<2x1xf32> to vector<2x64xf32>
    %1664 = vector.broadcast %1224 : vector<1x64xf32> to vector<2x64xf32>
    %1665 = arith.mulf %1663, %1664 : vector<2x64xf32>
    %1666 = vector.extract_strided_slice %1641 {offsets = [0, 6], sizes = [2, 1], strides = [1, 1]} : vector<2x16xf32> to vector<2x1xf32>
    %1667 = vector.broadcast %1666 : vector<2x1xf32> to vector<2x64xf32>
    %1668 = vector.broadcast %1225 : vector<1x64xf32> to vector<2x64xf32>
    %1669 = arith.mulf %1667, %1668 : vector<2x64xf32>
    %1670 = vector.extract_strided_slice %1641 {offsets = [0, 7], sizes = [2, 1], strides = [1, 1]} : vector<2x16xf32> to vector<2x1xf32>
    %1671 = vector.broadcast %1670 : vector<2x1xf32> to vector<2x64xf32>
    %1672 = vector.broadcast %1226 : vector<1x64xf32> to vector<2x64xf32>
    %1673 = arith.mulf %1671, %1672 : vector<2x64xf32>
    %1674 = vector.extract_strided_slice %1641 {offsets = [0, 8], sizes = [2, 1], strides = [1, 1]} : vector<2x16xf32> to vector<2x1xf32>
    %1675 = vector.broadcast %1674 : vector<2x1xf32> to vector<2x64xf32>
    %1676 = vector.broadcast %1227 : vector<1x64xf32> to vector<2x64xf32>
    %1677 = arith.mulf %1675, %1676 : vector<2x64xf32>
    %1678 = vector.extract_strided_slice %1641 {offsets = [0, 9], sizes = [2, 1], strides = [1, 1]} : vector<2x16xf32> to vector<2x1xf32>
    %1679 = vector.broadcast %1678 : vector<2x1xf32> to vector<2x64xf32>
    %1680 = vector.broadcast %1228 : vector<1x64xf32> to vector<2x64xf32>
    %1681 = arith.mulf %1679, %1680 : vector<2x64xf32>
    %1682 = vector.extract_strided_slice %1641 {offsets = [0, 10], sizes = [2, 1], strides = [1, 1]} : vector<2x16xf32> to vector<2x1xf32>
    %1683 = vector.broadcast %1682 : vector<2x1xf32> to vector<2x64xf32>
    %1684 = vector.broadcast %1229 : vector<1x64xf32> to vector<2x64xf32>
    %1685 = arith.mulf %1683, %1684 : vector<2x64xf32>
    %1686 = vector.extract_strided_slice %1641 {offsets = [0, 11], sizes = [2, 1], strides = [1, 1]} : vector<2x16xf32> to vector<2x1xf32>
    %1687 = vector.broadcast %1686 : vector<2x1xf32> to vector<2x64xf32>
    %1688 = vector.broadcast %1230 : vector<1x64xf32> to vector<2x64xf32>
    %1689 = arith.mulf %1687, %1688 : vector<2x64xf32>
    %1690 = vector.extract_strided_slice %1641 {offsets = [0, 12], sizes = [2, 1], strides = [1, 1]} : vector<2x16xf32> to vector<2x1xf32>
    %1691 = vector.broadcast %1690 : vector<2x1xf32> to vector<2x64xf32>
    %1692 = vector.broadcast %1231 : vector<1x64xf32> to vector<2x64xf32>
    %1693 = arith.mulf %1691, %1692 : vector<2x64xf32>
    %1694 = vector.extract_strided_slice %1641 {offsets = [0, 13], sizes = [2, 1], strides = [1, 1]} : vector<2x16xf32> to vector<2x1xf32>
    %1695 = vector.broadcast %1694 : vector<2x1xf32> to vector<2x64xf32>
    %1696 = vector.broadcast %1232 : vector<1x64xf32> to vector<2x64xf32>
    %1697 = arith.mulf %1695, %1696 : vector<2x64xf32>
    %1698 = vector.extract_strided_slice %1641 {offsets = [0, 14], sizes = [2, 1], strides = [1, 1]} : vector<2x16xf32> to vector<2x1xf32>
    %1699 = vector.broadcast %1698 : vector<2x1xf32> to vector<2x64xf32>
    %1700 = vector.broadcast %1233 : vector<1x64xf32> to vector<2x64xf32>
    %1701 = arith.mulf %1699, %1700 : vector<2x64xf32>
    %1702 = vector.extract_strided_slice %1641 {offsets = [0, 15], sizes = [2, 1], strides = [1, 1]} : vector<2x16xf32> to vector<2x1xf32>
    %1703 = vector.broadcast %1702 : vector<2x1xf32> to vector<2x64xf32>
    %1704 = vector.broadcast %1234 : vector<1x64xf32> to vector<2x64xf32>
    %1705 = arith.mulf %1703, %1704 : vector<2x64xf32>
    %1706 = arith.addf %1645, %1649 : vector<2x64xf32>
    %1707 = arith.addf %1653, %1657 : vector<2x64xf32>
    %1708 = arith.addf %1661, %1665 : vector<2x64xf32>
    %1709 = arith.addf %1669, %1673 : vector<2x64xf32>
    %1710 = arith.addf %1677, %1681 : vector<2x64xf32>
    %1711 = arith.addf %1685, %1689 : vector<2x64xf32>
    %1712 = arith.addf %1693, %1697 : vector<2x64xf32>
    %1713 = arith.addf %1701, %1705 : vector<2x64xf32>
    %1714 = arith.addf %1706, %1707 : vector<2x64xf32>
    %1715 = arith.addf %1708, %1709 : vector<2x64xf32>
    %1716 = arith.addf %1710, %1711 : vector<2x64xf32>
    %1717 = arith.addf %1712, %1713 : vector<2x64xf32>
    %1718 = arith.addf %1714, %1715 : vector<2x64xf32>
    %1719 = arith.addf %1716, %1717 : vector<2x64xf32>
    %1720 = arith.addf %1718, %1719 : vector<2x64xf32>
    %1721 = arith.addf %1215, %1720 : vector<2x64xf32>
    %1722 = arith.negf %1721 : vector<2x64xf32>
    %1723 = math.exp %1722 : vector<2x64xf32>
    %cst_116 = arith.constant 1.000000e+00 : f32
    %1724 = vector.broadcast %cst_116 : f32 to vector<2x64xf32>
    %1725 = arith.addf %1724, %1723 : vector<2x64xf32>
    %1726 = arith.divf %1724, %1725 : vector<2x64xf32>
    %1727 = vector.extract_strided_slice %1726 {offsets = [0, 0], sizes = [2, 16], strides = [1, 1]} : vector<2x64xf32> to vector<2x16xf32>
    %1728 = vector.extract_strided_slice %1726 {offsets = [0, 16], sizes = [2, 16], strides = [1, 1]} : vector<2x64xf32> to vector<2x16xf32>
    %1729 = vector.extract_strided_slice %1726 {offsets = [0, 32], sizes = [2, 16], strides = [1, 1]} : vector<2x64xf32> to vector<2x16xf32>
    %1730 = vector.extract_strided_slice %1726 {offsets = [0, 48], sizes = [2, 16], strides = [1, 1]} : vector<2x64xf32> to vector<2x16xf32>
    %cst_117 = arith.constant 2.000000e+00 : f32
    %1731 = vector.broadcast %cst_117 : f32 to vector<2x16xf32>
    %1732 = arith.mulf %1731, %1730 : vector<2x16xf32>
    %cst_118 = arith.constant 1.000000e+00 : f32
    %1733 = vector.broadcast %cst_118 : f32 to vector<2x16xf32>
    %1734 = arith.subf %1732, %1733 : vector<2x16xf32>
    %1735 = arith.mulf %1728, %1639 : vector<2x16xf32>
    %1736 = arith.mulf %1727, %1734 : vector<2x16xf32>
    %1737 = arith.addf %1735, %1736 : vector<2x16xf32>
    %1738 = math.tanh %1737 : vector<2x16xf32>
    %1739 = arith.mulf %1729, %1738 : vector<2x16xf32>
    %1740 = vector.extract_strided_slice %1739 {offsets = [0, 0], sizes = [2, 1], strides = [1, 1]} : vector<2x16xf32> to vector<2x1xf32>
    %1741 = vector.broadcast %1740 : vector<2x1xf32> to vector<2x64xf32>
    %1742 = vector.broadcast %1219 : vector<1x64xf32> to vector<2x64xf32>
    %1743 = arith.mulf %1741, %1742 : vector<2x64xf32>
    %1744 = vector.extract_strided_slice %1739 {offsets = [0, 1], sizes = [2, 1], strides = [1, 1]} : vector<2x16xf32> to vector<2x1xf32>
    %1745 = vector.broadcast %1744 : vector<2x1xf32> to vector<2x64xf32>
    %1746 = vector.broadcast %1220 : vector<1x64xf32> to vector<2x64xf32>
    %1747 = arith.mulf %1745, %1746 : vector<2x64xf32>
    %1748 = vector.extract_strided_slice %1739 {offsets = [0, 2], sizes = [2, 1], strides = [1, 1]} : vector<2x16xf32> to vector<2x1xf32>
    %1749 = vector.broadcast %1748 : vector<2x1xf32> to vector<2x64xf32>
    %1750 = vector.broadcast %1221 : vector<1x64xf32> to vector<2x64xf32>
    %1751 = arith.mulf %1749, %1750 : vector<2x64xf32>
    %1752 = vector.extract_strided_slice %1739 {offsets = [0, 3], sizes = [2, 1], strides = [1, 1]} : vector<2x16xf32> to vector<2x1xf32>
    %1753 = vector.broadcast %1752 : vector<2x1xf32> to vector<2x64xf32>
    %1754 = vector.broadcast %1222 : vector<1x64xf32> to vector<2x64xf32>
    %1755 = arith.mulf %1753, %1754 : vector<2x64xf32>
    %1756 = vector.extract_strided_slice %1739 {offsets = [0, 4], sizes = [2, 1], strides = [1, 1]} : vector<2x16xf32> to vector<2x1xf32>
    %1757 = vector.broadcast %1756 : vector<2x1xf32> to vector<2x64xf32>
    %1758 = vector.broadcast %1223 : vector<1x64xf32> to vector<2x64xf32>
    %1759 = arith.mulf %1757, %1758 : vector<2x64xf32>
    %1760 = vector.extract_strided_slice %1739 {offsets = [0, 5], sizes = [2, 1], strides = [1, 1]} : vector<2x16xf32> to vector<2x1xf32>
    %1761 = vector.broadcast %1760 : vector<2x1xf32> to vector<2x64xf32>
    %1762 = vector.broadcast %1224 : vector<1x64xf32> to vector<2x64xf32>
    %1763 = arith.mulf %1761, %1762 : vector<2x64xf32>
    %1764 = vector.extract_strided_slice %1739 {offsets = [0, 6], sizes = [2, 1], strides = [1, 1]} : vector<2x16xf32> to vector<2x1xf32>
    %1765 = vector.broadcast %1764 : vector<2x1xf32> to vector<2x64xf32>
    %1766 = vector.broadcast %1225 : vector<1x64xf32> to vector<2x64xf32>
    %1767 = arith.mulf %1765, %1766 : vector<2x64xf32>
    %1768 = vector.extract_strided_slice %1739 {offsets = [0, 7], sizes = [2, 1], strides = [1, 1]} : vector<2x16xf32> to vector<2x1xf32>
    %1769 = vector.broadcast %1768 : vector<2x1xf32> to vector<2x64xf32>
    %1770 = vector.broadcast %1226 : vector<1x64xf32> to vector<2x64xf32>
    %1771 = arith.mulf %1769, %1770 : vector<2x64xf32>
    %1772 = vector.extract_strided_slice %1739 {offsets = [0, 8], sizes = [2, 1], strides = [1, 1]} : vector<2x16xf32> to vector<2x1xf32>
    %1773 = vector.broadcast %1772 : vector<2x1xf32> to vector<2x64xf32>
    %1774 = vector.broadcast %1227 : vector<1x64xf32> to vector<2x64xf32>
    %1775 = arith.mulf %1773, %1774 : vector<2x64xf32>
    %1776 = vector.extract_strided_slice %1739 {offsets = [0, 9], sizes = [2, 1], strides = [1, 1]} : vector<2x16xf32> to vector<2x1xf32>
    %1777 = vector.broadcast %1776 : vector<2x1xf32> to vector<2x64xf32>
    %1778 = vector.broadcast %1228 : vector<1x64xf32> to vector<2x64xf32>
    %1779 = arith.mulf %1777, %1778 : vector<2x64xf32>
    %1780 = vector.extract_strided_slice %1739 {offsets = [0, 10], sizes = [2, 1], strides = [1, 1]} : vector<2x16xf32> to vector<2x1xf32>
    %1781 = vector.broadcast %1780 : vector<2x1xf32> to vector<2x64xf32>
    %1782 = vector.broadcast %1229 : vector<1x64xf32> to vector<2x64xf32>
    %1783 = arith.mulf %1781, %1782 : vector<2x64xf32>
    %1784 = vector.extract_strided_slice %1739 {offsets = [0, 11], sizes = [2, 1], strides = [1, 1]} : vector<2x16xf32> to vector<2x1xf32>
    %1785 = vector.broadcast %1784 : vector<2x1xf32> to vector<2x64xf32>
    %1786 = vector.broadcast %1230 : vector<1x64xf32> to vector<2x64xf32>
    %1787 = arith.mulf %1785, %1786 : vector<2x64xf32>
    %1788 = vector.extract_strided_slice %1739 {offsets = [0, 12], sizes = [2, 1], strides = [1, 1]} : vector<2x16xf32> to vector<2x1xf32>
    %1789 = vector.broadcast %1788 : vector<2x1xf32> to vector<2x64xf32>
    %1790 = vector.broadcast %1231 : vector<1x64xf32> to vector<2x64xf32>
    %1791 = arith.mulf %1789, %1790 : vector<2x64xf32>
    %1792 = vector.extract_strided_slice %1739 {offsets = [0, 13], sizes = [2, 1], strides = [1, 1]} : vector<2x16xf32> to vector<2x1xf32>
    %1793 = vector.broadcast %1792 : vector<2x1xf32> to vector<2x64xf32>
    %1794 = vector.broadcast %1232 : vector<1x64xf32> to vector<2x64xf32>
    %1795 = arith.mulf %1793, %1794 : vector<2x64xf32>
    %1796 = vector.extract_strided_slice %1739 {offsets = [0, 14], sizes = [2, 1], strides = [1, 1]} : vector<2x16xf32> to vector<2x1xf32>
    %1797 = vector.broadcast %1796 : vector<2x1xf32> to vector<2x64xf32>
    %1798 = vector.broadcast %1233 : vector<1x64xf32> to vector<2x64xf32>
    %1799 = arith.mulf %1797, %1798 : vector<2x64xf32>
    %1800 = vector.extract_strided_slice %1739 {offsets = [0, 15], sizes = [2, 1], strides = [1, 1]} : vector<2x16xf32> to vector<2x1xf32>
    %1801 = vector.broadcast %1800 : vector<2x1xf32> to vector<2x64xf32>
    %1802 = vector.broadcast %1234 : vector<1x64xf32> to vector<2x64xf32>
    %1803 = arith.mulf %1801, %1802 : vector<2x64xf32>
    %1804 = arith.addf %1743, %1747 : vector<2x64xf32>
    %1805 = arith.addf %1751, %1755 : vector<2x64xf32>
    %1806 = arith.addf %1759, %1763 : vector<2x64xf32>
    %1807 = arith.addf %1767, %1771 : vector<2x64xf32>
    %1808 = arith.addf %1775, %1779 : vector<2x64xf32>
    %1809 = arith.addf %1783, %1787 : vector<2x64xf32>
    %1810 = arith.addf %1791, %1795 : vector<2x64xf32>
    %1811 = arith.addf %1799, %1803 : vector<2x64xf32>
    %1812 = arith.addf %1804, %1805 : vector<2x64xf32>
    %1813 = arith.addf %1806, %1807 : vector<2x64xf32>
    %1814 = arith.addf %1808, %1809 : vector<2x64xf32>
    %1815 = arith.addf %1810, %1811 : vector<2x64xf32>
    %1816 = arith.addf %1812, %1813 : vector<2x64xf32>
    %1817 = arith.addf %1814, %1815 : vector<2x64xf32>
    %1818 = arith.addf %1816, %1817 : vector<2x64xf32>
    %1819 = arith.addf %1216, %1818 : vector<2x64xf32>
    %1820 = arith.negf %1819 : vector<2x64xf32>
    %1821 = math.exp %1820 : vector<2x64xf32>
    %cst_119 = arith.constant 1.000000e+00 : f32
    %1822 = vector.broadcast %cst_119 : f32 to vector<2x64xf32>
    %1823 = arith.addf %1822, %1821 : vector<2x64xf32>
    %1824 = arith.divf %1822, %1823 : vector<2x64xf32>
    %1825 = vector.extract_strided_slice %1824 {offsets = [0, 0], sizes = [2, 16], strides = [1, 1]} : vector<2x64xf32> to vector<2x16xf32>
    %1826 = vector.extract_strided_slice %1824 {offsets = [0, 16], sizes = [2, 16], strides = [1, 1]} : vector<2x64xf32> to vector<2x16xf32>
    %1827 = vector.extract_strided_slice %1824 {offsets = [0, 32], sizes = [2, 16], strides = [1, 1]} : vector<2x64xf32> to vector<2x16xf32>
    %1828 = vector.extract_strided_slice %1824 {offsets = [0, 48], sizes = [2, 16], strides = [1, 1]} : vector<2x64xf32> to vector<2x16xf32>
    %cst_120 = arith.constant 2.000000e+00 : f32
    %1829 = vector.broadcast %cst_120 : f32 to vector<2x16xf32>
    %1830 = arith.mulf %1829, %1828 : vector<2x16xf32>
    %cst_121 = arith.constant 1.000000e+00 : f32
    %1831 = vector.broadcast %cst_121 : f32 to vector<2x16xf32>
    %1832 = arith.subf %1830, %1831 : vector<2x16xf32>
    %1833 = arith.mulf %1826, %1737 : vector<2x16xf32>
    %1834 = arith.mulf %1825, %1832 : vector<2x16xf32>
    %1835 = arith.addf %1833, %1834 : vector<2x16xf32>
    %1836 = math.tanh %1835 : vector<2x16xf32>
    %1837 = arith.mulf %1827, %1836 : vector<2x16xf32>
    %1838 = vector.extract_strided_slice %1837 {offsets = [0, 0], sizes = [2, 1], strides = [1, 1]} : vector<2x16xf32> to vector<2x1xf32>
    %1839 = vector.broadcast %1838 : vector<2x1xf32> to vector<2x64xf32>
    %1840 = vector.broadcast %1219 : vector<1x64xf32> to vector<2x64xf32>
    %1841 = arith.mulf %1839, %1840 : vector<2x64xf32>
    %1842 = vector.extract_strided_slice %1837 {offsets = [0, 1], sizes = [2, 1], strides = [1, 1]} : vector<2x16xf32> to vector<2x1xf32>
    %1843 = vector.broadcast %1842 : vector<2x1xf32> to vector<2x64xf32>
    %1844 = vector.broadcast %1220 : vector<1x64xf32> to vector<2x64xf32>
    %1845 = arith.mulf %1843, %1844 : vector<2x64xf32>
    %1846 = vector.extract_strided_slice %1837 {offsets = [0, 2], sizes = [2, 1], strides = [1, 1]} : vector<2x16xf32> to vector<2x1xf32>
    %1847 = vector.broadcast %1846 : vector<2x1xf32> to vector<2x64xf32>
    %1848 = vector.broadcast %1221 : vector<1x64xf32> to vector<2x64xf32>
    %1849 = arith.mulf %1847, %1848 : vector<2x64xf32>
    %1850 = vector.extract_strided_slice %1837 {offsets = [0, 3], sizes = [2, 1], strides = [1, 1]} : vector<2x16xf32> to vector<2x1xf32>
    %1851 = vector.broadcast %1850 : vector<2x1xf32> to vector<2x64xf32>
    %1852 = vector.broadcast %1222 : vector<1x64xf32> to vector<2x64xf32>
    %1853 = arith.mulf %1851, %1852 : vector<2x64xf32>
    %1854 = vector.extract_strided_slice %1837 {offsets = [0, 4], sizes = [2, 1], strides = [1, 1]} : vector<2x16xf32> to vector<2x1xf32>
    %1855 = vector.broadcast %1854 : vector<2x1xf32> to vector<2x64xf32>
    %1856 = vector.broadcast %1223 : vector<1x64xf32> to vector<2x64xf32>
    %1857 = arith.mulf %1855, %1856 : vector<2x64xf32>
    %1858 = vector.extract_strided_slice %1837 {offsets = [0, 5], sizes = [2, 1], strides = [1, 1]} : vector<2x16xf32> to vector<2x1xf32>
    %1859 = vector.broadcast %1858 : vector<2x1xf32> to vector<2x64xf32>
    %1860 = vector.broadcast %1224 : vector<1x64xf32> to vector<2x64xf32>
    %1861 = arith.mulf %1859, %1860 : vector<2x64xf32>
    %1862 = vector.extract_strided_slice %1837 {offsets = [0, 6], sizes = [2, 1], strides = [1, 1]} : vector<2x16xf32> to vector<2x1xf32>
    %1863 = vector.broadcast %1862 : vector<2x1xf32> to vector<2x64xf32>
    %1864 = vector.broadcast %1225 : vector<1x64xf32> to vector<2x64xf32>
    %1865 = arith.mulf %1863, %1864 : vector<2x64xf32>
    %1866 = vector.extract_strided_slice %1837 {offsets = [0, 7], sizes = [2, 1], strides = [1, 1]} : vector<2x16xf32> to vector<2x1xf32>
    %1867 = vector.broadcast %1866 : vector<2x1xf32> to vector<2x64xf32>
    %1868 = vector.broadcast %1226 : vector<1x64xf32> to vector<2x64xf32>
    %1869 = arith.mulf %1867, %1868 : vector<2x64xf32>
    %1870 = vector.extract_strided_slice %1837 {offsets = [0, 8], sizes = [2, 1], strides = [1, 1]} : vector<2x16xf32> to vector<2x1xf32>
    %1871 = vector.broadcast %1870 : vector<2x1xf32> to vector<2x64xf32>
    %1872 = vector.broadcast %1227 : vector<1x64xf32> to vector<2x64xf32>
    %1873 = arith.mulf %1871, %1872 : vector<2x64xf32>
    %1874 = vector.extract_strided_slice %1837 {offsets = [0, 9], sizes = [2, 1], strides = [1, 1]} : vector<2x16xf32> to vector<2x1xf32>
    %1875 = vector.broadcast %1874 : vector<2x1xf32> to vector<2x64xf32>
    %1876 = vector.broadcast %1228 : vector<1x64xf32> to vector<2x64xf32>
    %1877 = arith.mulf %1875, %1876 : vector<2x64xf32>
    %1878 = vector.extract_strided_slice %1837 {offsets = [0, 10], sizes = [2, 1], strides = [1, 1]} : vector<2x16xf32> to vector<2x1xf32>
    %1879 = vector.broadcast %1878 : vector<2x1xf32> to vector<2x64xf32>
    %1880 = vector.broadcast %1229 : vector<1x64xf32> to vector<2x64xf32>
    %1881 = arith.mulf %1879, %1880 : vector<2x64xf32>
    %1882 = vector.extract_strided_slice %1837 {offsets = [0, 11], sizes = [2, 1], strides = [1, 1]} : vector<2x16xf32> to vector<2x1xf32>
    %1883 = vector.broadcast %1882 : vector<2x1xf32> to vector<2x64xf32>
    %1884 = vector.broadcast %1230 : vector<1x64xf32> to vector<2x64xf32>
    %1885 = arith.mulf %1883, %1884 : vector<2x64xf32>
    %1886 = vector.extract_strided_slice %1837 {offsets = [0, 12], sizes = [2, 1], strides = [1, 1]} : vector<2x16xf32> to vector<2x1xf32>
    %1887 = vector.broadcast %1886 : vector<2x1xf32> to vector<2x64xf32>
    %1888 = vector.broadcast %1231 : vector<1x64xf32> to vector<2x64xf32>
    %1889 = arith.mulf %1887, %1888 : vector<2x64xf32>
    %1890 = vector.extract_strided_slice %1837 {offsets = [0, 13], sizes = [2, 1], strides = [1, 1]} : vector<2x16xf32> to vector<2x1xf32>
    %1891 = vector.broadcast %1890 : vector<2x1xf32> to vector<2x64xf32>
    %1892 = vector.broadcast %1232 : vector<1x64xf32> to vector<2x64xf32>
    %1893 = arith.mulf %1891, %1892 : vector<2x64xf32>
    %1894 = vector.extract_strided_slice %1837 {offsets = [0, 14], sizes = [2, 1], strides = [1, 1]} : vector<2x16xf32> to vector<2x1xf32>
    %1895 = vector.broadcast %1894 : vector<2x1xf32> to vector<2x64xf32>
    %1896 = vector.broadcast %1233 : vector<1x64xf32> to vector<2x64xf32>
    %1897 = arith.mulf %1895, %1896 : vector<2x64xf32>
    %1898 = vector.extract_strided_slice %1837 {offsets = [0, 15], sizes = [2, 1], strides = [1, 1]} : vector<2x16xf32> to vector<2x1xf32>
    %1899 = vector.broadcast %1898 : vector<2x1xf32> to vector<2x64xf32>
    %1900 = vector.broadcast %1234 : vector<1x64xf32> to vector<2x64xf32>
    %1901 = arith.mulf %1899, %1900 : vector<2x64xf32>
    %1902 = arith.addf %1841, %1845 : vector<2x64xf32>
    %1903 = arith.addf %1849, %1853 : vector<2x64xf32>
    %1904 = arith.addf %1857, %1861 : vector<2x64xf32>
    %1905 = arith.addf %1865, %1869 : vector<2x64xf32>
    %1906 = arith.addf %1873, %1877 : vector<2x64xf32>
    %1907 = arith.addf %1881, %1885 : vector<2x64xf32>
    %1908 = arith.addf %1889, %1893 : vector<2x64xf32>
    %1909 = arith.addf %1897, %1901 : vector<2x64xf32>
    %1910 = arith.addf %1902, %1903 : vector<2x64xf32>
    %1911 = arith.addf %1904, %1905 : vector<2x64xf32>
    %1912 = arith.addf %1906, %1907 : vector<2x64xf32>
    %1913 = arith.addf %1908, %1909 : vector<2x64xf32>
    %1914 = arith.addf %1910, %1911 : vector<2x64xf32>
    %1915 = arith.addf %1912, %1913 : vector<2x64xf32>
    %1916 = arith.addf %1914, %1915 : vector<2x64xf32>
    %1917 = arith.addf %1217, %1916 : vector<2x64xf32>
    %1918 = arith.negf %1917 : vector<2x64xf32>
    %1919 = math.exp %1918 : vector<2x64xf32>
    %cst_122 = arith.constant 1.000000e+00 : f32
    %1920 = vector.broadcast %cst_122 : f32 to vector<2x64xf32>
    %1921 = arith.addf %1920, %1919 : vector<2x64xf32>
    %1922 = arith.divf %1920, %1921 : vector<2x64xf32>
    %1923 = vector.extract_strided_slice %1922 {offsets = [0, 0], sizes = [2, 16], strides = [1, 1]} : vector<2x64xf32> to vector<2x16xf32>
    %1924 = vector.extract_strided_slice %1922 {offsets = [0, 16], sizes = [2, 16], strides = [1, 1]} : vector<2x64xf32> to vector<2x16xf32>
    %1925 = vector.extract_strided_slice %1922 {offsets = [0, 32], sizes = [2, 16], strides = [1, 1]} : vector<2x64xf32> to vector<2x16xf32>
    %1926 = vector.extract_strided_slice %1922 {offsets = [0, 48], sizes = [2, 16], strides = [1, 1]} : vector<2x64xf32> to vector<2x16xf32>
    %cst_123 = arith.constant 2.000000e+00 : f32
    %1927 = vector.broadcast %cst_123 : f32 to vector<2x16xf32>
    %1928 = arith.mulf %1927, %1926 : vector<2x16xf32>
    %cst_124 = arith.constant 1.000000e+00 : f32
    %1929 = vector.broadcast %cst_124 : f32 to vector<2x16xf32>
    %1930 = arith.subf %1928, %1929 : vector<2x16xf32>
    %1931 = arith.mulf %1924, %1835 : vector<2x16xf32>
    %1932 = arith.mulf %1923, %1930 : vector<2x16xf32>
    %1933 = arith.addf %1931, %1932 : vector<2x16xf32>
    %1934 = math.tanh %1933 : vector<2x16xf32>
    %1935 = arith.mulf %1925, %1934 : vector<2x16xf32>
    %1936 = tpu.concatenate %1249, %1347, %1445, %1543, %1641, %1739, %1837, %1935 in 0 : vector<2x16xf32>, vector<2x16xf32>, vector<2x16xf32>, vector<2x16xf32>, vector<2x16xf32>, vector<2x16xf32>, vector<2x16xf32>, vector<2x16xf32> -> vector<16x16xf32>
    %1937 = tpu.concatenate %1935, %1837, %1739, %1641, %1543, %1445, %1347, %1249 in 0 : vector<2x16xf32>, vector<2x16xf32>, vector<2x16xf32>, vector<2x16xf32>, vector<2x16xf32>, vector<2x16xf32>, vector<2x16xf32>, vector<2x16xf32> -> vector<16x16xf32>
    %1938 = tpu.concatenate %1936, %1937 in 1 : vector<16x16xf32>, vector<16x16xf32> -> vector<16x32xf32>
    %c128 = arith.constant 128 : index
    %c0_125 = arith.constant 0 : index
    %1939 = vector.load %arg1[%c128, %c0_125] : memref<168x64xf32, #tpu.memory_space<vmem>>, vector<32x64xf32>
    %c160 = arith.constant 160 : index
    %c0_126 = arith.constant 0 : index
    %1940 = vector.load %arg1[%c160, %c0_126] : memref<168x64xf32, #tpu.memory_space<vmem>>, vector<1x64xf32>
    %cst_127 = arith.constant dense<0.000000e+00> : vector<16x64xf32>
    %1941 = tpu.matmul %1938, %1939, %cst_127 {dimension_numbers = #tpu.dot_dimension_numbers<[1], [0], [0], [1], [0, 0, 1, 1], [], []>, precision = #tpu.contract_precision<fp32>} : vector<16x32xf32>, vector<32x64xf32>, vector<16x64xf32> -> vector<16x64xf32>
    %1942 = vector.broadcast %1940 : vector<1x64xf32> to vector<16x64xf32>
    %1943 = arith.addf %1941, %1942 : vector<16x64xf32>
    %1944 = vector.extract_strided_slice %1943 {offsets = [0, 0], sizes = [2, 8], strides = [1, 1]} : vector<16x64xf32> to vector<2x8xf32>
    %c0_128 = arith.constant 0 : index
    %c0_129 = arith.constant 0 : index
    %1945 = vector.load %arg2[%c0_128, %c0_129] : memref<2x64xf32, #tpu.memory_space<vmem>>, vector<2x8xf32>
    tpu.vector_store %arg2[%c0_128, %c0_129], %1944 {strides = array<i32>} : memref<2x64xf32, #tpu.memory_space<vmem>>, vector<2x8xf32>,
    %1946 = vector.extract_strided_slice %1943 {offsets = [2, 0], sizes = [2, 8], strides = [1, 1]} : vector<16x64xf32> to vector<2x8xf32>
    %c0_130 = arith.constant 0 : index
    %c8_131 = arith.constant 8 : index
    %1947 = vector.load %arg2[%c0_130, %c8_131] : memref<2x64xf32, #tpu.memory_space<vmem>>, vector<2x8xf32>
    tpu.vector_store %arg2[%c0_130, %c8_131], %1946 {strides = array<i32>} : memref<2x64xf32, #tpu.memory_space<vmem>>, vector<2x8xf32>,
    %1948 = vector.extract_strided_slice %1943 {offsets = [4, 0], sizes = [2, 8], strides = [1, 1]} : vector<16x64xf32> to vector<2x8xf32>
    %c0_132 = arith.constant 0 : index
    %c16_133 = arith.constant 16 : index
    %1949 = vector.load %arg2[%c0_132, %c16_133] : memref<2x64xf32, #tpu.memory_space<vmem>>, vector<2x8xf32>
    tpu.vector_store %arg2[%c0_132, %c16_133], %1948 {strides = array<i32>} : memref<2x64xf32, #tpu.memory_space<vmem>>, vector<2x8xf32>,
    %1950 = vector.extract_strided_slice %1943 {offsets = [6, 0], sizes = [2, 8], strides = [1, 1]} : vector<16x64xf32> to vector<2x8xf32>
    %c0_134 = arith.constant 0 : index
    %c24_135 = arith.constant 24 : index
    %1951 = vector.load %arg2[%c0_134, %c24_135] : memref<2x64xf32, #tpu.memory_space<vmem>>, vector<2x8xf32>
    tpu.vector_store %arg2[%c0_134, %c24_135], %1950 {strides = array<i32>} : memref<2x64xf32, #tpu.memory_space<vmem>>, vector<2x8xf32>,
    %1952 = vector.extract_strided_slice %1943 {offsets = [8, 0], sizes = [2, 8], strides = [1, 1]} : vector<16x64xf32> to vector<2x8xf32>
    %c0_136 = arith.constant 0 : index
    %c32_137 = arith.constant 32 : index
    %1953 = vector.load %arg2[%c0_136, %c32_137] : memref<2x64xf32, #tpu.memory_space<vmem>>, vector<2x8xf32>
    tpu.vector_store %arg2[%c0_136, %c32_137], %1952 {strides = array<i32>} : memref<2x64xf32, #tpu.memory_space<vmem>>, vector<2x8xf32>,
    %1954 = vector.extract_strided_slice %1943 {offsets = [10, 0], sizes = [2, 8], strides = [1, 1]} : vector<16x64xf32> to vector<2x8xf32>
    %c0_138 = arith.constant 0 : index
    %c40_139 = arith.constant 40 : index
    %1955 = vector.load %arg2[%c0_138, %c40_139] : memref<2x64xf32, #tpu.memory_space<vmem>>, vector<2x8xf32>
    tpu.vector_store %arg2[%c0_138, %c40_139], %1954 {strides = array<i32>} : memref<2x64xf32, #tpu.memory_space<vmem>>, vector<2x8xf32>,
    %1956 = vector.extract_strided_slice %1943 {offsets = [12, 0], sizes = [2, 8], strides = [1, 1]} : vector<16x64xf32> to vector<2x8xf32>
    %c0_140 = arith.constant 0 : index
    %c48_141 = arith.constant 48 : index
    %1957 = vector.load %arg2[%c0_140, %c48_141] : memref<2x64xf32, #tpu.memory_space<vmem>>, vector<2x8xf32>
    tpu.vector_store %arg2[%c0_140, %c48_141], %1956 {strides = array<i32>} : memref<2x64xf32, #tpu.memory_space<vmem>>, vector<2x8xf32>,
    %1958 = vector.extract_strided_slice %1943 {offsets = [14, 0], sizes = [2, 8], strides = [1, 1]} : vector<16x64xf32> to vector<2x8xf32>
    %c0_142 = arith.constant 0 : index
    %c56_143 = arith.constant 56 : index
    %1959 = vector.load %arg2[%c0_142, %c56_143] : memref<2x64xf32, #tpu.memory_space<vmem>>, vector<2x8xf32>
    tpu.vector_store %arg2[%c0_142, %c56_143], %1958 {strides = array<i32>} : memref<2x64xf32, #tpu.memory_space<vmem>>, vector<2x8xf32>,
    return
  }
}

</mosaic_0001>

<llo_original>
// kernel: lstmae_forward.1
$region0: #{lstmae_forward.1}
  #allocation0 [shape = 'u32[]', space=smem, size = 0x4, offset = 0x4, fixed_abs, tag = 'smem constant byte address 0x4 - core index']
  #allocation1 [shape = 'u32[144,128]{1,0:T(1,128)}', space=vmem, size = 0x12000, scoped, tag = 'internal scratch']
  %s0 = inlined_call_operand.vmem [shape: f32[2,64], index: 0, kind: input, shape index: {}]
  %s1 = inlined_call_operand.vmem [shape: f32[168,64], index: 1, kind: input, shape index: {}]
  %s2 = inlined_call_operand.vmem [shape: f32[2,64], index: 2, kind: output, shape index: {}]
  %s3 = sld [smem:[#allocation0]]
  $region18: #{lstmae_forward.1} parent=0
    _
  %s5 = ssub.s32 1, %s3
  %s6 = scalar_select 0, %s5, %s3
  // Predicated region
  $region2: #{lstmae_forward.1} parent=0 // pred_check
    _
  $region3: #{lstmae_forward.1} parent=0 // pred_check_branch
    %8 = sbr.rel (0) target = $region5
  $region4: #{lstmae_forward.1} parent=0 // pred_region
    _
  $region5: #{lstmae_forward.1} parent=0 // pred_fallthru
    _
  // Predicated region
  $region6: #{lstmae_forward.1} parent=0 // pred_check
    _
  $region7: #{lstmae_forward.1} parent=0 // pred_check_branch
    %10 = sbr.rel (0) target = $region9
  $region8: #{lstmae_forward.1} parent=0 // pred_region
    _
  $region9: #{lstmae_forward.1} parent=0 // pred_fallthru
    _
  %v11 = vld [vmem:[%s0] sm:$0x3]
  %v13 = vrot.slane %v11, 6
  %14 = vrot.lane.b32.xlu0 %v13, 120
  %v15 = vpop.permute.xlu0 %14
  %v17 = vrot.slane %v11, 4
  %18 = vrot.lane.b32.xlu0 %v17, 112
  %v19 = vpop.permute.xlu0 %18
  %v21 = vrot.slane %v11, 2
  %22 = vrot.lane.b32.xlu0 %v21, 104
  %v23 = vpop.permute.xlu0 %22
  %25 = vrot.lane.b32.xlu0 %v11, 96
  %v26 = vpop.permute.xlu0 %25
  %28 = vrot.lane.b32.xlu0 %v13, 88
  %v29 = vpop.permute.xlu0 %28
  %31 = vrot.lane.b32.xlu0 %v17, 80
  %v32 = vpop.permute.xlu0 %31
  %34 = vrot.lane.b32.xlu0 %v21, 72
  %v35 = vpop.permute.xlu0 %34
  %vm37 = vcmask 1041408
  %v38 = vsel %vm37, %v11, %v15
  %vm39 = vcmask 1043456
  %v40 = vsel %vm39, %v38, %v19
  %vm41 = vcmask 1045504
  %v42 = vsel %vm41, %v40, %v23
  %v43 = vsel %vm37, %v26, %v29
  %v44 = vsel %vm39, %v43, %v32
  %v45 = vsel %vm41, %v44, %v35
  %46 = vrot.lane.b32.xlu0 %v13, 8
  %v47 = vpop.permute.xlu0 %46
  %49 = vrot.lane.b32.xlu0 %v17, 16
  %v50 = vpop.permute.xlu0 %49
  %52 = vrot.lane.b32.xlu0 %v21, 24
  %v53 = vpop.permute.xlu0 %52
  %55 = vrot.lane.b32.xlu0 %v11, 32
  %v56 = vpop.permute.xlu0 %55
  %58 = vrot.lane.b32.xlu0 %v13, 40
  %v59 = vpop.permute.xlu0 %58
  %61 = vrot.lane.b32.xlu0 %v17, 48
  %v62 = vpop.permute.xlu0 %61
  %64 = vrot.lane.b32.xlu0 %v21, 56
  %v65 = vpop.permute.xlu0 %64
  %v67 = vsel %vm37, %v11, %v47
  %v68 = vsel %vm39, %v67, %v50
  %v69 = vsel %vm41, %v68, %v53
  %v70 = vsel %vm37, %v56, %v59
  %v71 = vsel %vm39, %v70, %v62
  %v72 = vsel %vm41, %v71, %v65
  %75 = vrot.lane.b32.xlu0 %v69, 80
  %v76 = vpop.permute.xlu0 %75
  %77 = vrot.lane.b32.xlu0 %v72, 80
  %v78 = vpop.permute.xlu0 %77
  %vm81 = vcmask 64512
  %v82 = vsel %vm81, %v42, %v76
  %v83 = vsel %vm81, %v45, %v78
  %v84 = vld [vmem:[%s1] sm:$0xff]
  %v85 = vld [vmem:[%s1 + $0x8] sm:$0xff]
  %v86 = vld [vmem:[%s1 + $0x18] sm:$0x1]
  %v87 = vlaneseq
  %v88 = vshrl.u32 %v87, 7
  %v89 = vsub.s32 0, %v88
  %v90 = vrot.slane %v86, %v89
  %vm91 = vcmask 130048
  %v93 = vsel %vm91, %v82, 0
  %v96 = vsel %vm91, %v83, 0
  %98 = vmatprep.subr.mxu0 0.0
  %v99 = vand.u32 %v84, 4294901760
  %100 = vmatpush1.msra.mxu0 %v99
  %101 = vmatprep.subr.mxu0 0.0
  %v102 = vand.u32 %v85, 4294901760
  %103 = vmatpush1.msra.mxu0 %v102
  %104 = vmatprep.subr.mxu0 0.0
  %105 = vmatpush1.msra.mxu0 0.0
  %106 = vmatprep.subr.mxu0 0.0
  %107 = vmatpush1.msra.mxu0 0.0
  %108 = vmatprep.subr.mxu0 0.0
  %109 = vmatpush1.msra.mxu0 0.0
  %110 = vmatprep.subr.mxu0 0.0
  %111 = vmatpush1.msra.mxu0 0.0
  %112 = vmatprep.subr.mxu0 0.0
  %113 = vmatpush1.msra.mxu0 0.0
  %114 = vmatprep.subr.mxu0 0.0
  %115 = vmatpush1.msra.mxu0 0.0
  %116 = vmatprep.subr.mxu0 0.0
  %117 = vmatpush1.msra.mxu0 0.0
  %118 = vmatprep.subr.mxu0 0.0
  %119 = vmatpush1.msra.mxu0 0.0
  %120 = vmatprep.subr.mxu0 0.0
  %121 = vmatpush1.msra.mxu0 0.0
  %122 = vmatprep.subr.mxu0 0.0
  %123 = vmatpush1.msra.mxu0 0.0
  %124 = vmatprep.subr.mxu0 0.0
  %125 = vmatpush1.msra.mxu0 0.0
  %126 = vmatprep.subr.mxu0 0.0
  %127 = vmatpush1.msra.mxu0 0.0
  %128 = vmatprep.subr.mxu0 0.0
  %129 = vmatpush1.msra.mxu0 0.0
  %130 = vmatprep.subr.mxu0 0.0
  %131 = vmatpush1.msra.mxu0 0.0
  %132 = vmatprep.subr.mxu0 0.0
  %133 = vmatpush1.msra.mxu0 0.0
  %134 = vmatprep.subr.mxu0 0.0
  %135 = vmatpush1.msra.mxu0 0.0
  %136 = vmatprep.subr.mxu0 0.0
  %137 = vmatpush1.msra.mxu0 0.0
  %138 = vmatprep.subr.mxu0 0.0
  %139 = vmatpush1.msra.mxu0 0.0
  %140 = vmatprep.subr.mxu0 0.0
  %141 = vmatpush1.msra.mxu0 0.0
  %142 = vmatprep.subr.mxu0 0.0
  %143 = vmatpush1.msra.mxu0 0.0
  %144 = vmatprep.subr.mxu0 0.0
  %145 = vmatpush1.msra.mxu0 0.0
  %146 = vmatprep.subr.mxu0 0.0
  %147 = vmatpush1.msra.mxu0 0.0
  %148 = vmatprep.subr.mxu0 0.0
  %149 = vmatpush1.msra.mxu0 0.0
  %150 = vmatprep.subr.mxu0 0.0
  %151 = vmatpush1.msra.mxu0 0.0
  %152 = vmatprep.subr.mxu0 0.0
  %153 = vmatpush1.msra.mxu0 0.0
  %154 = vmatprep.subr.mxu0 0.0
  %155 = vmatpush1.msra.mxu0 0.0
  %156 = vmatprep.subr.mxu0 0.0
  %157 = vmatpush1.msra.mxu0 0.0
  %158 = vmatprep.subr.mxu0 0.0
  %159 = vmatpush1.msra.mxu0 0.0
  %160 = vmatprep.subr.mxu0 0.0
  %161 = vmatpush1.msra.mxu0 0.0
  %162 = vmatprep.subr.mxu0 0.0
  %163 = vmatpush1.msra.mxu0 0.0
  %164 = vmatprep.mubr.f32.mxu0 0.0
  %v165 = vand.u32 %v93, 4294901760
  %v166 = vsub.f32 %v93, %v165
  %v167 = vand.u32 %v166, 4294901760
  %v168 = vsub.f32 %v166, %v167
  %v169 = vand.u32 %v168, 4294901760
  %170 = vmatmul.mubr.f32.gmra.mrb[0].mxu0 %v169
  %v171 = vpop.f32.mrb[0].mxu0
  %v172 = vadd.f32 %v90, %v171
  %v173 = vpop.f32.mrb[0].mxu0
  %174 = vmatprep.mubr.f32.mxu0 0.0
  %v175 = vand.u32 %v96, 4294901760
  %v176 = vsub.f32 %v96, %v175
  %v177 = vand.u32 %v176, 4294901760
  %v178 = vsub.f32 %v176, %v177
  %v179 = vand.u32 %v178, 4294901760
  %180 = vmatmul.mubr.f32.gmra.mrb[0].mxu0 %v179
  %v181 = vpop.f32.mrb[0].mxu0
  %v182 = vadd.f32 %v90, %v181
  %v183 = vpop.f32.mrb[0].mxu0
  %184 = vdwg.mxu0
  %185 = vmatprep.subr.mxu0 0.0
  %v186 = vand.u32 %v84, 4294901760
  %v187 = vsub.f32 %v84, %v186
  %v188 = vand.u32 %v187, 4294901760
  %v189 = vsub.f32 %v187, %v188
  %v190 = vand.u32 %v189, 4294901760
  %191 = vmatpush1.msra.mxu0 %v190
  %192 = vmatprep.subr.mxu0 0.0
  %v193 = vand.u32 %v85, 4294901760
  %v194 = vsub.f32 %v85, %v193
  %v195 = vand.u32 %v194, 4294901760
  %v196 = vsub.f32 %v194, %v195
  %v197 = vand.u32 %v196, 4294901760
  %198 = vmatpush1.msra.mxu0 %v197
  %199 = vmatprep.subr.mxu0 0.0
  %200 = vmatpush1.msra.mxu0 0.0
  %201 = vmatprep.subr.mxu0 0.0
  %202 = vmatpush1.msra.mxu0 0.0
  %203 = vmatprep.subr.mxu0 0.0
  %204 = vmatpush1.msra.mxu0 0.0
  %205 = vmatprep.subr.mxu0 0.0
  %206 = vmatpush1.msra.mxu0 0.0
  %207 = vmatprep.subr.mxu0 0.0
  %208 = vmatpush1.msra.mxu0 0.0
  %209 = vmatprep.subr.mxu0 0.0
  %210 = vmatpush1.msra.mxu0 0.0
  %211 = vmatprep.subr.mxu0 0.0
  %212 = vmatpush1.msra.mxu0 0.0
  %213 = vmatprep.subr.mxu0 0.0
  %214 = vmatpush1.msra.mxu0 0.0
  %215 = vmatprep.subr.mxu0 0.0
  %216 = vmatpush1.msra.mxu0 0.0
  %217 = vmatprep.subr.mxu0 0.0
  %218 = vmatpush1.msra.mxu0 0.0
  %219 = vmatprep.subr.mxu0 0.0
  %220 = vmatpush1.msra.mxu0 0.0
  %221 = vmatprep.subr.mxu0 0.0
  %222 = vmatpush1.msra.mxu0 0.0
  %223 = vmatprep.subr.mxu0 0.0
  %224 = vmatpush1.msra.mxu0 0.0
  %225 = vmatprep.subr.mxu0 0.0
  %226 = vmatpush1.msra.mxu0 0.0
  %227 = vmatprep.subr.mxu0 0.0
  %228 = vmatpush1.msra.mxu0 0.0
  %229 = vmatprep.subr.mxu0 0.0
  %230 = vmatpush1.msra.mxu0 0.0
  %231 = vmatprep.subr.mxu0 0.0
  %232 = vmatpush1.msra.mxu0 0.0
  %233 = vmatprep.subr.mxu0 0.0
  %234 = vmatpush1.msra.mxu0 0.0
  %235 = vmatprep.subr.mxu0 0.0
  %236 = vmatpush1.msra.mxu0 0.0
  %237 = vmatprep.subr.mxu0 0.0
  %238 = vmatpush1.msra.mxu0 0.0
  %239 = vmatprep.subr.mxu0 0.0
  %240 = vmatpush1.msra.mxu0 0.0
  %241 = vmatprep.subr.mxu0 0.0
  %242 = vmatpush1.msra.mxu0 0.0
  %243 = vmatprep.subr.mxu0 0.0
  %244 = vmatpush1.msra.mxu0 0.0
  %245 = vmatprep.subr.mxu0 0.0
  %246 = vmatpush1.msra.mxu0 0.0
  %247 = vmatprep.subr.mxu0 0.0
  %248 = vmatpush1.msra.mxu0 0.0
  %249 = vmatprep.subr.mxu0 0.0
  %250 = vmatpush1.msra.mxu0 0.0
  %251 = vmatprep.subr.mxu0 0.0
  %252 = vmatpush1.msra.mxu0 0.0
  %253 = vmatprep.subr.mxu0 0.0
  %254 = vmatpush1.msra.mxu0 0.0
  %255 = vmatprep.subr.mxu0 0.0
  %256 = vmatpush1.msra.mxu0 0.0
  %257 = vmatprep.subr.mxu0 0.0
  %258 = vmatpush1.msra.mxu0 0.0
  %259 = vmatprep.mubr.f32.mxu0 0.0
  %v260 = vand.u32 %v93, 4294901760
  %261 = vmatmul.mubr.f32.gmra.mrb[0].mxu0 %v260
  %v262 = vpop.f32.mrb[0].mxu0
  %v263 = vadd.f32 %v172, %v262
  %v264 = vpop.f32.mrb[0].mxu0
  %265 = vmatprep.mubr.f32.mxu0 0.0
  %v266 = vand.u32 %v96, 4294901760
  %267 = vmatmul.mubr.f32.gmra.mrb[0].mxu0 %v266
  %v268 = vpop.f32.mrb[0].mxu0
  %v269 = vadd.f32 %v182, %v268
  %v270 = vpop.f32.mrb[0].mxu0
  %271 = vdwg.mxu0
  %272 = vmatprep.subr.mxu0 0.0
  %v273 = vand.u32 %v84, 4294901760
  %v274 = vsub.f32 %v84, %v273
  %275 = vmatpush1.msra.mxu0 %v274
  %276 = vmatprep.subr.mxu0 0.0
  %v277 = vand.u32 %v85, 4294901760
  %v278 = vsub.f32 %v85, %v277
  %279 = vmatpush1.msra.mxu0 %v278
  %280 = vmatprep.subr.mxu0 0.0
  %281 = vmatpush1.msra.mxu0 0.0
  %282 = vmatprep.subr.mxu0 0.0
  %283 = vmatpush1.msra.mxu0 0.0
  %284 = vmatprep.subr.mxu0 0.0
  %285 = vmatpush1.msra.mxu0 0.0
  %286 = vmatprep.subr.mxu0 0.0
  %287 = vmatpush1.msra.mxu0 0.0
  %288 = vmatprep.subr.mxu0 0.0
  %289 = vmatpush1.msra.mxu0 0.0
  %290 = vmatprep.subr.mxu0 0.0
  %291 = vmatpush1.msra.mxu0 0.0
  %292 = vmatprep.subr.mxu0 0.0
  %293 = vmatpush1.msra.mxu0 0.0
  %294 = vmatprep.subr.mxu0 0.0
  %295 = vmatpush1.msra.mxu0 0.0
  %296 = vmatprep.subr.mxu0 0.0
  %297 = vmatpush1.msra.mxu0 0.0
  %298 = vmatprep.subr.mxu0 0.0
  %299 = vmatpush1.msra.mxu0 0.0
  %300 = vmatprep.subr.mxu0 0.0
  %301 = vmatpush1.msra.mxu0 0.0
  %302 = vmatprep.subr.mxu0 0.0
  %303 = vmatpush1.msra.mxu0 0.0
  %304 = vmatprep.subr.mxu0 0.0
  %305 = vmatpush1.msra.mxu0 0.0
  %306 = vmatprep.subr.mxu0 0.0
  %307 = vmatpush1.msra.mxu0 0.0
  %308 = vmatprep.subr.mxu0 0.0
  %309 = vmatpush1.msra.mxu0 0.0
  %310 = vmatprep.subr.mxu0 0.0
  %311 = vmatpush1.msra.mxu0 0.0
  %312 = vmatprep.subr.mxu0 0.0
  %313 = vmatpush1.msra.mxu0 0.0
  %314 = vmatprep.subr.mxu0 0.0
  %315 = vmatpush1.msra.mxu0 0.0
  %316 = vmatprep.subr.mxu0 0.0
  %317 = vmatpush1.msra.mxu0 0.0
  %318 = vmatprep.subr.mxu0 0.0
  %319 = vmatpush1.msra.mxu0 0.0
  %320 = vmatprep.subr.mxu0 0.0
  %321 = vmatpush1.msra.mxu0 0.0
  %322 = vmatprep.subr.mxu0 0.0
  %323 = vmatpush1.msra.mxu0 0.0
  %324 = vmatprep.subr.mxu0 0.0
  %325 = vmatpush1.msra.mxu0 0.0
  %326 = vmatprep.subr.mxu0 0.0
  %327 = vmatpush1.msra.mxu0 0.0
  %328 = vmatprep.subr.mxu0 0.0
  %329 = vmatpush1.msra.mxu0 0.0
  %330 = vmatprep.subr.mxu0 0.0
  %331 = vmatpush1.msra.mxu0 0.0
  %332 = vmatprep.subr.mxu0 0.0
  %333 = vmatpush1.msra.mxu0 0.0
  %334 = vmatprep.subr.mxu0 0.0
  %335 = vmatpush1.msra.mxu0 0.0
  %336 = vmatprep.subr.mxu0 0.0
  %337 = vmatpush1.msra.mxu0 0.0
  %338 = vmatprep.subr.mxu0 0.0
  %339 = vmatpush1.msra.mxu0 0.0
  %340 = vmatprep.mubr.f32.mxu0 0.0
  %v341 = vand.u32 %v93, 4294901760
  %v342 = vsub.f32 %v93, %v341
  %343 = vmatmul.mubr.f32.gmra.mrb[0].mxu0 %v342
  %v344 = vpop.f32.mrb[0].mxu0
  %v345 = vadd.f32 %v263, %v344
  %v346 = vpop.f32.mrb[0].mxu0
  %347 = vmatprep.mubr.f32.mxu0 0.0
  %v348 = vand.u32 %v96, 4294901760
  %v349 = vsub.f32 %v96, %v348
  %350 = vmatmul.mubr.f32.gmra.mrb[0].mxu0 %v349
  %v351 = vpop.f32.mrb[0].mxu0
  %v352 = vadd.f32 %v269, %v351
  %v353 = vpop.f32.mrb[0].mxu0
  %354 = vdwg.mxu0
  %355 = vmatprep.subr.mxu0 0.0
  %v356 = vand.u32 %v84, 4294901760
  %357 = vmatpush1.msra.mxu0 %v356
  %358 = vmatprep.subr.mxu0 0.0
  %v359 = vand.u32 %v85, 4294901760
  %360 = vmatpush1.msra.mxu0 %v359
  %361 = vmatprep.subr.mxu0 0.0
  %362 = vmatpush1.msra.mxu0 0.0
  %363 = vmatprep.subr.mxu0 0.0
  %364 = vmatpush1.msra.mxu0 0.0
  %365 = vmatprep.subr.mxu0 0.0
  %366 = vmatpush1.msra.mxu0 0.0
  %367 = vmatprep.subr.mxu0 0.0
  %368 = vmatpush1.msra.mxu0 0.0
  %369 = vmatprep.subr.mxu0 0.0
  %370 = vmatpush1.msra.mxu0 0.0
  %371 = vmatprep.subr.mxu0 0.0
  %372 = vmatpush1.msra.mxu0 0.0
  %373 = vmatprep.subr.mxu0 0.0
  %374 = vmatpush1.msra.mxu0 0.0
  %375 = vmatprep.subr.mxu0 0.0
  %376 = vmatpush1.msra.mxu0 0.0
  %377 = vmatprep.subr.mxu0 0.0
  %378 = vmatpush1.msra.mxu0 0.0
  %379 = vmatprep.subr.mxu0 0.0
  %380 = vmatpush1.msra.mxu0 0.0
  %381 = vmatprep.subr.mxu0 0.0
  %382 = vmatpush1.msra.mxu0 0.0
  %383 = vmatprep.subr.mxu0 0.0
  %384 = vmatpush1.msra.mxu0 0.0
  %385 = vmatprep.subr.mxu0 0.0
  %386 = vmatpush1.msra.mxu0 0.0
  %387 = vmatprep.subr.mxu0 0.0
  %388 = vmatpush1.msra.mxu0 0.0
  %389 = vmatprep.subr.mxu0 0.0
  %390 = vmatpush1.msra.mxu0 0.0
  %391 = vmatprep.subr.mxu0 0.0
  %392 = vmatpush1.msra.mxu0 0.0
  %393 = vmatprep.subr.mxu0 0.0
  %394 = vmatpush1.msra.mxu0 0.0
  %395 = vmatprep.subr.mxu0 0.0
  %396 = vmatpush1.msra.mxu0 0.0
  %397 = vmatprep.subr.mxu0 0.0
  %398 = vmatpush1.msra.mxu0 0.0
  %399 = vmatprep.subr.mxu0 0.0
  %400 = vmatpush1.msra.mxu0 0.0
  %401 = vmatprep.subr.mxu0 0.0
  %402 = vmatpush1.msra.mxu0 0.0
  %403 = vmatprep.subr.mxu0 0.0
  %404 = vmatpush1.msra.mxu0 0.0
  %405 = vmatprep.subr.mxu0 0.0
  %406 = vmatpush1.msra.mxu0 0.0
  %407 = vmatprep.subr.mxu0 0.0
  %408 = vmatpush1.msra.mxu0 0.0
  %409 = vmatprep.subr.mxu0 0.0
  %410 = vmatpush1.msra.mxu0 0.0
  %411 = vmatprep.subr.mxu0 0.0
  %412 = vmatpush1.msra.mxu0 0.0
  %413 = vmatprep.subr.mxu0 0.0
  %414 = vmatpush1.msra.mxu0 0.0
  %415 = vmatprep.subr.mxu0 0.0
  %416 = vmatpush1.msra.mxu0 0.0
  %417 = vmatprep.subr.mxu0 0.0
  %418 = vmatpush1.msra.mxu0 0.0
  %419 = vmatprep.subr.mxu0 0.0
  %420 = vmatpush1.msra.mxu0 0.0
  %421 = vmatprep.mubr.f32.mxu0 0.0
  %v422 = vand.u32 %v93, 4294901760
  %v423 = vsub.f32 %v93, %v422
  %v424 = vand.u32 %v423, 4294901760
  %425 = vmatmul.mubr.f32.gmra.mrb[0].mxu0 %v424
  %v426 = vpop.f32.mrb[0].mxu0
  %v427 = vadd.f32 %v345, %v426
  %v428 = vpop.f32.mrb[0].mxu0
  %429 = vmatprep.mubr.f32.mxu0 0.0
  %v430 = vand.u32 %v96, 4294901760
  %v431 = vsub.f32 %v96, %v430
  %v432 = vand.u32 %v431, 4294901760
  %433 = vmatmul.mubr.f32.gmra.mrb[0].mxu0 %v432
  %v434 = vpop.f32.mrb[0].mxu0
  %v435 = vadd.f32 %v352, %v434
  %v436 = vpop.f32.mrb[0].mxu0
  %437 = vdwg.mxu0
  %438 = vmatprep.subr.mxu0 0.0
  %v439 = vand.u32 %v84, 4294901760
  %v440 = vsub.f32 %v84, %v439
  %v441 = vand.u32 %v440, 4294901760
  %442 = vmatpush1.msra.mxu0 %v441
  %443 = vmatprep.subr.mxu0 0.0
  %v444 = vand.u32 %v85, 4294901760
  %v445 = vsub.f32 %v85, %v444
  %v446 = vand.u32 %v445, 4294901760
  %447 = vmatpush1.msra.mxu0 %v446
  %448 = vmatprep.subr.mxu0 0.0
  %449 = vmatpush1.msra.mxu0 0.0
  %450 = vmatprep.subr.mxu0 0.0
  %451 = vmatpush1.msra.mxu0 0.0
  %452 = vmatprep.subr.mxu0 0.0
  %453 = vmatpush1.msra.mxu0 0.0
  %454 = vmatprep.subr.mxu0 0.0
  %455 = vmatpush1.msra.mxu0 0.0
  %456 = vmatprep.subr.mxu0 0.0
  %457 = vmatpush1.msra.mxu0 0.0
  %458 = vmatprep.subr.mxu0 0.0
  %459 = vmatpush1.msra.mxu0 0.0
  %460 = vmatprep.subr.mxu0 0.0
  %461 = vmatpush1.msra.mxu0 0.0
  %462 = vmatprep.subr.mxu0 0.0
  %463 = vmatpush1.msra.mxu0 0.0
  %464 = vmatprep.subr.mxu0 0.0
  %465 = vmatpush1.msra.mxu0 0.0
  %466 = vmatprep.subr.mxu0 0.0
  %467 = vmatpush1.msra.mxu0 0.0
  %468 = vmatprep.subr.mxu0 0.0
  %469 = vmatpush1.msra.mxu0 0.0
  %470 = vmatprep.subr.mxu0 0.0
  %471 = vmatpush1.msra.mxu0 0.0
  %472 = vmatprep.subr.mxu0 0.0
  %473 = vmatpush1.msra.mxu0 0.0
  %474 = vmatprep.subr.mxu0 0.0
  %475 = vmatpush1.msra.mxu0 0.0
  %476 = vmatprep.subr.mxu0 0.0
  %477 = vmatpush1.msra.mxu0 0.0
  %478 = vmatprep.subr.mxu0 0.0
  %479 = vmatpush1.msra.mxu0 0.0
  %480 = vmatprep.subr.mxu0 0.0
  %481 = vmatpush1.msra.mxu0 0.0
  %482 = vmatprep.subr.mxu0 0.0
  %483 = vmatpush1.msra.mxu0 0.0
  %484 = vmatprep.subr.mxu0 0.0
  %485 = vmatpush1.msra.mxu0 0.0
  %486 = vmatprep.subr.mxu0 0.0
  %487 = vmatpush1.msra.mxu0 0.0
  %488 = vmatprep.subr.mxu0 0.0
  %489 = vmatpush1.msra.mxu0 0.0
  %490 = vmatprep.subr.mxu0 0.0
  %491 = vmatpush1.msra.mxu0 0.0
  %492 = vmatprep.subr.mxu0 0.0
  %493 = vmatpush1.msra.mxu0 0.0
  %494 = vmatprep.subr.mxu0 0.0
  %495 = vmatpush1.msra.mxu0 0.0
  %496 = vmatprep.subr.mxu0 0.0
  %497 = vmatpush1.msra.mxu0 0.0
  %498 = vmatprep.subr.mxu0 0.0
  %499 = vmatpush1.msra.mxu0 0.0
  %500 = vmatprep.subr.mxu0 0.0
  %501 = vmatpush1.msra.mxu0 0.0
  %502 = vmatprep.subr.mxu0 0.0
  %503 = vmatpush1.msra.mxu0 0.0
  %504 = vmatprep.subr.mxu0 0.0
  %505 = vmatpush1.msra.mxu0 0.0
  %506 = vmatprep.subr.mxu0 0.0
  %507 = vmatpush1.msra.mxu0 0.0
  %508 = vmatprep.mubr.f32.mxu0 0.0
  %v509 = vand.u32 %v93, 4294901760
  %510 = vmatmul.mubr.f32.gmra.mrb[0].mxu0 %v509
  %v511 = vpop.f32.mrb[0].mxu0
  %v512 = vadd.f32 %v427, %v511
  %v513 = vpop.f32.mrb[0].mxu0
  %514 = vmatprep.mubr.f32.mxu0 0.0
  %v515 = vand.u32 %v96, 4294901760
  %516 = vmatmul.mubr.f32.gmra.mrb[0].mxu0 %v515
  %v517 = vpop.f32.mrb[0].mxu0
  %v518 = vadd.f32 %v435, %v517
  %v519 = vpop.f32.mrb[0].mxu0
  %520 = vdwg.mxu0
  %521 = vmatprep.subr.mxu0 0.0
  %v522 = vand.u32 %v84, 4294901760
  %523 = vmatpush1.msra.mxu0 %v522
  %524 = vmatprep.subr.mxu0 0.0
  %v525 = vand.u32 %v85, 4294901760
  %526 = vmatpush1.msra.mxu0 %v525
  %527 = vmatprep.subr.mxu0 0.0
  %528 = vmatpush1.msra.mxu0 0.0
  %529 = vmatprep.subr.mxu0 0.0
  %530 = vmatpush1.msra.mxu0 0.0
  %531 = vmatprep.subr.mxu0 0.0
  %532 = vmatpush1.msra.mxu0 0.0
  %533 = vmatprep.subr.mxu0 0.0
  %534 = vmatpush1.msra.mxu0 0.0
  %535 = vmatprep.subr.mxu0 0.0
  %536 = vmatpush1.msra.mxu0 0.0
  %537 = vmatprep.subr.mxu0 0.0
  %538 = vmatpush1.msra.mxu0 0.0
  %539 = vmatprep.subr.mxu0 0.0
  %540 = vmatpush1.msra.mxu0 0.0
  %541 = vmatprep.subr.mxu0 0.0
  %542 = vmatpush1.msra.mxu0 0.0
  %543 = vmatprep.subr.mxu0 0.0
  %544 = vmatpush1.msra.mxu0 0.0
  %545 = vmatprep.subr.mxu0 0.0
  %546 = vmatpush1.msra.mxu0 0.0
  %547 = vmatprep.subr.mxu0 0.0
  %548 = vmatpush1.msra.mxu0 0.0
  %549 = vmatprep.subr.mxu0 0.0
  %550 = vmatpush1.msra.mxu0 0.0
  %551 = vmatprep.subr.mxu0 0.0
  %552 = vmatpush1.msra.mxu0 0.0
  %553 = vmatprep.subr.mxu0 0.0
  %554 = vmatpush1.msra.mxu0 0.0
  %555 = vmatprep.subr.mxu0 0.0
  %556 = vmatpush1.msra.mxu0 0.0
  %557 = vmatprep.subr.mxu0 0.0
  %558 = vmatpush1.msra.mxu0 0.0
  %559 = vmatprep.subr.mxu0 0.0
  %560 = vmatpush1.msra.mxu0 0.0
  %561 = vmatprep.subr.mxu0 0.0
  %562 = vmatpush1.msra.mxu0 0.0
  %563 = vmatprep.subr.mxu0 0.0
  %564 = vmatpush1.msra.mxu0 0.0
  %565 = vmatprep.subr.mxu0 0.0
  %566 = vmatpush1.msra.mxu0 0.0
  %567 = vmatprep.subr.mxu0 0.0
  %568 = vmatpush1.msra.mxu0 0.0
  %569 = vmatprep.subr.mxu0 0.0
  %570 = vmatpush1.msra.mxu0 0.0
  %571 = vmatprep.subr.mxu0 0.0
  %572 = vmatpush1.msra.mxu0 0.0
  %573 = vmatprep.subr.mxu0 0.0
  %574 = vmatpush1.msra.mxu0 0.0
  %575 = vmatprep.subr.mxu0 0.0
  %576 = vmatpush1.msra.mxu0 0.0
  %577 = vmatprep.subr.mxu0 0.0
  %578 = vmatpush1.msra.mxu0 0.0
  %579 = vmatprep.subr.mxu0 0.0
  %580 = vmatpush1.msra.mxu0 0.0
  %581 = vmatprep.subr.mxu0 0.0
  %582 = vmatpush1.msra.mxu0 0.0
  %583 = vmatprep.subr.mxu0 0.0
  %584 = vmatpush1.msra.mxu0 0.0
  %585 = vmatprep.subr.mxu0 0.0
  %586 = vmatpush1.msra.mxu0 0.0
  %587 = vmatprep.mubr.f32.mxu0 0.0
  %v588 = vand.u32 %v93, 4294901760
  %589 = vmatmul.mubr.f32.gmra.mrb[0].mxu0 %v588
  %v590 = vpop.f32.mrb[0].mxu0
  %v591 = vadd.f32 %v512, %v590
  %v592 = vpop.f32.mrb[0].mxu0
  %593 = vmatprep.mubr.f32.mxu0 0.0
  %v594 = vand.u32 %v96, 4294901760
  %595 = vmatmul.mubr.f32.gmra.mrb[0].mxu0 %v594
  %v596 = vpop.f32.mrb[0].mxu0
  %v597 = vadd.f32 %v518, %v596
  %v598 = vpop.f32.mrb[0].mxu0
  %599 = vdwg.mxu0
  %v600 = vld [vmem:[%s1 + $0x10] sm:$0xff]
  %v601 = vxor.u32 %v591, 2147483648
  %v602 = vmul.f32 %v601, 1.442695
  %v603 = vpow.pop %v602
  %v604 = vadd.f32 %v603, 1.0
  %v605 = vrcp.pop %v604
  %v606 = vmul.f32 1.0, %v605
  %v607 = vmul.f32 %v606, 2.0
  %v608 = vsub.f32 %v607, 1.0
  %610 = vrot.lane.b32.xlu0 %v608, 104
  %v611 = vpop.permute.xlu0 %610
  %v613 = vmul.f32 %v606, %v611
  %v614 = vtanh.pop %v613
  %616 = vrot.lane.b32.xlu0 %v614, 16
  %v617 = vpop.permute.xlu0 %616
  %v619 = vmul.f32 %v606, %v617
  %621 = vset.pattern.permute.xlu0 16
  %622 = vperm.xlu0 %621, %v619
  %v623 = vpop.permute.xlu0 %622
  %v625 = vlaneseq
  %v626 = vshrl.u32 %v625, 7
  %v627 = vsub.s32 0, %v626
  %v628 = vrot.slane %v600, %v627
  %v629 = vmul.f32 %v623, %v628
  %630 = vset.pattern.permute.xlu0 17
  %631 = vperm.xlu0 %630, %v619
  %v632 = vpop.permute.xlu0 %631
  %v634 = vlaneseq
  %v635 = vshrl.u32 %v634, 7
  %v636 = vsub.s32 1, %v635
  %v637 = vrot.slane %v600, %v636
  %v638 = vmul.f32 %v632, %v637
  %639 = vset.pattern.permute.xlu0 18
  %640 = vperm.xlu0 %639, %v619
  %v641 = vpop.permute.xlu0 %640
  %v643 = vlaneseq
  %v644 = vshrl.u32 %v643, 7
  %v645 = vsub.s32 2, %v644
  %v646 = vrot.slane %v600, %v645
  %v647 = vmul.f32 %v641, %v646
  %648 = vset.pattern.permute.xlu0 19
  %649 = vperm.xlu0 %648, %v619
  %v650 = vpop.permute.xlu0 %649
  %v652 = vlaneseq
  %v653 = vshrl.u32 %v652, 7
  %v654 = vsub.s32 3, %v653
  %v655 = vrot.slane %v600, %v654
  %v656 = vmul.f32 %v650, %v655
  %657 = vset.pattern.permute.xlu0 20
  %658 = vperm.xlu0 %657, %v619
  %v659 = vpop.permute.xlu0 %658
  %v661 = vlaneseq
  %v662 = vshrl.u32 %v661, 7
  %v663 = vsub.s32 4, %v662
  %v664 = vrot.slane %v600, %v663
  %v665 = vmul.f32 %v659, %v664
  %666 = vset.pattern.permute.xlu0 21
  %667 = vperm.xlu0 %666, %v619
  %v668 = vpop.permute.xlu0 %667
  %v670 = vlaneseq
  %v671 = vshrl.u32 %v670, 7
  %v672 = vsub.s32 5, %v671
  %v673 = vrot.slane %v600, %v672
  %v674 = vmul.f32 %v668, %v673
  %675 = vset.pattern.permute.xlu0 22
  %676 = vperm.xlu0 %675, %v619
  %v677 = vpop.permute.xlu0 %676
  %v679 = vlaneseq
  %v680 = vshrl.u32 %v679, 7
  %v681 = vsub.s32 6, %v680
  %v682 = vrot.slane %v600, %v681
  %v683 = vmul.f32 %v677, %v682
  %684 = vset.pattern.permute.xlu0 23
  %685 = vperm.xlu0 %684, %v619
  %v686 = vpop.permute.xlu0 %685
  %v688 = vlaneseq
  %v689 = vshrl.u32 %v688, 7
  %v690 = vsub.s32 7, %v689
  %v691 = vrot.slane %v600, %v690
  %v692 = vmul.f32 %v686, %v691
  %v693 = vadd.f32 %v629, %v638
  %v694 = vadd.f32 %v647, %v656
  %v695 = vadd.f32 %v665, %v674
  %v696 = vadd.f32 %v683, %v692
  %v697 = vadd.f32 %v693, %v694
  %v698 = vadd.f32 %v695, %v696
  %v699 = vadd.f32 %v697, %v698
  %v701 = vrot.slane %v699, 6
  %v703 = vadd.f32 %v591, %v701
  %v704 = vxor.u32 %v703, 2147483648
  %v705 = vmul.f32 %v704, 1.442695
  %v706 = vpow.pop %v705
  %v707 = vadd.f32 %v706, 1.0
  %v708 = vrcp.pop %v707
  %v709 = vmul.f32 1.0, %v708
  %v710 = vmul.f32 %v709, 2.0
  %v711 = vsub.f32 %v710, 1.0
  %v713 = vrot.slane %v613, 6
  %714 = vrot.lane.b32.xlu0 %v713, 8
  %v715 = vpop.permute.xlu0 %714
  %v717 = vmul.f32 %v709, %v715
  %719 = vrot.lane.b32.xlu0 %v711, 104
  %v720 = vpop.permute.xlu0 %719
  %v722 = vmul.f32 %v709, %v720
  %724 = vrot.lane.b32.xlu0 %v722, 8
  %v725 = vpop.permute.xlu0 %724
  %v727 = vadd.f32 %v717, %v725
  %v728 = vtanh.pop %v727
  %730 = vrot.lane.b32.xlu0 %v728, 8
  %v731 = vpop.permute.xlu0 %730
  %v733 = vmul.f32 %v709, %v731
  %735 = vset.pattern.permute.xlu0 16
  %736 = vperm.xlu0 %735, %v733
  %v737 = vpop.permute.xlu0 %736
  %v739 = vmul.f32 %v737, %v628
  %740 = vset.pattern.permute.xlu0 17
  %741 = vperm.xlu0 %740, %v733
  %v742 = vpop.permute.xlu0 %741
  %v744 = vmul.f32 %v742, %v637
  %745 = vset.pattern.permute.xlu0 18
  %746 = vperm.xlu0 %745, %v733
  %v747 = vpop.permute.xlu0 %746
  %v749 = vmul.f32 %v747, %v646
  %750 = vset.pattern.permute.xlu0 19
  %751 = vperm.xlu0 %750, %v733
  %v752 = vpop.permute.xlu0 %751
  %v754 = vmul.f32 %v752, %v655
  %755 = vset.pattern.permute.xlu0 20
  %756 = vperm.xlu0 %755, %v733
  %v757 = vpop.permute.xlu0 %756
  %v759 = vmul.f32 %v757, %v664
  %760 = vset.pattern.permute.xlu0 21
  %761 = vperm.xlu0 %760, %v733
  %v762 = vpop.permute.xlu0 %761
  %v764 = vmul.f32 %v762, %v673
  %765 = vset.pattern.permute.xlu0 22
  %766 = vperm.xlu0 %765, %v733
  %v767 = vpop.permute.xlu0 %766
  %v769 = vmul.f32 %v767, %v682
  %770 = vset.pattern.permute.xlu0 23
  %771 = vperm.xlu0 %770, %v733
  %v772 = vpop.permute.xlu0 %771
  %v774 = vmul.f32 %v772, %v691
  %v775 = vadd.f32 %v739, %v744
  %v776 = vadd.f32 %v749, %v754
  %v777 = vadd.f32 %v759, %v764
  %v778 = vadd.f32 %v769, %v774
  %v779 = vadd.f32 %v775, %v776
  %v780 = vadd.f32 %v777, %v778
  %v781 = vadd.f32 %v779, %v780
  %v783 = vrot.slane %v781, 6
  %v785 = vadd.f32 %v591, %v783
  %v786 = vxor.u32 %v785, 2147483648
  %v787 = vmul.f32 %v786, 1.442695
  %v788 = vpow.pop %v787
  %v789 = vadd.f32 %v788, 1.0
  %v790 = vrcp.pop %v789
  %v791 = vmul.f32 1.0, %v790
  %v792 = vmul.f32 %v791, 2.0
  %v793 = vsub.f32 %v792, 1.0
  %v795 = vrot.slane %v727, 6
  %v797 = vmul.f32 %v791, %v795
  %799 = vrot.lane.b32.xlu0 %v793, 104
  %v800 = vpop.permute.xlu0 %799
  %v802 = vmul.f32 %v791, %v800
  %804 = vrot.lane.b32.xlu0 %v802, 8
  %v805 = vpop.permute.xlu0 %804
  %v807 = vadd.f32 %v797, %v805
  %v808 = vtanh.pop %v807
  %810 = vrot.lane.b32.xlu0 %v808, 8
  %v811 = vpop.permute.xlu0 %810
  %v813 = vmul.f32 %v791, %v811
  %815 = vset.pattern.permute.xlu0 16
  %816 = vperm.xlu0 %815, %v813
  %v817 = vpop.permute.xlu0 %816
  %v819 = vmul.f32 %v817, %v628
  %820 = vset.pattern.permute.xlu0 17
  %821 = vperm.xlu0 %820, %v813
  %v822 = vpop.permute.xlu0 %821
  %v824 = vmul.f32 %v822, %v637
  %825 = vset.pattern.permute.xlu0 18
  %826 = vperm.xlu0 %825, %v813
  %v827 = vpop.permute.xlu0 %826
  %v829 = vmul.f32 %v827, %v646
  %830 = vset.pattern.permute.xlu0 19
  %831 = vperm.xlu0 %830, %v813
  %v832 = vpop.permute.xlu0 %831
  %v834 = vmul.f32 %v832, %v655
  %835 = vset.pattern.permute.xlu0 20
  %836 = vperm.xlu0 %835, %v813
  %v837 = vpop.permute.xlu0 %836
  %v839 = vmul.f32 %v837, %v664
  %840 = vset.pattern.permute.xlu0 21
  %841 = vperm.xlu0 %840, %v813
  %v842 = vpop.permute.xlu0 %841
  %v844 = vmul.f32 %v842, %v673
  %845 = vset.pattern.permute.xlu0 22
  %846 = vperm.xlu0 %845, %v813
  %v847 = vpop.permute.xlu0 %846
  %v849 = vmul.f32 %v847, %v682
  %850 = vset.pattern.permute.xlu0 23
  %851 = vperm.xlu0 %850, %v813
  %v852 = vpop.permute.xlu0 %851
  %v854 = vmul.f32 %v852, %v691
  %v855 = vadd.f32 %v819, %v824
  %v856 = vadd.f32 %v829, %v834
  %v857 = vadd.f32 %v839, %v844
  %v858 = vadd.f32 %v849, %v854
  %v859 = vadd.f32 %v855, %v856
  %v860 = vadd.f32 %v857, %v858
  %v861 = vadd.f32 %v859, %v860
  %v863 = vrot.slane %v861, 6
  %v865 = vadd.f32 %v591, %v863
  %v866 = vxor.u32 %v865, 2147483648
  %v867 = vmul.f32 %v866, 1.442695
  %v868 = vpow.pop %v867
  %v869 = vadd.f32 %v868, 1.0
  %v870 = vrcp.pop %v869
  %v871 = vmul.f32 1.0, %v870
  %v872 = vmul.f32 %v871, 2.0
  %v873 = vsub.f32 %v872, 1.0
  %v875 = vrot.slane %v807, 6
  %v877 = vmul.f32 %v871, %v875
  %879 = vrot.lane.b32.xlu0 %v873, 104
  %v880 = vpop.permute.xlu0 %879
  %v882 = vmul.f32 %v871, %v880
  %884 = vrot.lane.b32.xlu0 %v882, 8
  %v885 = vpop.permute.xlu0 %884
  %v887 = vadd.f32 %v877, %v885
  %v888 = vtanh.pop %v887
  %890 = vrot.lane.b32.xlu0 %v888, 8
  %v891 = vpop.permute.xlu0 %890
  %v893 = vmul.f32 %v871, %v891
  %895 = vset.pattern.permute.xlu0 16
  %896 = vperm.xlu0 %895, %v893
  %v897 = vpop.permute.xlu0 %896
  %v899 = vmul.f32 %v897, %v628
  %900 = vset.pattern.permute.xlu0 17
  %901 = vperm.xlu0 %900, %v893
  %v902 = vpop.permute.xlu0 %901
  %v904 = vmul.f32 %v902, %v637
  %905 = vset.pattern.permute.xlu0 18
  %906 = vperm.xlu0 %905, %v893
  %v907 = vpop.permute.xlu0 %906
  %v909 = vmul.f32 %v907, %v646
  %910 = vset.pattern.permute.xlu0 19
  %911 = vperm.xlu0 %910, %v893
  %v912 = vpop.permute.xlu0 %911
  %v914 = vmul.f32 %v912, %v655
  %915 = vset.pattern.permute.xlu0 20
  %916 = vperm.xlu0 %915, %v893
  %v917 = vpop.permute.xlu0 %916
  %v919 = vmul.f32 %v917, %v664
  %920 = vset.pattern.permute.xlu0 21
  %921 = vperm.xlu0 %920, %v893
  %v922 = vpop.permute.xlu0 %921
  %v924 = vmul.f32 %v922, %v673
  %925 = vset.pattern.permute.xlu0 22
  %926 = vperm.xlu0 %925, %v893
  %v927 = vpop.permute.xlu0 %926
  %v929 = vmul.f32 %v927, %v682
  %930 = vset.pattern.permute.xlu0 23
  %931 = vperm.xlu0 %930, %v893
  %v932 = vpop.permute.xlu0 %931
  %v934 = vmul.f32 %v932, %v691
  %v935 = vadd.f32 %v899, %v904
  %v936 = vadd.f32 %v909, %v914
  %v937 = vadd.f32 %v919, %v924
  %v938 = vadd.f32 %v929, %v934
  %v939 = vadd.f32 %v935, %v936
  %v940 = vadd.f32 %v937, %v938
  %v941 = vadd.f32 %v939, %v940
  %v943 = vrot.slane %v941, 6
  %v945 = vadd.f32 %v597, %v943
  %v946 = vxor.u32 %v945, 2147483648
  %v947 = vmul.f32 %v946, 1.442695
  %v948 = vpow.pop %v947
  %v949 = vadd.f32 %v948, 1.0
  %v950 = vrcp.pop %v949
  %v951 = vmul.f32 1.0, %v950
  %v952 = vmul.f32 %v951, 2.0
  %v953 = vsub.f32 %v952, 1.0
  %v955 = vrot.slane %v887, 6
  %v957 = vmul.f32 %v951, %v955
  %959 = vrot.lane.b32.xlu0 %v953, 104
  %v960 = vpop.permute.xlu0 %959
  %v962 = vmul.f32 %v951, %v960
  %964 = vrot.lane.b32.xlu0 %v962, 8
  %v965 = vpop.permute.xlu0 %964
  %v967 = vadd.f32 %v957, %v965
  %v968 = vtanh.pop %v967
  %970 = vrot.lane.b32.xlu0 %v968, 8
  %v971 = vpop.permute.xlu0 %970
  %v973 = vmul.f32 %v951, %v971
  %975 = vset.pattern.permute.xlu0 16
  %976 = vperm.xlu0 %975, %v973
  %v977 = vpop.permute.xlu0 %976
  %v979 = vmul.f32 %v977, %v628
  %980 = vset.pattern.permute.xlu0 17
  %981 = vperm.xlu0 %980, %v973
  %v982 = vpop.permute.xlu0 %981
  %v984 = vmul.f32 %v982, %v637
  %985 = vset.pattern.permute.xlu0 18
  %986 = vperm.xlu0 %985, %v973
  %v987 = vpop.permute.xlu0 %986
  %v989 = vmul.f32 %v987, %v646
  %990 = vset.pattern.permute.xlu0 19
  %991 = vperm.xlu0 %990, %v973
  %v992 = vpop.permute.xlu0 %991
  %v994 = vmul.f32 %v992, %v655
  %995 = vset.pattern.permute.xlu0 20
  %996 = vperm.xlu0 %995, %v973
  %v997 = vpop.permute.xlu0 %996
  %v999 = vmul.f32 %v997, %v664
  %1000 = vset.pattern.permute.xlu0 21
  %1001 = vperm.xlu0 %1000, %v973
  %v1002 = vpop.permute.xlu0 %1001
  %v1004 = vmul.f32 %v1002, %v673
  %1005 = vset.pattern.permute.xlu0 22
  %1006 = vperm.xlu0 %1005, %v973
  %v1007 = vpop.permute.xlu0 %1006
  %v1009 = vmul.f32 %v1007, %v682
  %1010 = vset.pattern.permute.xlu0 23
  %1011 = vperm.xlu0 %1010, %v973
  %v1012 = vpop.permute.xlu0 %1011
  %v1014 = vmul.f32 %v1012, %v691
  %v1015 = vadd.f32 %v979, %v984
  %v1016 = vadd.f32 %v989, %v994
  %v1017 = vadd.f32 %v999, %v1004
  %v1018 = vadd.f32 %v1009, %v1014
  %v1019 = vadd.f32 %v1015, %v1016
  %v1020 = vadd.f32 %v1017, %v1018
  %v1021 = vadd.f32 %v1019, %v1020
  %v1023 = vrot.slane %v1021, 6
  %v1025 = vadd.f32 %v597, %v1023
  %v1026 = vxor.u32 %v1025, 2147483648
  %v1027 = vmul.f32 %v1026, 1.442695
  %v1028 = vpow.pop %v1027
  %v1029 = vadd.f32 %v1028, 1.0
  %v1030 = vrcp.pop %v1029
  %v1031 = vmul.f32 1.0, %v1030
  %v1032 = vmul.f32 %v1031, 2.0
  %v1033 = vsub.f32 %v1032, 1.0
  %v1035 = vrot.slane %v967, 6
  %v1037 = vmul.f32 %v1031, %v1035
  %1039 = vrot.lane.b32.xlu0 %v1033, 104
  %v1040 = vpop.permute.xlu0 %1039
  %v1042 = vmul.f32 %v1031, %v1040
  %1044 = vrot.lane.b32.xlu0 %v1042, 8
  %v1045 = vpop.permute.xlu0 %1044
  %v1047 = vadd.f32 %v1037, %v1045
  %v1048 = vtanh.pop %v1047
  %1050 = vrot.lane.b32.xlu0 %v1048, 8
  %v1051 = vpop.permute.xlu0 %1050
  %v1053 = vmul.f32 %v1031, %v1051
  %1055 = vset.pattern.permute.xlu0 16
  %1056 = vperm.xlu0 %1055, %v1053
  %v1057 = vpop.permute.xlu0 %1056
  %v1059 = vmul.f32 %v1057, %v628
  %1060 = vset.pattern.permute.xlu0 17
  %1061 = vperm.xlu0 %1060, %v1053
  %v1062 = vpop.permute.xlu0 %1061
  %v1064 = vmul.f32 %v1062, %v637
  %1065 = vset.pattern.permute.xlu0 18
  %1066 = vperm.xlu0 %1065, %v1053
  %v1067 = vpop.permute.xlu0 %1066
  %v1069 = vmul.f32 %v1067, %v646
  %1070 = vset.pattern.permute.xlu0 19
  %1071 = vperm.xlu0 %1070, %v1053
  %v1072 = vpop.permute.xlu0 %1071
  %v1074 = vmul.f32 %v1072, %v655
  %1075 = vset.pattern.permute.xlu0 20
  %1076 = vperm.xlu0 %1075, %v1053
  %v1077 = vpop.permute.xlu0 %1076
  %v1079 = vmul.f32 %v1077, %v664
  %1080 = vset.pattern.permute.xlu0 21
  %1081 = vperm.xlu0 %1080, %v1053
  %v1082 = vpop.permute.xlu0 %1081
  %v1084 = vmul.f32 %v1082, %v673
  %1085 = vset.pattern.permute.xlu0 22
  %1086 = vperm.xlu0 %1085, %v1053
  %v1087 = vpop.permute.xlu0 %1086
  %v1089 = vmul.f32 %v1087, %v682
  %1090 = vset.pattern.permute.xlu0 23
  %1091 = vperm.xlu0 %1090, %v1053
  %v1092 = vpop.permute.xlu0 %1091
  %v1094 = vmul.f32 %v1092, %v691
  %v1095 = vadd.f32 %v1059, %v1064
  %v1096 = vadd.f32 %v1069, %v1074
  %v1097 = vadd.f32 %v1079, %v1084
  %v1098 = vadd.f32 %v1089, %v1094
  %v1099 = vadd.f32 %v1095, %v1096
  %v1100 = vadd.f32 %v1097, %v1098
  %v1101 = vadd.f32 %v1099, %v1100
  %v1103 = vrot.slane %v1101, 6
  %v1105 = vadd.f32 %v597, %v1103
  %v1106 = vxor.u32 %v1105, 2147483648
  %v1107 = vmul.f32 %v1106, 1.442695
  %v1108 = vpow.pop %v1107
  %v1109 = vadd.f32 %v1108, 1.0
  %v1110 = vrcp.pop %v1109
  %v1111 = vmul.f32 1.0, %v1110
  %v1112 = vmul.f32 %v1111, 2.0
  %v1113 = vsub.f32 %v1112, 1.0
  %v1115 = vrot.slane %v1047, 6
  %v1117 = vmul.f32 %v1111, %v1115
  %1119 = vrot.lane.b32.xlu0 %v1113, 104
  %v1120 = vpop.permute.xlu0 %1119
  %v1122 = vmul.f32 %v1111, %v1120
  %1124 = vrot.lane.b32.xlu0 %v1122, 8
  %v1125 = vpop.permute.xlu0 %1124
  %v1127 = vadd.f32 %v1117, %v1125
  %v1128 = vtanh.pop %v1127
  %1130 = vrot.lane.b32.xlu0 %v1128, 8
  %v1131 = vpop.permute.xlu0 %1130
  %v1133 = vmul.f32 %v1111, %v1131
  %1135 = vset.pattern.permute.xlu0 16
  %1136 = vperm.xlu0 %1135, %v1133
  %v1137 = vpop.permute.xlu0 %1136
  %v1139 = vmul.f32 %v1137, %v628
  %1140 = vset.pattern.permute.xlu0 17
  %1141 = vperm.xlu0 %1140, %v1133
  %v1142 = vpop.permute.xlu0 %1141
  %v1144 = vmul.f32 %v1142, %v637
  %1145 = vset.pattern.permute.xlu0 18
  %1146 = vperm.xlu0 %1145, %v1133
  %v1147 = vpop.permute.xlu0 %1146
  %v1149 = vmul.f32 %v1147, %v646
  %1150 = vset.pattern.permute.xlu0 19
  %1151 = vperm.xlu0 %1150, %v1133
  %v1152 = vpop.permute.xlu0 %1151
  %v1154 = vmul.f32 %v1152, %v655
  %1155 = vset.pattern.permute.xlu0 20
  %1156 = vperm.xlu0 %1155, %v1133
  %v1157 = vpop.permute.xlu0 %1156
  %v1159 = vmul.f32 %v1157, %v664
  %1160 = vset.pattern.permute.xlu0 21
  %1161 = vperm.xlu0 %1160, %v1133
  %v1162 = vpop.permute.xlu0 %1161
  %v1164 = vmul.f32 %v1162, %v673
  %1165 = vset.pattern.permute.xlu0 22
  %1166 = vperm.xlu0 %1165, %v1133
  %v1167 = vpop.permute.xlu0 %1166
  %v1169 = vmul.f32 %v1167, %v682
  %1170 = vset.pattern.permute.xlu0 23
  %1171 = vperm.xlu0 %1170, %v1133
  %v1172 = vpop.permute.xlu0 %1171
  %v1174 = vmul.f32 %v1172, %v691
  %v1175 = vadd.f32 %v1139, %v1144
  %v1176 = vadd.f32 %v1149, %v1154
  %v1177 = vadd.f32 %v1159, %v1164
  %v1178 = vadd.f32 %v1169, %v1174
  %v1179 = vadd.f32 %v1175, %v1176
  %v1180 = vadd.f32 %v1177, %v1178
  %v1181 = vadd.f32 %v1179, %v1180
  %v1183 = vrot.slane %v1181, 6
  %v1185 = vadd.f32 %v597, %v1183
  %v1186 = vxor.u32 %v1185, 2147483648
  %v1187 = vmul.f32 %v1186, 1.442695
  %v1188 = vpow.pop %v1187
  %v1189 = vadd.f32 %v1188, 1.0
  %v1190 = vrcp.pop %v1189
  %v1191 = vmul.f32 1.0, %v1190
  %v1192 = vmul.f32 %v1191, 2.0
  %v1193 = vsub.f32 %v1192, 1.0
  %v1195 = vrot.slane %v1127, 6
  %v1197 = vmul.f32 %v1191, %v1195
  %1199 = vrot.lane.b32.xlu0 %v1193, 104
  %v1200 = vpop.permute.xlu0 %1199
  %v1202 = vmul.f32 %v1191, %v1200
  %1204 = vrot.lane.b32.xlu0 %v1202, 8
  %v1205 = vpop.permute.xlu0 %1204
  %v1207 = vadd.f32 %v1197, %v1205
  %v1208 = vtanh.pop %v1207
  %1210 = vrot.lane.b32.xlu0 %v1208, 8
  %v1211 = vpop.permute.xlu0 %1210
  %v1213 = vmul.f32 %v1191, %v1211
  %v1214 = vsel %vm37, %v619, %v733
  %v1215 = vsel %vm39, %v1214, %v813
  %v1216 = vsel %vm41, %v1215, %v893
  %v1217 = vsel %vm37, %v973, %v1053
  %v1218 = vsel %vm39, %v1217, %v1133
  %v1219 = vsel %vm41, %v1218, %v1213
  %v1221 = vrot.slane %v1213, 6
  %v1223 = vrot.slane %v1133, 2
  %v1225 = vrot.slane %v1053, 6
  %v1227 = vrot.slane %v973, 2
  %v1229 = vrot.slane %v893, 6
  %v1231 = vrot.slane %v813, 2
  %v1233 = vrot.slane %v733, 6
  %v1235 = vrot.slane %v619, 2
  %v1237 = vsel %vm37, %v1221, %v1223
  %v1238 = vsel %vm39, %v1237, %v1225
  %v1239 = vsel %vm41, %v1238, %v1227
  %v1240 = vsel %vm37, %v1229, %v1231
  %v1241 = vsel %vm39, %v1240, %v1233
  %v1242 = vsel %vm41, %v1241, %v1235
  %1245 = vrot.lane.b32.xlu0 %v1216, 112
  %v1246 = vpop.permute.xlu0 %1245
  %1247 = vrot.lane.b32.xlu0 %v1219, 112
  %v1248 = vpop.permute.xlu0 %1247
  %1253 = vrot.lane.b32.xlu0 %v1239, 120
  %v1254 = vpop.permute.xlu0 %1253
  %1255 = vrot.lane.b32.xlu0 %v1242, 120
  %v1256 = vpop.permute.xlu0 %1255
  %v1259 = vsel %vm81, %v1246, %v1254
  %v1260 = vsel %vm81, %v1248, %v1256
  %v1261 = vld [vmem:[%s1 + $0x20] sm:$0xff]
  %v1262 = vld [vmem:[%s1 + $0x28] sm:$0xff]
  %v1263 = vld [vmem:[%s1 + $0x38] sm:$0x1]
  %v1264 = vlaneseq
  %v1265 = vshrl.u32 %v1264, 7
  %v1266 = vsub.s32 0, %v1265
  %v1267 = vrot.slane %v1263, %v1266
  %v1269 = vsel %vm91, %v1259, 0
  %v1272 = vsel %vm91, %v1260, 0
  %1274 = vmatprep.subr.mxu0 0.0
  %v1275 = vand.u32 %v1261, 4294901760
  %1276 = vmatpush1.msra.mxu0 %v1275
  %1277 = vmatprep.subr.mxu0 0.0
  %v1278 = vand.u32 %v1262, 4294901760
  %1279 = vmatpush1.msra.mxu0 %v1278
  %1280 = vmatprep.subr.mxu0 0.0
  %1281 = vmatpush1.msra.mxu0 0.0
  %1282 = vmatprep.subr.mxu0 0.0
  %1283 = vmatpush1.msra.mxu0 0.0
  %1284 = vmatprep.subr.mxu0 0.0
  %1285 = vmatpush1.msra.mxu0 0.0
  %1286 = vmatprep.subr.mxu0 0.0
  %1287 = vmatpush1.msra.mxu0 0.0
  %1288 = vmatprep.subr.mxu0 0.0
  %1289 = vmatpush1.msra.mxu0 0.0
  %1290 = vmatprep.subr.mxu0 0.0
  %1291 = vmatpush1.msra.mxu0 0.0
  %1292 = vmatprep.subr.mxu0 0.0
  %1293 = vmatpush1.msra.mxu0 0.0
  %1294 = vmatprep.subr.mxu0 0.0
  %1295 = vmatpush1.msra.mxu0 0.0
  %1296 = vmatprep.subr.mxu0 0.0
  %1297 = vmatpush1.msra.mxu0 0.0
  %1298 = vmatprep.subr.mxu0 0.0
  %1299 = vmatpush1.msra.mxu0 0.0
  %1300 = vmatprep.subr.mxu0 0.0
  %1301 = vmatpush1.msra.mxu0 0.0
  %1302 = vmatprep.subr.mxu0 0.0
  %1303 = vmatpush1.msra.mxu0 0.0
  %1304 = vmatprep.subr.mxu0 0.0
  %1305 = vmatpush1.msra.mxu0 0.0
  %1306 = vmatprep.subr.mxu0 0.0
  %1307 = vmatpush1.msra.mxu0 0.0
  %1308 = vmatprep.subr.mxu0 0.0
  %1309 = vmatpush1.msra.mxu0 0.0
  %1310 = vmatprep.subr.mxu0 0.0
  %1311 = vmatpush1.msra.mxu0 0.0
  %1312 = vmatprep.subr.mxu0 0.0
  %1313 = vmatpush1.msra.mxu0 0.0
  %1314 = vmatprep.subr.mxu0 0.0
  %1315 = vmatpush1.msra.mxu0 0.0
  %1316 = vmatprep.subr.mxu0 0.0
  %1317 = vmatpush1.msra.mxu0 0.0
  %1318 = vmatprep.subr.mxu0 0.0
  %1319 = vmatpush1.msra.mxu0 0.0
  %1320 = vmatprep.subr.mxu0 0.0
  %1321 = vmatpush1.msra.mxu0 0.0
  %1322 = vmatprep.subr.mxu0 0.0
  %1323 = vmatpush1.msra.mxu0 0.0
  %1324 = vmatprep.subr.mxu0 0.0
  %1325 = vmatpush1.msra.mxu0 0.0
  %1326 = vmatprep.subr.mxu0 0.0
  %1327 = vmatpush1.msra.mxu0 0.0
  %1328 = vmatprep.subr.mxu0 0.0
  %1329 = vmatpush1.msra.mxu0 0.0
  %1330 = vmatprep.subr.mxu0 0.0
  %1331 = vmatpush1.msra.mxu0 0.0
  %1332 = vmatprep.subr.mxu0 0.0
  %1333 = vmatpush1.msra.mxu0 0.0
  %1334 = vmatprep.subr.mxu0 0.0
  %1335 = vmatpush1.msra.mxu0 0.0
  %1336 = vmatprep.subr.mxu0 0.0
  %1337 = vmatpush1.msra.mxu0 0.0
  %1338 = vmatprep.subr.mxu0 0.0
  %1339 = vmatpush1.msra.mxu0 0.0
  %1340 = vmatprep.mubr.f32.mxu0 0.0
  %v1341 = vand.u32 %v1269, 4294901760
  %v1342 = vsub.f32 %v1269, %v1341
  %v1343 = vand.u32 %v1342, 4294901760
  %v1344 = vsub.f32 %v1342, %v1343
  %v1345 = vand.u32 %v1344, 4294901760
  %1346 = vmatmul.mubr.f32.gmra.mrb[0].mxu0 %v1345
  %v1347 = vpop.f32.mrb[0].mxu0
  %v1348 = vadd.f32 %v1267, %v1347
  %v1349 = vpop.f32.mrb[0].mxu0
  %1350 = vmatprep.mubr.f32.mxu0 0.0
  %v1351 = vand.u32 %v1272, 4294901760
  %v1352 = vsub.f32 %v1272, %v1351
  %v1353 = vand.u32 %v1352, 4294901760
  %v1354 = vsub.f32 %v1352, %v1353
  %v1355 = vand.u32 %v1354, 4294901760
  %1356 = vmatmul.mubr.f32.gmra.mrb[0].mxu0 %v1355
  %v1357 = vpop.f32.mrb[0].mxu0
  %v1358 = vadd.f32 %v1267, %v1357
  %v1359 = vpop.f32.mrb[0].mxu0
  %1360 = vdwg.mxu0
  %1361 = vmatprep.subr.mxu0 0.0
  %v1362 = vand.u32 %v1261, 4294901760
  %v1363 = vsub.f32 %v1261, %v1362
  %v1364 = vand.u32 %v1363, 4294901760
  %v1365 = vsub.f32 %v1363, %v1364
  %v1366 = vand.u32 %v1365, 4294901760
  %1367 = vmatpush1.msra.mxu0 %v1366
  %1368 = vmatprep.subr.mxu0 0.0
  %v1369 = vand.u32 %v1262, 4294901760
  %v1370 = vsub.f32 %v1262, %v1369
  %v1371 = vand.u32 %v1370, 4294901760
  %v1372 = vsub.f32 %v1370, %v1371
  %v1373 = vand.u32 %v1372, 4294901760
  %1374 = vmatpush1.msra.mxu0 %v1373
  %1375 = vmatprep.subr.mxu0 0.0
  %1376 = vmatpush1.msra.mxu0 0.0
  %1377 = vmatprep.subr.mxu0 0.0
  %1378 = vmatpush1.msra.mxu0 0.0
  %1379 = vmatprep.subr.mxu0 0.0
  %1380 = vmatpush1.msra.mxu0 0.0
  %1381 = vmatprep.subr.mxu0 0.0
  %1382 = vmatpush1.msra.mxu0 0.0
  %1383 = vmatprep.subr.mxu0 0.0
  %1384 = vmatpush1.msra.mxu0 0.0
  %1385 = vmatprep.subr.mxu0 0.0
  %1386 = vmatpush1.msra.mxu0 0.0
  %1387 = vmatprep.subr.mxu0 0.0
  %1388 = vmatpush1.msra.mxu0 0.0
  %1389 = vmatprep.subr.mxu0 0.0
  %1390 = vmatpush1.msra.mxu0 0.0
  %1391 = vmatprep.subr.mxu0 0.0
  %1392 = vmatpush1.msra.mxu0 0.0
  %1393 = vmatprep.subr.mxu0 0.0
  %1394 = vmatpush1.msra.mxu0 0.0
  %1395 = vmatprep.subr.mxu0 0.0
  %1396 = vmatpush1.msra.mxu0 0.0
  %1397 = vmatprep.subr.mxu0 0.0
  %1398 = vmatpush1.msra.mxu0 0.0
  %1399 = vmatprep.subr.mxu0 0.0
  %1400 = vmatpush1.msra.mxu0 0.0
  %1401 = vmatprep.subr.mxu0 0.0
  %1402 = vmatpush1.msra.mxu0 0.0
  %1403 = vmatprep.subr.mxu0 0.0
  %1404 = vmatpush1.msra.mxu0 0.0
  %1405 = vmatprep.subr.mxu0 0.0
  %1406 = vmatpush1.msra.mxu0 0.0
  %1407 = vmatprep.subr.mxu0 0.0
  %1408 = vmatpush1.msra.mxu0 0.0
  %1409 = vmatprep.subr.mxu0 0.0
  %1410 = vmatpush1.msra.mxu0 0.0
  %1411 = vmatprep.subr.mxu0 0.0
  %1412 = vmatpush1.msra.mxu0 0.0
  %1413 = vmatprep.subr.mxu0 0.0
  %1414 = vmatpush1.msra.mxu0 0.0
  %1415 = vmatprep.subr.mxu0 0.0
  %1416 = vmatpush1.msra.mxu0 0.0
  %1417 = vmatprep.subr.mxu0 0.0
  %1418 = vmatpush1.msra.mxu0 0.0
  %1419 = vmatprep.subr.mxu0 0.0
  %1420 = vmatpush1.msra.mxu0 0.0
  %1421 = vmatprep.subr.mxu0 0.0
  %1422 = vmatpush1.msra.mxu0 0.0
  %1423 = vmatprep.subr.mxu0 0.0
  %1424 = vmatpush1.msra.mxu0 0.0
  %1425 = vmatprep.subr.mxu0 0.0
  %1426 = vmatpush1.msra.mxu0 0.0
  %1427 = vmatprep.subr.mxu0 0.0
  %1428 = vmatpush1.msra.mxu0 0.0
  %1429 = vmatprep.subr.mxu0 0.0
  %1430 = vmatpush1.msra.mxu0 0.0
  %1431 = vmatprep.subr.mxu0 0.0
  %1432 = vmatpush1.msra.mxu0 0.0
  %1433 = vmatprep.subr.mxu0 0.0
  %1434 = vmatpush1.msra.mxu0 0.0
  %1435 = vmatprep.mubr.f32.mxu0 0.0
  %v1436 = vand.u32 %v1269, 4294901760
  %1437 = vmatmul.mubr.f32.gmra.mrb[0].mxu0 %v1436
  %v1438 = vpop.f32.mrb[0].mxu0
  %v1439 = vadd.f32 %v1348, %v1438
  %v1440 = vpop.f32.mrb[0].mxu0
  %1441 = vmatprep.mubr.f32.mxu0 0.0
  %v1442 = vand.u32 %v1272, 4294901760
  %1443 = vmatmul.mubr.f32.gmra.mrb[0].mxu0 %v1442
  %v1444 = vpop.f32.mrb[0].mxu0
  %v1445 = vadd.f32 %v1358, %v1444
  %v1446 = vpop.f32.mrb[0].mxu0
  %1447 = vdwg.mxu0
  %1448 = vmatprep.subr.mxu0 0.0
  %v1449 = vand.u32 %v1261, 4294901760
  %v1450 = vsub.f32 %v1261, %v1449
  %1451 = vmatpush1.msra.mxu0 %v1450
  %1452 = vmatprep.subr.mxu0 0.0
  %v1453 = vand.u32 %v1262, 4294901760
  %v1454 = vsub.f32 %v1262, %v1453
  %1455 = vmatpush1.msra.mxu0 %v1454
  %1456 = vmatprep.subr.mxu0 0.0
  %1457 = vmatpush1.msra.mxu0 0.0
  %1458 = vmatprep.subr.mxu0 0.0
  %1459 = vmatpush1.msra.mxu0 0.0
  %1460 = vmatprep.subr.mxu0 0.0
  %1461 = vmatpush1.msra.mxu0 0.0
  %1462 = vmatprep.subr.mxu0 0.0
  %1463 = vmatpush1.msra.mxu0 0.0
  %1464 = vmatprep.subr.mxu0 0.0
  %1465 = vmatpush1.msra.mxu0 0.0
  %1466 = vmatprep.subr.mxu0 0.0
  %1467 = vmatpush1.msra.mxu0 0.0
  %1468 = vmatprep.subr.mxu0 0.0
  %1469 = vmatpush1.msra.mxu0 0.0
  %1470 = vmatprep.subr.mxu0 0.0
  %1471 = vmatpush1.msra.mxu0 0.0
  %1472 = vmatprep.subr.mxu0 0.0
  %1473 = vmatpush1.msra.mxu0 0.0
  %1474 = vmatprep.subr.mxu0 0.0
  %1475 = vmatpush1.msra.mxu0 0.0
  %1476 = vmatprep.subr.mxu0 0.0
  %1477 = vmatpush1.msra.mxu0 0.0
  %1478 = vmatprep.subr.mxu0 0.0
  %1479 = vmatpush1.msra.mxu0 0.0
  %1480 = vmatprep.subr.mxu0 0.0
  %1481 = vmatpush1.msra.mxu0 0.0
  %1482 = vmatprep.subr.mxu0 0.0
  %1483 = vmatpush1.msra.mxu0 0.0
  %1484 = vmatprep.subr.mxu0 0.0
  %1485 = vmatpush1.msra.mxu0 0.0
  %1486 = vmatprep.subr.mxu0 0.0
  %1487 = vmatpush1.msra.mxu0 0.0
  %1488 = vmatprep.subr.mxu0 0.0
  %1489 = vmatpush1.msra.mxu0 0.0
  %1490 = vmatprep.subr.mxu0 0.0
  %1491 = vmatpush1.msra.mxu0 0.0
  %1492 = vmatprep.subr.mxu0 0.0
  %1493 = vmatpush1.msra.mxu0 0.0
  %1494 = vmatprep.subr.mxu0 0.0
  %1495 = vmatpush1.msra.mxu0 0.0
  %1496 = vmatprep.subr.mxu0 0.0
  %1497 = vmatpush1.msra.mxu0 0.0
  %1498 = vmatprep.subr.mxu0 0.0
  %1499 = vmatpush1.msra.mxu0 0.0
  %1500 = vmatprep.subr.mxu0 0.0
  %1501 = vmatpush1.msra.mxu0 0.0
  %1502 = vmatprep.subr.mxu0 0.0
  %1503 = vmatpush1.msra.mxu0 0.0
  %1504 = vmatprep.subr.mxu0 0.0
  %1505 = vmatpush1.msra.mxu0 0.0
  %1506 = vmatprep.subr.mxu0 0.0
  %1507 = vmatpush1.msra.mxu0 0.0
  %1508 = vmatprep.subr.mxu0 0.0
  %1509 = vmatpush1.msra.mxu0 0.0
  %1510 = vmatprep.subr.mxu0 0.0
  %1511 = vmatpush1.msra.mxu0 0.0
  %1512 = vmatprep.subr.mxu0 0.0
  %1513 = vmatpush1.msra.mxu0 0.0
  %1514 = vmatprep.subr.mxu0 0.0
  %1515 = vmatpush1.msra.mxu0 0.0
  %1516 = vmatprep.mubr.f32.mxu0 0.0
  %v1517 = vand.u32 %v1269, 4294901760
  %v1518 = vsub.f32 %v1269, %v1517
  %1519 = vmatmul.mubr.f32.gmra.mrb[0].mxu0 %v1518
  %v1520 = vpop.f32.mrb[0].mxu0
  %v1521 = vadd.f32 %v1439, %v1520
  %v1522 = vpop.f32.mrb[0].mxu0
  %1523 = vmatprep.mubr.f32.mxu0 0.0
  %v1524 = vand.u32 %v1272, 4294901760
  %v1525 = vsub.f32 %v1272, %v1524
  %1526 = vmatmul.mubr.f32.gmra.mrb[0].mxu0 %v1525
  %v1527 = vpop.f32.mrb[0].mxu0
  %v1528 = vadd.f32 %v1445, %v1527
  %v1529 = vpop.f32.mrb[0].mxu0
  %1530 = vdwg.mxu0
  %1531 = vmatprep.subr.mxu0 0.0
  %v1532 = vand.u32 %v1261, 4294901760
  %1533 = vmatpush1.msra.mxu0 %v1532
  %1534 = vmatprep.subr.mxu0 0.0
  %v1535 = vand.u32 %v1262, 4294901760
  %1536 = vmatpush1.msra.mxu0 %v1535
  %1537 = vmatprep.subr.mxu0 0.0
  %1538 = vmatpush1.msra.mxu0 0.0
  %1539 = vmatprep.subr.mxu0 0.0
  %1540 = vmatpush1.msra.mxu0 0.0
  %1541 = vmatprep.subr.mxu0 0.0
  %1542 = vmatpush1.msra.mxu0 0.0
  %1543 = vmatprep.subr.mxu0 0.0
  %1544 = vmatpush1.msra.mxu0 0.0
  %1545 = vmatprep.subr.mxu0 0.0
  %1546 = vmatpush1.msra.mxu0 0.0
  %1547 = vmatprep.subr.mxu0 0.0
  %1548 = vmatpush1.msra.mxu0 0.0
  %1549 = vmatprep.subr.mxu0 0.0
  %1550 = vmatpush1.msra.mxu0 0.0
  %1551 = vmatprep.subr.mxu0 0.0
  %1552 = vmatpush1.msra.mxu0 0.0
  %1553 = vmatprep.subr.mxu0 0.0
  %1554 = vmatpush1.msra.mxu0 0.0
  %1555 = vmatprep.subr.mxu0 0.0
  %1556 = vmatpush1.msra.mxu0 0.0
  %1557 = vmatprep.subr.mxu0 0.0
  %1558 = vmatpush1.msra.mxu0 0.0
  %1559 = vmatprep.subr.mxu0 0.0
  %1560 = vmatpush1.msra.mxu0 0.0
  %1561 = vmatprep.subr.mxu0 0.0
  %1562 = vmatpush1.msra.mxu0 0.0
  %1563 = vmatprep.subr.mxu0 0.0
  %1564 = vmatpush1.msra.mxu0 0.0
  %1565 = vmatprep.subr.mxu0 0.0
  %1566 = vmatpush1.msra.mxu0 0.0
  %1567 = vmatprep.subr.mxu0 0.0
  %1568 = vmatpush1.msra.mxu0 0.0
  %1569 = vmatprep.subr.mxu0 0.0
  %1570 = vmatpush1.msra.mxu0 0.0
  %1571 = vmatprep.subr.mxu0 0.0
  %1572 = vmatpush1.msra.mxu0 0.0
  %1573 = vmatprep.subr.mxu0 0.0
  %1574 = vmatpush1.msra.mxu0 0.0
  %1575 = vmatprep.subr.mxu0 0.0
  %1576 = vmatpush1.msra.mxu0 0.0
  %1577 = vmatprep.subr.mxu0 0.0
  %1578 = vmatpush1.msra.mxu0 0.0
  %1579 = vmatprep.subr.mxu0 0.0
  %1580 = vmatpush1.msra.mxu0 0.0
  %1581 = vmatprep.subr.mxu0 0.0
  %1582 = vmatpush1.msra.mxu0 0.0
  %1583 = vmatprep.subr.mxu0 0.0
  %1584 = vmatpush1.msra.mxu0 0.0
  %1585 = vmatprep.subr.mxu0 0.0
  %1586 = vmatpush1.msra.mxu0 0.0
  %1587 = vmatprep.subr.mxu0 0.0
  %1588 = vmatpush1.msra.mxu0 0.0
  %1589 = vmatprep.subr.mxu0 0.0
  %1590 = vmatpush1.msra.mxu0 0.0
  %1591 = vmatprep.subr.mxu0 0.0
  %1592 = vmatpush1.msra.mxu0 0.0
  %1593 = vmatprep.subr.mxu0 0.0
  %1594 = vmatpush1.msra.mxu0 0.0
  %1595 = vmatprep.subr.mxu0 0.0
  %1596 = vmatpush1.msra.mxu0 0.0
  %1597 = vmatprep.mubr.f32.mxu0 0.0
  %v1598 = vand.u32 %v1269, 4294901760
  %v1599 = vsub.f32 %v1269, %v1598
  %v1600 = vand.u32 %v1599, 4294901760
  %1601 = vmatmul.mubr.f32.gmra.mrb[0].mxu0 %v1600
  %v1602 = vpop.f32.mrb[0].mxu0
  %v1603 = vadd.f32 %v1521, %v1602
  %v1604 = vpop.f32.mrb[0].mxu0
  %1605 = vmatprep.mubr.f32.mxu0 0.0
  %v1606 = vand.u32 %v1272, 4294901760
  %v1607 = vsub.f32 %v1272, %v1606
  %v1608 = vand.u32 %v1607, 4294901760
  %1609 = vmatmul.mubr.f32.gmra.mrb[0].mxu0 %v1608
  %v1610 = vpop.f32.mrb[0].mxu0
  %v1611 = vadd.f32 %v1528, %v1610
  %v1612 = vpop.f32.mrb[0].mxu0
  %1613 = vdwg.mxu0
  %1614 = vmatprep.subr.mxu0 0.0
  %v1615 = vand.u32 %v1261, 4294901760
  %v1616 = vsub.f32 %v1261, %v1615
  %v1617 = vand.u32 %v1616, 4294901760
  %1618 = vmatpush1.msra.mxu0 %v1617
  %1619 = vmatprep.subr.mxu0 0.0
  %v1620 = vand.u32 %v1262, 4294901760
  %v1621 = vsub.f32 %v1262, %v1620
  %v1622 = vand.u32 %v1621, 4294901760
  %1623 = vmatpush1.msra.mxu0 %v1622
  %1624 = vmatprep.subr.mxu0 0.0
  %1625 = vmatpush1.msra.mxu0 0.0
  %1626 = vmatprep.subr.mxu0 0.0
  %1627 = vmatpush1.msra.mxu0 0.0
  %1628 = vmatprep.subr.mxu0 0.0
  %1629 = vmatpush1.msra.mxu0 0.0
  %1630 = vmatprep.subr.mxu0 0.0
  %1631 = vmatpush1.msra.mxu0 0.0
  %1632 = vmatprep.subr.mxu0 0.0
  %1633 = vmatpush1.msra.mxu0 0.0
  %1634 = vmatprep.subr.mxu0 0.0
  %1635 = vmatpush1.msra.mxu0 0.0
  %1636 = vmatprep.subr.mxu0 0.0
  %1637 = vmatpush1.msra.mxu0 0.0
  %1638 = vmatprep.subr.mxu0 0.0
  %1639 = vmatpush1.msra.mxu0 0.0
  %1640 = vmatprep.subr.mxu0 0.0
  %1641 = vmatpush1.msra.mxu0 0.0
  %1642 = vmatprep.subr.mxu0 0.0
  %1643 = vmatpush1.msra.mxu0 0.0
  %1644 = vmatprep.subr.mxu0 0.0
  %1645 = vmatpush1.msra.mxu0 0.0
  %1646 = vmatprep.subr.mxu0 0.0
  %1647 = vmatpush1.msra.mxu0 0.0
  %1648 = vmatprep.subr.mxu0 0.0
  %1649 = vmatpush1.msra.mxu0 0.0
  %1650 = vmatprep.subr.mxu0 0.0
  %1651 = vmatpush1.msra.mxu0 0.0
  %1652 = vmatprep.subr.mxu0 0.0
  %1653 = vmatpush1.msra.mxu0 0.0
  %1654 = vmatprep.subr.mxu0 0.0
  %1655 = vmatpush1.msra.mxu0 0.0
  %1656 = vmatprep.subr.mxu0 0.0
  %1657 = vmatpush1.msra.mxu0 0.0
  %1658 = vmatprep.subr.mxu0 0.0
  %1659 = vmatpush1.msra.mxu0 0.0
  %1660 = vmatprep.subr.mxu0 0.0
  %1661 = vmatpush1.msra.mxu0 0.0
  %1662 = vmatprep.subr.mxu0 0.0
  %1663 = vmatpush1.msra.mxu0 0.0
  %1664 = vmatprep.subr.mxu0 0.0
  %1665 = vmatpush1.msra.mxu0 0.0
  %1666 = vmatprep.subr.mxu0 0.0
  %1667 = vmatpush1.msra.mxu0 0.0
  %1668 = vmatprep.subr.mxu0 0.0
  %1669 = vmatpush1.msra.mxu0 0.0
  %1670 = vmatprep.subr.mxu0 0.0
  %1671 = vmatpush1.msra.mxu0 0.0
  %1672 = vmatprep.subr.mxu0 0.0
  %1673 = vmatpush1.msra.mxu0 0.0
  %1674 = vmatprep.subr.mxu0 0.0
  %1675 = vmatpush1.msra.mxu0 0.0
  %1676 = vmatprep.subr.mxu0 0.0
  %1677 = vmatpush1.msra.mxu0 0.0
  %1678 = vmatprep.subr.mxu0 0.0
  %1679 = vmatpush1.msra.mxu0 0.0
  %1680 = vmatprep.subr.mxu0 0.0
  %1681 = vmatpush1.msra.mxu0 0.0
  %1682 = vmatprep.subr.mxu0 0.0
  %1683 = vmatpush1.msra.mxu0 0.0
  %1684 = vmatprep.mubr.f32.mxu0 0.0
  %v1685 = vand.u32 %v1269, 4294901760
  %1686 = vmatmul.mubr.f32.gmra.mrb[0].mxu0 %v1685
  %v1687 = vpop.f32.mrb[0].mxu0
  %v1688 = vadd.f32 %v1603, %v1687
  %v1689 = vpop.f32.mrb[0].mxu0
  %1690 = vmatprep.mubr.f32.mxu0 0.0
  %v1691 = vand.u32 %v1272, 4294901760
  %1692 = vmatmul.mubr.f32.gmra.mrb[0].mxu0 %v1691
  %v1693 = vpop.f32.mrb[0].mxu0
  %v1694 = vadd.f32 %v1611, %v1693
  %v1695 = vpop.f32.mrb[0].mxu0
  %1696 = vdwg.mxu0
  %1697 = vmatprep.subr.mxu0 0.0
  %v1698 = vand.u32 %v1261, 4294901760
  %1699 = vmatpush1.msra.mxu0 %v1698
  %1700 = vmatprep.subr.mxu0 0.0
  %v1701 = vand.u32 %v1262, 4294901760
  %1702 = vmatpush1.msra.mxu0 %v1701
  %1703 = vmatprep.subr.mxu0 0.0
  %1704 = vmatpush1.msra.mxu0 0.0
  %1705 = vmatprep.subr.mxu0 0.0
  %1706 = vmatpush1.msra.mxu0 0.0
  %1707 = vmatprep.subr.mxu0 0.0
  %1708 = vmatpush1.msra.mxu0 0.0
  %1709 = vmatprep.subr.mxu0 0.0
  %1710 = vmatpush1.msra.mxu0 0.0
  %1711 = vmatprep.subr.mxu0 0.0
  %1712 = vmatpush1.msra.mxu0 0.0
  %1713 = vmatprep.subr.mxu0 0.0
  %1714 = vmatpush1.msra.mxu0 0.0
  %1715 = vmatprep.subr.mxu0 0.0
  %1716 = vmatpush1.msra.mxu0 0.0
  %1717 = vmatprep.subr.mxu0 0.0
  %1718 = vmatpush1.msra.mxu0 0.0
  %1719 = vmatprep.subr.mxu0 0.0
  %1720 = vmatpush1.msra.mxu0 0.0
  %1721 = vmatprep.subr.mxu0 0.0
  %1722 = vmatpush1.msra.mxu0 0.0
  %1723 = vmatprep.subr.mxu0 0.0
  %1724 = vmatpush1.msra.mxu0 0.0
  %1725 = vmatprep.subr.mxu0 0.0
  %1726 = vmatpush1.msra.mxu0 0.0
  %1727 = vmatprep.subr.mxu0 0.0
  %1728 = vmatpush1.msra.mxu0 0.0
  %1729 = vmatprep.subr.mxu0 0.0
  %1730 = vmatpush1.msra.mxu0 0.0
  %1731 = vmatprep.subr.mxu0 0.0
  %1732 = vmatpush1.msra.mxu0 0.0
  %1733 = vmatprep.subr.mxu0 0.0
  %1734 = vmatpush1.msra.mxu0 0.0
  %1735 = vmatprep.subr.mxu0 0.0
  %1736 = vmatpush1.msra.mxu0 0.0
  %1737 = vmatprep.subr.mxu0 0.0
  %1738 = vmatpush1.msra.mxu0 0.0
  %1739 = vmatprep.subr.mxu0 0.0
  %1740 = vmatpush1.msra.mxu0 0.0
  %1741 = vmatprep.subr.mxu0 0.0
  %1742 = vmatpush1.msra.mxu0 0.0
  %1743 = vmatprep.subr.mxu0 0.0
  %1744 = vmatpush1.msra.mxu0 0.0
  %1745 = vmatprep.subr.mxu0 0.0
  %1746 = vmatpush1.msra.mxu0 0.0
  %1747 = vmatprep.subr.mxu0 0.0
  %1748 = vmatpush1.msra.mxu0 0.0
  %1749 = vmatprep.subr.mxu0 0.0
  %1750 = vmatpush1.msra.mxu0 0.0
  %1751 = vmatprep.subr.mxu0 0.0
  %1752 = vmatpush1.msra.mxu0 0.0
  %1753 = vmatprep.subr.mxu0 0.0
  %1754 = vmatpush1.msra.mxu0 0.0
  %1755 = vmatprep.subr.mxu0 0.0
  %1756 = vmatpush1.msra.mxu0 0.0
  %1757 = vmatprep.subr.mxu0 0.0
  %1758 = vmatpush1.msra.mxu0 0.0
  %1759 = vmatprep.subr.mxu0 0.0
  %1760 = vmatpush1.msra.mxu0 0.0
  %1761 = vmatprep.subr.mxu0 0.0
  %1762 = vmatpush1.msra.mxu0 0.0
  %1763 = vmatprep.mubr.f32.mxu0 0.0
  %v1764 = vand.u32 %v1269, 4294901760
  %1765 = vmatmul.mubr.f32.gmra.mrb[0].mxu0 %v1764
  %v1766 = vpop.f32.mrb[0].mxu0
  %v1767 = vadd.f32 %v1688, %v1766
  %v1768 = vpop.f32.mrb[0].mxu0
  %1769 = vmatprep.mubr.f32.mxu0 0.0
  %v1770 = vand.u32 %v1272, 4294901760
  %1771 = vmatmul.mubr.f32.gmra.mrb[0].mxu0 %v1770
  %v1772 = vpop.f32.mrb[0].mxu0
  %v1773 = vadd.f32 %v1694, %v1772
  %v1774 = vpop.f32.mrb[0].mxu0
  %1775 = vdwg.mxu0
  %v1776 = vld [vmem:[%s1 + $0x30] sm:$0xf]
  %v1777 = vxor.u32 %v1767, 2147483648
  %v1778 = vmul.f32 %v1777, 1.442695
  %v1779 = vpow.pop %v1778
  %v1780 = vadd.f32 %v1779, 1.0
  %v1781 = vrcp.pop %v1780
  %v1782 = vmul.f32 1.0, %v1781
  %v1783 = vmul.f32 %v1782, 2.0
  %v1784 = vsub.f32 %v1783, 1.0
  %1786 = vrot.lane.b32.xlu0 %v1784, 116
  %v1787 = vpop.permute.xlu0 %1786
  %v1789 = vmul.f32 %v1782, %v1787
  %v1790 = vtanh.pop %v1789
  %1792 = vrot.lane.b32.xlu0 %v1790, 8
  %v1793 = vpop.permute.xlu0 %1792
  %v1795 = vmul.f32 %v1782, %v1793
  %1797 = vset.pattern.permute.xlu0 8
  %1798 = vperm.xlu0 %1797, %v1795
  %v1799 = vpop.permute.xlu0 %1798
  %v1801 = vlaneseq
  %v1802 = vshrl.u32 %v1801, 7
  %v1803 = vsub.s32 0, %v1802
  %v1804 = vrot.slane %v1776, %v1803
  %v1805 = vmul.f32 %v1799, %v1804
  %1806 = vset.pattern.permute.xlu0 9
  %1807 = vperm.xlu0 %1806, %v1795
  %v1808 = vpop.permute.xlu0 %1807
  %v1810 = vlaneseq
  %v1811 = vshrl.u32 %v1810, 7
  %v1812 = vsub.s32 1, %v1811
  %v1813 = vrot.slane %v1776, %v1812
  %v1814 = vmul.f32 %v1808, %v1813
  %1815 = vset.pattern.permute.xlu0 10
  %1816 = vperm.xlu0 %1815, %v1795
  %v1817 = vpop.permute.xlu0 %1816
  %v1819 = vlaneseq
  %v1820 = vshrl.u32 %v1819, 7
  %v1821 = vsub.s32 2, %v1820
  %v1822 = vrot.slane %v1776, %v1821
  %v1823 = vmul.f32 %v1817, %v1822
  %1824 = vset.pattern.permute.xlu0 11
  %1825 = vperm.xlu0 %1824, %v1795
  %v1826 = vpop.permute.xlu0 %1825
  %v1828 = vlaneseq
  %v1829 = vshrl.u32 %v1828, 7
  %v1830 = vsub.s32 3, %v1829
  %v1831 = vrot.slane %v1776, %v1830
  %v1832 = vmul.f32 %v1826, %v1831
  %v1833 = vadd.f32 %v1805, %v1814
  %v1834 = vadd.f32 %v1823, %v1832
  %v1835 = vadd.f32 %v1833, %v1834
  %v1837 = vrot.slane %v1835, 6
  %v1839 = vadd.f32 %v1767, %v1837
  %v1840 = vxor.u32 %v1839, 2147483648
  %v1841 = vmul.f32 %v1840, 1.442695
  %v1842 = vpow.pop %v1841
  %v1843 = vadd.f32 %v1842, 1.0
  %v1844 = vrcp.pop %v1843
  %v1845 = vmul.f32 1.0, %v1844
  %v1846 = vmul.f32 %v1845, 2.0
  %v1847 = vsub.f32 %v1846, 1.0
  %v1849 = vrot.slane %v1789, 6
  %1850 = vrot.lane.b32.xlu0 %v1849, 4
  %v1851 = vpop.permute.xlu0 %1850
  %v1853 = vmul.f32 %v1845, %v1851
  %1855 = vrot.lane.b32.xlu0 %v1847, 116
  %v1856 = vpop.permute.xlu0 %1855
  %v1858 = vmul.f32 %v1845, %v1856
  %1860 = vrot.lane.b32.xlu0 %v1858, 4
  %v1861 = vpop.permute.xlu0 %1860
  %v1863 = vadd.f32 %v1853, %v1861
  %v1864 = vtanh.pop %v1863
  %1866 = vrot.lane.b32.xlu0 %v1864, 4
  %v1867 = vpop.permute.xlu0 %1866
  %v1869 = vmul.f32 %v1845, %v1867
  %1871 = vset.pattern.permute.xlu0 8
  %1872 = vperm.xlu0 %1871, %v1869
  %v1873 = vpop.permute.xlu0 %1872
  %v1875 = vmul.f32 %v1873, %v1804
  %1876 = vset.pattern.permute.xlu0 9
  %1877 = vperm.xlu0 %1876, %v1869
  %v1878 = vpop.permute.xlu0 %1877
  %v1880 = vmul.f32 %v1878, %v1813
  %1881 = vset.pattern.permute.xlu0 10
  %1882 = vperm.xlu0 %1881, %v1869
  %v1883 = vpop.permute.xlu0 %1882
  %v1885 = vmul.f32 %v1883, %v1822
  %1886 = vset.pattern.permute.xlu0 11
  %1887 = vperm.xlu0 %1886, %v1869
  %v1888 = vpop.permute.xlu0 %1887
  %v1890 = vmul.f32 %v1888, %v1831
  %v1891 = vadd.f32 %v1875, %v1880
  %v1892 = vadd.f32 %v1885, %v1890
  %v1893 = vadd.f32 %v1891, %v1892
  %v1895 = vrot.slane %v1893, 6
  %v1897 = vadd.f32 %v1767, %v1895
  %v1898 = vxor.u32 %v1897, 2147483648
  %v1899 = vmul.f32 %v1898, 1.442695
  %v1900 = vpow.pop %v1899
  %v1901 = vadd.f32 %v1900, 1.0
  %v1902 = vrcp.pop %v1901
  %v1903 = vmul.f32 1.0, %v1902
  %v1904 = vmul.f32 %v1903, 2.0
  %v1905 = vsub.f32 %v1904, 1.0
  %v1907 = vrot.slane %v1863, 6
  %v1909 = vmul.f32 %v1903, %v1907
  %1911 = vrot.lane.b32.xlu0 %v1905, 116
  %v1912 = vpop.permute.xlu0 %1911
  %v1914 = vmul.f32 %v1903, %v1912
  %1916 = vrot.lane.b32.xlu0 %v1914, 4
  %v1917 = vpop.permute.xlu0 %1916
  %v1919 = vadd.f32 %v1909, %v1917
  %v1920 = vtanh.pop %v1919
  %1922 = vrot.lane.b32.xlu0 %v1920, 4
  %v1923 = vpop.permute.xlu0 %1922
  %v1925 = vmul.f32 %v1903, %v1923
  %1927 = vset.pattern.permute.xlu0 8
  %1928 = vperm.xlu0 %1927, %v1925
  %v1929 = vpop.permute.xlu0 %1928
  %v1931 = vmul.f32 %v1929, %v1804
  %1932 = vset.pattern.permute.xlu0 9
  %1933 = vperm.xlu0 %1932, %v1925
  %v1934 = vpop.permute.xlu0 %1933
  %v1936 = vmul.f32 %v1934, %v1813
  %1937 = vset.pattern.permute.xlu0 10
  %1938 = vperm.xlu0 %1937, %v1925
  %v1939 = vpop.permute.xlu0 %1938
  %v1941 = vmul.f32 %v1939, %v1822
  %1942 = vset.pattern.permute.xlu0 11
  %1943 = vperm.xlu0 %1942, %v1925
  %v1944 = vpop.permute.xlu0 %1943
  %v1946 = vmul.f32 %v1944, %v1831
  %v1947 = vadd.f32 %v1931, %v1936
  %v1948 = vadd.f32 %v1941, %v1946
  %v1949 = vadd.f32 %v1947, %v1948
  %v1951 = vrot.slane %v1949, 6
  %v1953 = vadd.f32 %v1767, %v1951
  %v1954 = vxor.u32 %v1953, 2147483648
  %v1955 = vmul.f32 %v1954, 1.442695
  %v1956 = vpow.pop %v1955
  %v1957 = vadd.f32 %v1956, 1.0
  %v1958 = vrcp.pop %v1957
  %v1959 = vmul.f32 1.0, %v1958
  %v1960 = vmul.f32 %v1959, 2.0
  %v1961 = vsub.f32 %v1960, 1.0
  %v1963 = vrot.slane %v1919, 6
  %v1965 = vmul.f32 %v1959, %v1963
  %1967 = vrot.lane.b32.xlu0 %v1961, 116
  %v1968 = vpop.permute.xlu0 %1967
  %v1970 = vmul.f32 %v1959, %v1968
  %1972 = vrot.lane.b32.xlu0 %v1970, 4
  %v1973 = vpop.permute.xlu0 %1972
  %v1975 = vadd.f32 %v1965, %v1973
  %v1976 = vtanh.pop %v1975
  %1978 = vrot.lane.b32.xlu0 %v1976, 4
  %v1979 = vpop.permute.xlu0 %1978
  %v1981 = vmul.f32 %v1959, %v1979
  %1983 = vset.pattern.permute.xlu0 8
  %1984 = vperm.xlu0 %1983, %v1981
  %v1985 = vpop.permute.xlu0 %1984
  %v1987 = vmul.f32 %v1985, %v1804
  %1988 = vset.pattern.permute.xlu0 9
  %1989 = vperm.xlu0 %1988, %v1981
  %v1990 = vpop.permute.xlu0 %1989
  %v1992 = vmul.f32 %v1990, %v1813
  %1993 = vset.pattern.permute.xlu0 10
  %1994 = vperm.xlu0 %1993, %v1981
  %v1995 = vpop.permute.xlu0 %1994
  %v1997 = vmul.f32 %v1995, %v1822
  %1998 = vset.pattern.permute.xlu0 11
  %1999 = vperm.xlu0 %1998, %v1981
  %v2000 = vpop.permute.xlu0 %1999
  %v2002 = vmul.f32 %v2000, %v1831
  %v2003 = vadd.f32 %v1987, %v1992
  %v2004 = vadd.f32 %v1997, %v2002
  %v2005 = vadd.f32 %v2003, %v2004
  %v2007 = vrot.slane %v2005, 6
  %v2009 = vadd.f32 %v1773, %v2007
  %v2010 = vxor.u32 %v2009, 2147483648
  %v2011 = vmul.f32 %v2010, 1.442695
  %v2012 = vpow.pop %v2011
  %v2013 = vadd.f32 %v2012, 1.0
  %v2014 = vrcp.pop %v2013
  %v2015 = vmul.f32 1.0, %v2014
  %v2016 = vmul.f32 %v2015, 2.0
  %v2017 = vsub.f32 %v2016, 1.0
  %v2019 = vrot.slane %v1975, 6
  %v2021 = vmul.f32 %v2015, %v2019
  %2023 = vrot.lane.b32.xlu0 %v2017, 116
  %v2024 = vpop.permute.xlu0 %2023
  %v2026 = vmul.f32 %v2015, %v2024
  %2028 = vrot.lane.b32.xlu0 %v2026, 4
  %v2029 = vpop.permute.xlu0 %2028
  %v2031 = vadd.f32 %v2021, %v2029
  %v2032 = vtanh.pop %v2031
  %2034 = vrot.lane.b32.xlu0 %v2032, 4
  %v2035 = vpop.permute.xlu0 %2034
  %v2037 = vmul.f32 %v2015, %v2035
  %2039 = vset.pattern.permute.xlu0 8
  %2040 = vperm.xlu0 %2039, %v2037
  %v2041 = vpop.permute.xlu0 %2040
  %v2043 = vmul.f32 %v2041, %v1804
  %2044 = vset.pattern.permute.xlu0 9
  %2045 = vperm.xlu0 %2044, %v2037
  %v2046 = vpop.permute.xlu0 %2045
  %v2048 = vmul.f32 %v2046, %v1813
  %2049 = vset.pattern.permute.xlu0 10
  %2050 = vperm.xlu0 %2049, %v2037
  %v2051 = vpop.permute.xlu0 %2050
  %v2053 = vmul.f32 %v2051, %v1822
  %2054 = vset.pattern.permute.xlu0 11
  %2055 = vperm.xlu0 %2054, %v2037
  %v2056 = vpop.permute.xlu0 %2055
  %v2058 = vmul.f32 %v2056, %v1831
  %v2059 = vadd.f32 %v2043, %v2048
  %v2060 = vadd.f32 %v2053, %v2058
  %v2061 = vadd.f32 %v2059, %v2060
  %v2063 = vrot.slane %v2061, 6
  %v2065 = vadd.f32 %v1773, %v2063
  %v2066 = vxor.u32 %v2065, 2147483648
  %v2067 = vmul.f32 %v2066, 1.442695
  %v2068 = vpow.pop %v2067
  %v2069 = vadd.f32 %v2068, 1.0
  %v2070 = vrcp.pop %v2069
  %v2071 = vmul.f32 1.0, %v2070
  %v2072 = vmul.f32 %v2071, 2.0
  %v2073 = vsub.f32 %v2072, 1.0
  %v2075 = vrot.slane %v2031, 6
  %v2077 = vmul.f32 %v2071, %v2075
  %2079 = vrot.lane.b32.xlu0 %v2073, 116
  %v2080 = vpop.permute.xlu0 %2079
  %v2082 = vmul.f32 %v2071, %v2080
  %2084 = vrot.lane.b32.xlu0 %v2082, 4
  %v2085 = vpop.permute.xlu0 %2084
  %v2087 = vadd.f32 %v2077, %v2085
  %v2088 = vtanh.pop %v2087
  %2090 = vrot.lane.b32.xlu0 %v2088, 4
  %v2091 = vpop.permute.xlu0 %2090
  %v2093 = vmul.f32 %v2071, %v2091
  %2095 = vset.pattern.permute.xlu0 8
  %2096 = vperm.xlu0 %2095, %v2093
  %v2097 = vpop.permute.xlu0 %2096
  %v2099 = vmul.f32 %v2097, %v1804
  %2100 = vset.pattern.permute.xlu0 9
  %2101 = vperm.xlu0 %2100, %v2093
  %v2102 = vpop.permute.xlu0 %2101
  %v2104 = vmul.f32 %v2102, %v1813
  %2105 = vset.pattern.permute.xlu0 10
  %2106 = vperm.xlu0 %2105, %v2093
  %v2107 = vpop.permute.xlu0 %2106
  %v2109 = vmul.f32 %v2107, %v1822
  %2110 = vset.pattern.permute.xlu0 11
  %2111 = vperm.xlu0 %2110, %v2093
  %v2112 = vpop.permute.xlu0 %2111
  %v2114 = vmul.f32 %v2112, %v1831
  %v2115 = vadd.f32 %v2099, %v2104
  %v2116 = vadd.f32 %v2109, %v2114
  %v2117 = vadd.f32 %v2115, %v2116
  %v2119 = vrot.slane %v2117, 6
  %v2121 = vadd.f32 %v1773, %v2119
  %v2122 = vxor.u32 %v2121, 2147483648
  %v2123 = vmul.f32 %v2122, 1.442695
  %v2124 = vpow.pop %v2123
  %v2125 = vadd.f32 %v2124, 1.0
  %v2126 = vrcp.pop %v2125
  %v2127 = vmul.f32 1.0, %v2126
  %v2128 = vmul.f32 %v2127, 2.0
  %v2129 = vsub.f32 %v2128, 1.0
  %v2131 = vrot.slane %v2087, 6
  %v2133 = vmul.f32 %v2127, %v2131
  %2135 = vrot.lane.b32.xlu0 %v2129, 116
  %v2136 = vpop.permute.xlu0 %2135
  %v2138 = vmul.f32 %v2127, %v2136
  %2140 = vrot.lane.b32.xlu0 %v2138, 4
  %v2141 = vpop.permute.xlu0 %2140
  %v2143 = vadd.f32 %v2133, %v2141
  %v2144 = vtanh.pop %v2143
  %2146 = vrot.lane.b32.xlu0 %v2144, 4
  %v2147 = vpop.permute.xlu0 %2146
  %v2149 = vmul.f32 %v2127, %v2147
  %2151 = vset.pattern.permute.xlu0 8
  %2152 = vperm.xlu0 %2151, %v2149
  %v2153 = vpop.permute.xlu0 %2152
  %v2155 = vmul.f32 %v2153, %v1804
  %2156 = vset.pattern.permute.xlu0 9
  %2157 = vperm.xlu0 %2156, %v2149
  %v2158 = vpop.permute.xlu0 %2157
  %v2160 = vmul.f32 %v2158, %v1813
  %2161 = vset.pattern.permute.xlu0 10
  %2162 = vperm.xlu0 %2161, %v2149
  %v2163 = vpop.permute.xlu0 %2162
  %v2165 = vmul.f32 %v2163, %v1822
  %2166 = vset.pattern.permute.xlu0 11
  %2167 = vperm.xlu0 %2166, %v2149
  %v2168 = vpop.permute.xlu0 %2167
  %v2170 = vmul.f32 %v2168, %v1831
  %v2171 = vadd.f32 %v2155, %v2160
  %v2172 = vadd.f32 %v2165, %v2170
  %v2173 = vadd.f32 %v2171, %v2172
  %v2175 = vrot.slane %v2173, 6
  %v2177 = vadd.f32 %v1773, %v2175
  %v2178 = vxor.u32 %v2177, 2147483648
  %v2179 = vmul.f32 %v2178, 1.442695
  %v2180 = vpow.pop %v2179
  %v2181 = vadd.f32 %v2180, 1.0
  %v2182 = vrcp.pop %v2181
  %v2183 = vmul.f32 1.0, %v2182
  %v2184 = vmul.f32 %v2183, 2.0
  %v2185 = vsub.f32 %v2184, 1.0
  %v2187 = vrot.slane %v2143, 6
  %v2189 = vmul.f32 %v2183, %v2187
  %2191 = vrot.lane.b32.xlu0 %v2185, 116
  %v2192 = vpop.permute.xlu0 %2191
  %v2194 = vmul.f32 %v2183, %v2192
  %2196 = vrot.lane.b32.xlu0 %v2194, 4
  %v2197 = vpop.permute.xlu0 %2196
  %v2199 = vadd.f32 %v2189, %v2197
  %v2200 = vtanh.pop %v2199
  %2202 = vrot.lane.b32.xlu0 %v2200, 4
  %v2203 = vpop.permute.xlu0 %2202
  %v2205 = vmul.f32 %v2183, %v2203
  %v2206 = vsel %vm37, %v1795, %v1869
  %v2207 = vsel %vm39, %v2206, %v1925
  %v2208 = vsel %vm41, %v2207, %v1981
  %v2209 = vsel %vm37, %v2037, %v2093
  %v2210 = vsel %vm39, %v2209, %v2149
  %v2211 = vsel %vm41, %v2210, %v2205
  %v2213 = vrot.slane %v2205, 6
  %v2215 = vrot.slane %v2149, 2
  %v2217 = vrot.slane %v2093, 6
  %v2219 = vrot.slane %v2037, 2
  %v2221 = vrot.slane %v1981, 6
  %v2223 = vrot.slane %v1925, 2
  %v2225 = vrot.slane %v1869, 6
  %v2227 = vrot.slane %v1795, 2
  %v2229 = vsel %vm37, %v2213, %v2215
  %v2230 = vsel %vm39, %v2229, %v2217
  %v2231 = vsel %vm41, %v2230, %v2219
  %v2232 = vsel %vm37, %v2221, %v2223
  %v2233 = vsel %vm39, %v2232, %v2225
  %v2234 = vsel %vm41, %v2233, %v2227
  %2237 = vrot.lane.b32.xlu0 %v2208, 120
  %v2238 = vpop.permute.xlu0 %2237
  %2239 = vrot.lane.b32.xlu0 %v2211, 120
  %v2240 = vpop.permute.xlu0 %2239
  %2245 = vrot.lane.b32.xlu0 %v2231, 124
  %v2246 = vpop.permute.xlu0 %2245
  %2247 = vrot.lane.b32.xlu0 %v2234, 124
  %v2248 = vpop.permute.xlu0 %2247
  %vm2251 = vcmask 31744
  %v2252 = vsel %vm2251, %v2238, %v2246
  %v2253 = vsel %vm2251, %v2240, %v2248
  %v2254 = vld [vmem:[%s1 + $0x40] sm:$0xff]
  %v2255 = vld [vmem:[%s1 + $0x50] sm:$0x1]
  %v2256 = vlaneseq
  %v2257 = vshrl.u32 %v2256, 7
  %v2258 = vsub.s32 0, %v2257
  %v2259 = vrot.slane %v2255, %v2258
  %v2261 = vsel %vm81, %v2252, 0
  %v2264 = vsel %vm81, %v2253, 0
  %2266 = vmatprep.subr.mxu0 0.0
  %v2267 = vand.u32 %v2254, 4294901760
  %2268 = vmatpush1.msra.mxu0 %v2267
  %2269 = vmatprep.subr.mxu0 0.0
  %2270 = vmatpush1.msra.mxu0 0.0
  %2271 = vmatprep.subr.mxu0 0.0
  %2272 = vmatpush1.msra.mxu0 0.0
  %2273 = vmatprep.subr.mxu0 0.0
  %2274 = vmatpush1.msra.mxu0 0.0
  %2275 = vmatprep.subr.mxu0 0.0
  %2276 = vmatpush1.msra.mxu0 0.0
  %2277 = vmatprep.subr.mxu0 0.0
  %2278 = vmatpush1.msra.mxu0 0.0
  %2279 = vmatprep.subr.mxu0 0.0
  %2280 = vmatpush1.msra.mxu0 0.0
  %2281 = vmatprep.subr.mxu0 0.0
  %2282 = vmatpush1.msra.mxu0 0.0
  %2283 = vmatprep.subr.mxu0 0.0
  %2284 = vmatpush1.msra.mxu0 0.0
  %2285 = vmatprep.subr.mxu0 0.0
  %2286 = vmatpush1.msra.mxu0 0.0
  %2287 = vmatprep.subr.mxu0 0.0
  %2288 = vmatpush1.msra.mxu0 0.0
  %2289 = vmatprep.subr.mxu0 0.0
  %2290 = vmatpush1.msra.mxu0 0.0
  %2291 = vmatprep.subr.mxu0 0.0
  %2292 = vmatpush1.msra.mxu0 0.0
  %2293 = vmatprep.subr.mxu0 0.0
  %2294 = vmatpush1.msra.mxu0 0.0
  %2295 = vmatprep.subr.mxu0 0.0
  %2296 = vmatpush1.msra.mxu0 0.0
  %2297 = vmatprep.subr.mxu0 0.0
  %2298 = vmatpush1.msra.mxu0 0.0
  %2299 = vmatprep.subr.mxu0 0.0
  %2300 = vmatpush1.msra.mxu0 0.0
  %2301 = vmatprep.subr.mxu0 0.0
  %2302 = vmatpush1.msra.mxu0 0.0
  %2303 = vmatprep.subr.mxu0 0.0
  %2304 = vmatpush1.msra.mxu0 0.0
  %2305 = vmatprep.subr.mxu0 0.0
  %2306 = vmatpush1.msra.mxu0 0.0
  %2307 = vmatprep.subr.mxu0 0.0
  %2308 = vmatpush1.msra.mxu0 0.0
  %2309 = vmatprep.subr.mxu0 0.0
  %2310 = vmatpush1.msra.mxu0 0.0
  %2311 = vmatprep.subr.mxu0 0.0
  %2312 = vmatpush1.msra.mxu0 0.0
  %2313 = vmatprep.subr.mxu0 0.0
  %2314 = vmatpush1.msra.mxu0 0.0
  %2315 = vmatprep.subr.mxu0 0.0
  %2316 = vmatpush1.msra.mxu0 0.0
  %2317 = vmatprep.subr.mxu0 0.0
  %2318 = vmatpush1.msra.mxu0 0.0
  %2319 = vmatprep.subr.mxu0 0.0
  %2320 = vmatpush1.msra.mxu0 0.0
  %2321 = vmatprep.subr.mxu0 0.0
  %2322 = vmatpush1.msra.mxu0 0.0
  %2323 = vmatprep.subr.mxu0 0.0
  %2324 = vmatpush1.msra.mxu0 0.0
  %2325 = vmatprep.subr.mxu0 0.0
  %2326 = vmatpush1.msra.mxu0 0.0
  %2327 = vmatprep.subr.mxu0 0.0
  %2328 = vmatpush1.msra.mxu0 0.0
  %2329 = vmatprep.subr.mxu0 0.0
  %2330 = vmatpush1.msra.mxu0 0.0
  %2331 = vmatprep.mubr.f32.mxu0 0.0
  %v2332 = vand.u32 %v2261, 4294901760
  %v2333 = vsub.f32 %v2261, %v2332
  %v2334 = vand.u32 %v2333, 4294901760
  %v2335 = vsub.f32 %v2333, %v2334
  %v2336 = vand.u32 %v2335, 4294901760
  %2337 = vmatmul.mubr.f32.gmra.mrb[0].mxu0 %v2336
  %v2338 = vpop.f32.mrb[0].mxu0
  %v2339 = vadd.f32 %v2259, %v2338
  %v2340 = vpop.f32.mrb[0].mxu0
  %2341 = vmatprep.mubr.f32.mxu0 0.0
  %v2342 = vand.u32 %v2264, 4294901760
  %v2343 = vsub.f32 %v2264, %v2342
  %v2344 = vand.u32 %v2343, 4294901760
  %v2345 = vsub.f32 %v2343, %v2344
  %v2346 = vand.u32 %v2345, 4294901760
  %2347 = vmatmul.mubr.f32.gmra.mrb[0].mxu0 %v2346
  %v2348 = vpop.f32.mrb[0].mxu0
  %v2349 = vadd.f32 %v2259, %v2348
  %v2350 = vpop.f32.mrb[0].mxu0
  %2351 = vdwg.mxu0
  %2352 = vmatprep.subr.mxu0 0.0
  %v2353 = vand.u32 %v2254, 4294901760
  %v2354 = vsub.f32 %v2254, %v2353
  %v2355 = vand.u32 %v2354, 4294901760
  %v2356 = vsub.f32 %v2354, %v2355
  %v2357 = vand.u32 %v2356, 4294901760
  %2358 = vmatpush1.msra.mxu0 %v2357
  %2359 = vmatprep.subr.mxu0 0.0
  %2360 = vmatpush1.msra.mxu0 0.0
  %2361 = vmatprep.subr.mxu0 0.0
  %2362 = vmatpush1.msra.mxu0 0.0
  %2363 = vmatprep.subr.mxu0 0.0
  %2364 = vmatpush1.msra.mxu0 0.0
  %2365 = vmatprep.subr.mxu0 0.0
  %2366 = vmatpush1.msra.mxu0 0.0
  %2367 = vmatprep.subr.mxu0 0.0
  %2368 = vmatpush1.msra.mxu0 0.0
  %2369 = vmatprep.subr.mxu0 0.0
  %2370 = vmatpush1.msra.mxu0 0.0
  %2371 = vmatprep.subr.mxu0 0.0
  %2372 = vmatpush1.msra.mxu0 0.0
  %2373 = vmatprep.subr.mxu0 0.0
  %2374 = vmatpush1.msra.mxu0 0.0
  %2375 = vmatprep.subr.mxu0 0.0
  %2376 = vmatpush1.msra.mxu0 0.0
  %2377 = vmatprep.subr.mxu0 0.0
  %2378 = vmatpush1.msra.mxu0 0.0
  %2379 = vmatprep.subr.mxu0 0.0
  %2380 = vmatpush1.msra.mxu0 0.0
  %2381 = vmatprep.subr.mxu0 0.0
  %2382 = vmatpush1.msra.mxu0 0.0
  %2383 = vmatprep.subr.mxu0 0.0
  %2384 = vmatpush1.msra.mxu0 0.0
  %2385 = vmatprep.subr.mxu0 0.0
  %2386 = vmatpush1.msra.mxu0 0.0
  %2387 = vmatprep.subr.mxu0 0.0
  %2388 = vmatpush1.msra.mxu0 0.0
  %2389 = vmatprep.subr.mxu0 0.0
  %2390 = vmatpush1.msra.mxu0 0.0
  %2391 = vmatprep.subr.mxu0 0.0
  %2392 = vmatpush1.msra.mxu0 0.0
  %2393 = vmatprep.subr.mxu0 0.0
  %2394 = vmatpush1.msra.mxu0 0.0
  %2395 = vmatprep.subr.mxu0 0.0
  %2396 = vmatpush1.msra.mxu0 0.0
  %2397 = vmatprep.subr.mxu0 0.0
  %2398 = vmatpush1.msra.mxu0 0.0
  %2399 = vmatprep.subr.mxu0 0.0
  %2400 = vmatpush1.msra.mxu0 0.0
  %2401 = vmatprep.subr.mxu0 0.0
  %2402 = vmatpush1.msra.mxu0 0.0
  %2403 = vmatprep.subr.mxu0 0.0
  %2404 = vmatpush1.msra.mxu0 0.0
  %2405 = vmatprep.subr.mxu0 0.0
  %2406 = vmatpush1.msra.mxu0 0.0
  %2407 = vmatprep.subr.mxu0 0.0
  %2408 = vmatpush1.msra.mxu0 0.0
  %2409 = vmatprep.subr.mxu0 0.0
  %2410 = vmatpush1.msra.mxu0 0.0
  %2411 = vmatprep.subr.mxu0 0.0
  %2412 = vmatpush1.msra.mxu0 0.0
  %2413 = vmatprep.subr.mxu0 0.0
  %2414 = vmatpush1.msra.mxu0 0.0
  %2415 = vmatprep.subr.mxu0 0.0
  %2416 = vmatpush1.msra.mxu0 0.0
  %2417 = vmatprep.subr.mxu0 0.0
  %2418 = vmatpush1.msra.mxu0 0.0
  %2419 = vmatprep.subr.mxu0 0.0
  %2420 = vmatpush1.msra.mxu0 0.0
  %2421 = vmatprep.mubr.f32.mxu0 0.0
  %v2422 = vand.u32 %v2261, 4294901760
  %2423 = vmatmul.mubr.f32.gmra.mrb[0].mxu0 %v2422
  %v2424 = vpop.f32.mrb[0].mxu0
  %v2425 = vadd.f32 %v2339, %v2424
  %v2426 = vpop.f32.mrb[0].mxu0
  %2427 = vmatprep.mubr.f32.mxu0 0.0
  %v2428 = vand.u32 %v2264, 4294901760
  %2429 = vmatmul.mubr.f32.gmra.mrb[0].mxu0 %v2428
  %v2430 = vpop.f32.mrb[0].mxu0
  %v2431 = vadd.f32 %v2349, %v2430
  %v2432 = vpop.f32.mrb[0].mxu0
  %2433 = vdwg.mxu0
  %2434 = vmatprep.subr.mxu0 0.0
  %v2435 = vand.u32 %v2254, 4294901760
  %v2436 = vsub.f32 %v2254, %v2435
  %2437 = vmatpush1.msra.mxu0 %v2436
  %2438 = vmatprep.subr.mxu0 0.0
  %2439 = vmatpush1.msra.mxu0 0.0
  %2440 = vmatprep.subr.mxu0 0.0
  %2441 = vmatpush1.msra.mxu0 0.0
  %2442 = vmatprep.subr.mxu0 0.0
  %2443 = vmatpush1.msra.mxu0 0.0
  %2444 = vmatprep.subr.mxu0 0.0
  %2445 = vmatpush1.msra.mxu0 0.0
  %2446 = vmatprep.subr.mxu0 0.0
  %2447 = vmatpush1.msra.mxu0 0.0
  %2448 = vmatprep.subr.mxu0 0.0
  %2449 = vmatpush1.msra.mxu0 0.0
  %2450 = vmatprep.subr.mxu0 0.0
  %2451 = vmatpush1.msra.mxu0 0.0
  %2452 = vmatprep.subr.mxu0 0.0
  %2453 = vmatpush1.msra.mxu0 0.0
  %2454 = vmatprep.subr.mxu0 0.0
  %2455 = vmatpush1.msra.mxu0 0.0
  %2456 = vmatprep.subr.mxu0 0.0
  %2457 = vmatpush1.msra.mxu0 0.0
  %2458 = vmatprep.subr.mxu0 0.0
  %2459 = vmatpush1.msra.mxu0 0.0
  %2460 = vmatprep.subr.mxu0 0.0
  %2461 = vmatpush1.msra.mxu0 0.0
  %2462 = vmatprep.subr.mxu0 0.0
  %2463 = vmatpush1.msra.mxu0 0.0
  %2464 = vmatprep.subr.mxu0 0.0
  %2465 = vmatpush1.msra.mxu0 0.0
  %2466 = vmatprep.subr.mxu0 0.0
  %2467 = vmatpush1.msra.mxu0 0.0
  %2468 = vmatprep.subr.mxu0 0.0
  %2469 = vmatpush1.msra.mxu0 0.0
  %2470 = vmatprep.subr.mxu0 0.0
  %2471 = vmatpush1.msra.mxu0 0.0
  %2472 = vmatprep.subr.mxu0 0.0
  %2473 = vmatpush1.msra.mxu0 0.0
  %2474 = vmatprep.subr.mxu0 0.0
  %2475 = vmatpush1.msra.mxu0 0.0
  %2476 = vmatprep.subr.mxu0 0.0
  %2477 = vmatpush1.msra.mxu0 0.0
  %2478 = vmatprep.subr.mxu0 0.0
  %2479 = vmatpush1.msra.mxu0 0.0
  %2480 = vmatprep.subr.mxu0 0.0
  %2481 = vmatpush1.msra.mxu0 0.0
  %2482 = vmatprep.subr.mxu0 0.0
  %2483 = vmatpush1.msra.mxu0 0.0
  %2484 = vmatprep.subr.mxu0 0.0
  %2485 = vmatpush1.msra.mxu0 0.0
  %2486 = vmatprep.subr.mxu0 0.0
  %2487 = vmatpush1.msra.mxu0 0.0
  %2488 = vmatprep.subr.mxu0 0.0
  %2489 = vmatpush1.msra.mxu0 0.0
  %2490 = vmatprep.subr.mxu0 0.0
  %2491 = vmatpush1.msra.mxu0 0.0
  %2492 = vmatprep.subr.mxu0 0.0
  %2493 = vmatpush1.msra.mxu0 0.0
  %2494 = vmatprep.subr.mxu0 0.0
  %2495 = vmatpush1.msra.mxu0 0.0
  %2496 = vmatprep.subr.mxu0 0.0
  %2497 = vmatpush1.msra.mxu0 0.0
  %2498 = vmatprep.subr.mxu0 0.0
  %2499 = vmatpush1.msra.mxu0 0.0
  %2500 = vmatprep.mubr.f32.mxu0 0.0
  %v2501 = vand.u32 %v2261, 4294901760
  %v2502 = vsub.f32 %v2261, %v2501
  %2503 = vmatmul.mubr.f32.gmra.mrb[0].mxu0 %v2502
  %v2504 = vpop.f32.mrb[0].mxu0
  %v2505 = vadd.f32 %v2425, %v2504
  %v2506 = vpop.f32.mrb[0].mxu0
  %2507 = vmatprep.mubr.f32.mxu0 0.0
  %v2508 = vand.u32 %v2264, 4294901760
  %v2509 = vsub.f32 %v2264, %v2508
  %2510 = vmatmul.mubr.f32.gmra.mrb[0].mxu0 %v2509
  %v2511 = vpop.f32.mrb[0].mxu0
  %v2512 = vadd.f32 %v2431, %v2511
  %v2513 = vpop.f32.mrb[0].mxu0
  %2514 = vdwg.mxu0
  %2515 = vmatprep.subr.mxu0 0.0
  %v2516 = vand.u32 %v2254, 4294901760
  %2517 = vmatpush1.msra.mxu0 %v2516
  %2518 = vmatprep.subr.mxu0 0.0
  %2519 = vmatpush1.msra.mxu0 0.0
  %2520 = vmatprep.subr.mxu0 0.0
  %2521 = vmatpush1.msra.mxu0 0.0
  %2522 = vmatprep.subr.mxu0 0.0
  %2523 = vmatpush1.msra.mxu0 0.0
  %2524 = vmatprep.subr.mxu0 0.0
  %2525 = vmatpush1.msra.mxu0 0.0
  %2526 = vmatprep.subr.mxu0 0.0
  %2527 = vmatpush1.msra.mxu0 0.0
  %2528 = vmatprep.subr.mxu0 0.0
  %2529 = vmatpush1.msra.mxu0 0.0
  %2530 = vmatprep.subr.mxu0 0.0
  %2531 = vmatpush1.msra.mxu0 0.0
  %2532 = vmatprep.subr.mxu0 0.0
  %2533 = vmatpush1.msra.mxu0 0.0
  %2534 = vmatprep.subr.mxu0 0.0
  %2535 = vmatpush1.msra.mxu0 0.0
  %2536 = vmatprep.subr.mxu0 0.0
  %2537 = vmatpush1.msra.mxu0 0.0
  %2538 = vmatprep.subr.mxu0 0.0
  %2539 = vmatpush1.msra.mxu0 0.0
  %2540 = vmatprep.subr.mxu0 0.0
  %2541 = vmatpush1.msra.mxu0 0.0
  %2542 = vmatprep.subr.mxu0 0.0
  %2543 = vmatpush1.msra.mxu0 0.0
  %2544 = vmatprep.subr.mxu0 0.0
  %2545 = vmatpush1.msra.mxu0 0.0
  %2546 = vmatprep.subr.mxu0 0.0
  %2547 = vmatpush1.msra.mxu0 0.0
  %2548 = vmatprep.subr.mxu0 0.0
  %2549 = vmatpush1.msra.mxu0 0.0
  %2550 = vmatprep.subr.mxu0 0.0
  %2551 = vmatpush1.msra.mxu0 0.0
  %2552 = vmatprep.subr.mxu0 0.0
  %2553 = vmatpush1.msra.mxu0 0.0
  %2554 = vmatprep.subr.mxu0 0.0
  %2555 = vmatpush1.msra.mxu0 0.0
  %2556 = vmatprep.subr.mxu0 0.0
  %2557 = vmatpush1.msra.mxu0 0.0
  %2558 = vmatprep.subr.mxu0 0.0
  %2559 = vmatpush1.msra.mxu0 0.0
  %2560 = vmatprep.subr.mxu0 0.0
  %2561 = vmatpush1.msra.mxu0 0.0
  %2562 = vmatprep.subr.mxu0 0.0
  %2563 = vmatpush1.msra.mxu0 0.0
  %2564 = vmatprep.subr.mxu0 0.0
  %2565 = vmatpush1.msra.mxu0 0.0
  %2566 = vmatprep.subr.mxu0 0.0
  %2567 = vmatpush1.msra.mxu0 0.0
  %2568 = vmatprep.subr.mxu0 0.0
  %2569 = vmatpush1.msra.mxu0 0.0
  %2570 = vmatprep.subr.mxu0 0.0
  %2571 = vmatpush1.msra.mxu0 0.0
  %2572 = vmatprep.subr.mxu0 0.0
  %2573 = vmatpush1.msra.mxu0 0.0
  %2574 = vmatprep.subr.mxu0 0.0
  %2575 = vmatpush1.msra.mxu0 0.0
  %2576 = vmatprep.subr.mxu0 0.0
  %2577 = vmatpush1.msra.mxu0 0.0
  %2578 = vmatprep.subr.mxu0 0.0
  %2579 = vmatpush1.msra.mxu0 0.0
  %2580 = vmatprep.mubr.f32.mxu0 0.0
  %v2581 = vand.u32 %v2261, 4294901760
  %v2582 = vsub.f32 %v2261, %v2581
  %v2583 = vand.u32 %v2582, 4294901760
  %2584 = vmatmul.mubr.f32.gmra.mrb[0].mxu0 %v2583
  %v2585 = vpop.f32.mrb[0].mxu0
  %v2586 = vadd.f32 %v2505, %v2585
  %v2587 = vpop.f32.mrb[0].mxu0
  %2588 = vmatprep.mubr.f32.mxu0 0.0
  %v2589 = vand.u32 %v2264, 4294901760
  %v2590 = vsub.f32 %v2264, %v2589
  %v2591 = vand.u32 %v2590, 4294901760
  %2592 = vmatmul.mubr.f32.gmra.mrb[0].mxu0 %v2591
  %v2593 = vpop.f32.mrb[0].mxu0
  %v2594 = vadd.f32 %v2512, %v2593
  %v2595 = vpop.f32.mrb[0].mxu0
  %2596 = vdwg.mxu0
  %2597 = vmatprep.subr.mxu0 0.0
  %v2598 = vand.u32 %v2254, 4294901760
  %v2599 = vsub.f32 %v2254, %v2598
  %v2600 = vand.u32 %v2599, 4294901760
  %2601 = vmatpush1.msra.mxu0 %v2600
  %2602 = vmatprep.subr.mxu0 0.0
  %2603 = vmatpush1.msra.mxu0 0.0
  %2604 = vmatprep.subr.mxu0 0.0
  %2605 = vmatpush1.msra.mxu0 0.0
  %2606 = vmatprep.subr.mxu0 0.0
  %2607 = vmatpush1.msra.mxu0 0.0
  %2608 = vmatprep.subr.mxu0 0.0
  %2609 = vmatpush1.msra.mxu0 0.0
  %2610 = vmatprep.subr.mxu0 0.0
  %2611 = vmatpush1.msra.mxu0 0.0
  %2612 = vmatprep.subr.mxu0 0.0
  %2613 = vmatpush1.msra.mxu0 0.0
  %2614 = vmatprep.subr.mxu0 0.0
  %2615 = vmatpush1.msra.mxu0 0.0
  %2616 = vmatprep.subr.mxu0 0.0
  %2617 = vmatpush1.msra.mxu0 0.0
  %2618 = vmatprep.subr.mxu0 0.0
  %2619 = vmatpush1.msra.mxu0 0.0
  %2620 = vmatprep.subr.mxu0 0.0
  %2621 = vmatpush1.msra.mxu0 0.0
  %2622 = vmatprep.subr.mxu0 0.0
  %2623 = vmatpush1.msra.mxu0 0.0
  %2624 = vmatprep.subr.mxu0 0.0
  %2625 = vmatpush1.msra.mxu0 0.0
  %2626 = vmatprep.subr.mxu0 0.0
  %2627 = vmatpush1.msra.mxu0 0.0
  %2628 = vmatprep.subr.mxu0 0.0
  %2629 = vmatpush1.msra.mxu0 0.0
  %2630 = vmatprep.subr.mxu0 0.0
  %2631 = vmatpush1.msra.mxu0 0.0
  %2632 = vmatprep.subr.mxu0 0.0
  %2633 = vmatpush1.msra.mxu0 0.0
  %2634 = vmatprep.subr.mxu0 0.0
  %2635 = vmatpush1.msra.mxu0 0.0
  %2636 = vmatprep.subr.mxu0 0.0
  %2637 = vmatpush1.msra.mxu0 0.0
  %2638 = vmatprep.subr.mxu0 0.0
  %2639 = vmatpush1.msra.mxu0 0.0
  %2640 = vmatprep.subr.mxu0 0.0
  %2641 = vmatpush1.msra.mxu0 0.0
  %2642 = vmatprep.subr.mxu0 0.0
  %2643 = vmatpush1.msra.mxu0 0.0
  %2644 = vmatprep.subr.mxu0 0.0
  %2645 = vmatpush1.msra.mxu0 0.0
  %2646 = vmatprep.subr.mxu0 0.0
  %2647 = vmatpush1.msra.mxu0 0.0
  %2648 = vmatprep.subr.mxu0 0.0
  %2649 = vmatpush1.msra.mxu0 0.0
  %2650 = vmatprep.subr.mxu0 0.0
  %2651 = vmatpush1.msra.mxu0 0.0
  %2652 = vmatprep.subr.mxu0 0.0
  %2653 = vmatpush1.msra.mxu0 0.0
  %2654 = vmatprep.subr.mxu0 0.0
  %2655 = vmatpush1.msra.mxu0 0.0
  %2656 = vmatprep.subr.mxu0 0.0
  %2657 = vmatpush1.msra.mxu0 0.0
  %2658 = vmatprep.subr.mxu0 0.0
  %2659 = vmatpush1.msra.mxu0 0.0
  %2660 = vmatprep.subr.mxu0 0.0
  %2661 = vmatpush1.msra.mxu0 0.0
  %2662 = vmatprep.subr.mxu0 0.0
  %2663 = vmatpush1.msra.mxu0 0.0
  %2664 = vmatprep.mubr.f32.mxu0 0.0
  %v2665 = vand.u32 %v2261, 4294901760
  %2666 = vmatmul.mubr.f32.gmra.mrb[0].mxu0 %v2665
  %v2667 = vpop.f32.mrb[0].mxu0
  %v2668 = vadd.f32 %v2586, %v2667
  %v2669 = vpop.f32.mrb[0].mxu0
  %2670 = vmatprep.mubr.f32.mxu0 0.0
  %v2671 = vand.u32 %v2264, 4294901760
  %2672 = vmatmul.mubr.f32.gmra.mrb[0].mxu0 %v2671
  %v2673 = vpop.f32.mrb[0].mxu0
  %v2674 = vadd.f32 %v2594, %v2673
  %v2675 = vpop.f32.mrb[0].mxu0
  %2676 = vdwg.mxu0
  %2677 = vmatprep.subr.mxu0 0.0
  %v2678 = vand.u32 %v2254, 4294901760
  %2679 = vmatpush1.msra.mxu0 %v2678
  %2680 = vmatprep.subr.mxu0 0.0
  %2681 = vmatpush1.msra.mxu0 0.0
  %2682 = vmatprep.subr.mxu0 0.0
  %2683 = vmatpush1.msra.mxu0 0.0
  %2684 = vmatprep.subr.mxu0 0.0
  %2685 = vmatpush1.msra.mxu0 0.0
  %2686 = vmatprep.subr.mxu0 0.0
  %2687 = vmatpush1.msra.mxu0 0.0
  %2688 = vmatprep.subr.mxu0 0.0
  %2689 = vmatpush1.msra.mxu0 0.0
  %2690 = vmatprep.subr.mxu0 0.0
  %2691 = vmatpush1.msra.mxu0 0.0
  %2692 = vmatprep.subr.mxu0 0.0
  %2693 = vmatpush1.msra.mxu0 0.0
  %2694 = vmatprep.subr.mxu0 0.0
  %2695 = vmatpush1.msra.mxu0 0.0
  %2696 = vmatprep.subr.mxu0 0.0
  %2697 = vmatpush1.msra.mxu0 0.0
  %2698 = vmatprep.subr.mxu0 0.0
  %2699 = vmatpush1.msra.mxu0 0.0
  %2700 = vmatprep.subr.mxu0 0.0
  %2701 = vmatpush1.msra.mxu0 0.0
  %2702 = vmatprep.subr.mxu0 0.0
  %2703 = vmatpush1.msra.mxu0 0.0
  %2704 = vmatprep.subr.mxu0 0.0
  %2705 = vmatpush1.msra.mxu0 0.0
  %2706 = vmatprep.subr.mxu0 0.0
  %2707 = vmatpush1.msra.mxu0 0.0
  %2708 = vmatprep.subr.mxu0 0.0
  %2709 = vmatpush1.msra.mxu0 0.0
  %2710 = vmatprep.subr.mxu0 0.0
  %2711 = vmatpush1.msra.mxu0 0.0
  %2712 = vmatprep.subr.mxu0 0.0
  %2713 = vmatpush1.msra.mxu0 0.0
  %2714 = vmatprep.subr.mxu0 0.0
  %2715 = vmatpush1.msra.mxu0 0.0
  %2716 = vmatprep.subr.mxu0 0.0
  %2717 = vmatpush1.msra.mxu0 0.0
  %2718 = vmatprep.subr.mxu0 0.0
  %2719 = vmatpush1.msra.mxu0 0.0
  %2720 = vmatprep.subr.mxu0 0.0
  %2721 = vmatpush1.msra.mxu0 0.0
  %2722 = vmatprep.subr.mxu0 0.0
  %2723 = vmatpush1.msra.mxu0 0.0
  %2724 = vmatprep.subr.mxu0 0.0
  %2725 = vmatpush1.msra.mxu0 0.0
  %2726 = vmatprep.subr.mxu0 0.0
  %2727 = vmatpush1.msra.mxu0 0.0
  %2728 = vmatprep.subr.mxu0 0.0
  %2729 = vmatpush1.msra.mxu0 0.0
  %2730 = vmatprep.subr.mxu0 0.0
  %2731 = vmatpush1.msra.mxu0 0.0
  %2732 = vmatprep.subr.mxu0 0.0
  %2733 = vmatpush1.msra.mxu0 0.0
  %2734 = vmatprep.subr.mxu0 0.0
  %2735 = vmatpush1.msra.mxu0 0.0
  %2736 = vmatprep.subr.mxu0 0.0
  %2737 = vmatpush1.msra.mxu0 0.0
  %2738 = vmatprep.subr.mxu0 0.0
  %2739 = vmatpush1.msra.mxu0 0.0
  %2740 = vmatprep.subr.mxu0 0.0
  %2741 = vmatpush1.msra.mxu0 0.0
  %2742 = vmatprep.mubr.f32.mxu0 0.0
  %v2743 = vand.u32 %v2261, 4294901760
  %2744 = vmatmul.mubr.f32.gmra.mrb[0].mxu0 %v2743
  %v2745 = vpop.f32.mrb[0].mxu0
  %v2746 = vadd.f32 %v2668, %v2745
  %v2747 = vpop.f32.mrb[0].mxu0
  %2748 = vmatprep.mubr.f32.mxu0 0.0
  %v2749 = vand.u32 %v2264, 4294901760
  %2750 = vmatmul.mubr.f32.gmra.mrb[0].mxu0 %v2749
  %v2751 = vpop.f32.mrb[0].mxu0
  %v2752 = vadd.f32 %v2674, %v2751
  %v2753 = vpop.f32.mrb[0].mxu0
  %2754 = vdwg.mxu0
  %v2755 = vld [vmem:[%s1 + $0x48] sm:$0xff]
  %v2756 = vxor.u32 %v2746, 2147483648
  %v2757 = vmul.f32 %v2756, 1.442695
  %v2758 = vpow.pop %v2757
  %v2759 = vadd.f32 %v2758, 1.0
  %v2760 = vrcp.pop %v2759
  %v2761 = vmul.f32 1.0, %v2760
  %v2762 = vmul.f32 %v2761, 2.0
  %v2763 = vsub.f32 %v2762, 1.0
  %2765 = vrot.lane.b32.xlu0 %v2763, 104
  %v2766 = vpop.permute.xlu0 %2765
  %v2768 = vmul.f32 %v2761, %v2766
  %v2769 = vtanh.pop %v2768
  %2771 = vrot.lane.b32.xlu0 %v2769, 16
  %v2772 = vpop.permute.xlu0 %2771
  %v2774 = vmul.f32 %v2761, %v2772
  %2776 = vset.pattern.permute.xlu0 16
  %2777 = vperm.xlu0 %2776, %v2774
  %v2778 = vpop.permute.xlu0 %2777
  %v2780 = vlaneseq
  %v2781 = vshrl.u32 %v2780, 7
  %v2782 = vsub.s32 0, %v2781
  %v2783 = vrot.slane %v2755, %v2782
  %v2784 = vmul.f32 %v2778, %v2783
  %2785 = vset.pattern.permute.xlu0 17
  %2786 = vperm.xlu0 %2785, %v2774
  %v2787 = vpop.permute.xlu0 %2786
  %v2789 = vlaneseq
  %v2790 = vshrl.u32 %v2789, 7
  %v2791 = vsub.s32 1, %v2790
  %v2792 = vrot.slane %v2755, %v2791
  %v2793 = vmul.f32 %v2787, %v2792
  %2794 = vset.pattern.permute.xlu0 18
  %2795 = vperm.xlu0 %2794, %v2774
  %v2796 = vpop.permute.xlu0 %2795
  %v2798 = vlaneseq
  %v2799 = vshrl.u32 %v2798, 7
  %v2800 = vsub.s32 2, %v2799
  %v2801 = vrot.slane %v2755, %v2800
  %v2802 = vmul.f32 %v2796, %v2801
  %2803 = vset.pattern.permute.xlu0 19
  %2804 = vperm.xlu0 %2803, %v2774
  %v2805 = vpop.permute.xlu0 %2804
  %v2807 = vlaneseq
  %v2808 = vshrl.u32 %v2807, 7
  %v2809 = vsub.s32 3, %v2808
  %v2810 = vrot.slane %v2755, %v2809
  %v2811 = vmul.f32 %v2805, %v2810
  %2812 = vset.pattern.permute.xlu0 20
  %2813 = vperm.xlu0 %2812, %v2774
  %v2814 = vpop.permute.xlu0 %2813
  %v2816 = vlaneseq
  %v2817 = vshrl.u32 %v2816, 7
  %v2818 = vsub.s32 4, %v2817
  %v2819 = vrot.slane %v2755, %v2818
  %v2820 = vmul.f32 %v2814, %v2819
  %2821 = vset.pattern.permute.xlu0 21
  %2822 = vperm.xlu0 %2821, %v2774
  %v2823 = vpop.permute.xlu0 %2822
  %v2825 = vlaneseq
  %v2826 = vshrl.u32 %v2825, 7
  %v2827 = vsub.s32 5, %v2826
  %v2828 = vrot.slane %v2755, %v2827
  %v2829 = vmul.f32 %v2823, %v2828
  %2830 = vset.pattern.permute.xlu0 22
  %2831 = vperm.xlu0 %2830, %v2774
  %v2832 = vpop.permute.xlu0 %2831
  %v2834 = vlaneseq
  %v2835 = vshrl.u32 %v2834, 7
  %v2836 = vsub.s32 6, %v2835
  %v2837 = vrot.slane %v2755, %v2836
  %v2838 = vmul.f32 %v2832, %v2837
  %2839 = vset.pattern.permute.xlu0 23
  %2840 = vperm.xlu0 %2839, %v2774
  %v2841 = vpop.permute.xlu0 %2840
  %v2843 = vlaneseq
  %v2844 = vshrl.u32 %v2843, 7
  %v2845 = vsub.s32 7, %v2844
  %v2846 = vrot.slane %v2755, %v2845
  %v2847 = vmul.f32 %v2841, %v2846
  %v2848 = vadd.f32 %v2784, %v2793
  %v2849 = vadd.f32 %v2802, %v2811
  %v2850 = vadd.f32 %v2820, %v2829
  %v2851 = vadd.f32 %v2838, %v2847
  %v2852 = vadd.f32 %v2848, %v2849
  %v2853 = vadd.f32 %v2850, %v2851
  %v2854 = vadd.f32 %v2852, %v2853
  %v2856 = vrot.slane %v2854, 6
  %v2858 = vadd.f32 %v2746, %v2856
  %v2859 = vxor.u32 %v2858, 2147483648
  %v2860 = vmul.f32 %v2859, 1.442695
  %v2861 = vpow.pop %v2860
  %v2862 = vadd.f32 %v2861, 1.0
  %v2863 = vrcp.pop %v2862
  %v2864 = vmul.f32 1.0, %v2863
  %v2865 = vmul.f32 %v2864, 2.0
  %v2866 = vsub.f32 %v2865, 1.0
  %v2868 = vrot.slane %v2768, 6
  %2869 = vrot.lane.b32.xlu0 %v2868, 8
  %v2870 = vpop.permute.xlu0 %2869
  %v2872 = vmul.f32 %v2864, %v2870
  %2874 = vrot.lane.b32.xlu0 %v2866, 104
  %v2875 = vpop.permute.xlu0 %2874
  %v2877 = vmul.f32 %v2864, %v2875
  %2879 = vrot.lane.b32.xlu0 %v2877, 8
  %v2880 = vpop.permute.xlu0 %2879
  %v2882 = vadd.f32 %v2872, %v2880
  %v2883 = vtanh.pop %v2882
  %2885 = vrot.lane.b32.xlu0 %v2883, 8
  %v2886 = vpop.permute.xlu0 %2885
  %v2888 = vmul.f32 %v2864, %v2886
  %2890 = vset.pattern.permute.xlu0 16
  %2891 = vperm.xlu0 %2890, %v2888
  %v2892 = vpop.permute.xlu0 %2891
  %v2894 = vmul.f32 %v2892, %v2783
  %2895 = vset.pattern.permute.xlu0 17
  %2896 = vperm.xlu0 %2895, %v2888
  %v2897 = vpop.permute.xlu0 %2896
  %v2899 = vmul.f32 %v2897, %v2792
  %2900 = vset.pattern.permute.xlu0 18
  %2901 = vperm.xlu0 %2900, %v2888
  %v2902 = vpop.permute.xlu0 %2901
  %v2904 = vmul.f32 %v2902, %v2801
  %2905 = vset.pattern.permute.xlu0 19
  %2906 = vperm.xlu0 %2905, %v2888
  %v2907 = vpop.permute.xlu0 %2906
  %v2909 = vmul.f32 %v2907, %v2810
  %2910 = vset.pattern.permute.xlu0 20
  %2911 = vperm.xlu0 %2910, %v2888
  %v2912 = vpop.permute.xlu0 %2911
  %v2914 = vmul.f32 %v2912, %v2819
  %2915 = vset.pattern.permute.xlu0 21
  %2916 = vperm.xlu0 %2915, %v2888
  %v2917 = vpop.permute.xlu0 %2916
  %v2919 = vmul.f32 %v2917, %v2828
  %2920 = vset.pattern.permute.xlu0 22
  %2921 = vperm.xlu0 %2920, %v2888
  %v2922 = vpop.permute.xlu0 %2921
  %v2924 = vmul.f32 %v2922, %v2837
  %2925 = vset.pattern.permute.xlu0 23
  %2926 = vperm.xlu0 %2925, %v2888
  %v2927 = vpop.permute.xlu0 %2926
  %v2929 = vmul.f32 %v2927, %v2846
  %v2930 = vadd.f32 %v2894, %v2899
  %v2931 = vadd.f32 %v2904, %v2909
  %v2932 = vadd.f32 %v2914, %v2919
  %v2933 = vadd.f32 %v2924, %v2929
  %v2934 = vadd.f32 %v2930, %v2931
  %v2935 = vadd.f32 %v2932, %v2933
  %v2936 = vadd.f32 %v2934, %v2935
  %v2938 = vrot.slane %v2936, 6
  %v2940 = vadd.f32 %v2746, %v2938
  %v2941 = vxor.u32 %v2940, 2147483648
  %v2942 = vmul.f32 %v2941, 1.442695
  %v2943 = vpow.pop %v2942
  %v2944 = vadd.f32 %v2943, 1.0
  %v2945 = vrcp.pop %v2944
  %v2946 = vmul.f32 1.0, %v2945
  %v2947 = vmul.f32 %v2946, 2.0
  %v2948 = vsub.f32 %v2947, 1.0
  %v2950 = vrot.slane %v2882, 6
  %v2952 = vmul.f32 %v2946, %v2950
  %2954 = vrot.lane.b32.xlu0 %v2948, 104
  %v2955 = vpop.permute.xlu0 %2954
  %v2957 = vmul.f32 %v2946, %v2955
  %2959 = vrot.lane.b32.xlu0 %v2957, 8
  %v2960 = vpop.permute.xlu0 %2959
  %v2962 = vadd.f32 %v2952, %v2960
  %v2963 = vtanh.pop %v2962
  %2965 = vrot.lane.b32.xlu0 %v2963, 8
  %v2966 = vpop.permute.xlu0 %2965
  %v2968 = vmul.f32 %v2946, %v2966
  %2970 = vset.pattern.permute.xlu0 16
  %2971 = vperm.xlu0 %2970, %v2968
  %v2972 = vpop.permute.xlu0 %2971
  %v2974 = vmul.f32 %v2972, %v2783
  %2975 = vset.pattern.permute.xlu0 17
  %2976 = vperm.xlu0 %2975, %v2968
  %v2977 = vpop.permute.xlu0 %2976
  %v2979 = vmul.f32 %v2977, %v2792
  %2980 = vset.pattern.permute.xlu0 18
  %2981 = vperm.xlu0 %2980, %v2968
  %v2982 = vpop.permute.xlu0 %2981
  %v2984 = vmul.f32 %v2982, %v2801
  %2985 = vset.pattern.permute.xlu0 19
  %2986 = vperm.xlu0 %2985, %v2968
  %v2987 = vpop.permute.xlu0 %2986
  %v2989 = vmul.f32 %v2987, %v2810
  %2990 = vset.pattern.permute.xlu0 20
  %2991 = vperm.xlu0 %2990, %v2968
  %v2992 = vpop.permute.xlu0 %2991
  %v2994 = vmul.f32 %v2992, %v2819
  %2995 = vset.pattern.permute.xlu0 21
  %2996 = vperm.xlu0 %2995, %v2968
  %v2997 = vpop.permute.xlu0 %2996
  %v2999 = vmul.f32 %v2997, %v2828
  %3000 = vset.pattern.permute.xlu0 22
  %3001 = vperm.xlu0 %3000, %v2968
  %v3002 = vpop.permute.xlu0 %3001
  %v3004 = vmul.f32 %v3002, %v2837
  %3005 = vset.pattern.permute.xlu0 23
  %3006 = vperm.xlu0 %3005, %v2968
  %v3007 = vpop.permute.xlu0 %3006
  %v3009 = vmul.f32 %v3007, %v2846
  %v3010 = vadd.f32 %v2974, %v2979
  %v3011 = vadd.f32 %v2984, %v2989
  %v3012 = vadd.f32 %v2994, %v2999
  %v3013 = vadd.f32 %v3004, %v3009
  %v3014 = vadd.f32 %v3010, %v3011
  %v3015 = vadd.f32 %v3012, %v3013
  %v3016 = vadd.f32 %v3014, %v3015
  %v3018 = vrot.slane %v3016, 6
  %v3020 = vadd.f32 %v2746, %v3018
  %v3021 = vxor.u32 %v3020, 2147483648
  %v3022 = vmul.f32 %v3021, 1.442695
  %v3023 = vpow.pop %v3022
  %v3024 = vadd.f32 %v3023, 1.0
  %v3025 = vrcp.pop %v3024
  %v3026 = vmul.f32 1.0, %v3025
  %v3027 = vmul.f32 %v3026, 2.0
  %v3028 = vsub.f32 %v3027, 1.0
  %v3030 = vrot.slane %v2962, 6
  %v3032 = vmul.f32 %v3026, %v3030
  %3034 = vrot.lane.b32.xlu0 %v3028, 104
  %v3035 = vpop.permute.xlu0 %3034
  %v3037 = vmul.f32 %v3026, %v3035
  %3039 = vrot.lane.b32.xlu0 %v3037, 8
  %v3040 = vpop.permute.xlu0 %3039
  %v3042 = vadd.f32 %v3032, %v3040
  %v3043 = vtanh.pop %v3042
  %3045 = vrot.lane.b32.xlu0 %v3043, 8
  %v3046 = vpop.permute.xlu0 %3045
  %v3048 = vmul.f32 %v3026, %v3046
  %3050 = vset.pattern.permute.xlu0 16
  %3051 = vperm.xlu0 %3050, %v3048
  %v3052 = vpop.permute.xlu0 %3051
  %v3054 = vmul.f32 %v3052, %v2783
  %3055 = vset.pattern.permute.xlu0 17
  %3056 = vperm.xlu0 %3055, %v3048
  %v3057 = vpop.permute.xlu0 %3056
  %v3059 = vmul.f32 %v3057, %v2792
  %3060 = vset.pattern.permute.xlu0 18
  %3061 = vperm.xlu0 %3060, %v3048
  %v3062 = vpop.permute.xlu0 %3061
  %v3064 = vmul.f32 %v3062, %v2801
  %3065 = vset.pattern.permute.xlu0 19
  %3066 = vperm.xlu0 %3065, %v3048
  %v3067 = vpop.permute.xlu0 %3066
  %v3069 = vmul.f32 %v3067, %v2810
  %3070 = vset.pattern.permute.xlu0 20
  %3071 = vperm.xlu0 %3070, %v3048
  %v3072 = vpop.permute.xlu0 %3071
  %v3074 = vmul.f32 %v3072, %v2819
  %3075 = vset.pattern.permute.xlu0 21
  %3076 = vperm.xlu0 %3075, %v3048
  %v3077 = vpop.permute.xlu0 %3076
  %v3079 = vmul.f32 %v3077, %v2828
  %3080 = vset.pattern.permute.xlu0 22
  %3081 = vperm.xlu0 %3080, %v3048
  %v3082 = vpop.permute.xlu0 %3081
  %v3084 = vmul.f32 %v3082, %v2837
  %3085 = vset.pattern.permute.xlu0 23
  %3086 = vperm.xlu0 %3085, %v3048
  %v3087 = vpop.permute.xlu0 %3086
  %v3089 = vmul.f32 %v3087, %v2846
  %v3090 = vadd.f32 %v3054, %v3059
  %v3091 = vadd.f32 %v3064, %v3069
  %v3092 = vadd.f32 %v3074, %v3079
  %v3093 = vadd.f32 %v3084, %v3089
  %v3094 = vadd.f32 %v3090, %v3091
  %v3095 = vadd.f32 %v3092, %v3093
  %v3096 = vadd.f32 %v3094, %v3095
  %v3098 = vrot.slane %v3096, 6
  %v3100 = vadd.f32 %v2752, %v3098
  %v3101 = vxor.u32 %v3100, 2147483648
  %v3102 = vmul.f32 %v3101, 1.442695
  %v3103 = vpow.pop %v3102
  %v3104 = vadd.f32 %v3103, 1.0
  %v3105 = vrcp.pop %v3104
  %v3106 = vmul.f32 1.0, %v3105
  %v3107 = vmul.f32 %v3106, 2.0
  %v3108 = vsub.f32 %v3107, 1.0
  %v3110 = vrot.slane %v3042, 6
  %v3112 = vmul.f32 %v3106, %v3110
  %3114 = vrot.lane.b32.xlu0 %v3108, 104
  %v3115 = vpop.permute.xlu0 %3114
  %v3117 = vmul.f32 %v3106, %v3115
  %3119 = vrot.lane.b32.xlu0 %v3117, 8
  %v3120 = vpop.permute.xlu0 %3119
  %v3122 = vadd.f32 %v3112, %v3120
  %v3123 = vtanh.pop %v3122
  %3125 = vrot.lane.b32.xlu0 %v3123, 8
  %v3126 = vpop.permute.xlu0 %3125
  %v3128 = vmul.f32 %v3106, %v3126
  %3130 = vset.pattern.permute.xlu0 16
  %3131 = vperm.xlu0 %3130, %v3128
  %v3132 = vpop.permute.xlu0 %3131
  %v3134 = vmul.f32 %v3132, %v2783
  %3135 = vset.pattern.permute.xlu0 17
  %3136 = vperm.xlu0 %3135, %v3128
  %v3137 = vpop.permute.xlu0 %3136
  %v3139 = vmul.f32 %v3137, %v2792
  %3140 = vset.pattern.permute.xlu0 18
  %3141 = vperm.xlu0 %3140, %v3128
  %v3142 = vpop.permute.xlu0 %3141
  %v3144 = vmul.f32 %v3142, %v2801
  %3145 = vset.pattern.permute.xlu0 19
  %3146 = vperm.xlu0 %3145, %v3128
  %v3147 = vpop.permute.xlu0 %3146
  %v3149 = vmul.f32 %v3147, %v2810
  %3150 = vset.pattern.permute.xlu0 20
  %3151 = vperm.xlu0 %3150, %v3128
  %v3152 = vpop.permute.xlu0 %3151
  %v3154 = vmul.f32 %v3152, %v2819
  %3155 = vset.pattern.permute.xlu0 21
  %3156 = vperm.xlu0 %3155, %v3128
  %v3157 = vpop.permute.xlu0 %3156
  %v3159 = vmul.f32 %v3157, %v2828
  %3160 = vset.pattern.permute.xlu0 22
  %3161 = vperm.xlu0 %3160, %v3128
  %v3162 = vpop.permute.xlu0 %3161
  %v3164 = vmul.f32 %v3162, %v2837
  %3165 = vset.pattern.permute.xlu0 23
  %3166 = vperm.xlu0 %3165, %v3128
  %v3167 = vpop.permute.xlu0 %3166
  %v3169 = vmul.f32 %v3167, %v2846
  %v3170 = vadd.f32 %v3134, %v3139
  %v3171 = vadd.f32 %v3144, %v3149
  %v3172 = vadd.f32 %v3154, %v3159
  %v3173 = vadd.f32 %v3164, %v3169
  %v3174 = vadd.f32 %v3170, %v3171
  %v3175 = vadd.f32 %v3172, %v3173
  %v3176 = vadd.f32 %v3174, %v3175
  %v3178 = vrot.slane %v3176, 6
  %v3180 = vadd.f32 %v2752, %v3178
  %v3181 = vxor.u32 %v3180, 2147483648
  %v3182 = vmul.f32 %v3181, 1.442695
  %v3183 = vpow.pop %v3182
  %v3184 = vadd.f32 %v3183, 1.0
  %v3185 = vrcp.pop %v3184
  %v3186 = vmul.f32 1.0, %v3185
  %v3187 = vmul.f32 %v3186, 2.0
  %v3188 = vsub.f32 %v3187, 1.0
  %v3190 = vrot.slane %v3122, 6
  %v3192 = vmul.f32 %v3186, %v3190
  %3194 = vrot.lane.b32.xlu0 %v3188, 104
  %v3195 = vpop.permute.xlu0 %3194
  %v3197 = vmul.f32 %v3186, %v3195
  %3199 = vrot.lane.b32.xlu0 %v3197, 8
  %v3200 = vpop.permute.xlu0 %3199
  %v3202 = vadd.f32 %v3192, %v3200
  %v3203 = vtanh.pop %v3202
  %3205 = vrot.lane.b32.xlu0 %v3203, 8
  %v3206 = vpop.permute.xlu0 %3205
  %v3208 = vmul.f32 %v3186, %v3206
  %3210 = vset.pattern.permute.xlu0 16
  %3211 = vperm.xlu0 %3210, %v3208
  %v3212 = vpop.permute.xlu0 %3211
  %v3214 = vmul.f32 %v3212, %v2783
  %3215 = vset.pattern.permute.xlu0 17
  %3216 = vperm.xlu0 %3215, %v3208
  %v3217 = vpop.permute.xlu0 %3216
  %v3219 = vmul.f32 %v3217, %v2792
  %3220 = vset.pattern.permute.xlu0 18
  %3221 = vperm.xlu0 %3220, %v3208
  %v3222 = vpop.permute.xlu0 %3221
  %v3224 = vmul.f32 %v3222, %v2801
  %3225 = vset.pattern.permute.xlu0 19
  %3226 = vperm.xlu0 %3225, %v3208
  %v3227 = vpop.permute.xlu0 %3226
  %v3229 = vmul.f32 %v3227, %v2810
  %3230 = vset.pattern.permute.xlu0 20
  %3231 = vperm.xlu0 %3230, %v3208
  %v3232 = vpop.permute.xlu0 %3231
  %v3234 = vmul.f32 %v3232, %v2819
  %3235 = vset.pattern.permute.xlu0 21
  %3236 = vperm.xlu0 %3235, %v3208
  %v3237 = vpop.permute.xlu0 %3236
  %v3239 = vmul.f32 %v3237, %v2828
  %3240 = vset.pattern.permute.xlu0 22
  %3241 = vperm.xlu0 %3240, %v3208
  %v3242 = vpop.permute.xlu0 %3241
  %v3244 = vmul.f32 %v3242, %v2837
  %3245 = vset.pattern.permute.xlu0 23
  %3246 = vperm.xlu0 %3245, %v3208
  %v3247 = vpop.permute.xlu0 %3246
  %v3249 = vmul.f32 %v3247, %v2846
  %v3250 = vadd.f32 %v3214, %v3219
  %v3251 = vadd.f32 %v3224, %v3229
  %v3252 = vadd.f32 %v3234, %v3239
  %v3253 = vadd.f32 %v3244, %v3249
  %v3254 = vadd.f32 %v3250, %v3251
  %v3255 = vadd.f32 %v3252, %v3253
  %v3256 = vadd.f32 %v3254, %v3255
  %v3258 = vrot.slane %v3256, 6
  %v3260 = vadd.f32 %v2752, %v3258
  %v3261 = vxor.u32 %v3260, 2147483648
  %v3262 = vmul.f32 %v3261, 1.442695
  %v3263 = vpow.pop %v3262
  %v3264 = vadd.f32 %v3263, 1.0
  %v3265 = vrcp.pop %v3264
  %v3266 = vmul.f32 1.0, %v3265
  %v3267 = vmul.f32 %v3266, 2.0
  %v3268 = vsub.f32 %v3267, 1.0
  %v3270 = vrot.slane %v3202, 6
  %v3272 = vmul.f32 %v3266, %v3270
  %3274 = vrot.lane.b32.xlu0 %v3268, 104
  %v3275 = vpop.permute.xlu0 %3274
  %v3277 = vmul.f32 %v3266, %v3275
  %3279 = vrot.lane.b32.xlu0 %v3277, 8
  %v3280 = vpop.permute.xlu0 %3279
  %v3282 = vadd.f32 %v3272, %v3280
  %v3283 = vtanh.pop %v3282
  %3285 = vrot.lane.b32.xlu0 %v3283, 8
  %v3286 = vpop.permute.xlu0 %3285
  %v3288 = vmul.f32 %v3266, %v3286
  %3290 = vset.pattern.permute.xlu0 16
  %3291 = vperm.xlu0 %3290, %v3288
  %v3292 = vpop.permute.xlu0 %3291
  %v3294 = vmul.f32 %v3292, %v2783
  %3295 = vset.pattern.permute.xlu0 17
  %3296 = vperm.xlu0 %3295, %v3288
  %v3297 = vpop.permute.xlu0 %3296
  %v3299 = vmul.f32 %v3297, %v2792
  %3300 = vset.pattern.permute.xlu0 18
  %3301 = vperm.xlu0 %3300, %v3288
  %v3302 = vpop.permute.xlu0 %3301
  %v3304 = vmul.f32 %v3302, %v2801
  %3305 = vset.pattern.permute.xlu0 19
  %3306 = vperm.xlu0 %3305, %v3288
  %v3307 = vpop.permute.xlu0 %3306
  %v3309 = vmul.f32 %v3307, %v2810
  %3310 = vset.pattern.permute.xlu0 20
  %3311 = vperm.xlu0 %3310, %v3288
  %v3312 = vpop.permute.xlu0 %3311
  %v3314 = vmul.f32 %v3312, %v2819
  %3315 = vset.pattern.permute.xlu0 21
  %3316 = vperm.xlu0 %3315, %v3288
  %v3317 = vpop.permute.xlu0 %3316
  %v3319 = vmul.f32 %v3317, %v2828
  %3320 = vset.pattern.permute.xlu0 22
  %3321 = vperm.xlu0 %3320, %v3288
  %v3322 = vpop.permute.xlu0 %3321
  %v3324 = vmul.f32 %v3322, %v2837
  %3325 = vset.pattern.permute.xlu0 23
  %3326 = vperm.xlu0 %3325, %v3288
  %v3327 = vpop.permute.xlu0 %3326
  %v3329 = vmul.f32 %v3327, %v2846
  %v3330 = vadd.f32 %v3294, %v3299
  %v3331 = vadd.f32 %v3304, %v3309
  %v3332 = vadd.f32 %v3314, %v3319
  %v3333 = vadd.f32 %v3324, %v3329
  %v3334 = vadd.f32 %v3330, %v3331
  %v3335 = vadd.f32 %v3332, %v3333
  %v3336 = vadd.f32 %v3334, %v3335
  %v3338 = vrot.slane %v3336, 6
  %v3340 = vadd.f32 %v2752, %v3338
  %v3341 = vxor.u32 %v3340, 2147483648
  %v3342 = vmul.f32 %v3341, 1.442695
  %v3343 = vpow.pop %v3342
  %v3344 = vadd.f32 %v3343, 1.0
  %v3345 = vrcp.pop %v3344
  %v3346 = vmul.f32 1.0, %v3345
  %v3347 = vmul.f32 %v3346, 2.0
  %v3348 = vsub.f32 %v3347, 1.0
  %v3350 = vrot.slane %v3282, 6
  %v3352 = vmul.f32 %v3346, %v3350
  %3354 = vrot.lane.b32.xlu0 %v3348, 104
  %v3355 = vpop.permute.xlu0 %3354
  %v3357 = vmul.f32 %v3346, %v3355
  %3359 = vrot.lane.b32.xlu0 %v3357, 8
  %v3360 = vpop.permute.xlu0 %3359
  %v3362 = vadd.f32 %v3352, %v3360
  %v3363 = vtanh.pop %v3362
  %3365 = vrot.lane.b32.xlu0 %v3363, 8
  %v3366 = vpop.permute.xlu0 %3365
  %v3368 = vmul.f32 %v3346, %v3366
  %v3369 = vsel %vm37, %v2774, %v2888
  %v3370 = vsel %vm39, %v3369, %v2968
  %v3371 = vsel %vm41, %v3370, %v3048
  %v3372 = vsel %vm37, %v3128, %v3208
  %v3373 = vsel %vm39, %v3372, %v3288
  %v3374 = vsel %vm41, %v3373, %v3368
  %v3376 = vrot.slane %v3368, 6
  %v3378 = vrot.slane %v3288, 2
  %v3380 = vrot.slane %v3208, 6
  %v3382 = vrot.slane %v3128, 2
  %v3384 = vrot.slane %v3048, 6
  %v3386 = vrot.slane %v2968, 2
  %v3388 = vrot.slane %v2888, 6
  %v3390 = vrot.slane %v2774, 2
  %v3392 = vsel %vm37, %v3376, %v3378
  %v3393 = vsel %vm39, %v3392, %v3380
  %v3394 = vsel %vm41, %v3393, %v3382
  %v3395 = vsel %vm37, %v3384, %v3386
  %v3396 = vsel %vm39, %v3395, %v3388
  %v3397 = vsel %vm41, %v3396, %v3390
  %3400 = vrot.lane.b32.xlu0 %v3371, 112
  %v3401 = vpop.permute.xlu0 %3400
  %3402 = vrot.lane.b32.xlu0 %v3374, 112
  %v3403 = vpop.permute.xlu0 %3402
  %3408 = vrot.lane.b32.xlu0 %v3394, 120
  %v3409 = vpop.permute.xlu0 %3408
  %3410 = vrot.lane.b32.xlu0 %v3397, 120
  %v3411 = vpop.permute.xlu0 %3410
  %v3414 = vsel %vm81, %v3401, %v3409
  %v3415 = vsel %vm81, %v3403, %v3411
  %v3416 = vld [vmem:[%s1 + $0x58] sm:$0xff]
  %v3417 = vld [vmem:[%s1 + $0x60] sm:$0xff]
  %v3418 = vld [vmem:[%s1 + $0x78] sm:$0x1]
  %v3419 = vlaneseq
  %v3420 = vshrl.u32 %v3419, 7
  %v3421 = vsub.s32 0, %v3420
  %v3422 = vrot.slane %v3418, %v3421
  %v3424 = vsel %vm91, %v3414, 0
  %v3427 = vsel %vm91, %v3415, 0
  %3429 = vmatprep.subr.mxu0 0.0
  %v3430 = vand.u32 %v3416, 4294901760
  %3431 = vmatpush1.msra.mxu0 %v3430
  %3432 = vmatprep.subr.mxu0 0.0
  %v3433 = vand.u32 %v3417, 4294901760
  %3434 = vmatpush1.msra.mxu0 %v3433
  %3435 = vmatprep.subr.mxu0 0.0
  %3436 = vmatpush1.msra.mxu0 0.0
  %3437 = vmatprep.subr.mxu0 0.0
  %3438 = vmatpush1.msra.mxu0 0.0
  %3439 = vmatprep.subr.mxu0 0.0
  %3440 = vmatpush1.msra.mxu0 0.0
  %3441 = vmatprep.subr.mxu0 0.0
  %3442 = vmatpush1.msra.mxu0 0.0
  %3443 = vmatprep.subr.mxu0 0.0
  %3444 = vmatpush1.msra.mxu0 0.0
  %3445 = vmatprep.subr.mxu0 0.0
  %3446 = vmatpush1.msra.mxu0 0.0
  %3447 = vmatprep.subr.mxu0 0.0
  %3448 = vmatpush1.msra.mxu0 0.0
  %3449 = vmatprep.subr.mxu0 0.0
  %3450 = vmatpush1.msra.mxu0 0.0
  %3451 = vmatprep.subr.mxu0 0.0
  %3452 = vmatpush1.msra.mxu0 0.0
  %3453 = vmatprep.subr.mxu0 0.0
  %3454 = vmatpush1.msra.mxu0 0.0
  %3455 = vmatprep.subr.mxu0 0.0
  %3456 = vmatpush1.msra.mxu0 0.0
  %3457 = vmatprep.subr.mxu0 0.0
  %3458 = vmatpush1.msra.mxu0 0.0
  %3459 = vmatprep.subr.mxu0 0.0
  %3460 = vmatpush1.msra.mxu0 0.0
  %3461 = vmatprep.subr.mxu0 0.0
  %3462 = vmatpush1.msra.mxu0 0.0
  %3463 = vmatprep.subr.mxu0 0.0
  %3464 = vmatpush1.msra.mxu0 0.0
  %3465 = vmatprep.subr.mxu0 0.0
  %3466 = vmatpush1.msra.mxu0 0.0
  %3467 = vmatprep.subr.mxu0 0.0
  %3468 = vmatpush1.msra.mxu0 0.0
  %3469 = vmatprep.subr.mxu0 0.0
  %3470 = vmatpush1.msra.mxu0 0.0
  %3471 = vmatprep.subr.mxu0 0.0
  %3472 = vmatpush1.msra.mxu0 0.0
  %3473 = vmatprep.subr.mxu0 0.0
  %3474 = vmatpush1.msra.mxu0 0.0
  %3475 = vmatprep.subr.mxu0 0.0
  %3476 = vmatpush1.msra.mxu0 0.0
  %3477 = vmatprep.subr.mxu0 0.0
  %3478 = vmatpush1.msra.mxu0 0.0
  %3479 = vmatprep.subr.mxu0 0.0
  %3480 = vmatpush1.msra.mxu0 0.0
  %3481 = vmatprep.subr.mxu0 0.0
  %3482 = vmatpush1.msra.mxu0 0.0
  %3483 = vmatprep.subr.mxu0 0.0
  %3484 = vmatpush1.msra.mxu0 0.0
  %3485 = vmatprep.subr.mxu0 0.0
  %3486 = vmatpush1.msra.mxu0 0.0
  %3487 = vmatprep.subr.mxu0 0.0
  %3488 = vmatpush1.msra.mxu0 0.0
  %3489 = vmatprep.subr.mxu0 0.0
  %3490 = vmatpush1.msra.mxu0 0.0
  %3491 = vmatprep.subr.mxu0 0.0
  %3492 = vmatpush1.msra.mxu0 0.0
  %3493 = vmatprep.subr.mxu0 0.0
  %3494 = vmatpush1.msra.mxu0 0.0
  %3495 = vmatprep.mubr.f32.mxu0 0.0
  %v3496 = vand.u32 %v3424, 4294901760
  %v3497 = vsub.f32 %v3424, %v3496
  %v3498 = vand.u32 %v3497, 4294901760
  %v3499 = vsub.f32 %v3497, %v3498
  %v3500 = vand.u32 %v3499, 4294901760
  %3501 = vmatmul.mubr.f32.gmra.mrb[0].mxu0 %v3500
  %v3502 = vpop.f32.mrb[0].mxu0
  %v3503 = vadd.f32 %v3422, %v3502
  %v3504 = vpop.f32.mrb[0].mxu0
  %3505 = vmatprep.mubr.f32.mxu0 0.0
  %v3506 = vand.u32 %v3427, 4294901760
  %v3507 = vsub.f32 %v3427, %v3506
  %v3508 = vand.u32 %v3507, 4294901760
  %v3509 = vsub.f32 %v3507, %v3508
  %v3510 = vand.u32 %v3509, 4294901760
  %3511 = vmatmul.mubr.f32.gmra.mrb[0].mxu0 %v3510
  %v3512 = vpop.f32.mrb[0].mxu0
  %v3513 = vadd.f32 %v3422, %v3512
  %v3514 = vpop.f32.mrb[0].mxu0
  %3515 = vdwg.mxu0
  %3516 = vmatprep.subr.mxu0 0.0
  %v3517 = vand.u32 %v3416, 4294901760
  %v3518 = vsub.f32 %v3416, %v3517
  %v3519 = vand.u32 %v3518, 4294901760
  %v3520 = vsub.f32 %v3518, %v3519
  %v3521 = vand.u32 %v3520, 4294901760
  %3522 = vmatpush1.msra.mxu0 %v3521
  %3523 = vmatprep.subr.mxu0 0.0
  %v3524 = vand.u32 %v3417, 4294901760
  %v3525 = vsub.f32 %v3417, %v3524
  %v3526 = vand.u32 %v3525, 4294901760
  %v3527 = vsub.f32 %v3525, %v3526
  %v3528 = vand.u32 %v3527, 4294901760
  %3529 = vmatpush1.msra.mxu0 %v3528
  %3530 = vmatprep.subr.mxu0 0.0
  %3531 = vmatpush1.msra.mxu0 0.0
  %3532 = vmatprep.subr.mxu0 0.0
  %3533 = vmatpush1.msra.mxu0 0.0
  %3534 = vmatprep.subr.mxu0 0.0
  %3535 = vmatpush1.msra.mxu0 0.0
  %3536 = vmatprep.subr.mxu0 0.0
  %3537 = vmatpush1.msra.mxu0 0.0
  %3538 = vmatprep.subr.mxu0 0.0
  %3539 = vmatpush1.msra.mxu0 0.0
  %3540 = vmatprep.subr.mxu0 0.0
  %3541 = vmatpush1.msra.mxu0 0.0
  %3542 = vmatprep.subr.mxu0 0.0
  %3543 = vmatpush1.msra.mxu0 0.0
  %3544 = vmatprep.subr.mxu0 0.0
  %3545 = vmatpush1.msra.mxu0 0.0
  %3546 = vmatprep.subr.mxu0 0.0
  %3547 = vmatpush1.msra.mxu0 0.0
  %3548 = vmatprep.subr.mxu0 0.0
  %3549 = vmatpush1.msra.mxu0 0.0
  %3550 = vmatprep.subr.mxu0 0.0
  %3551 = vmatpush1.msra.mxu0 0.0
  %3552 = vmatprep.subr.mxu0 0.0
  %3553 = vmatpush1.msra.mxu0 0.0
  %3554 = vmatprep.subr.mxu0 0.0
  %3555 = vmatpush1.msra.mxu0 0.0
  %3556 = vmatprep.subr.mxu0 0.0
  %3557 = vmatpush1.msra.mxu0 0.0
  %3558 = vmatprep.subr.mxu0 0.0
  %3559 = vmatpush1.msra.mxu0 0.0
  %3560 = vmatprep.subr.mxu0 0.0
  %3561 = vmatpush1.msra.mxu0 0.0
  %3562 = vmatprep.subr.mxu0 0.0
  %3563 = vmatpush1.msra.mxu0 0.0
  %3564 = vmatprep.subr.mxu0 0.0
  %3565 = vmatpush1.msra.mxu0 0.0
  %3566 = vmatprep.subr.mxu0 0.0
  %3567 = vmatpush1.msra.mxu0 0.0
  %3568 = vmatprep.subr.mxu0 0.0
  %3569 = vmatpush1.msra.mxu0 0.0
  %3570 = vmatprep.subr.mxu0 0.0
  %3571 = vmatpush1.msra.mxu0 0.0
  %3572 = vmatprep.subr.mxu0 0.0
  %3573 = vmatpush1.msra.mxu0 0.0
  %3574 = vmatprep.subr.mxu0 0.0
  %3575 = vmatpush1.msra.mxu0 0.0
  %3576 = vmatprep.subr.mxu0 0.0
  %3577 = vmatpush1.msra.mxu0 0.0
  %3578 = vmatprep.subr.mxu0 0.0
  %3579 = vmatpush1.msra.mxu0 0.0
  %3580 = vmatprep.subr.mxu0 0.0
  %3581 = vmatpush1.msra.mxu0 0.0
  %3582 = vmatprep.subr.mxu0 0.0
  %3583 = vmatpush1.msra.mxu0 0.0
  %3584 = vmatprep.subr.mxu0 0.0
  %3585 = vmatpush1.msra.mxu0 0.0
  %3586 = vmatprep.subr.mxu0 0.0
  %3587 = vmatpush1.msra.mxu0 0.0
  %3588 = vmatprep.subr.mxu0 0.0
  %3589 = vmatpush1.msra.mxu0 0.0
  %3590 = vmatprep.mubr.f32.mxu0 0.0
  %v3591 = vand.u32 %v3424, 4294901760
  %3592 = vmatmul.mubr.f32.gmra.mrb[0].mxu0 %v3591
  %v3593 = vpop.f32.mrb[0].mxu0
  %v3594 = vadd.f32 %v3503, %v3593
  %v3595 = vpop.f32.mrb[0].mxu0
  %3596 = vmatprep.mubr.f32.mxu0 0.0
  %v3597 = vand.u32 %v3427, 4294901760
  %3598 = vmatmul.mubr.f32.gmra.mrb[0].mxu0 %v3597
  %v3599 = vpop.f32.mrb[0].mxu0
  %v3600 = vadd.f32 %v3513, %v3599
  %v3601 = vpop.f32.mrb[0].mxu0
  %3602 = vdwg.mxu0
  %3603 = vmatprep.subr.mxu0 0.0
  %v3604 = vand.u32 %v3416, 4294901760
  %v3605 = vsub.f32 %v3416, %v3604
  %3606 = vmatpush1.msra.mxu0 %v3605
  %3607 = vmatprep.subr.mxu0 0.0
  %v3608 = vand.u32 %v3417, 4294901760
  %v3609 = vsub.f32 %v3417, %v3608
  %3610 = vmatpush1.msra.mxu0 %v3609
  %3611 = vmatprep.subr.mxu0 0.0
  %3612 = vmatpush1.msra.mxu0 0.0
  %3613 = vmatprep.subr.mxu0 0.0
  %3614 = vmatpush1.msra.mxu0 0.0
  %3615 = vmatprep.subr.mxu0 0.0
  %3616 = vmatpush1.msra.mxu0 0.0
  %3617 = vmatprep.subr.mxu0 0.0
  %3618 = vmatpush1.msra.mxu0 0.0
  %3619 = vmatprep.subr.mxu0 0.0
  %3620 = vmatpush1.msra.mxu0 0.0
  %3621 = vmatprep.subr.mxu0 0.0
  %3622 = vmatpush1.msra.mxu0 0.0
  %3623 = vmatprep.subr.mxu0 0.0
  %3624 = vmatpush1.msra.mxu0 0.0
  %3625 = vmatprep.subr.mxu0 0.0
  %3626 = vmatpush1.msra.mxu0 0.0
  %3627 = vmatprep.subr.mxu0 0.0
  %3628 = vmatpush1.msra.mxu0 0.0
  %3629 = vmatprep.subr.mxu0 0.0
  %3630 = vmatpush1.msra.mxu0 0.0
  %3631 = vmatprep.subr.mxu0 0.0
  %3632 = vmatpush1.msra.mxu0 0.0
  %3633 = vmatprep.subr.mxu0 0.0
  %3634 = vmatpush1.msra.mxu0 0.0
  %3635 = vmatprep.subr.mxu0 0.0
  %3636 = vmatpush1.msra.mxu0 0.0
  %3637 = vmatprep.subr.mxu0 0.0
  %3638 = vmatpush1.msra.mxu0 0.0
  %3639 = vmatprep.subr.mxu0 0.0
  %3640 = vmatpush1.msra.mxu0 0.0
  %3641 = vmatprep.subr.mxu0 0.0
  %3642 = vmatpush1.msra.mxu0 0.0
  %3643 = vmatprep.subr.mxu0 0.0
  %3644 = vmatpush1.msra.mxu0 0.0
  %3645 = vmatprep.subr.mxu0 0.0
  %3646 = vmatpush1.msra.mxu0 0.0
  %3647 = vmatprep.subr.mxu0 0.0
  %3648 = vmatpush1.msra.mxu0 0.0
  %3649 = vmatprep.subr.mxu0 0.0
  %3650 = vmatpush1.msra.mxu0 0.0
  %3651 = vmatprep.subr.mxu0 0.0
  %3652 = vmatpush1.msra.mxu0 0.0
  %3653 = vmatprep.subr.mxu0 0.0
  %3654 = vmatpush1.msra.mxu0 0.0
  %3655 = vmatprep.subr.mxu0 0.0
  %3656 = vmatpush1.msra.mxu0 0.0
  %3657 = vmatprep.subr.mxu0 0.0
  %3658 = vmatpush1.msra.mxu0 0.0
  %3659 = vmatprep.subr.mxu0 0.0
  %3660 = vmatpush1.msra.mxu0 0.0
  %3661 = vmatprep.subr.mxu0 0.0
  %3662 = vmatpush1.msra.mxu0 0.0
  %3663 = vmatprep.subr.mxu0 0.0
  %3664 = vmatpush1.msra.mxu0 0.0
  %3665 = vmatprep.subr.mxu0 0.0
  %3666 = vmatpush1.msra.mxu0 0.0
  %3667 = vmatprep.subr.mxu0 0.0
  %3668 = vmatpush1.msra.mxu0 0.0
  %3669 = vmatprep.subr.mxu0 0.0
  %3670 = vmatpush1.msra.mxu0 0.0
  %3671 = vmatprep.mubr.f32.mxu0 0.0
  %v3672 = vand.u32 %v3424, 4294901760
  %v3673 = vsub.f32 %v3424, %v3672
  %3674 = vmatmul.mubr.f32.gmra.mrb[0].mxu0 %v3673
  %v3675 = vpop.f32.mrb[0].mxu0
  %v3676 = vadd.f32 %v3594, %v3675
  %v3677 = vpop.f32.mrb[0].mxu0
  %3678 = vmatprep.mubr.f32.mxu0 0.0
  %v3679 = vand.u32 %v3427, 4294901760
  %v3680 = vsub.f32 %v3427, %v3679
  %3681 = vmatmul.mubr.f32.gmra.mrb[0].mxu0 %v3680
  %v3682 = vpop.f32.mrb[0].mxu0
  %v3683 = vadd.f32 %v3600, %v3682
  %v3684 = vpop.f32.mrb[0].mxu0
  %3685 = vdwg.mxu0
  %3686 = vmatprep.subr.mxu0 0.0
  %v3687 = vand.u32 %v3416, 4294901760
  %3688 = vmatpush1.msra.mxu0 %v3687
  %3689 = vmatprep.subr.mxu0 0.0
  %v3690 = vand.u32 %v3417, 4294901760
  %3691 = vmatpush1.msra.mxu0 %v3690
  %3692 = vmatprep.subr.mxu0 0.0
  %3693 = vmatpush1.msra.mxu0 0.0
  %3694 = vmatprep.subr.mxu0 0.0
  %3695 = vmatpush1.msra.mxu0 0.0
  %3696 = vmatprep.subr.mxu0 0.0
  %3697 = vmatpush1.msra.mxu0 0.0
  %3698 = vmatprep.subr.mxu0 0.0
  %3699 = vmatpush1.msra.mxu0 0.0
  %3700 = vmatprep.subr.mxu0 0.0
  %3701 = vmatpush1.msra.mxu0 0.0
  %3702 = vmatprep.subr.mxu0 0.0
  %3703 = vmatpush1.msra.mxu0 0.0
  %3704 = vmatprep.subr.mxu0 0.0
  %3705 = vmatpush1.msra.mxu0 0.0
  %3706 = vmatprep.subr.mxu0 0.0
  %3707 = vmatpush1.msra.mxu0 0.0
  %3708 = vmatprep.subr.mxu0 0.0
  %3709 = vmatpush1.msra.mxu0 0.0
  %3710 = vmatprep.subr.mxu0 0.0
  %3711 = vmatpush1.msra.mxu0 0.0
  %3712 = vmatprep.subr.mxu0 0.0
  %3713 = vmatpush1.msra.mxu0 0.0
  %3714 = vmatprep.subr.mxu0 0.0
  %3715 = vmatpush1.msra.mxu0 0.0
  %3716 = vmatprep.subr.mxu0 0.0
  %3717 = vmatpush1.msra.mxu0 0.0
  %3718 = vmatprep.subr.mxu0 0.0
  %3719 = vmatpush1.msra.mxu0 0.0
  %3720 = vmatprep.subr.mxu0 0.0
  %3721 = vmatpush1.msra.mxu0 0.0
  %3722 = vmatprep.subr.mxu0 0.0
  %3723 = vmatpush1.msra.mxu0 0.0
  %3724 = vmatprep.subr.mxu0 0.0
  %3725 = vmatpush1.msra.mxu0 0.0
  %3726 = vmatprep.subr.mxu0 0.0
  %3727 = vmatpush1.msra.mxu0 0.0
  %3728 = vmatprep.subr.mxu0 0.0
  %3729 = vmatpush1.msra.mxu0 0.0
  %3730 = vmatprep.subr.mxu0 0.0
  %3731 = vmatpush1.msra.mxu0 0.0
  %3732 = vmatprep.subr.mxu0 0.0
  %3733 = vmatpush1.msra.mxu0 0.0
  %3734 = vmatprep.subr.mxu0 0.0
  %3735 = vmatpush1.msra.mxu0 0.0
  %3736 = vmatprep.subr.mxu0 0.0
  %3737 = vmatpush1.msra.mxu0 0.0
  %3738 = vmatprep.subr.mxu0 0.0
  %3739 = vmatpush1.msra.mxu0 0.0
  %3740 = vmatprep.subr.mxu0 0.0
  %3741 = vmatpush1.msra.mxu0 0.0
  %3742 = vmatprep.subr.mxu0 0.0
  %3743 = vmatpush1.msra.mxu0 0.0
  %3744 = vmatprep.subr.mxu0 0.0
  %3745 = vmatpush1.msra.mxu0 0.0
  %3746 = vmatprep.subr.mxu0 0.0
  %3747 = vmatpush1.msra.mxu0 0.0
  %3748 = vmatprep.subr.mxu0 0.0
  %3749 = vmatpush1.msra.mxu0 0.0
  %3750 = vmatprep.subr.mxu0 0.0
  %3751 = vmatpush1.msra.mxu0 0.0
  %3752 = vmatprep.mubr.f32.mxu0 0.0
  %v3753 = vand.u32 %v3424, 4294901760
  %v3754 = vsub.f32 %v3424, %v3753
  %v3755 = vand.u32 %v3754, 4294901760
  %3756 = vmatmul.mubr.f32.gmra.mrb[0].mxu0 %v3755
  %v3757 = vpop.f32.mrb[0].mxu0
  %v3758 = vadd.f32 %v3676, %v3757
  %v3759 = vpop.f32.mrb[0].mxu0
  %3760 = vmatprep.mubr.f32.mxu0 0.0
  %v3761 = vand.u32 %v3427, 4294901760
  %v3762 = vsub.f32 %v3427, %v3761
  %v3763 = vand.u32 %v3762, 4294901760
  %3764 = vmatmul.mubr.f32.gmra.mrb[0].mxu0 %v3763
  %v3765 = vpop.f32.mrb[0].mxu0
  %v3766 = vadd.f32 %v3683, %v3765
  %v3767 = vpop.f32.mrb[0].mxu0
  %3768 = vdwg.mxu0
  %3769 = vmatprep.subr.mxu0 0.0
  %v3770 = vand.u32 %v3416, 4294901760
  %v3771 = vsub.f32 %v3416, %v3770
  %v3772 = vand.u32 %v3771, 4294901760
  %3773 = vmatpush1.msra.mxu0 %v3772
  %3774 = vmatprep.subr.mxu0 0.0
  %v3775 = vand.u32 %v3417, 4294901760
  %v3776 = vsub.f32 %v3417, %v3775
  %v3777 = vand.u32 %v3776, 4294901760
  %3778 = vmatpush1.msra.mxu0 %v3777
  %3779 = vmatprep.subr.mxu0 0.0
  %3780 = vmatpush1.msra.mxu0 0.0
  %3781 = vmatprep.subr.mxu0 0.0
  %3782 = vmatpush1.msra.mxu0 0.0
  %3783 = vmatprep.subr.mxu0 0.0
  %3784 = vmatpush1.msra.mxu0 0.0
  %3785 = vmatprep.subr.mxu0 0.0
  %3786 = vmatpush1.msra.mxu0 0.0
  %3787 = vmatprep.subr.mxu0 0.0
  %3788 = vmatpush1.msra.mxu0 0.0
  %3789 = vmatprep.subr.mxu0 0.0
  %3790 = vmatpush1.msra.mxu0 0.0
  %3791 = vmatprep.subr.mxu0 0.0
  %3792 = vmatpush1.msra.mxu0 0.0
  %3793 = vmatprep.subr.mxu0 0.0
  %3794 = vmatpush1.msra.mxu0 0.0
  %3795 = vmatprep.subr.mxu0 0.0
  %3796 = vmatpush1.msra.mxu0 0.0
  %3797 = vmatprep.subr.mxu0 0.0
  %3798 = vmatpush1.msra.mxu0 0.0
  %3799 = vmatprep.subr.mxu0 0.0
  %3800 = vmatpush1.msra.mxu0 0.0
  %3801 = vmatprep.subr.mxu0 0.0
  %3802 = vmatpush1.msra.mxu0 0.0
  %3803 = vmatprep.subr.mxu0 0.0
  %3804 = vmatpush1.msra.mxu0 0.0
  %3805 = vmatprep.subr.mxu0 0.0
  %3806 = vmatpush1.msra.mxu0 0.0
  %3807 = vmatprep.subr.mxu0 0.0
  %3808 = vmatpush1.msra.mxu0 0.0
  %3809 = vmatprep.subr.mxu0 0.0
  %3810 = vmatpush1.msra.mxu0 0.0
  %3811 = vmatprep.subr.mxu0 0.0
  %3812 = vmatpush1.msra.mxu0 0.0
  %3813 = vmatprep.subr.mxu0 0.0
  %3814 = vmatpush1.msra.mxu0 0.0
  %3815 = vmatprep.subr.mxu0 0.0
  %3816 = vmatpush1.msra.mxu0 0.0
  %3817 = vmatprep.subr.mxu0 0.0
  %3818 = vmatpush1.msra.mxu0 0.0
  %3819 = vmatprep.subr.mxu0 0.0
  %3820 = vmatpush1.msra.mxu0 0.0
  %3821 = vmatprep.subr.mxu0 0.0
  %3822 = vmatpush1.msra.mxu0 0.0
  %3823 = vmatprep.subr.mxu0 0.0
  %3824 = vmatpush1.msra.mxu0 0.0
  %3825 = vmatprep.subr.mxu0 0.0
  %3826 = vmatpush1.msra.mxu0 0.0
  %3827 = vmatprep.subr.mxu0 0.0
  %3828 = vmatpush1.msra.mxu0 0.0
  %3829 = vmatprep.subr.mxu0 0.0
  %3830 = vmatpush1.msra.mxu0 0.0
  %3831 = vmatprep.subr.mxu0 0.0
  %3832 = vmatpush1.msra.mxu0 0.0
  %3833 = vmatprep.subr.mxu0 0.0
  %3834 = vmatpush1.msra.mxu0 0.0
  %3835 = vmatprep.subr.mxu0 0.0
  %3836 = vmatpush1.msra.mxu0 0.0
  %3837 = vmatprep.subr.mxu0 0.0
  %3838 = vmatpush1.msra.mxu0 0.0
  %3839 = vmatprep.mubr.f32.mxu0 0.0
  %v3840 = vand.u32 %v3424, 4294901760
  %3841 = vmatmul.mubr.f32.gmra.mrb[0].mxu0 %v3840
  %v3842 = vpop.f32.mrb[0].mxu0
  %v3843 = vadd.f32 %v3758, %v3842
  %v3844 = vpop.f32.mrb[0].mxu0
  %3845 = vmatprep.mubr.f32.mxu0 0.0
  %v3846 = vand.u32 %v3427, 4294901760
  %3847 = vmatmul.mubr.f32.gmra.mrb[0].mxu0 %v3846
  %v3848 = vpop.f32.mrb[0].mxu0
  %v3849 = vadd.f32 %v3766, %v3848
  %v3850 = vpop.f32.mrb[0].mxu0
  %3851 = vdwg.mxu0
  %3852 = vmatprep.subr.mxu0 0.0
  %v3853 = vand.u32 %v3416, 4294901760
  %3854 = vmatpush1.msra.mxu0 %v3853
  %3855 = vmatprep.subr.mxu0 0.0
  %v3856 = vand.u32 %v3417, 4294901760
  %3857 = vmatpush1.msra.mxu0 %v3856
  %3858 = vmatprep.subr.mxu0 0.0
  %3859 = vmatpush1.msra.mxu0 0.0
  %3860 = vmatprep.subr.mxu0 0.0
  %3861 = vmatpush1.msra.mxu0 0.0
  %3862 = vmatprep.subr.mxu0 0.0
  %3863 = vmatpush1.msra.mxu0 0.0
  %3864 = vmatprep.subr.mxu0 0.0
  %3865 = vmatpush1.msra.mxu0 0.0
  %3866 = vmatprep.subr.mxu0 0.0
  %3867 = vmatpush1.msra.mxu0 0.0
  %3868 = vmatprep.subr.mxu0 0.0
  %3869 = vmatpush1.msra.mxu0 0.0
  %3870 = vmatprep.subr.mxu0 0.0
  %3871 = vmatpush1.msra.mxu0 0.0
  %3872 = vmatprep.subr.mxu0 0.0
  %3873 = vmatpush1.msra.mxu0 0.0
  %3874 = vmatprep.subr.mxu0 0.0
  %3875 = vmatpush1.msra.mxu0 0.0
  %3876 = vmatprep.subr.mxu0 0.0
  %3877 = vmatpush1.msra.mxu0 0.0
  %3878 = vmatprep.subr.mxu0 0.0
  %3879 = vmatpush1.msra.mxu0 0.0
  %3880 = vmatprep.subr.mxu0 0.0
  %3881 = vmatpush1.msra.mxu0 0.0
  %3882 = vmatprep.subr.mxu0 0.0
  %3883 = vmatpush1.msra.mxu0 0.0
  %3884 = vmatprep.subr.mxu0 0.0
  %3885 = vmatpush1.msra.mxu0 0.0
  %3886 = vmatprep.subr.mxu0 0.0
  %3887 = vmatpush1.msra.mxu0 0.0
  %3888 = vmatprep.subr.mxu0 0.0
  %3889 = vmatpush1.msra.mxu0 0.0
  %3890 = vmatprep.subr.mxu0 0.0
  %3891 = vmatpush1.msra.mxu0 0.0
  %3892 = vmatprep.subr.mxu0 0.0
  %3893 = vmatpush1.msra.mxu0 0.0
  %3894 = vmatprep.subr.mxu0 0.0
  %3895 = vmatpush1.msra.mxu0 0.0
  %3896 = vmatprep.subr.mxu0 0.0
  %3897 = vmatpush1.msra.mxu0 0.0
  %3898 = vmatprep.subr.mxu0 0.0
  %3899 = vmatpush1.msra.mxu0 0.0
  %3900 = vmatprep.subr.mxu0 0.0
  %3901 = vmatpush1.msra.mxu0 0.0
  %3902 = vmatprep.subr.mxu0 0.0
  %3903 = vmatpush1.msra.mxu0 0.0
  %3904 = vmatprep.subr.mxu0 0.0
  %3905 = vmatpush1.msra.mxu0 0.0
  %3906 = vmatprep.subr.mxu0 0.0
  %3907 = vmatpush1.msra.mxu0 0.0
  %3908 = vmatprep.subr.mxu0 0.0
  %3909 = vmatpush1.msra.mxu0 0.0
  %3910 = vmatprep.subr.mxu0 0.0
  %3911 = vmatpush1.msra.mxu0 0.0
  %3912 = vmatprep.subr.mxu0 0.0
  %3913 = vmatpush1.msra.mxu0 0.0
  %3914 = vmatprep.subr.mxu0 0.0
  %3915 = vmatpush1.msra.mxu0 0.0
  %3916 = vmatprep.subr.mxu0 0.0
  %3917 = vmatpush1.msra.mxu0 0.0
  %3918 = vmatprep.mubr.f32.mxu0 0.0
  %v3919 = vand.u32 %v3424, 4294901760
  %3920 = vmatmul.mubr.f32.gmra.mrb[0].mxu0 %v3919
  %v3921 = vpop.f32.mrb[0].mxu0
  %v3922 = vadd.f32 %v3843, %v3921
  %v3923 = vpop.f32.mrb[0].mxu0
  %3924 = vmatprep.mubr.f32.mxu0 0.0
  %v3925 = vand.u32 %v3427, 4294901760
  %3926 = vmatmul.mubr.f32.gmra.mrb[0].mxu0 %v3925
  %v3927 = vpop.f32.mrb[0].mxu0
  %v3928 = vadd.f32 %v3849, %v3927
  %v3929 = vpop.f32.mrb[0].mxu0
  %3930 = vdwg.mxu0
  %v3931 = vld [vmem:[%s1 + $0x68] sm:$0xff]
  %v3932 = vld [vmem:[%s1 + $0x70] sm:$0xff]
  %v3933 = vxor.u32 %v3922, 2147483648
  %v3934 = vmul.f32 %v3933, 1.442695
  %v3935 = vpow.pop %v3934
  %v3936 = vadd.f32 %v3935, 1.0
  %v3937 = vrcp.pop %v3936
  %v3938 = vmul.f32 1.0, %v3937
  %v3939 = vmul.f32 %v3938, 2.0
  %v3940 = vsub.f32 %v3939, 1.0
  %3942 = vrot.lane.b32.xlu0 %v3940, 80
  %v3943 = vpop.permute.xlu0 %3942
  %v3945 = vmul.f32 %v3938, %v3943
  %v3946 = vtanh.pop %v3945
  %3948 = vrot.lane.b32.xlu0 %v3946, 32
  %v3949 = vpop.permute.xlu0 %3948
  %v3951 = vmul.f32 %v3938, %v3949
  %3953 = vset.pattern.permute.xlu0 32
  %3954 = vperm.xlu0 %3953, %v3951
  %v3955 = vpop.permute.xlu0 %3954
  %v3957 = vlaneseq
  %v3958 = vshrl.u32 %v3957, 7
  %v3959 = vsub.s32 0, %v3958
  %v3960 = vrot.slane %v3931, %v3959
  %v3961 = vmul.f32 %v3955, %v3960
  %3962 = vset.pattern.permute.xlu0 33
  %3963 = vperm.xlu0 %3962, %v3951
  %v3964 = vpop.permute.xlu0 %3963
  %v3966 = vlaneseq
  %v3967 = vshrl.u32 %v3966, 7
  %v3968 = vsub.s32 1, %v3967
  %v3969 = vrot.slane %v3931, %v3968
  %v3970 = vmul.f32 %v3964, %v3969
  %3971 = vset.pattern.permute.xlu0 34
  %3972 = vperm.xlu0 %3971, %v3951
  %v3973 = vpop.permute.xlu0 %3972
  %v3975 = vlaneseq
  %v3976 = vshrl.u32 %v3975, 7
  %v3977 = vsub.s32 2, %v3976
  %v3978 = vrot.slane %v3931, %v3977
  %v3979 = vmul.f32 %v3973, %v3978
  %3980 = vset.pattern.permute.xlu0 35
  %3981 = vperm.xlu0 %3980, %v3951
  %v3982 = vpop.permute.xlu0 %3981
  %v3984 = vlaneseq
  %v3985 = vshrl.u32 %v3984, 7
  %v3986 = vsub.s32 3, %v3985
  %v3987 = vrot.slane %v3931, %v3986
  %v3988 = vmul.f32 %v3982, %v3987
  %3989 = vset.pattern.permute.xlu0 36
  %3990 = vperm.xlu0 %3989, %v3951
  %v3991 = vpop.permute.xlu0 %3990
  %v3993 = vlaneseq
  %v3994 = vshrl.u32 %v3993, 7
  %v3995 = vsub.s32 4, %v3994
  %v3996 = vrot.slane %v3931, %v3995
  %v3997 = vmul.f32 %v3991, %v3996
  %3998 = vset.pattern.permute.xlu0 37
  %3999 = vperm.xlu0 %3998, %v3951
  %v4000 = vpop.permute.xlu0 %3999
  %v4002 = vlaneseq
  %v4003 = vshrl.u32 %v4002, 7
  %v4004 = vsub.s32 5, %v4003
  %v4005 = vrot.slane %v3931, %v4004
  %v4006 = vmul.f32 %v4000, %v4005
  %4007 = vset.pattern.permute.xlu0 38
  %4008 = vperm.xlu0 %4007, %v3951
  %v4009 = vpop.permute.xlu0 %4008
  %v4011 = vlaneseq
  %v4012 = vshrl.u32 %v4011, 7
  %v4013 = vsub.s32 6, %v4012
  %v4014 = vrot.slane %v3931, %v4013
  %v4015 = vmul.f32 %v4009, %v4014
  %4016 = vset.pattern.permute.xlu0 39
  %4017 = vperm.xlu0 %4016, %v3951
  %v4018 = vpop.permute.xlu0 %4017
  %v4020 = vlaneseq
  %v4021 = vshrl.u32 %v4020, 7
  %v4022 = vsub.s32 7, %v4021
  %v4023 = vrot.slane %v3931, %v4022
  %v4024 = vmul.f32 %v4018, %v4023
  %4025 = vset.pattern.permute.xlu0 40
  %4026 = vperm.xlu0 %4025, %v3951
  %v4027 = vpop.permute.xlu0 %4026
  %v4029 = vlaneseq
  %v4030 = vshrl.u32 %v4029, 7
  %v4031 = vsub.s32 0, %v4030
  %v4032 = vrot.slane %v3932, %v4031
  %v4033 = vmul.f32 %v4027, %v4032
  %4034 = vset.pattern.permute.xlu0 41
  %4035 = vperm.xlu0 %4034, %v3951
  %v4036 = vpop.permute.xlu0 %4035
  %v4038 = vlaneseq
  %v4039 = vshrl.u32 %v4038, 7
  %v4040 = vsub.s32 1, %v4039
  %v4041 = vrot.slane %v3932, %v4040
  %v4042 = vmul.f32 %v4036, %v4041
  %4043 = vset.pattern.permute.xlu0 42
  %4044 = vperm.xlu0 %4043, %v3951
  %v4045 = vpop.permute.xlu0 %4044
  %v4047 = vlaneseq
  %v4048 = vshrl.u32 %v4047, 7
  %v4049 = vsub.s32 2, %v4048
  %v4050 = vrot.slane %v3932, %v4049
  %v4051 = vmul.f32 %v4045, %v4050
  %4052 = vset.pattern.permute.xlu0 43
  %4053 = vperm.xlu0 %4052, %v3951
  %v4054 = vpop.permute.xlu0 %4053
  %v4056 = vlaneseq
  %v4057 = vshrl.u32 %v4056, 7
  %v4058 = vsub.s32 3, %v4057
  %v4059 = vrot.slane %v3932, %v4058
  %v4060 = vmul.f32 %v4054, %v4059
  %4061 = vset.pattern.permute.xlu0 44
  %4062 = vperm.xlu0 %4061, %v3951
  %v4063 = vpop.permute.xlu0 %4062
  %v4065 = vlaneseq
  %v4066 = vshrl.u32 %v4065, 7
  %v4067 = vsub.s32 4, %v4066
  %v4068 = vrot.slane %v3932, %v4067
  %v4069 = vmul.f32 %v4063, %v4068
  %4070 = vset.pattern.permute.xlu0 45
  %4071 = vperm.xlu0 %4070, %v3951
  %v4072 = vpop.permute.xlu0 %4071
  %v4074 = vlaneseq
  %v4075 = vshrl.u32 %v4074, 7
  %v4076 = vsub.s32 5, %v4075
  %v4077 = vrot.slane %v3932, %v4076
  %v4078 = vmul.f32 %v4072, %v4077
  %4079 = vset.pattern.permute.xlu0 46
  %4080 = vperm.xlu0 %4079, %v3951
  %v4081 = vpop.permute.xlu0 %4080
  %v4083 = vlaneseq
  %v4084 = vshrl.u32 %v4083, 7
  %v4085 = vsub.s32 6, %v4084
  %v4086 = vrot.slane %v3932, %v4085
  %v4087 = vmul.f32 %v4081, %v4086
  %4088 = vset.pattern.permute.xlu0 47
  %4089 = vperm.xlu0 %4088, %v3951
  %v4090 = vpop.permute.xlu0 %4089
  %v4092 = vlaneseq
  %v4093 = vshrl.u32 %v4092, 7
  %v4094 = vsub.s32 7, %v4093
  %v4095 = vrot.slane %v3932, %v4094
  %v4096 = vmul.f32 %v4090, %v4095
  %v4097 = vadd.f32 %v3961, %v3970
  %v4098 = vadd.f32 %v3979, %v3988
  %v4099 = vadd.f32 %v3997, %v4006
  %v4100 = vadd.f32 %v4015, %v4024
  %v4101 = vadd.f32 %v4033, %v4042
  %v4102 = vadd.f32 %v4051, %v4060
  %v4103 = vadd.f32 %v4069, %v4078
  %v4104 = vadd.f32 %v4087, %v4096
  %v4105 = vadd.f32 %v4097, %v4098
  %v4106 = vadd.f32 %v4099, %v4100
  %v4107 = vadd.f32 %v4101, %v4102
  %v4108 = vadd.f32 %v4103, %v4104
  %v4109 = vadd.f32 %v4105, %v4106
  %v4110 = vadd.f32 %v4107, %v4108
  %v4111 = vadd.f32 %v4109, %v4110
  %v4113 = vrot.slane %v4111, 6
  %v4115 = vadd.f32 %v3922, %v4113
  %v4116 = vxor.u32 %v4115, 2147483648
  %v4117 = vmul.f32 %v4116, 1.442695
  %v4118 = vpow.pop %v4117
  %v4119 = vadd.f32 %v4118, 1.0
  %v4120 = vrcp.pop %v4119
  %v4121 = vmul.f32 1.0, %v4120
  %v4122 = vmul.f32 %v4121, 2.0
  %v4123 = vsub.f32 %v4122, 1.0
  %v4125 = vrot.slane %v3945, 6
  %4126 = vrot.lane.b32.xlu0 %v4125, 16
  %v4127 = vpop.permute.xlu0 %4126
  %v4129 = vmul.f32 %v4121, %v4127
  %4131 = vrot.lane.b32.xlu0 %v4123, 80
  %v4132 = vpop.permute.xlu0 %4131
  %v4134 = vmul.f32 %v4121, %v4132
  %4136 = vrot.lane.b32.xlu0 %v4134, 16
  %v4137 = vpop.permute.xlu0 %4136
  %v4139 = vadd.f32 %v4129, %v4137
  %v4140 = vtanh.pop %v4139
  %4142 = vrot.lane.b32.xlu0 %v4140, 16
  %v4143 = vpop.permute.xlu0 %4142
  %v4145 = vmul.f32 %v4121, %v4143
  %4147 = vset.pattern.permute.xlu0 32
  %4148 = vperm.xlu0 %4147, %v4145
  %v4149 = vpop.permute.xlu0 %4148
  %v4151 = vmul.f32 %v4149, %v3960
  %4152 = vset.pattern.permute.xlu0 33
  %4153 = vperm.xlu0 %4152, %v4145
  %v4154 = vpop.permute.xlu0 %4153
  %v4156 = vmul.f32 %v4154, %v3969
  %4157 = vset.pattern.permute.xlu0 34
  %4158 = vperm.xlu0 %4157, %v4145
  %v4159 = vpop.permute.xlu0 %4158
  %v4161 = vmul.f32 %v4159, %v3978
  %4162 = vset.pattern.permute.xlu0 35
  %4163 = vperm.xlu0 %4162, %v4145
  %v4164 = vpop.permute.xlu0 %4163
  %v4166 = vmul.f32 %v4164, %v3987
  %4167 = vset.pattern.permute.xlu0 36
  %4168 = vperm.xlu0 %4167, %v4145
  %v4169 = vpop.permute.xlu0 %4168
  %v4171 = vmul.f32 %v4169, %v3996
  %4172 = vset.pattern.permute.xlu0 37
  %4173 = vperm.xlu0 %4172, %v4145
  %v4174 = vpop.permute.xlu0 %4173
  %v4176 = vmul.f32 %v4174, %v4005
  %4177 = vset.pattern.permute.xlu0 38
  %4178 = vperm.xlu0 %4177, %v4145
  %v4179 = vpop.permute.xlu0 %4178
  %v4181 = vmul.f32 %v4179, %v4014
  %4182 = vset.pattern.permute.xlu0 39
  %4183 = vperm.xlu0 %4182, %v4145
  %v4184 = vpop.permute.xlu0 %4183
  %v4186 = vmul.f32 %v4184, %v4023
  %4187 = vset.pattern.permute.xlu0 40
  %4188 = vperm.xlu0 %4187, %v4145
  %v4189 = vpop.permute.xlu0 %4188
  %v4191 = vmul.f32 %v4189, %v4032
  %4192 = vset.pattern.permute.xlu0 41
  %4193 = vperm.xlu0 %4192, %v4145
  %v4194 = vpop.permute.xlu0 %4193
  %v4196 = vmul.f32 %v4194, %v4041
  %4197 = vset.pattern.permute.xlu0 42
  %4198 = vperm.xlu0 %4197, %v4145
  %v4199 = vpop.permute.xlu0 %4198
  %v4201 = vmul.f32 %v4199, %v4050
  %4202 = vset.pattern.permute.xlu0 43
  %4203 = vperm.xlu0 %4202, %v4145
  %v4204 = vpop.permute.xlu0 %4203
  %v4206 = vmul.f32 %v4204, %v4059
  %4207 = vset.pattern.permute.xlu0 44
  %4208 = vperm.xlu0 %4207, %v4145
  %v4209 = vpop.permute.xlu0 %4208
  %v4211 = vmul.f32 %v4209, %v4068
  %4212 = vset.pattern.permute.xlu0 45
  %4213 = vperm.xlu0 %4212, %v4145
  %v4214 = vpop.permute.xlu0 %4213
  %v4216 = vmul.f32 %v4214, %v4077
  %4217 = vset.pattern.permute.xlu0 46
  %4218 = vperm.xlu0 %4217, %v4145
  %v4219 = vpop.permute.xlu0 %4218
  %v4221 = vmul.f32 %v4219, %v4086
  %4222 = vset.pattern.permute.xlu0 47
  %4223 = vperm.xlu0 %4222, %v4145
  %v4224 = vpop.permute.xlu0 %4223
  %v4226 = vmul.f32 %v4224, %v4095
  %v4227 = vadd.f32 %v4151, %v4156
  %v4228 = vadd.f32 %v4161, %v4166
  %v4229 = vadd.f32 %v4171, %v4176
  %v4230 = vadd.f32 %v4181, %v4186
  %v4231 = vadd.f32 %v4191, %v4196
  %v4232 = vadd.f32 %v4201, %v4206
  %v4233 = vadd.f32 %v4211, %v4216
  %v4234 = vadd.f32 %v4221, %v4226
  %v4235 = vadd.f32 %v4227, %v4228
  %v4236 = vadd.f32 %v4229, %v4230
  %v4237 = vadd.f32 %v4231, %v4232
  %v4238 = vadd.f32 %v4233, %v4234
  %v4239 = vadd.f32 %v4235, %v4236
  %v4240 = vadd.f32 %v4237, %v4238
  %v4241 = vadd.f32 %v4239, %v4240
  %v4243 = vrot.slane %v4241, 6
  %v4245 = vadd.f32 %v3922, %v4243
  %v4246 = vxor.u32 %v4245, 2147483648
  %v4247 = vmul.f32 %v4246, 1.442695
  %v4248 = vpow.pop %v4247
  %v4249 = vadd.f32 %v4248, 1.0
  %v4250 = vrcp.pop %v4249
  %v4251 = vmul.f32 1.0, %v4250
  %v4252 = vmul.f32 %v4251, 2.0
  %v4253 = vsub.f32 %v4252, 1.0
  %v4255 = vrot.slane %v4139, 6
  %v4257 = vmul.f32 %v4251, %v4255
  %4259 = vrot.lane.b32.xlu0 %v4253, 80
  %v4260 = vpop.permute.xlu0 %4259
  %v4262 = vmul.f32 %v4251, %v4260
  %4264 = vrot.lane.b32.xlu0 %v4262, 16
  %v4265 = vpop.permute.xlu0 %4264
  %v4267 = vadd.f32 %v4257, %v4265
  %v4268 = vtanh.pop %v4267
  %4270 = vrot.lane.b32.xlu0 %v4268, 16
  %v4271 = vpop.permute.xlu0 %4270
  %v4273 = vmul.f32 %v4251, %v4271
  %4275 = vset.pattern.permute.xlu0 32
  %4276 = vperm.xlu0 %4275, %v4273
  %v4277 = vpop.permute.xlu0 %4276
  %v4279 = vmul.f32 %v4277, %v3960
  %4280 = vset.pattern.permute.xlu0 33
  %4281 = vperm.xlu0 %4280, %v4273
  %v4282 = vpop.permute.xlu0 %4281
  %v4284 = vmul.f32 %v4282, %v3969
  %4285 = vset.pattern.permute.xlu0 34
  %4286 = vperm.xlu0 %4285, %v4273
  %v4287 = vpop.permute.xlu0 %4286
  %v4289 = vmul.f32 %v4287, %v3978
  %4290 = vset.pattern.permute.xlu0 35
  %4291 = vperm.xlu0 %4290, %v4273
  %v4292 = vpop.permute.xlu0 %4291
  %v4294 = vmul.f32 %v4292, %v3987
  %4295 = vset.pattern.permute.xlu0 36
  %4296 = vperm.xlu0 %4295, %v4273
  %v4297 = vpop.permute.xlu0 %4296
  %v4299 = vmul.f32 %v4297, %v3996
  %4300 = vset.pattern.permute.xlu0 37
  %4301 = vperm.xlu0 %4300, %v4273
  %v4302 = vpop.permute.xlu0 %4301
  %v4304 = vmul.f32 %v4302, %v4005
  %4305 = vset.pattern.permute.xlu0 38
  %4306 = vperm.xlu0 %4305, %v4273
  %v4307 = vpop.permute.xlu0 %4306
  %v4309 = vmul.f32 %v4307, %v4014
  %4310 = vset.pattern.permute.xlu0 39
  %4311 = vperm.xlu0 %4310, %v4273
  %v4312 = vpop.permute.xlu0 %4311
  %v4314 = vmul.f32 %v4312, %v4023
  %4315 = vset.pattern.permute.xlu0 40
  %4316 = vperm.xlu0 %4315, %v4273
  %v4317 = vpop.permute.xlu0 %4316
  %v4319 = vmul.f32 %v4317, %v4032
  %4320 = vset.pattern.permute.xlu0 41
  %4321 = vperm.xlu0 %4320, %v4273
  %v4322 = vpop.permute.xlu0 %4321
  %v4324 = vmul.f32 %v4322, %v4041
  %4325 = vset.pattern.permute.xlu0 42
  %4326 = vperm.xlu0 %4325, %v4273
  %v4327 = vpop.permute.xlu0 %4326
  %v4329 = vmul.f32 %v4327, %v4050
  %4330 = vset.pattern.permute.xlu0 43
  %4331 = vperm.xlu0 %4330, %v4273
  %v4332 = vpop.permute.xlu0 %4331
  %v4334 = vmul.f32 %v4332, %v4059
  %4335 = vset.pattern.permute.xlu0 44
  %4336 = vperm.xlu0 %4335, %v4273
  %v4337 = vpop.permute.xlu0 %4336
  %v4339 = vmul.f32 %v4337, %v4068
  %4340 = vset.pattern.permute.xlu0 45
  %4341 = vperm.xlu0 %4340, %v4273
  %v4342 = vpop.permute.xlu0 %4341
  %v4344 = vmul.f32 %v4342, %v4077
  %4345 = vset.pattern.permute.xlu0 46
  %4346 = vperm.xlu0 %4345, %v4273
  %v4347 = vpop.permute.xlu0 %4346
  %v4349 = vmul.f32 %v4347, %v4086
  %4350 = vset.pattern.permute.xlu0 47
  %4351 = vperm.xlu0 %4350, %v4273
  %v4352 = vpop.permute.xlu0 %4351
  %v4354 = vmul.f32 %v4352, %v4095
  %v4355 = vadd.f32 %v4279, %v4284
  %v4356 = vadd.f32 %v4289, %v4294
  %v4357 = vadd.f32 %v4299, %v4304
  %v4358 = vadd.f32 %v4309, %v4314
  %v4359 = vadd.f32 %v4319, %v4324
  %v4360 = vadd.f32 %v4329, %v4334
  %v4361 = vadd.f32 %v4339, %v4344
  %v4362 = vadd.f32 %v4349, %v4354
  %v4363 = vadd.f32 %v4355, %v4356
  %v4364 = vadd.f32 %v4357, %v4358
  %v4365 = vadd.f32 %v4359, %v4360
  %v4366 = vadd.f32 %v4361, %v4362
  %v4367 = vadd.f32 %v4363, %v4364
  %v4368 = vadd.f32 %v4365, %v4366
  %v4369 = vadd.f32 %v4367, %v4368
  %v4371 = vrot.slane %v4369, 6
  %v4373 = vadd.f32 %v3922, %v4371
  %v4374 = vxor.u32 %v4373, 2147483648
  %v4375 = vmul.f32 %v4374, 1.442695
  %v4376 = vpow.pop %v4375
  %v4377 = vadd.f32 %v4376, 1.0
  %v4378 = vrcp.pop %v4377
  %v4379 = vmul.f32 1.0, %v4378
  %v4380 = vmul.f32 %v4379, 2.0
  %v4381 = vsub.f32 %v4380, 1.0
  %v4383 = vrot.slane %v4267, 6
  %v4385 = vmul.f32 %v4379, %v4383
  %4387 = vrot.lane.b32.xlu0 %v4381, 80
  %v4388 = vpop.permute.xlu0 %4387
  %v4390 = vmul.f32 %v4379, %v4388
  %4392 = vrot.lane.b32.xlu0 %v4390, 16
  %v4393 = vpop.permute.xlu0 %4392
  %v4395 = vadd.f32 %v4385, %v4393
  %v4396 = vtanh.pop %v4395
  %4398 = vrot.lane.b32.xlu0 %v4396, 16
  %v4399 = vpop.permute.xlu0 %4398
  %v4401 = vmul.f32 %v4379, %v4399
  %4403 = vset.pattern.permute.xlu0 32
  %4404 = vperm.xlu0 %4403, %v4401
  %v4405 = vpop.permute.xlu0 %4404
  %v4407 = vmul.f32 %v4405, %v3960
  %4408 = vset.pattern.permute.xlu0 33
  %4409 = vperm.xlu0 %4408, %v4401
  %v4410 = vpop.permute.xlu0 %4409
  %v4412 = vmul.f32 %v4410, %v3969
  %4413 = vset.pattern.permute.xlu0 34
  %4414 = vperm.xlu0 %4413, %v4401
  %v4415 = vpop.permute.xlu0 %4414
  %v4417 = vmul.f32 %v4415, %v3978
  %4418 = vset.pattern.permute.xlu0 35
  %4419 = vperm.xlu0 %4418, %v4401
  %v4420 = vpop.permute.xlu0 %4419
  %v4422 = vmul.f32 %v4420, %v3987
  %4423 = vset.pattern.permute.xlu0 36
  %4424 = vperm.xlu0 %4423, %v4401
  %v4425 = vpop.permute.xlu0 %4424
  %v4427 = vmul.f32 %v4425, %v3996
  %4428 = vset.pattern.permute.xlu0 37
  %4429 = vperm.xlu0 %4428, %v4401
  %v4430 = vpop.permute.xlu0 %4429
  %v4432 = vmul.f32 %v4430, %v4005
  %4433 = vset.pattern.permute.xlu0 38
  %4434 = vperm.xlu0 %4433, %v4401
  %v4435 = vpop.permute.xlu0 %4434
  %v4437 = vmul.f32 %v4435, %v4014
  %4438 = vset.pattern.permute.xlu0 39
  %4439 = vperm.xlu0 %4438, %v4401
  %v4440 = vpop.permute.xlu0 %4439
  %v4442 = vmul.f32 %v4440, %v4023
  %4443 = vset.pattern.permute.xlu0 40
  %4444 = vperm.xlu0 %4443, %v4401
  %v4445 = vpop.permute.xlu0 %4444
  %v4447 = vmul.f32 %v4445, %v4032
  %4448 = vset.pattern.permute.xlu0 41
  %4449 = vperm.xlu0 %4448, %v4401
  %v4450 = vpop.permute.xlu0 %4449
  %v4452 = vmul.f32 %v4450, %v4041
  %4453 = vset.pattern.permute.xlu0 42
  %4454 = vperm.xlu0 %4453, %v4401
  %v4455 = vpop.permute.xlu0 %4454
  %v4457 = vmul.f32 %v4455, %v4050
  %4458 = vset.pattern.permute.xlu0 43
  %4459 = vperm.xlu0 %4458, %v4401
  %v4460 = vpop.permute.xlu0 %4459
  %v4462 = vmul.f32 %v4460, %v4059
  %4463 = vset.pattern.permute.xlu0 44
  %4464 = vperm.xlu0 %4463, %v4401
  %v4465 = vpop.permute.xlu0 %4464
  %v4467 = vmul.f32 %v4465, %v4068
  %4468 = vset.pattern.permute.xlu0 45
  %4469 = vperm.xlu0 %4468, %v4401
  %v4470 = vpop.permute.xlu0 %4469
  %v4472 = vmul.f32 %v4470, %v4077
  %4473 = vset.pattern.permute.xlu0 46
  %4474 = vperm.xlu0 %4473, %v4401
  %v4475 = vpop.permute.xlu0 %4474
  %v4477 = vmul.f32 %v4475, %v4086
  %4478 = vset.pattern.permute.xlu0 47
  %4479 = vperm.xlu0 %4478, %v4401
  %v4480 = vpop.permute.xlu0 %4479
  %v4482 = vmul.f32 %v4480, %v4095
  %v4483 = vadd.f32 %v4407, %v4412
  %v4484 = vadd.f32 %v4417, %v4422
  %v4485 = vadd.f32 %v4427, %v4432
  %v4486 = vadd.f32 %v4437, %v4442
  %v4487 = vadd.f32 %v4447, %v4452
  %v4488 = vadd.f32 %v4457, %v4462
  %v4489 = vadd.f32 %v4467, %v4472
  %v4490 = vadd.f32 %v4477, %v4482
  %v4491 = vadd.f32 %v4483, %v4484
  %v4492 = vadd.f32 %v4485, %v4486
  %v4493 = vadd.f32 %v4487, %v4488
  %v4494 = vadd.f32 %v4489, %v4490
  %v4495 = vadd.f32 %v4491, %v4492
  %v4496 = vadd.f32 %v4493, %v4494
  %v4497 = vadd.f32 %v4495, %v4496
  %v4499 = vrot.slane %v4497, 6
  %v4501 = vadd.f32 %v3928, %v4499
  %v4502 = vxor.u32 %v4501, 2147483648
  %v4503 = vmul.f32 %v4502, 1.442695
  %v4504 = vpow.pop %v4503
  %v4505 = vadd.f32 %v4504, 1.0
  %v4506 = vrcp.pop %v4505
  %v4507 = vmul.f32 1.0, %v4506
  %v4508 = vmul.f32 %v4507, 2.0
  %v4509 = vsub.f32 %v4508, 1.0
  %v4511 = vrot.slane %v4395, 6
  %v4513 = vmul.f32 %v4507, %v4511
  %4515 = vrot.lane.b32.xlu0 %v4509, 80
  %v4516 = vpop.permute.xlu0 %4515
  %v4518 = vmul.f32 %v4507, %v4516
  %4520 = vrot.lane.b32.xlu0 %v4518, 16
  %v4521 = vpop.permute.xlu0 %4520
  %v4523 = vadd.f32 %v4513, %v4521
  %v4524 = vtanh.pop %v4523
  %4526 = vrot.lane.b32.xlu0 %v4524, 16
  %v4527 = vpop.permute.xlu0 %4526
  %v4529 = vmul.f32 %v4507, %v4527
  %4531 = vset.pattern.permute.xlu0 32
  %4532 = vperm.xlu0 %4531, %v4529
  %v4533 = vpop.permute.xlu0 %4532
  %v4535 = vmul.f32 %v4533, %v3960
  %4536 = vset.pattern.permute.xlu0 33
  %4537 = vperm.xlu0 %4536, %v4529
  %v4538 = vpop.permute.xlu0 %4537
  %v4540 = vmul.f32 %v4538, %v3969
  %4541 = vset.pattern.permute.xlu0 34
  %4542 = vperm.xlu0 %4541, %v4529
  %v4543 = vpop.permute.xlu0 %4542
  %v4545 = vmul.f32 %v4543, %v3978
  %4546 = vset.pattern.permute.xlu0 35
  %4547 = vperm.xlu0 %4546, %v4529
  %v4548 = vpop.permute.xlu0 %4547
  %v4550 = vmul.f32 %v4548, %v3987
  %4551 = vset.pattern.permute.xlu0 36
  %4552 = vperm.xlu0 %4551, %v4529
  %v4553 = vpop.permute.xlu0 %4552
  %v4555 = vmul.f32 %v4553, %v3996
  %4556 = vset.pattern.permute.xlu0 37
  %4557 = vperm.xlu0 %4556, %v4529
  %v4558 = vpop.permute.xlu0 %4557
  %v4560 = vmul.f32 %v4558, %v4005
  %4561 = vset.pattern.permute.xlu0 38
  %4562 = vperm.xlu0 %4561, %v4529
  %v4563 = vpop.permute.xlu0 %4562
  %v4565 = vmul.f32 %v4563, %v4014
  %4566 = vset.pattern.permute.xlu0 39
  %4567 = vperm.xlu0 %4566, %v4529
  %v4568 = vpop.permute.xlu0 %4567
  %v4570 = vmul.f32 %v4568, %v4023
  %4571 = vset.pattern.permute.xlu0 40
  %4572 = vperm.xlu0 %4571, %v4529
  %v4573 = vpop.permute.xlu0 %4572
  %v4575 = vmul.f32 %v4573, %v4032
  %4576 = vset.pattern.permute.xlu0 41
  %4577 = vperm.xlu0 %4576, %v4529
  %v4578 = vpop.permute.xlu0 %4577
  %v4580 = vmul.f32 %v4578, %v4041
  %4581 = vset.pattern.permute.xlu0 42
  %4582 = vperm.xlu0 %4581, %v4529
  %v4583 = vpop.permute.xlu0 %4582
  %v4585 = vmul.f32 %v4583, %v4050
  %4586 = vset.pattern.permute.xlu0 43
  %4587 = vperm.xlu0 %4586, %v4529
  %v4588 = vpop.permute.xlu0 %4587
  %v4590 = vmul.f32 %v4588, %v4059
  %4591 = vset.pattern.permute.xlu0 44
  %4592 = vperm.xlu0 %4591, %v4529
  %v4593 = vpop.permute.xlu0 %4592
  %v4595 = vmul.f32 %v4593, %v4068
  %4596 = vset.pattern.permute.xlu0 45
  %4597 = vperm.xlu0 %4596, %v4529
  %v4598 = vpop.permute.xlu0 %4597
  %v4600 = vmul.f32 %v4598, %v4077
  %4601 = vset.pattern.permute.xlu0 46
  %4602 = vperm.xlu0 %4601, %v4529
  %v4603 = vpop.permute.xlu0 %4602
  %v4605 = vmul.f32 %v4603, %v4086
  %4606 = vset.pattern.permute.xlu0 47
  %4607 = vperm.xlu0 %4606, %v4529
  %v4608 = vpop.permute.xlu0 %4607
  %v4610 = vmul.f32 %v4608, %v4095
  %v4611 = vadd.f32 %v4535, %v4540
  %v4612 = vadd.f32 %v4545, %v4550
  %v4613 = vadd.f32 %v4555, %v4560
  %v4614 = vadd.f32 %v4565, %v4570
  %v4615 = vadd.f32 %v4575, %v4580
  %v4616 = vadd.f32 %v4585, %v4590
  %v4617 = vadd.f32 %v4595, %v4600
  %v4618 = vadd.f32 %v4605, %v4610
  %v4619 = vadd.f32 %v4611, %v4612
  %v4620 = vadd.f32 %v4613, %v4614
  %v4621 = vadd.f32 %v4615, %v4616
  %v4622 = vadd.f32 %v4617, %v4618
  %v4623 = vadd.f32 %v4619, %v4620
  %v4624 = vadd.f32 %v4621, %v4622
  %v4625 = vadd.f32 %v4623, %v4624
  %v4627 = vrot.slane %v4625, 6
  %v4629 = vadd.f32 %v3928, %v4627
  %v4630 = vxor.u32 %v4629, 2147483648
  %v4631 = vmul.f32 %v4630, 1.442695
  %v4632 = vpow.pop %v4631
  %v4633 = vadd.f32 %v4632, 1.0
  %v4634 = vrcp.pop %v4633
  %v4635 = vmul.f32 1.0, %v4634
  %v4636 = vmul.f32 %v4635, 2.0
  %v4637 = vsub.f32 %v4636, 1.0
  %v4639 = vrot.slane %v4523, 6
  %v4641 = vmul.f32 %v4635, %v4639
  %4643 = vrot.lane.b32.xlu0 %v4637, 80
  %v4644 = vpop.permute.xlu0 %4643
  %v4646 = vmul.f32 %v4635, %v4644
  %4648 = vrot.lane.b32.xlu0 %v4646, 16
  %v4649 = vpop.permute.xlu0 %4648
  %v4651 = vadd.f32 %v4641, %v4649
  %v4652 = vtanh.pop %v4651
  %4654 = vrot.lane.b32.xlu0 %v4652, 16
  %v4655 = vpop.permute.xlu0 %4654
  %v4657 = vmul.f32 %v4635, %v4655
  %4659 = vset.pattern.permute.xlu0 32
  %4660 = vperm.xlu0 %4659, %v4657
  %v4661 = vpop.permute.xlu0 %4660
  %v4663 = vmul.f32 %v4661, %v3960
  %4664 = vset.pattern.permute.xlu0 33
  %4665 = vperm.xlu0 %4664, %v4657
  %v4666 = vpop.permute.xlu0 %4665
  %v4668 = vmul.f32 %v4666, %v3969
  %4669 = vset.pattern.permute.xlu0 34
  %4670 = vperm.xlu0 %4669, %v4657
  %v4671 = vpop.permute.xlu0 %4670
  %v4673 = vmul.f32 %v4671, %v3978
  %4674 = vset.pattern.permute.xlu0 35
  %4675 = vperm.xlu0 %4674, %v4657
  %v4676 = vpop.permute.xlu0 %4675
  %v4678 = vmul.f32 %v4676, %v3987
  %4679 = vset.pattern.permute.xlu0 36
  %4680 = vperm.xlu0 %4679, %v4657
  %v4681 = vpop.permute.xlu0 %4680
  %v4683 = vmul.f32 %v4681, %v3996
  %4684 = vset.pattern.permute.xlu0 37
  %4685 = vperm.xlu0 %4684, %v4657
  %v4686 = vpop.permute.xlu0 %4685
  %v4688 = vmul.f32 %v4686, %v4005
  %4689 = vset.pattern.permute.xlu0 38
  %4690 = vperm.xlu0 %4689, %v4657
  %v4691 = vpop.permute.xlu0 %4690
  %v4693 = vmul.f32 %v4691, %v4014
  %4694 = vset.pattern.permute.xlu0 39
  %4695 = vperm.xlu0 %4694, %v4657
  %v4696 = vpop.permute.xlu0 %4695
  %v4698 = vmul.f32 %v4696, %v4023
  %4699 = vset.pattern.permute.xlu0 40
  %4700 = vperm.xlu0 %4699, %v4657
  %v4701 = vpop.permute.xlu0 %4700
  %v4703 = vmul.f32 %v4701, %v4032
  %4704 = vset.pattern.permute.xlu0 41
  %4705 = vperm.xlu0 %4704, %v4657
  %v4706 = vpop.permute.xlu0 %4705
  %v4708 = vmul.f32 %v4706, %v4041
  %4709 = vset.pattern.permute.xlu0 42
  %4710 = vperm.xlu0 %4709, %v4657
  %v4711 = vpop.permute.xlu0 %4710
  %v4713 = vmul.f32 %v4711, %v4050
  %4714 = vset.pattern.permute.xlu0 43
  %4715 = vperm.xlu0 %4714, %v4657
  %v4716 = vpop.permute.xlu0 %4715
  %v4718 = vmul.f32 %v4716, %v4059
  %4719 = vset.pattern.permute.xlu0 44
  %4720 = vperm.xlu0 %4719, %v4657
  %v4721 = vpop.permute.xlu0 %4720
  %v4723 = vmul.f32 %v4721, %v4068
  %4724 = vset.pattern.permute.xlu0 45
  %4725 = vperm.xlu0 %4724, %v4657
  %v4726 = vpop.permute.xlu0 %4725
  %v4728 = vmul.f32 %v4726, %v4077
  %4729 = vset.pattern.permute.xlu0 46
  %4730 = vperm.xlu0 %4729, %v4657
  %v4731 = vpop.permute.xlu0 %4730
  %v4733 = vmul.f32 %v4731, %v4086
  %4734 = vset.pattern.permute.xlu0 47
  %4735 = vperm.xlu0 %4734, %v4657
  %v4736 = vpop.permute.xlu0 %4735
  %v4738 = vmul.f32 %v4736, %v4095
  %v4739 = vadd.f32 %v4663, %v4668
  %v4740 = vadd.f32 %v4673, %v4678
  %v4741 = vadd.f32 %v4683, %v4688
  %v4742 = vadd.f32 %v4693, %v4698
  %v4743 = vadd.f32 %v4703, %v4708
  %v4744 = vadd.f32 %v4713, %v4718
  %v4745 = vadd.f32 %v4723, %v4728
  %v4746 = vadd.f32 %v4733, %v4738
  %v4747 = vadd.f32 %v4739, %v4740
  %v4748 = vadd.f32 %v4741, %v4742
  %v4749 = vadd.f32 %v4743, %v4744
  %v4750 = vadd.f32 %v4745, %v4746
  %v4751 = vadd.f32 %v4747, %v4748
  %v4752 = vadd.f32 %v4749, %v4750
  %v4753 = vadd.f32 %v4751, %v4752
  %v4755 = vrot.slane %v4753, 6
  %v4757 = vadd.f32 %v3928, %v4755
  %v4758 = vxor.u32 %v4757, 2147483648
  %v4759 = vmul.f32 %v4758, 1.442695
  %v4760 = vpow.pop %v4759
  %v4761 = vadd.f32 %v4760, 1.0
  %v4762 = vrcp.pop %v4761
  %v4763 = vmul.f32 1.0, %v4762
  %v4764 = vmul.f32 %v4763, 2.0
  %v4765 = vsub.f32 %v4764, 1.0
  %v4767 = vrot.slane %v4651, 6
  %v4769 = vmul.f32 %v4763, %v4767
  %4771 = vrot.lane.b32.xlu0 %v4765, 80
  %v4772 = vpop.permute.xlu0 %4771
  %v4774 = vmul.f32 %v4763, %v4772
  %4776 = vrot.lane.b32.xlu0 %v4774, 16
  %v4777 = vpop.permute.xlu0 %4776
  %v4779 = vadd.f32 %v4769, %v4777
  %v4780 = vtanh.pop %v4779
  %4782 = vrot.lane.b32.xlu0 %v4780, 16
  %v4783 = vpop.permute.xlu0 %4782
  %v4785 = vmul.f32 %v4763, %v4783
  %4787 = vset.pattern.permute.xlu0 32
  %4788 = vperm.xlu0 %4787, %v4785
  %v4789 = vpop.permute.xlu0 %4788
  %v4791 = vmul.f32 %v4789, %v3960
  %4792 = vset.pattern.permute.xlu0 33
  %4793 = vperm.xlu0 %4792, %v4785
  %v4794 = vpop.permute.xlu0 %4793
  %v4796 = vmul.f32 %v4794, %v3969
  %4797 = vset.pattern.permute.xlu0 34
  %4798 = vperm.xlu0 %4797, %v4785
  %v4799 = vpop.permute.xlu0 %4798
  %v4801 = vmul.f32 %v4799, %v3978
  %4802 = vset.pattern.permute.xlu0 35
  %4803 = vperm.xlu0 %4802, %v4785
  %v4804 = vpop.permute.xlu0 %4803
  %v4806 = vmul.f32 %v4804, %v3987
  %4807 = vset.pattern.permute.xlu0 36
  %4808 = vperm.xlu0 %4807, %v4785
  %v4809 = vpop.permute.xlu0 %4808
  %v4811 = vmul.f32 %v4809, %v3996
  %4812 = vset.pattern.permute.xlu0 37
  %4813 = vperm.xlu0 %4812, %v4785
  %v4814 = vpop.permute.xlu0 %4813
  %v4816 = vmul.f32 %v4814, %v4005
  %4817 = vset.pattern.permute.xlu0 38
  %4818 = vperm.xlu0 %4817, %v4785
  %v4819 = vpop.permute.xlu0 %4818
  %v4821 = vmul.f32 %v4819, %v4014
  %4822 = vset.pattern.permute.xlu0 39
  %4823 = vperm.xlu0 %4822, %v4785
  %v4824 = vpop.permute.xlu0 %4823
  %v4826 = vmul.f32 %v4824, %v4023
  %4827 = vset.pattern.permute.xlu0 40
  %4828 = vperm.xlu0 %4827, %v4785
  %v4829 = vpop.permute.xlu0 %4828
  %v4831 = vmul.f32 %v4829, %v4032
  %4832 = vset.pattern.permute.xlu0 41
  %4833 = vperm.xlu0 %4832, %v4785
  %v4834 = vpop.permute.xlu0 %4833
  %v4836 = vmul.f32 %v4834, %v4041
  %4837 = vset.pattern.permute.xlu0 42
  %4838 = vperm.xlu0 %4837, %v4785
  %v4839 = vpop.permute.xlu0 %4838
  %v4841 = vmul.f32 %v4839, %v4050
  %4842 = vset.pattern.permute.xlu0 43
  %4843 = vperm.xlu0 %4842, %v4785
  %v4844 = vpop.permute.xlu0 %4843
  %v4846 = vmul.f32 %v4844, %v4059
  %4847 = vset.pattern.permute.xlu0 44
  %4848 = vperm.xlu0 %4847, %v4785
  %v4849 = vpop.permute.xlu0 %4848
  %v4851 = vmul.f32 %v4849, %v4068
  %4852 = vset.pattern.permute.xlu0 45
  %4853 = vperm.xlu0 %4852, %v4785
  %v4854 = vpop.permute.xlu0 %4853
  %v4856 = vmul.f32 %v4854, %v4077
  %4857 = vset.pattern.permute.xlu0 46
  %4858 = vperm.xlu0 %4857, %v4785
  %v4859 = vpop.permute.xlu0 %4858
  %v4861 = vmul.f32 %v4859, %v4086
  %4862 = vset.pattern.permute.xlu0 47
  %4863 = vperm.xlu0 %4862, %v4785
  %v4864 = vpop.permute.xlu0 %4863
  %v4866 = vmul.f32 %v4864, %v4095
  %v4867 = vadd.f32 %v4791, %v4796
  %v4868 = vadd.f32 %v4801, %v4806
  %v4869 = vadd.f32 %v4811, %v4816
  %v4870 = vadd.f32 %v4821, %v4826
  %v4871 = vadd.f32 %v4831, %v4836
  %v4872 = vadd.f32 %v4841, %v4846
  %v4873 = vadd.f32 %v4851, %v4856
  %v4874 = vadd.f32 %v4861, %v4866
  %v4875 = vadd.f32 %v4867, %v4868
  %v4876 = vadd.f32 %v4869, %v4870
  %v4877 = vadd.f32 %v4871, %v4872
  %v4878 = vadd.f32 %v4873, %v4874
  %v4879 = vadd.f32 %v4875, %v4876
  %v4880 = vadd.f32 %v4877, %v4878
  %v4881 = vadd.f32 %v4879, %v4880
  %v4883 = vrot.slane %v4881, 6
  %v4885 = vadd.f32 %v3928, %v4883
  %v4886 = vxor.u32 %v4885, 2147483648
  %v4887 = vmul.f32 %v4886, 1.442695
  %v4888 = vpow.pop %v4887
  %v4889 = vadd.f32 %v4888, 1.0
  %v4890 = vrcp.pop %v4889
  %v4891 = vmul.f32 1.0, %v4890
  %v4892 = vmul.f32 %v4891, 2.0
  %v4893 = vsub.f32 %v4892, 1.0
  %v4895 = vrot.slane %v4779, 6
  %v4897 = vmul.f32 %v4891, %v4895
  %4899 = vrot.lane.b32.xlu0 %v4893, 80
  %v4900 = vpop.permute.xlu0 %4899
  %v4902 = vmul.f32 %v4891, %v4900
  %4904 = vrot.lane.b32.xlu0 %v4902, 16
  %v4905 = vpop.permute.xlu0 %4904
  %v4907 = vadd.f32 %v4897, %v4905
  %v4908 = vtanh.pop %v4907
  %4910 = vrot.lane.b32.xlu0 %v4908, 16
  %v4911 = vpop.permute.xlu0 %4910
  %v4913 = vmul.f32 %v4891, %v4911
  %v4914 = vsel %vm37, %v3951, %v4145
  %v4915 = vsel %vm39, %v4914, %v4273
  %v4916 = vsel %vm41, %v4915, %v4401
  %v4917 = vsel %vm37, %v4529, %v4657
  %v4918 = vsel %vm39, %v4917, %v4785
  %v4919 = vsel %vm41, %v4918, %v4913
  %v4921 = vrot.slane %v4913, 6
  %v4923 = vrot.slane %v4785, 2
  %v4925 = vrot.slane %v4657, 6
  %v4927 = vrot.slane %v4529, 2
  %v4929 = vrot.slane %v4401, 6
  %v4931 = vrot.slane %v4273, 2
  %v4933 = vrot.slane %v4145, 6
  %v4935 = vrot.slane %v3951, 2
  %v4937 = vsel %vm37, %v4921, %v4923
  %v4938 = vsel %vm39, %v4937, %v4925
  %v4939 = vsel %vm41, %v4938, %v4927
  %v4940 = vsel %vm37, %v4929, %v4931
  %v4941 = vsel %vm39, %v4940, %v4933
  %v4942 = vsel %vm41, %v4941, %v4935
  %4945 = vrot.lane.b32.xlu0 %v4916, 96
  %v4946 = vpop.permute.xlu0 %4945
  %4947 = vrot.lane.b32.xlu0 %v4919, 96
  %v4948 = vpop.permute.xlu0 %4947
  %4953 = vrot.lane.b32.xlu0 %v4939, 112
  %v4954 = vpop.permute.xlu0 %4953
  %4955 = vrot.lane.b32.xlu0 %v4942, 112
  %v4956 = vpop.permute.xlu0 %4955
  %v4959 = vsel %vm91, %v4946, %v4954
  %v4960 = vsel %vm91, %v4948, %v4956
  %v4961 = vld [vmem:[%s1 + $0x80] sm:$0xff]
  %v4962 = vld [vmem:[%s1 + $0x88] sm:$0xff]
  %v4963 = vld [vmem:[%s1 + $0x90] sm:$0xff]
  %v4964 = vld [vmem:[%s1 + $0x98] sm:$0xff]
  %v4965 = vld [vmem:[%s1 + $0xa0] sm:$0x1]
  %v4966 = vlaneseq
  %v4967 = vshrl.u32 %v4966, 7
  %v4968 = vsub.s32 0, %v4967
  %v4969 = vrot.slane %v4965, %v4968
  %vm4970 = vcmask 261120
  %v4972 = vsel %vm4970, %v4959, 0
  %v4975 = vsel %vm4970, %v4960, 0
  %4977 = vmatprep.subr.mxu0 0.0
  %v4978 = vand.u32 %v4961, 4294901760
  %4979 = vmatpush1.msra.mxu0 %v4978
  %4980 = vmatprep.subr.mxu0 0.0
  %v4981 = vand.u32 %v4962, 4294901760
  %4982 = vmatpush1.msra.mxu0 %v4981
  %4983 = vmatprep.subr.mxu0 0.0
  %v4984 = vand.u32 %v4963, 4294901760
  %4985 = vmatpush1.msra.mxu0 %v4984
  %4986 = vmatprep.subr.mxu0 0.0
  %v4987 = vand.u32 %v4964, 4294901760
  %4988 = vmatpush1.msra.mxu0 %v4987
  %4989 = vmatprep.subr.mxu0 0.0
  %4990 = vmatpush1.msra.mxu0 0.0
  %4991 = vmatprep.subr.mxu0 0.0
  %4992 = vmatpush1.msra.mxu0 0.0
  %4993 = vmatprep.subr.mxu0 0.0
  %4994 = vmatpush1.msra.mxu0 0.0
  %4995 = vmatprep.subr.mxu0 0.0
  %4996 = vmatpush1.msra.mxu0 0.0
  %4997 = vmatprep.subr.mxu0 0.0
  %4998 = vmatpush1.msra.mxu0 0.0
  %4999 = vmatprep.subr.mxu0 0.0
  %5000 = vmatpush1.msra.mxu0 0.0
  %5001 = vmatprep.subr.mxu0 0.0
  %5002 = vmatpush1.msra.mxu0 0.0
  %5003 = vmatprep.subr.mxu0 0.0
  %5004 = vmatpush1.msra.mxu0 0.0
  %5005 = vmatprep.subr.mxu0 0.0
  %5006 = vmatpush1.msra.mxu0 0.0
  %5007 = vmatprep.subr.mxu0 0.0
  %5008 = vmatpush1.msra.mxu0 0.0
  %5009 = vmatprep.subr.mxu0 0.0
  %5010 = vmatpush1.msra.mxu0 0.0
  %5011 = vmatprep.subr.mxu0 0.0
  %5012 = vmatpush1.msra.mxu0 0.0
  %5013 = vmatprep.subr.mxu0 0.0
  %5014 = vmatpush1.msra.mxu0 0.0
  %5015 = vmatprep.subr.mxu0 0.0
  %5016 = vmatpush1.msra.mxu0 0.0
  %5017 = vmatprep.subr.mxu0 0.0
  %5018 = vmatpush1.msra.mxu0 0.0
  %5019 = vmatprep.subr.mxu0 0.0
  %5020 = vmatpush1.msra.mxu0 0.0
  %5021 = vmatprep.subr.mxu0 0.0
  %5022 = vmatpush1.msra.mxu0 0.0
  %5023 = vmatprep.subr.mxu0 0.0
  %5024 = vmatpush1.msra.mxu0 0.0
  %5025 = vmatprep.subr.mxu0 0.0
  %5026 = vmatpush1.msra.mxu0 0.0
  %5027 = vmatprep.subr.mxu0 0.0
  %5028 = vmatpush1.msra.mxu0 0.0
  %5029 = vmatprep.subr.mxu0 0.0
  %5030 = vmatpush1.msra.mxu0 0.0
  %5031 = vmatprep.subr.mxu0 0.0
  %5032 = vmatpush1.msra.mxu0 0.0
  %5033 = vmatprep.subr.mxu0 0.0
  %5034 = vmatpush1.msra.mxu0 0.0
  %5035 = vmatprep.subr.mxu0 0.0
  %5036 = vmatpush1.msra.mxu0 0.0
  %5037 = vmatprep.subr.mxu0 0.0
  %5038 = vmatpush1.msra.mxu0 0.0
  %5039 = vmatprep.subr.mxu0 0.0
  %5040 = vmatpush1.msra.mxu0 0.0
  %5041 = vmatprep.subr.mxu0 0.0
  %5042 = vmatpush1.msra.mxu0 0.0
  %5043 = vmatprep.subr.mxu0 0.0
  %5044 = vmatpush1.msra.mxu0 0.0
  %5045 = vmatprep.mubr.f32.mxu0 0.0
  %v5046 = vand.u32 %v4972, 4294901760
  %v5047 = vsub.f32 %v4972, %v5046
  %v5048 = vand.u32 %v5047, 4294901760
  %v5049 = vsub.f32 %v5047, %v5048
  %v5050 = vand.u32 %v5049, 4294901760
  %5051 = vmatmul.mubr.f32.gmra.mrb[0].mxu0 %v5050
  %v5052 = vpop.f32.mrb[0].mxu0
  %v5053 = vadd.f32 %v4969, %v5052
  %v5054 = vpop.f32.mrb[0].mxu0
  %5055 = vmatprep.mubr.f32.mxu0 0.0
  %v5056 = vand.u32 %v4975, 4294901760
  %v5057 = vsub.f32 %v4975, %v5056
  %v5058 = vand.u32 %v5057, 4294901760
  %v5059 = vsub.f32 %v5057, %v5058
  %v5060 = vand.u32 %v5059, 4294901760
  %5061 = vmatmul.mubr.f32.gmra.mrb[0].mxu0 %v5060
  %v5062 = vpop.f32.mrb[0].mxu0
  %v5063 = vadd.f32 %v4969, %v5062
  %v5064 = vpop.f32.mrb[0].mxu0
  %5065 = vdwg.mxu0
  %5066 = vmatprep.subr.mxu0 0.0
  %v5067 = vand.u32 %v4961, 4294901760
  %v5068 = vsub.f32 %v4961, %v5067
  %v5069 = vand.u32 %v5068, 4294901760
  %v5070 = vsub.f32 %v5068, %v5069
  %v5071 = vand.u32 %v5070, 4294901760
  %5072 = vmatpush1.msra.mxu0 %v5071
  %5073 = vmatprep.subr.mxu0 0.0
  %v5074 = vand.u32 %v4962, 4294901760
  %v5075 = vsub.f32 %v4962, %v5074
  %v5076 = vand.u32 %v5075, 4294901760
  %v5077 = vsub.f32 %v5075, %v5076
  %v5078 = vand.u32 %v5077, 4294901760
  %5079 = vmatpush1.msra.mxu0 %v5078
  %5080 = vmatprep.subr.mxu0 0.0
  %v5081 = vand.u32 %v4963, 4294901760
  %v5082 = vsub.f32 %v4963, %v5081
  %v5083 = vand.u32 %v5082, 4294901760
  %v5084 = vsub.f32 %v5082, %v5083
  %v5085 = vand.u32 %v5084, 4294901760
  %5086 = vmatpush1.msra.mxu0 %v5085
  %5087 = vmatprep.subr.mxu0 0.0
  %v5088 = vand.u32 %v4964, 4294901760
  %v5089 = vsub.f32 %v4964, %v5088
  %v5090 = vand.u32 %v5089, 4294901760
  %v5091 = vsub.f32 %v5089, %v5090
  %v5092 = vand.u32 %v5091, 4294901760
  %5093 = vmatpush1.msra.mxu0 %v5092
  %5094 = vmatprep.subr.mxu0 0.0
  %5095 = vmatpush1.msra.mxu0 0.0
  %5096 = vmatprep.subr.mxu0 0.0
  %5097 = vmatpush1.msra.mxu0 0.0
  %5098 = vmatprep.subr.mxu0 0.0
  %5099 = vmatpush1.msra.mxu0 0.0
  %5100 = vmatprep.subr.mxu0 0.0
  %5101 = vmatpush1.msra.mxu0 0.0
  %5102 = vmatprep.subr.mxu0 0.0
  %5103 = vmatpush1.msra.mxu0 0.0
  %5104 = vmatprep.subr.mxu0 0.0
  %5105 = vmatpush1.msra.mxu0 0.0
  %5106 = vmatprep.subr.mxu0 0.0
  %5107 = vmatpush1.msra.mxu0 0.0
  %5108 = vmatprep.subr.mxu0 0.0
  %5109 = vmatpush1.msra.mxu0 0.0
  %5110 = vmatprep.subr.mxu0 0.0
  %5111 = vmatpush1.msra.mxu0 0.0
  %5112 = vmatprep.subr.mxu0 0.0
  %5113 = vmatpush1.msra.mxu0 0.0
  %5114 = vmatprep.subr.mxu0 0.0
  %5115 = vmatpush1.msra.mxu0 0.0
  %5116 = vmatprep.subr.mxu0 0.0
  %5117 = vmatpush1.msra.mxu0 0.0
  %5118 = vmatprep.subr.mxu0 0.0
  %5119 = vmatpush1.msra.mxu0 0.0
  %5120 = vmatprep.subr.mxu0 0.0
  %5121 = vmatpush1.msra.mxu0 0.0
  %5122 = vmatprep.subr.mxu0 0.0
  %5123 = vmatpush1.msra.mxu0 0.0
  %5124 = vmatprep.subr.mxu0 0.0
  %5125 = vmatpush1.msra.mxu0 0.0
  %5126 = vmatprep.subr.mxu0 0.0
  %5127 = vmatpush1.msra.mxu0 0.0
  %5128 = vmatprep.subr.mxu0 0.0
  %5129 = vmatpush1.msra.mxu0 0.0
  %5130 = vmatprep.subr.mxu0 0.0
  %5131 = vmatpush1.msra.mxu0 0.0
  %5132 = vmatprep.subr.mxu0 0.0
  %5133 = vmatpush1.msra.mxu0 0.0
  %5134 = vmatprep.subr.mxu0 0.0
  %5135 = vmatpush1.msra.mxu0 0.0
  %5136 = vmatprep.subr.mxu0 0.0
  %5137 = vmatpush1.msra.mxu0 0.0
  %5138 = vmatprep.subr.mxu0 0.0
  %5139 = vmatpush1.msra.mxu0 0.0
  %5140 = vmatprep.subr.mxu0 0.0
  %5141 = vmatpush1.msra.mxu0 0.0
  %5142 = vmatprep.subr.mxu0 0.0
  %5143 = vmatpush1.msra.mxu0 0.0
  %5144 = vmatprep.subr.mxu0 0.0
  %5145 = vmatpush1.msra.mxu0 0.0
  %5146 = vmatprep.subr.mxu0 0.0
  %5147 = vmatpush1.msra.mxu0 0.0
  %5148 = vmatprep.subr.mxu0 0.0
  %5149 = vmatpush1.msra.mxu0 0.0
  %5150 = vmatprep.mubr.f32.mxu0 0.0
  %v5151 = vand.u32 %v4972, 4294901760
  %5152 = vmatmul.mubr.f32.gmra.mrb[0].mxu0 %v5151
  %v5153 = vpop.f32.mrb[0].mxu0
  %v5154 = vadd.f32 %v5053, %v5153
  %v5155 = vpop.f32.mrb[0].mxu0
  %5156 = vmatprep.mubr.f32.mxu0 0.0
  %v5157 = vand.u32 %v4975, 4294901760
  %5158 = vmatmul.mubr.f32.gmra.mrb[0].mxu0 %v5157
  %v5159 = vpop.f32.mrb[0].mxu0
  %v5160 = vadd.f32 %v5063, %v5159
  %v5161 = vpop.f32.mrb[0].mxu0
  %5162 = vdwg.mxu0
  %5163 = vmatprep.subr.mxu0 0.0
  %v5164 = vand.u32 %v4961, 4294901760
  %v5165 = vsub.f32 %v4961, %v5164
  %5166 = vmatpush1.msra.mxu0 %v5165
  %5167 = vmatprep.subr.mxu0 0.0
  %v5168 = vand.u32 %v4962, 4294901760
  %v5169 = vsub.f32 %v4962, %v5168
  %5170 = vmatpush1.msra.mxu0 %v5169
  %5171 = vmatprep.subr.mxu0 0.0
  %v5172 = vand.u32 %v4963, 4294901760
  %v5173 = vsub.f32 %v4963, %v5172
  %5174 = vmatpush1.msra.mxu0 %v5173
  %5175 = vmatprep.subr.mxu0 0.0
  %v5176 = vand.u32 %v4964, 4294901760
  %v5177 = vsub.f32 %v4964, %v5176
  %5178 = vmatpush1.msra.mxu0 %v5177
  %5179 = vmatprep.subr.mxu0 0.0
  %5180 = vmatpush1.msra.mxu0 0.0
  %5181 = vmatprep.subr.mxu0 0.0
  %5182 = vmatpush1.msra.mxu0 0.0
  %5183 = vmatprep.subr.mxu0 0.0
  %5184 = vmatpush1.msra.mxu0 0.0
  %5185 = vmatprep.subr.mxu0 0.0
  %5186 = vmatpush1.msra.mxu0 0.0
  %5187 = vmatprep.subr.mxu0 0.0
  %5188 = vmatpush1.msra.mxu0 0.0
  %5189 = vmatprep.subr.mxu0 0.0
  %5190 = vmatpush1.msra.mxu0 0.0
  %5191 = vmatprep.subr.mxu0 0.0
  %5192 = vmatpush1.msra.mxu0 0.0
  %5193 = vmatprep.subr.mxu0 0.0
  %5194 = vmatpush1.msra.mxu0 0.0
  %5195 = vmatprep.subr.mxu0 0.0
  %5196 = vmatpush1.msra.mxu0 0.0
  %5197 = vmatprep.subr.mxu0 0.0
  %5198 = vmatpush1.msra.mxu0 0.0
  %5199 = vmatprep.subr.mxu0 0.0
  %5200 = vmatpush1.msra.mxu0 0.0
  %5201 = vmatprep.subr.mxu0 0.0
  %5202 = vmatpush1.msra.mxu0 0.0
  %5203 = vmatprep.subr.mxu0 0.0
  %5204 = vmatpush1.msra.mxu0 0.0
  %5205 = vmatprep.subr.mxu0 0.0
  %5206 = vmatpush1.msra.mxu0 0.0
  %5207 = vmatprep.subr.mxu0 0.0
  %5208 = vmatpush1.msra.mxu0 0.0
  %5209 = vmatprep.subr.mxu0 0.0
  %5210 = vmatpush1.msra.mxu0 0.0
  %5211 = vmatprep.subr.mxu0 0.0
  %5212 = vmatpush1.msra.mxu0 0.0
  %5213 = vmatprep.subr.mxu0 0.0
  %5214 = vmatpush1.msra.mxu0 0.0
  %5215 = vmatprep.subr.mxu0 0.0
  %5216 = vmatpush1.msra.mxu0 0.0
  %5217 = vmatprep.subr.mxu0 0.0
  %5218 = vmatpush1.msra.mxu0 0.0
  %5219 = vmatprep.subr.mxu0 0.0
  %5220 = vmatpush1.msra.mxu0 0.0
  %5221 = vmatprep.subr.mxu0 0.0
  %5222 = vmatpush1.msra.mxu0 0.0
  %5223 = vmatprep.subr.mxu0 0.0
  %5224 = vmatpush1.msra.mxu0 0.0
  %5225 = vmatprep.subr.mxu0 0.0
  %5226 = vmatpush1.msra.mxu0 0.0
  %5227 = vmatprep.subr.mxu0 0.0
  %5228 = vmatpush1.msra.mxu0 0.0
  %5229 = vmatprep.subr.mxu0 0.0
  %5230 = vmatpush1.msra.mxu0 0.0
  %5231 = vmatprep.subr.mxu0 0.0
  %5232 = vmatpush1.msra.mxu0 0.0
  %5233 = vmatprep.subr.mxu0 0.0
  %5234 = vmatpush1.msra.mxu0 0.0
  %5235 = vmatprep.mubr.f32.mxu0 0.0
  %v5236 = vand.u32 %v4972, 4294901760
  %v5237 = vsub.f32 %v4972, %v5236
  %5238 = vmatmul.mubr.f32.gmra.mrb[0].mxu0 %v5237
  %v5239 = vpop.f32.mrb[0].mxu0
  %v5240 = vadd.f32 %v5154, %v5239
  %v5241 = vpop.f32.mrb[0].mxu0
  %5242 = vmatprep.mubr.f32.mxu0 0.0
  %v5243 = vand.u32 %v4975, 4294901760
  %v5244 = vsub.f32 %v4975, %v5243
  %5245 = vmatmul.mubr.f32.gmra.mrb[0].mxu0 %v5244
  %v5246 = vpop.f32.mrb[0].mxu0
  %v5247 = vadd.f32 %v5160, %v5246
  %v5248 = vpop.f32.mrb[0].mxu0
  %5249 = vdwg.mxu0
  %5250 = vmatprep.subr.mxu0 0.0
  %v5251 = vand.u32 %v4961, 4294901760
  %5252 = vmatpush1.msra.mxu0 %v5251
  %5253 = vmatprep.subr.mxu0 0.0
  %v5254 = vand.u32 %v4962, 4294901760
  %5255 = vmatpush1.msra.mxu0 %v5254
  %5256 = vmatprep.subr.mxu0 0.0
  %v5257 = vand.u32 %v4963, 4294901760
  %5258 = vmatpush1.msra.mxu0 %v5257
  %5259 = vmatprep.subr.mxu0 0.0
  %v5260 = vand.u32 %v4964, 4294901760
  %5261 = vmatpush1.msra.mxu0 %v5260
  %5262 = vmatprep.subr.mxu0 0.0
  %5263 = vmatpush1.msra.mxu0 0.0
  %5264 = vmatprep.subr.mxu0 0.0
  %5265 = vmatpush1.msra.mxu0 0.0
  %5266 = vmatprep.subr.mxu0 0.0
  %5267 = vmatpush1.msra.mxu0 0.0
  %5268 = vmatprep.subr.mxu0 0.0
  %5269 = vmatpush1.msra.mxu0 0.0
  %5270 = vmatprep.subr.mxu0 0.0
  %5271 = vmatpush1.msra.mxu0 0.0
  %5272 = vmatprep.subr.mxu0 0.0
  %5273 = vmatpush1.msra.mxu0 0.0
  %5274 = vmatprep.subr.mxu0 0.0
  %5275 = vmatpush1.msra.mxu0 0.0
  %5276 = vmatprep.subr.mxu0 0.0
  %5277 = vmatpush1.msra.mxu0 0.0
  %5278 = vmatprep.subr.mxu0 0.0
  %5279 = vmatpush1.msra.mxu0 0.0
  %5280 = vmatprep.subr.mxu0 0.0
  %5281 = vmatpush1.msra.mxu0 0.0
  %5282 = vmatprep.subr.mxu0 0.0
  %5283 = vmatpush1.msra.mxu0 0.0
  %5284 = vmatprep.subr.mxu0 0.0
  %5285 = vmatpush1.msra.mxu0 0.0
  %5286 = vmatprep.subr.mxu0 0.0
  %5287 = vmatpush1.msra.mxu0 0.0
  %5288 = vmatprep.subr.mxu0 0.0
  %5289 = vmatpush1.msra.mxu0 0.0
  %5290 = vmatprep.subr.mxu0 0.0
  %5291 = vmatpush1.msra.mxu0 0.0
  %5292 = vmatprep.subr.mxu0 0.0
  %5293 = vmatpush1.msra.mxu0 0.0
  %5294 = vmatprep.subr.mxu0 0.0
  %5295 = vmatpush1.msra.mxu0 0.0
  %5296 = vmatprep.subr.mxu0 0.0
  %5297 = vmatpush1.msra.mxu0 0.0
  %5298 = vmatprep.subr.mxu0 0.0
  %5299 = vmatpush1.msra.mxu0 0.0
  %5300 = vmatprep.subr.mxu0 0.0
  %5301 = vmatpush1.msra.mxu0 0.0
  %5302 = vmatprep.subr.mxu0 0.0
  %5303 = vmatpush1.msra.mxu0 0.0
  %5304 = vmatprep.subr.mxu0 0.0
  %5305 = vmatpush1.msra.mxu0 0.0
  %5306 = vmatprep.subr.mxu0 0.0
  %5307 = vmatpush1.msra.mxu0 0.0
  %5308 = vmatprep.subr.mxu0 0.0
  %5309 = vmatpush1.msra.mxu0 0.0
  %5310 = vmatprep.subr.mxu0 0.0
  %5311 = vmatpush1.msra.mxu0 0.0
  %5312 = vmatprep.subr.mxu0 0.0
  %5313 = vmatpush1.msra.mxu0 0.0
  %5314 = vmatprep.subr.mxu0 0.0
  %5315 = vmatpush1.msra.mxu0 0.0
  %5316 = vmatprep.subr.mxu0 0.0
  %5317 = vmatpush1.msra.mxu0 0.0
  %5318 = vmatprep.mubr.f32.mxu0 0.0
  %v5319 = vand.u32 %v4972, 4294901760
  %v5320 = vsub.f32 %v4972, %v5319
  %v5321 = vand.u32 %v5320, 4294901760
  %5322 = vmatmul.mubr.f32.gmra.mrb[0].mxu0 %v5321
  %v5323 = vpop.f32.mrb[0].mxu0
  %v5324 = vadd.f32 %v5240, %v5323
  %v5325 = vpop.f32.mrb[0].mxu0
  %5326 = vmatprep.mubr.f32.mxu0 0.0
  %v5327 = vand.u32 %v4975, 4294901760
  %v5328 = vsub.f32 %v4975, %v5327
  %v5329 = vand.u32 %v5328, 4294901760
  %5330 = vmatmul.mubr.f32.gmra.mrb[0].mxu0 %v5329
  %v5331 = vpop.f32.mrb[0].mxu0
  %v5332 = vadd.f32 %v5247, %v5331
  %v5333 = vpop.f32.mrb[0].mxu0
  %5334 = vdwg.mxu0
  %5335 = vmatprep.subr.mxu0 0.0
  %v5336 = vand.u32 %v4961, 4294901760
  %v5337 = vsub.f32 %v4961, %v5336
  %v5338 = vand.u32 %v5337, 4294901760
  %5339 = vmatpush1.msra.mxu0 %v5338
  %5340 = vmatprep.subr.mxu0 0.0
  %v5341 = vand.u32 %v4962, 4294901760
  %v5342 = vsub.f32 %v4962, %v5341
  %v5343 = vand.u32 %v5342, 4294901760
  %5344 = vmatpush1.msra.mxu0 %v5343
  %5345 = vmatprep.subr.mxu0 0.0
  %v5346 = vand.u32 %v4963, 4294901760
  %v5347 = vsub.f32 %v4963, %v5346
  %v5348 = vand.u32 %v5347, 4294901760
  %5349 = vmatpush1.msra.mxu0 %v5348
  %5350 = vmatprep.subr.mxu0 0.0
  %v5351 = vand.u32 %v4964, 4294901760
  %v5352 = vsub.f32 %v4964, %v5351
  %v5353 = vand.u32 %v5352, 4294901760
  %5354 = vmatpush1.msra.mxu0 %v5353
  %5355 = vmatprep.subr.mxu0 0.0
  %5356 = vmatpush1.msra.mxu0 0.0
  %5357 = vmatprep.subr.mxu0 0.0
  %5358 = vmatpush1.msra.mxu0 0.0
  %5359 = vmatprep.subr.mxu0 0.0
  %5360 = vmatpush1.msra.mxu0 0.0
  %5361 = vmatprep.subr.mxu0 0.0
  %5362 = vmatpush1.msra.mxu0 0.0
  %5363 = vmatprep.subr.mxu0 0.0
  %5364 = vmatpush1.msra.mxu0 0.0
  %5365 = vmatprep.subr.mxu0 0.0
  %5366 = vmatpush1.msra.mxu0 0.0
  %5367 = vmatprep.subr.mxu0 0.0
  %5368 = vmatpush1.msra.mxu0 0.0
  %5369 = vmatprep.subr.mxu0 0.0
  %5370 = vmatpush1.msra.mxu0 0.0
  %5371 = vmatprep.subr.mxu0 0.0
  %5372 = vmatpush1.msra.mxu0 0.0
  %5373 = vmatprep.subr.mxu0 0.0
  %5374 = vmatpush1.msra.mxu0 0.0
  %5375 = vmatprep.subr.mxu0 0.0
  %5376 = vmatpush1.msra.mxu0 0.0
  %5377 = vmatprep.subr.mxu0 0.0
  %5378 = vmatpush1.msra.mxu0 0.0
  %5379 = vmatprep.subr.mxu0 0.0
  %5380 = vmatpush1.msra.mxu0 0.0
  %5381 = vmatprep.subr.mxu0 0.0
  %5382 = vmatpush1.msra.mxu0 0.0
  %5383 = vmatprep.subr.mxu0 0.0
  %5384 = vmatpush1.msra.mxu0 0.0
  %5385 = vmatprep.subr.mxu0 0.0
  %5386 = vmatpush1.msra.mxu0 0.0
  %5387 = vmatprep.subr.mxu0 0.0
  %5388 = vmatpush1.msra.mxu0 0.0
  %5389 = vmatprep.subr.mxu0 0.0
  %5390 = vmatpush1.msra.mxu0 0.0
  %5391 = vmatprep.subr.mxu0 0.0
  %5392 = vmatpush1.msra.mxu0 0.0
  %5393 = vmatprep.subr.mxu0 0.0
  %5394 = vmatpush1.msra.mxu0 0.0
  %5395 = vmatprep.subr.mxu0 0.0
  %5396 = vmatpush1.msra.mxu0 0.0
  %5397 = vmatprep.subr.mxu0 0.0
  %5398 = vmatpush1.msra.mxu0 0.0
  %5399 = vmatprep.subr.mxu0 0.0
  %5400 = vmatpush1.msra.mxu0 0.0
  %5401 = vmatprep.subr.mxu0 0.0
  %5402 = vmatpush1.msra.mxu0 0.0
  %5403 = vmatprep.subr.mxu0 0.0
  %5404 = vmatpush1.msra.mxu0 0.0
  %5405 = vmatprep.subr.mxu0 0.0
  %5406 = vmatpush1.msra.mxu0 0.0
  %5407 = vmatprep.subr.mxu0 0.0
  %5408 = vmatpush1.msra.mxu0 0.0
  %5409 = vmatprep.subr.mxu0 0.0
  %5410 = vmatpush1.msra.mxu0 0.0
  %5411 = vmatprep.mubr.f32.mxu0 0.0
  %v5412 = vand.u32 %v4972, 4294901760
  %5413 = vmatmul.mubr.f32.gmra.mrb[0].mxu0 %v5412
  %v5414 = vpop.f32.mrb[0].mxu0
  %v5415 = vadd.f32 %v5324, %v5414
  %v5416 = vpop.f32.mrb[0].mxu0
  %5417 = vmatprep.mubr.f32.mxu0 0.0
  %v5418 = vand.u32 %v4975, 4294901760
  %5419 = vmatmul.mubr.f32.gmra.mrb[0].mxu0 %v5418
  %v5420 = vpop.f32.mrb[0].mxu0
  %v5421 = vadd.f32 %v5332, %v5420
  %v5422 = vpop.f32.mrb[0].mxu0
  %5423 = vdwg.mxu0
  %5424 = vmatprep.subr.mxu0 0.0
  %v5425 = vand.u32 %v4961, 4294901760
  %5426 = vmatpush1.msra.mxu0 %v5425
  %5427 = vmatprep.subr.mxu0 0.0
  %v5428 = vand.u32 %v4962, 4294901760
  %5429 = vmatpush1.msra.mxu0 %v5428
  %5430 = vmatprep.subr.mxu0 0.0
  %v5431 = vand.u32 %v4963, 4294901760
  %5432 = vmatpush1.msra.mxu0 %v5431
  %5433 = vmatprep.subr.mxu0 0.0
  %v5434 = vand.u32 %v4964, 4294901760
  %5435 = vmatpush1.msra.mxu0 %v5434
  %5436 = vmatprep.subr.mxu0 0.0
  %5437 = vmatpush1.msra.mxu0 0.0
  %5438 = vmatprep.subr.mxu0 0.0
  %5439 = vmatpush1.msra.mxu0 0.0
  %5440 = vmatprep.subr.mxu0 0.0
  %5441 = vmatpush1.msra.mxu0 0.0
  %5442 = vmatprep.subr.mxu0 0.0
  %5443 = vmatpush1.msra.mxu0 0.0
  %5444 = vmatprep.subr.mxu0 0.0
  %5445 = vmatpush1.msra.mxu0 0.0
  %5446 = vmatprep.subr.mxu0 0.0
  %5447 = vmatpush1.msra.mxu0 0.0
  %5448 = vmatprep.subr.mxu0 0.0
  %5449 = vmatpush1.msra.mxu0 0.0
  %5450 = vmatprep.subr.mxu0 0.0
  %5451 = vmatpush1.msra.mxu0 0.0
  %5452 = vmatprep.subr.mxu0 0.0
  %5453 = vmatpush1.msra.mxu0 0.0
  %5454 = vmatprep.subr.mxu0 0.0
  %5455 = vmatpush1.msra.mxu0 0.0
  %5456 = vmatprep.subr.mxu0 0.0
  %5457 = vmatpush1.msra.mxu0 0.0
  %5458 = vmatprep.subr.mxu0 0.0
  %5459 = vmatpush1.msra.mxu0 0.0
  %5460 = vmatprep.subr.mxu0 0.0
  %5461 = vmatpush1.msra.mxu0 0.0
  %5462 = vmatprep.subr.mxu0 0.0
  %5463 = vmatpush1.msra.mxu0 0.0
  %5464 = vmatprep.subr.mxu0 0.0
  %5465 = vmatpush1.msra.mxu0 0.0
  %5466 = vmatprep.subr.mxu0 0.0
  %5467 = vmatpush1.msra.mxu0 0.0
  %5468 = vmatprep.subr.mxu0 0.0
  %5469 = vmatpush1.msra.mxu0 0.0
  %5470 = vmatprep.subr.mxu0 0.0
  %5471 = vmatpush1.msra.mxu0 0.0
  %5472 = vmatprep.subr.mxu0 0.0
  %5473 = vmatpush1.msra.mxu0 0.0
  %5474 = vmatprep.subr.mxu0 0.0
  %5475 = vmatpush1.msra.mxu0 0.0
  %5476 = vmatprep.subr.mxu0 0.0
  %5477 = vmatpush1.msra.mxu0 0.0
  %5478 = vmatprep.subr.mxu0 0.0
  %5479 = vmatpush1.msra.mxu0 0.0
  %5480 = vmatprep.subr.mxu0 0.0
  %5481 = vmatpush1.msra.mxu0 0.0
  %5482 = vmatprep.subr.mxu0 0.0
  %5483 = vmatpush1.msra.mxu0 0.0
  %5484 = vmatprep.subr.mxu0 0.0
  %5485 = vmatpush1.msra.mxu0 0.0
  %5486 = vmatprep.subr.mxu0 0.0
  %5487 = vmatpush1.msra.mxu0 0.0
  %5488 = vmatprep.subr.mxu0 0.0
  %5489 = vmatpush1.msra.mxu0 0.0
  %5490 = vmatprep.subr.mxu0 0.0
  %5491 = vmatpush1.msra.mxu0 0.0
  %5492 = vmatprep.mubr.f32.mxu0 0.0
  %v5493 = vand.u32 %v4972, 4294901760
  %5494 = vmatmul.mubr.f32.gmra.mrb[0].mxu0 %v5493
  %v5495 = vpop.f32.mrb[0].mxu0
  %v5496 = vadd.f32 %v5415, %v5495
  %v5497 = vpop.f32.mrb[0].mxu0
  %5498 = vmatprep.mubr.f32.mxu0 0.0
  %v5499 = vand.u32 %v4975, 4294901760
  %5500 = vmatmul.mubr.f32.gmra.mrb[0].mxu0 %v5499
  %v5501 = vpop.f32.mrb[0].mxu0
  %v5502 = vadd.f32 %v5421, %v5501
  %v5503 = vpop.f32.mrb[0].mxu0
  %5504 = vdwg.mxu0
  %vm5505 = vcmask 58368
  %5506 = vst.msk [vmem:[%s2] sm:$0x3] %vm5505, %v5496
  %5508 = vrot.lane.b32.xlu0 %v5496, 8
  %v5509 = vpop.permute.xlu0 %5508
  %vm5511 = vcmask 126018
  %5512 = vst.msk [vmem:[%s2 - $0x2] sm:$0xc] %vm5511, %v5509
  %5513 = vrot.lane.b32.xlu0 %v5496, 16
  %v5514 = vpop.permute.xlu0 %5513
  %vm5516 = vcmask 193668
  %5517 = vst.msk [vmem:[%s2 - $0x4] sm:$0x30] %vm5516, %v5514
  %5518 = vrot.lane.b32.xlu0 %v5496, 24
  %v5519 = vpop.permute.xlu0 %5518
  %vm5521 = vcmask 261318
  %5522 = vst.msk [vmem:[%s2 - $0x6] sm:$0xc0] %vm5521, %v5519
  %5524 = vrot.lane.b32.xlu0 %v5502, 32
  %v5525 = vpop.permute.xlu0 %5524
  %vm5527 = vcmask 320768
  %5528 = vst.msk [vmem:[%s2] sm:$0x3] %vm5527, %v5525
  %5529 = vrot.lane.b32.xlu0 %v5502, 40
  %v5530 = vpop.permute.xlu0 %5529
  %vm5532 = vcmask 388418
  %5533 = vst.msk [vmem:[%s2 - $0x2] sm:$0xc] %vm5532, %v5530
  %5534 = vrot.lane.b32.xlu0 %v5502, 48
  %v5535 = vpop.permute.xlu0 %5534
  %vm5537 = vcmask 456068
  %5538 = vst.msk [vmem:[%s2 - $0x4] sm:$0x30] %vm5537, %v5535
  %5539 = vrot.lane.b32.xlu0 %v5502, 56
  %v5540 = vpop.permute.xlu0 %5539
  %vm5542 = vcmask 523718
  %5543 = vst.msk [vmem:[%s2 - $0x6] sm:$0xc0] %vm5542, %v5540
  // Predicated region
  $region10: #{lstmae_forward.1} parent=0 // pred_check
    _
  $region11: #{lstmae_forward.1} parent=0 // pred_check_branch
    %5545 = sbr.rel (0) target = $region13
  $region12: #{lstmae_forward.1} parent=0 // pred_region
    _
  $region13: #{lstmae_forward.1} parent=0 // pred_fallthru
    _
  // Predicated region
  $region14: #{lstmae_forward.1} parent=0 // pred_check
    _
  $region15: #{lstmae_forward.1} parent=0 // pred_check_branch
    %5547 = sbr.rel (0) target = $region17
  $region16: #{lstmae_forward.1} parent=0 // pred_region
    _
  $region17: #{lstmae_forward.1} parent=0 // pred_fallthru
    _

</llo_original>
